<compile_context>
chip_gen: v7x
topology: tpu7x:2x2x1
jax: 0.10.0
libtpu: 0.0.40
codegen_flags: <defaults>
</compile_context>

<pallas_src>
import jax
import jax.numpy as jnp
from jax.experimental import pallas as pl
from jax.experimental.pallas import tpu as pltpu

# ----------------------------- model sizes -----------------------------------
T = 8                # input sequence length (padded)
E = 32               # embedding dim
H = 32               # hidden dim
V = 32               # vocab size
G4H = 4 * H          # fused gate width = 128 (exactly one lane vreg)
SOS_TOK = 1
EOS_TOK = 2
MAX_DECODE_STEPS = 20
PRED_LANES = 128     # lane-dense int32 prediction row (>= MAX_DECODE_STEPS)


# ----------------------------- fused-gate LSTM nonlinearity -------------------
def _lstm_gates(gates, c):
    """gates: (1,4H) pre-activation, torch gate order (i,f,g,o); c: (1,H)."""
    sig = jax.nn.sigmoid(gates)      # one full-vreg EUP pass (covers i, f, o)
    tg = jnp.tanh(gates)             # one full-vreg EUP pass (covers g)
    i = sig[:, 0 * H:1 * H]
    f = sig[:, 1 * H:2 * H]
    g = tg[:, 2 * H:3 * H]
    o = sig[:, 3 * H:4 * H]
    c_new = f * c + i * g
    h_new = o * jnp.tanh(c_new)
    return h_new, c_new


# ----------------------------- fused Seq2seq kernel ----------------------------
def seq2seq_kernel(tokcol_ref, len_ref,                    # (T,1) VMEM, (1,) SMEM
                   enc_l1_in_ref, enc_whh1_ref, enc_b1_ref,
                   enc_l2_w_ref, enc_b2_ref,
                   dec_w_ref, dec_b_ref, dec_wout_ref, dec_bout_ref,
                   pred_ref):
    # ---- hoisted weight loads (closed over by the fully-unrolled loops) -----
    enc_whh1 = enc_whh1_ref[...]
    enc_l2_w = enc_l2_w_ref[...]
    enc_b2 = enc_b2_ref[...]
    dec_w = dec_w_ref[...]
    dec_b = dec_b_ref[...]
    dec_wout = dec_wout_ref[...]
    dec_bout = dec_bout_ref[...]

    seq_len = len_ref[0]
    vocab_iota = jax.lax.broadcasted_iota(jnp.int32, (1, V), 1)

    # ---- encoder layer-1 input path, hoisted out of the time loop -----------
    # (T,V) one-hot built once; ONE (T,V)x(V,4H) matmul (embedding + W_ih1 were
    # folded offline) replaces T serial gather + projection mat-vecs.
    onehot_TV = (jax.lax.broadcasted_iota(jnp.int32, (T, V), 1)
                 == tokcol_ref[...]).astype(jnp.float32)            # (T, V)
    x1_all = (jnp.dot(onehot_TV, enc_l1_in_ref[...],
                      preferred_element_type=jnp.float32)
              + enc_b1_ref[...])                                    # (T, 4H)

    # ---- encoder: 2-layer LSTM, fully unrolled, packed-sequence masking -----
    z = jnp.zeros((1, H), jnp.float32)
    h1, c1, h2, c2 = z, z, z, z
    for t in range(T):
        # layer 1: only h1 @ W_hh1 remains on the per-step critical path
        gates1 = x1_all[t:t + 1, :] + jnp.dot(
            h1, enc_whh1, preferred_element_type=jnp.float32)
        h1n, c1n = _lstm_gates(gates1, c1)
        # layer 2: [h1n ; h2] @ stacked (2H,4H) -> single matmul
        gates2 = (jnp.dot(jnp.concatenate([h1n, h2], axis=1), enc_l2_w,
                          preferred_element_type=jnp.float32) + enc_b2)
        h2n, c2n = _lstm_gates(gates2, c2)
        v = (seq_len > t).astype(jnp.float32)     # 1.0 while t < input_len
        nv = 1.0 - v
        h1 = v * h1n + nv * h1
        c1 = v * c1n + nv * c1
        h2 = v * h2n + nv * h2
        c2 = v * c2n + nv * c2

    # Seq2seq.forward: decoder_state = h.mean(dim=0); cell = c.mean(dim=0)
    h = (h1 + h2) * 0.5
    c = (c1 + c2) * 0.5

    # ---- greedy decoder: fully unrolled; 2 serial matmuls per step ----------
    pred_iota = jax.lax.broadcasted_iota(jnp.int32, (1, PRED_LANES), 1)
    tok = jnp.full((1, 1), SOS_TOK, jnp.int32)
    done = jnp.zeros((1, 1), jnp.int32)
    preds = jnp.full((1, PRED_LANES), -1, jnp.int32)    # -1 sentinel = "no token"
    for s in range(MAX_DECODE_STEPS):
        onehot = (vocab_iota == tok).astype(jnp.float32)            # (1, V)
        # [onehot ; h] @ stacked (V+H, 4H): embedding gather + W_ih + W_hh fused
        xin = jnp.concatenate([onehot, h], axis=1)                  # (1, V+H)
        gates = jnp.dot(xin, dec_w, preferred_element_type=jnp.float32) + dec_b
        h_new, c_new = _lstm_gates(gates, c)
        logits = (jnp.dot(h_new, dec_wout, preferred_element_type=jnp.float32)
                  + dec_bout)
        # argmax over vocab (first occurrence == torch.argmax); softmax is monotone, skipped
        mx = jnp.max(logits, axis=-1, keepdims=True)
        pred = jnp.min(jnp.where(logits == mx, vocab_iota, V),
                       axis=-1, keepdims=True)                      # (1,1) int32
        is_eos = (pred == EOS_TOK).astype(jnp.int32)
        active = 1 - done                  # 1 until EOS has been produced
        append = active * (1 - is_eos)     # EOS itself is not appended
        write = (pred_iota == s).astype(jnp.int32) * append
        preds = write * pred + (1 - write) * preds
        af = active.astype(jnp.float32)
        h = af * h_new + (1.0 - af) * h
        c = af * c_new + (1.0 - af) * c
        tok = active * pred + (1 - active) * tok
        done = jnp.maximum(done, is_eos)

    pred_ref[...] = preds                  # single lane-dense (1,128) int32 store


# ----------------------------- wrapper -----------------------------------------
@jax.jit
def run_seq2seq(fp, tok_col, len_arr):
    vmem = lambda: pl.BlockSpec(memory_space=pltpu.MemorySpace.VMEM)
    smem = lambda: pl.BlockSpec(memory_space=pltpu.MemorySpace.SMEM)
    return pl.pallas_call(
        seq2seq_kernel,
        out_shape=jax.ShapeDtypeStruct((1, PRED_LANES), jnp.int32),
        in_specs=[vmem(), smem(),
                  vmem(), vmem(), vmem(),
                  vmem(), vmem(),
                  vmem(), vmem(), vmem(), vmem()],
        out_specs=vmem(),
    )(tok_col, len_arr,
      fp["enc_l1_in"], fp["enc_whh1"], fp["enc_b1"],
      fp["enc_l2_w"], fp["enc_b2"],
      fp["dec_w"], fp["dec_b"], fp["dec_wout"], fp["dec_bout"])


# ----------------------------- parameters --------------------------------------
def init_params(key):
    """Raw params in (input, 4H) layout, gate (column) order (i,f,g,o)."""
    k = 1.0 / jnp.sqrt(jnp.float32(H))
    names_shapes = [
        ("enc_embed", (V, E)),
        ("enc_wih1", (E, G4H)), ("enc_whh1", (H, G4H)), ("enc_b1", (1, G4H)),
        ("enc_wih2", (H, G4H)), ("enc_whh2", (H, G4H)), ("enc_b2", (1, G4H)),
        ("dec_embed", (V, E)),
        ("dec_wih", (E, G4H)), ("dec_whh", (H, G4H)), ("dec_b", (1, G4H)),
        ("dec_wout", (H, V)), ("dec_bout", (1, V)),
    ]
    keys = jax.random.split(key, len(names_shapes))
    params = {}
    for (name, shape), kk in zip(names_shapes, keys):
        params[name] = jax.random.uniform(kk, shape, jnp.float32, minval=-k, maxval=k)
    return params


def fold_params(p):
    """Offline folding: embed tables into W_ih; stack [x;h] weights per cell."""
    return {
        "enc_l1_in": p["enc_embed"] @ p["enc_wih1"],                          # (V, 4H)
        "enc_whh1": p["enc_whh1"],                                            # (H, 4H)
        "enc_b1": p["enc_b1"],                                                # (1, 4H)
        "enc_l2_w": jnp.concatenate([p["enc_wih2"], p["enc_whh2"]], axis=0),  # (2H, 4H)
        "enc_b2": p["enc_b2"],                                                # (1, 4H)
        "dec_w": jnp.concatenate([p["dec_embed"] @ p["dec_wih"],
                                  p["dec_whh"]], axis=0),                     # (V+H, 4H)
        "dec_b": p["dec_b"],                                                  # (1, 4H)
        "dec_wout": p["dec_wout"],                                            # (H, V)
        "dec_bout": p["dec_bout"],                                            # (1, V)
    }


# ----------------------------- Seq2seq.forward ---------------------------------
def seq2seq_forward(folded_params, input_tokens, input_len):
    """Greedy decode of a single example (batch=1), mirroring Seq2seq.forward."""
    tok_col = jnp.asarray(input_tokens, dtype=jnp.int32).reshape(T, 1)
    len_arr = jnp.asarray([input_len], dtype=jnp.int32)
    pred_row = run_seq2seq(folded_params, tok_col, len_arr)
    jax.block_until_ready(pred_row)
    row = jax.device_get(pred_row)[0, :MAX_DECODE_STEPS]   # single D2H transfer
    prediction = []
    for tid in row:
        tid = int(tid)
        if tid < 0:           # -1 sentinel: EOS was produced at/before this step
            break
        prediction.append(tid)
    # TODO(synk): data.tensorized_to_program is an opaque data-object mapping; return raw indices.
    return prediction


# ----------------------------- main ---------------------------------------------
if __name__ == "__main__":
    key = jax.random.PRNGKey(0)
    pkey, dkey = jax.random.split(key)
    params = init_params(pkey)
    folded = fold_params(params)

    # deterministic synthetic utterance (token ids), padded to length T
    input_tokens = jax.random.randint(dkey, (T,), minval=3, maxval=V, dtype=jnp.int32)
    input_len = 6  # < T, exercises the packed-sequence length masking

    prediction = seq2seq_forward(folded, input_tokens, input_len)
    print("KERNEL_OK")
</pallas_src>

<mosaic_0001>
module attributes {stable_mosaic.version = 11 : i64} {
  func.func @seq2seq_kernel(%arg0: memref<8x1xi32, #tpu.memory_space<vmem>>, %arg1: memref<1xi32, #tpu.memory_space<smem>>, %arg2: memref<32x128xf32, #tpu.memory_space<vmem>>, %arg3: memref<32x128xf32, #tpu.memory_space<vmem>>, %arg4: memref<1x128xf32, #tpu.memory_space<vmem>>, %arg5: memref<64x128xf32, #tpu.memory_space<vmem>>, %arg6: memref<1x128xf32, #tpu.memory_space<vmem>>, %arg7: memref<64x128xf32, #tpu.memory_space<vmem>>, %arg8: memref<1x128xf32, #tpu.memory_space<vmem>>, %arg9: memref<32x32xf32, #tpu.memory_space<vmem>>, %arg10: memref<1x32xf32, #tpu.memory_space<vmem>>, %arg11: memref<1x128xi32, #tpu.memory_space<vmem>>) attributes {dimension_semantics = [], scalar_prefetch = 0 : i64, scratch_operands = 0 : i64, tpu.core_type = #tpu.core_type<tc>} {
    %c0 = arith.constant 0 : index
    %c0_0 = arith.constant 0 : index
    %0 = vector.load %arg3[%c0, %c0_0] : memref<32x128xf32, #tpu.memory_space<vmem>>, vector<32x128xf32>
    %c0_1 = arith.constant 0 : index
    %c0_2 = arith.constant 0 : index
    %1 = vector.load %arg5[%c0_1, %c0_2] : memref<64x128xf32, #tpu.memory_space<vmem>>, vector<64x128xf32>
    %c0_3 = arith.constant 0 : index
    %c0_4 = arith.constant 0 : index
    %2 = vector.load %arg6[%c0_3, %c0_4] : memref<1x128xf32, #tpu.memory_space<vmem>>, vector<1x128xf32>
    %c0_5 = arith.constant 0 : index
    %c0_6 = arith.constant 0 : index
    %3 = vector.load %arg7[%c0_5, %c0_6] : memref<64x128xf32, #tpu.memory_space<vmem>>, vector<64x128xf32>
    %c0_7 = arith.constant 0 : index
    %c0_8 = arith.constant 0 : index
    %4 = vector.load %arg8[%c0_7, %c0_8] : memref<1x128xf32, #tpu.memory_space<vmem>>, vector<1x128xf32>
    %c0_9 = arith.constant 0 : index
    %c0_10 = arith.constant 0 : index
    %5 = vector.load %arg9[%c0_9, %c0_10] : memref<32x32xf32, #tpu.memory_space<vmem>>, vector<32x32xf32>
    %c0_11 = arith.constant 0 : index
    %c0_12 = arith.constant 0 : index
    %6 = vector.load %arg10[%c0_11, %c0_12] : memref<1x32xf32, #tpu.memory_space<vmem>>, vector<1x32xf32>
    %c0_13 = arith.constant 0 : index
    %7 = memref.load %arg1[%c0_13] : memref<1xi32, #tpu.memory_space<smem>>
    %8 = tpu.iota {dimensions = array<i32: 1>} : vector<1x32xi32>
    %9 = tpu.iota {dimensions = array<i32: 1>} : vector<8x32xi32>
    %c0_14 = arith.constant 0 : index
    %c0_15 = arith.constant 0 : index
    %10 = vector.load %arg0[%c0_14, %c0_15] : memref<8x1xi32, #tpu.memory_space<vmem>>, vector<8x1xi32>
    %11 = vector.broadcast %10 : vector<8x1xi32> to vector<8x32xi32>
    %12 = arith.cmpi eq, %9, %11 : vector<8x32xi32>
    %13 = arith.extui %12 : vector<8x32xi1> to vector<8x32xi32>
    %14 = arith.sitofp %13 : vector<8x32xi32> to vector<8x32xf32>
    %c0_16 = arith.constant 0 : index
    %c0_17 = arith.constant 0 : index
    %15 = vector.load %arg2[%c0_16, %c0_17] : memref<32x128xf32, #tpu.memory_space<vmem>>, vector<32x128xf32>
    %cst = arith.constant dense<0.000000e+00> : vector<8x128xf32>
    %16 = tpu.matmul %14, %15, %cst {dimension_numbers = #tpu.dot_dimension_numbers<[1], [0], [0], [1], [0, 0, 1, 1], [], []>} : vector<8x32xf32>, vector<32x128xf32>, vector<8x128xf32> -> vector<8x128xf32>
    %c0_18 = arith.constant 0 : index
    %c0_19 = arith.constant 0 : index
    %17 = vector.load %arg4[%c0_18, %c0_19] : memref<1x128xf32, #tpu.memory_space<vmem>>, vector<1x128xf32>
    %18 = vector.broadcast %17 : vector<1x128xf32> to vector<8x128xf32>
    %19 = arith.addf %16, %18 : vector<8x128xf32>
    %cst_20 = arith.constant 0.000000e+00 : f32
    %20 = vector.broadcast %cst_20 : f32 to vector<1x32xf32>
    %21 = vector.extract_strided_slice %19 {offsets = [0, 0], sizes = [1, 128], strides = [1, 1]} : vector<8x128xf32> to vector<1x128xf32>
    %cst_21 = arith.constant dense<0.000000e+00> : vector<1x128xf32>
    %22 = tpu.matmul %20, %0, %cst_21 {dimension_numbers = #tpu.dot_dimension_numbers<[1], [0], [0], [1], [0, 0, 1, 1], [], []>} : vector<1x32xf32>, vector<32x128xf32>, vector<1x128xf32> -> vector<1x128xf32>
    %23 = arith.addf %21, %22 : vector<1x128xf32>
    %24 = arith.negf %23 : vector<1x128xf32>
    %25 = math.exp %24 : vector<1x128xf32>
    %cst_22 = arith.constant 1.000000e+00 : f32
    %26 = vector.broadcast %cst_22 : f32 to vector<1x128xf32>
    %27 = arith.addf %26, %25 : vector<1x128xf32>
    %28 = arith.divf %26, %27 : vector<1x128xf32>
    %29 = math.tanh %23 : vector<1x128xf32>
    %30 = vector.extract_strided_slice %28 {offsets = [0, 0], sizes = [1, 32], strides = [1, 1]} : vector<1x128xf32> to vector<1x32xf32>
    %31 = vector.extract_strided_slice %28 {offsets = [0, 32], sizes = [1, 32], strides = [1, 1]} : vector<1x128xf32> to vector<1x32xf32>
    %32 = vector.extract_strided_slice %29 {offsets = [0, 64], sizes = [1, 32], strides = [1, 1]} : vector<1x128xf32> to vector<1x32xf32>
    %33 = vector.extract_strided_slice %28 {offsets = [0, 96], sizes = [1, 32], strides = [1, 1]} : vector<1x128xf32> to vector<1x32xf32>
    %34 = arith.mulf %31, %20 : vector<1x32xf32>
    %35 = arith.mulf %30, %32 : vector<1x32xf32>
    %36 = arith.addf %34, %35 : vector<1x32xf32>
    %37 = math.tanh %36 : vector<1x32xf32>
    %38 = arith.mulf %33, %37 : vector<1x32xf32>
    %39 = tpu.concatenate %38, %20 in 1 : vector<1x32xf32>, vector<1x32xf32> -> vector<1x64xf32>
    %cst_23 = arith.constant dense<0.000000e+00> : vector<1x128xf32>
    %40 = tpu.matmul %39, %1, %cst_23 {dimension_numbers = #tpu.dot_dimension_numbers<[1], [0], [0], [1], [0, 0, 1, 1], [], []>} : vector<1x64xf32>, vector<64x128xf32>, vector<1x128xf32> -> vector<1x128xf32>
    %41 = arith.addf %40, %2 : vector<1x128xf32>
    %42 = arith.negf %41 : vector<1x128xf32>
    %43 = math.exp %42 : vector<1x128xf32>
    %cst_24 = arith.constant 1.000000e+00 : f32
    %44 = vector.broadcast %cst_24 : f32 to vector<1x128xf32>
    %45 = arith.addf %44, %43 : vector<1x128xf32>
    %46 = arith.divf %44, %45 : vector<1x128xf32>
    %47 = math.tanh %41 : vector<1x128xf32>
    %48 = vector.extract_strided_slice %46 {offsets = [0, 0], sizes = [1, 32], strides = [1, 1]} : vector<1x128xf32> to vector<1x32xf32>
    %49 = vector.extract_strided_slice %46 {offsets = [0, 32], sizes = [1, 32], strides = [1, 1]} : vector<1x128xf32> to vector<1x32xf32>
    %50 = vector.extract_strided_slice %47 {offsets = [0, 64], sizes = [1, 32], strides = [1, 1]} : vector<1x128xf32> to vector<1x32xf32>
    %51 = vector.extract_strided_slice %46 {offsets = [0, 96], sizes = [1, 32], strides = [1, 1]} : vector<1x128xf32> to vector<1x32xf32>
    %52 = arith.mulf %49, %20 : vector<1x32xf32>
    %53 = arith.mulf %48, %50 : vector<1x32xf32>
    %54 = arith.addf %52, %53 : vector<1x32xf32>
    %55 = math.tanh %54 : vector<1x32xf32>
    %56 = arith.mulf %51, %55 : vector<1x32xf32>
    %c0_i32 = arith.constant 0 : i32
    %57 = arith.cmpi sgt, %7, %c0_i32 : i32
    %58 = arith.extui %57 : i1 to i32
    %59 = arith.sitofp %58 : i32 to f32
    %cst_25 = arith.constant 1.000000e+00 : f32
    %60 = arith.subf %cst_25, %59 : f32
    %61 = vector.broadcast %59 : f32 to vector<1x32xf32>
    %62 = arith.mulf %61, %38 : vector<1x32xf32>
    %63 = vector.broadcast %60 : f32 to vector<1x32xf32>
    %64 = arith.mulf %63, %20 : vector<1x32xf32>
    %65 = arith.addf %62, %64 : vector<1x32xf32>
    %66 = vector.broadcast %59 : f32 to vector<1x32xf32>
    %67 = arith.mulf %66, %36 : vector<1x32xf32>
    %68 = vector.broadcast %60 : f32 to vector<1x32xf32>
    %69 = arith.mulf %68, %20 : vector<1x32xf32>
    %70 = arith.addf %67, %69 : vector<1x32xf32>
    %71 = vector.broadcast %59 : f32 to vector<1x32xf32>
    %72 = arith.mulf %71, %56 : vector<1x32xf32>
    %73 = vector.broadcast %60 : f32 to vector<1x32xf32>
    %74 = arith.mulf %73, %20 : vector<1x32xf32>
    %75 = arith.addf %72, %74 : vector<1x32xf32>
    %76 = vector.broadcast %59 : f32 to vector<1x32xf32>
    %77 = arith.mulf %76, %54 : vector<1x32xf32>
    %78 = vector.broadcast %60 : f32 to vector<1x32xf32>
    %79 = arith.mulf %78, %20 : vector<1x32xf32>
    %80 = arith.addf %77, %79 : vector<1x32xf32>
    %81 = vector.extract_strided_slice %19 {offsets = [1, 0], sizes = [1, 128], strides = [1, 1]} : vector<8x128xf32> to vector<1x128xf32>
    %cst_26 = arith.constant dense<0.000000e+00> : vector<1x128xf32>
    %82 = tpu.matmul %65, %0, %cst_26 {dimension_numbers = #tpu.dot_dimension_numbers<[1], [0], [0], [1], [0, 0, 1, 1], [], []>} : vector<1x32xf32>, vector<32x128xf32>, vector<1x128xf32> -> vector<1x128xf32>
    %83 = arith.addf %81, %82 : vector<1x128xf32>
    %84 = arith.negf %83 : vector<1x128xf32>
    %85 = math.exp %84 : vector<1x128xf32>
    %cst_27 = arith.constant 1.000000e+00 : f32
    %86 = vector.broadcast %cst_27 : f32 to vector<1x128xf32>
    %87 = arith.addf %86, %85 : vector<1x128xf32>
    %88 = arith.divf %86, %87 : vector<1x128xf32>
    %89 = math.tanh %83 : vector<1x128xf32>
    %90 = vector.extract_strided_slice %88 {offsets = [0, 0], sizes = [1, 32], strides = [1, 1]} : vector<1x128xf32> to vector<1x32xf32>
    %91 = vector.extract_strided_slice %88 {offsets = [0, 32], sizes = [1, 32], strides = [1, 1]} : vector<1x128xf32> to vector<1x32xf32>
    %92 = vector.extract_strided_slice %89 {offsets = [0, 64], sizes = [1, 32], strides = [1, 1]} : vector<1x128xf32> to vector<1x32xf32>
    %93 = vector.extract_strided_slice %88 {offsets = [0, 96], sizes = [1, 32], strides = [1, 1]} : vector<1x128xf32> to vector<1x32xf32>
    %94 = arith.mulf %91, %70 : vector<1x32xf32>
    %95 = arith.mulf %90, %92 : vector<1x32xf32>
    %96 = arith.addf %94, %95 : vector<1x32xf32>
    %97 = math.tanh %96 : vector<1x32xf32>
    %98 = arith.mulf %93, %97 : vector<1x32xf32>
    %99 = tpu.concatenate %98, %75 in 1 : vector<1x32xf32>, vector<1x32xf32> -> vector<1x64xf32>
    %cst_28 = arith.constant dense<0.000000e+00> : vector<1x128xf32>
    %100 = tpu.matmul %99, %1, %cst_28 {dimension_numbers = #tpu.dot_dimension_numbers<[1], [0], [0], [1], [0, 0, 1, 1], [], []>} : vector<1x64xf32>, vector<64x128xf32>, vector<1x128xf32> -> vector<1x128xf32>
    %101 = arith.addf %100, %2 : vector<1x128xf32>
    %102 = arith.negf %101 : vector<1x128xf32>
    %103 = math.exp %102 : vector<1x128xf32>
    %cst_29 = arith.constant 1.000000e+00 : f32
    %104 = vector.broadcast %cst_29 : f32 to vector<1x128xf32>
    %105 = arith.addf %104, %103 : vector<1x128xf32>
    %106 = arith.divf %104, %105 : vector<1x128xf32>
    %107 = math.tanh %101 : vector<1x128xf32>
    %108 = vector.extract_strided_slice %106 {offsets = [0, 0], sizes = [1, 32], strides = [1, 1]} : vector<1x128xf32> to vector<1x32xf32>
    %109 = vector.extract_strided_slice %106 {offsets = [0, 32], sizes = [1, 32], strides = [1, 1]} : vector<1x128xf32> to vector<1x32xf32>
    %110 = vector.extract_strided_slice %107 {offsets = [0, 64], sizes = [1, 32], strides = [1, 1]} : vector<1x128xf32> to vector<1x32xf32>
    %111 = vector.extract_strided_slice %106 {offsets = [0, 96], sizes = [1, 32], strides = [1, 1]} : vector<1x128xf32> to vector<1x32xf32>
    %112 = arith.mulf %109, %80 : vector<1x32xf32>
    %113 = arith.mulf %108, %110 : vector<1x32xf32>
    %114 = arith.addf %112, %113 : vector<1x32xf32>
    %115 = math.tanh %114 : vector<1x32xf32>
    %116 = arith.mulf %111, %115 : vector<1x32xf32>
    %c1_i32 = arith.constant 1 : i32
    %117 = arith.cmpi sgt, %7, %c1_i32 : i32
    %118 = arith.extui %117 : i1 to i32
    %119 = arith.sitofp %118 : i32 to f32
    %cst_30 = arith.constant 1.000000e+00 : f32
    %120 = arith.subf %cst_30, %119 : f32
    %121 = vector.broadcast %119 : f32 to vector<1x32xf32>
    %122 = arith.mulf %121, %98 : vector<1x32xf32>
    %123 = vector.broadcast %120 : f32 to vector<1x32xf32>
    %124 = arith.mulf %123, %65 : vector<1x32xf32>
    %125 = arith.addf %122, %124 : vector<1x32xf32>
    %126 = vector.broadcast %119 : f32 to vector<1x32xf32>
    %127 = arith.mulf %126, %96 : vector<1x32xf32>
    %128 = vector.broadcast %120 : f32 to vector<1x32xf32>
    %129 = arith.mulf %128, %70 : vector<1x32xf32>
    %130 = arith.addf %127, %129 : vector<1x32xf32>
    %131 = vector.broadcast %119 : f32 to vector<1x32xf32>
    %132 = arith.mulf %131, %116 : vector<1x32xf32>
    %133 = vector.broadcast %120 : f32 to vector<1x32xf32>
    %134 = arith.mulf %133, %75 : vector<1x32xf32>
    %135 = arith.addf %132, %134 : vector<1x32xf32>
    %136 = vector.broadcast %119 : f32 to vector<1x32xf32>
    %137 = arith.mulf %136, %114 : vector<1x32xf32>
    %138 = vector.broadcast %120 : f32 to vector<1x32xf32>
    %139 = arith.mulf %138, %80 : vector<1x32xf32>
    %140 = arith.addf %137, %139 : vector<1x32xf32>
    %141 = vector.extract_strided_slice %19 {offsets = [2, 0], sizes = [1, 128], strides = [1, 1]} : vector<8x128xf32> to vector<1x128xf32>
    %cst_31 = arith.constant dense<0.000000e+00> : vector<1x128xf32>
    %142 = tpu.matmul %125, %0, %cst_31 {dimension_numbers = #tpu.dot_dimension_numbers<[1], [0], [0], [1], [0, 0, 1, 1], [], []>} : vector<1x32xf32>, vector<32x128xf32>, vector<1x128xf32> -> vector<1x128xf32>
    %143 = arith.addf %141, %142 : vector<1x128xf32>
    %144 = arith.negf %143 : vector<1x128xf32>
    %145 = math.exp %144 : vector<1x128xf32>
    %cst_32 = arith.constant 1.000000e+00 : f32
    %146 = vector.broadcast %cst_32 : f32 to vector<1x128xf32>
    %147 = arith.addf %146, %145 : vector<1x128xf32>
    %148 = arith.divf %146, %147 : vector<1x128xf32>
    %149 = math.tanh %143 : vector<1x128xf32>
    %150 = vector.extract_strided_slice %148 {offsets = [0, 0], sizes = [1, 32], strides = [1, 1]} : vector<1x128xf32> to vector<1x32xf32>
    %151 = vector.extract_strided_slice %148 {offsets = [0, 32], sizes = [1, 32], strides = [1, 1]} : vector<1x128xf32> to vector<1x32xf32>
    %152 = vector.extract_strided_slice %149 {offsets = [0, 64], sizes = [1, 32], strides = [1, 1]} : vector<1x128xf32> to vector<1x32xf32>
    %153 = vector.extract_strided_slice %148 {offsets = [0, 96], sizes = [1, 32], strides = [1, 1]} : vector<1x128xf32> to vector<1x32xf32>
    %154 = arith.mulf %151, %130 : vector<1x32xf32>
    %155 = arith.mulf %150, %152 : vector<1x32xf32>
    %156 = arith.addf %154, %155 : vector<1x32xf32>
    %157 = math.tanh %156 : vector<1x32xf32>
    %158 = arith.mulf %153, %157 : vector<1x32xf32>
    %159 = tpu.concatenate %158, %135 in 1 : vector<1x32xf32>, vector<1x32xf32> -> vector<1x64xf32>
    %cst_33 = arith.constant dense<0.000000e+00> : vector<1x128xf32>
    %160 = tpu.matmul %159, %1, %cst_33 {dimension_numbers = #tpu.dot_dimension_numbers<[1], [0], [0], [1], [0, 0, 1, 1], [], []>} : vector<1x64xf32>, vector<64x128xf32>, vector<1x128xf32> -> vector<1x128xf32>
    %161 = arith.addf %160, %2 : vector<1x128xf32>
    %162 = arith.negf %161 : vector<1x128xf32>
    %163 = math.exp %162 : vector<1x128xf32>
    %cst_34 = arith.constant 1.000000e+00 : f32
    %164 = vector.broadcast %cst_34 : f32 to vector<1x128xf32>
    %165 = arith.addf %164, %163 : vector<1x128xf32>
    %166 = arith.divf %164, %165 : vector<1x128xf32>
    %167 = math.tanh %161 : vector<1x128xf32>
    %168 = vector.extract_strided_slice %166 {offsets = [0, 0], sizes = [1, 32], strides = [1, 1]} : vector<1x128xf32> to vector<1x32xf32>
    %169 = vector.extract_strided_slice %166 {offsets = [0, 32], sizes = [1, 32], strides = [1, 1]} : vector<1x128xf32> to vector<1x32xf32>
    %170 = vector.extract_strided_slice %167 {offsets = [0, 64], sizes = [1, 32], strides = [1, 1]} : vector<1x128xf32> to vector<1x32xf32>
    %171 = vector.extract_strided_slice %166 {offsets = [0, 96], sizes = [1, 32], strides = [1, 1]} : vector<1x128xf32> to vector<1x32xf32>
    %172 = arith.mulf %169, %140 : vector<1x32xf32>
    %173 = arith.mulf %168, %170 : vector<1x32xf32>
    %174 = arith.addf %172, %173 : vector<1x32xf32>
    %175 = math.tanh %174 : vector<1x32xf32>
    %176 = arith.mulf %171, %175 : vector<1x32xf32>
    %c2_i32 = arith.constant 2 : i32
    %177 = arith.cmpi sgt, %7, %c2_i32 : i32
    %178 = arith.extui %177 : i1 to i32
    %179 = arith.sitofp %178 : i32 to f32
    %cst_35 = arith.constant 1.000000e+00 : f32
    %180 = arith.subf %cst_35, %179 : f32
    %181 = vector.broadcast %179 : f32 to vector<1x32xf32>
    %182 = arith.mulf %181, %158 : vector<1x32xf32>
    %183 = vector.broadcast %180 : f32 to vector<1x32xf32>
    %184 = arith.mulf %183, %125 : vector<1x32xf32>
    %185 = arith.addf %182, %184 : vector<1x32xf32>
    %186 = vector.broadcast %179 : f32 to vector<1x32xf32>
    %187 = arith.mulf %186, %156 : vector<1x32xf32>
    %188 = vector.broadcast %180 : f32 to vector<1x32xf32>
    %189 = arith.mulf %188, %130 : vector<1x32xf32>
    %190 = arith.addf %187, %189 : vector<1x32xf32>
    %191 = vector.broadcast %179 : f32 to vector<1x32xf32>
    %192 = arith.mulf %191, %176 : vector<1x32xf32>
    %193 = vector.broadcast %180 : f32 to vector<1x32xf32>
    %194 = arith.mulf %193, %135 : vector<1x32xf32>
    %195 = arith.addf %192, %194 : vector<1x32xf32>
    %196 = vector.broadcast %179 : f32 to vector<1x32xf32>
    %197 = arith.mulf %196, %174 : vector<1x32xf32>
    %198 = vector.broadcast %180 : f32 to vector<1x32xf32>
    %199 = arith.mulf %198, %140 : vector<1x32xf32>
    %200 = arith.addf %197, %199 : vector<1x32xf32>
    %201 = vector.extract_strided_slice %19 {offsets = [3, 0], sizes = [1, 128], strides = [1, 1]} : vector<8x128xf32> to vector<1x128xf32>
    %cst_36 = arith.constant dense<0.000000e+00> : vector<1x128xf32>
    %202 = tpu.matmul %185, %0, %cst_36 {dimension_numbers = #tpu.dot_dimension_numbers<[1], [0], [0], [1], [0, 0, 1, 1], [], []>} : vector<1x32xf32>, vector<32x128xf32>, vector<1x128xf32> -> vector<1x128xf32>
    %203 = arith.addf %201, %202 : vector<1x128xf32>
    %204 = arith.negf %203 : vector<1x128xf32>
    %205 = math.exp %204 : vector<1x128xf32>
    %cst_37 = arith.constant 1.000000e+00 : f32
    %206 = vector.broadcast %cst_37 : f32 to vector<1x128xf32>
    %207 = arith.addf %206, %205 : vector<1x128xf32>
    %208 = arith.divf %206, %207 : vector<1x128xf32>
    %209 = math.tanh %203 : vector<1x128xf32>
    %210 = vector.extract_strided_slice %208 {offsets = [0, 0], sizes = [1, 32], strides = [1, 1]} : vector<1x128xf32> to vector<1x32xf32>
    %211 = vector.extract_strided_slice %208 {offsets = [0, 32], sizes = [1, 32], strides = [1, 1]} : vector<1x128xf32> to vector<1x32xf32>
    %212 = vector.extract_strided_slice %209 {offsets = [0, 64], sizes = [1, 32], strides = [1, 1]} : vector<1x128xf32> to vector<1x32xf32>
    %213 = vector.extract_strided_slice %208 {offsets = [0, 96], sizes = [1, 32], strides = [1, 1]} : vector<1x128xf32> to vector<1x32xf32>
    %214 = arith.mulf %211, %190 : vector<1x32xf32>
    %215 = arith.mulf %210, %212 : vector<1x32xf32>
    %216 = arith.addf %214, %215 : vector<1x32xf32>
    %217 = math.tanh %216 : vector<1x32xf32>
    %218 = arith.mulf %213, %217 : vector<1x32xf32>
    %219 = tpu.concatenate %218, %195 in 1 : vector<1x32xf32>, vector<1x32xf32> -> vector<1x64xf32>
    %cst_38 = arith.constant dense<0.000000e+00> : vector<1x128xf32>
    %220 = tpu.matmul %219, %1, %cst_38 {dimension_numbers = #tpu.dot_dimension_numbers<[1], [0], [0], [1], [0, 0, 1, 1], [], []>} : vector<1x64xf32>, vector<64x128xf32>, vector<1x128xf32> -> vector<1x128xf32>
    %221 = arith.addf %220, %2 : vector<1x128xf32>
    %222 = arith.negf %221 : vector<1x128xf32>
    %223 = math.exp %222 : vector<1x128xf32>
    %cst_39 = arith.constant 1.000000e+00 : f32
    %224 = vector.broadcast %cst_39 : f32 to vector<1x128xf32>
    %225 = arith.addf %224, %223 : vector<1x128xf32>
    %226 = arith.divf %224, %225 : vector<1x128xf32>
    %227 = math.tanh %221 : vector<1x128xf32>
    %228 = vector.extract_strided_slice %226 {offsets = [0, 0], sizes = [1, 32], strides = [1, 1]} : vector<1x128xf32> to vector<1x32xf32>
    %229 = vector.extract_strided_slice %226 {offsets = [0, 32], sizes = [1, 32], strides = [1, 1]} : vector<1x128xf32> to vector<1x32xf32>
    %230 = vector.extract_strided_slice %227 {offsets = [0, 64], sizes = [1, 32], strides = [1, 1]} : vector<1x128xf32> to vector<1x32xf32>
    %231 = vector.extract_strided_slice %226 {offsets = [0, 96], sizes = [1, 32], strides = [1, 1]} : vector<1x128xf32> to vector<1x32xf32>
    %232 = arith.mulf %229, %200 : vector<1x32xf32>
    %233 = arith.mulf %228, %230 : vector<1x32xf32>
    %234 = arith.addf %232, %233 : vector<1x32xf32>
    %235 = math.tanh %234 : vector<1x32xf32>
    %236 = arith.mulf %231, %235 : vector<1x32xf32>
    %c3_i32 = arith.constant 3 : i32
    %237 = arith.cmpi sgt, %7, %c3_i32 : i32
    %238 = arith.extui %237 : i1 to i32
    %239 = arith.sitofp %238 : i32 to f32
    %cst_40 = arith.constant 1.000000e+00 : f32
    %240 = arith.subf %cst_40, %239 : f32
    %241 = vector.broadcast %239 : f32 to vector<1x32xf32>
    %242 = arith.mulf %241, %218 : vector<1x32xf32>
    %243 = vector.broadcast %240 : f32 to vector<1x32xf32>
    %244 = arith.mulf %243, %185 : vector<1x32xf32>
    %245 = arith.addf %242, %244 : vector<1x32xf32>
    %246 = vector.broadcast %239 : f32 to vector<1x32xf32>
    %247 = arith.mulf %246, %216 : vector<1x32xf32>
    %248 = vector.broadcast %240 : f32 to vector<1x32xf32>
    %249 = arith.mulf %248, %190 : vector<1x32xf32>
    %250 = arith.addf %247, %249 : vector<1x32xf32>
    %251 = vector.broadcast %239 : f32 to vector<1x32xf32>
    %252 = arith.mulf %251, %236 : vector<1x32xf32>
    %253 = vector.broadcast %240 : f32 to vector<1x32xf32>
    %254 = arith.mulf %253, %195 : vector<1x32xf32>
    %255 = arith.addf %252, %254 : vector<1x32xf32>
    %256 = vector.broadcast %239 : f32 to vector<1x32xf32>
    %257 = arith.mulf %256, %234 : vector<1x32xf32>
    %258 = vector.broadcast %240 : f32 to vector<1x32xf32>
    %259 = arith.mulf %258, %200 : vector<1x32xf32>
    %260 = arith.addf %257, %259 : vector<1x32xf32>
    %261 = vector.extract_strided_slice %19 {offsets = [4, 0], sizes = [1, 128], strides = [1, 1]} : vector<8x128xf32> to vector<1x128xf32>
    %cst_41 = arith.constant dense<0.000000e+00> : vector<1x128xf32>
    %262 = tpu.matmul %245, %0, %cst_41 {dimension_numbers = #tpu.dot_dimension_numbers<[1], [0], [0], [1], [0, 0, 1, 1], [], []>} : vector<1x32xf32>, vector<32x128xf32>, vector<1x128xf32> -> vector<1x128xf32>
    %263 = arith.addf %261, %262 : vector<1x128xf32>
    %264 = arith.negf %263 : vector<1x128xf32>
    %265 = math.exp %264 : vector<1x128xf32>
    %cst_42 = arith.constant 1.000000e+00 : f32
    %266 = vector.broadcast %cst_42 : f32 to vector<1x128xf32>
    %267 = arith.addf %266, %265 : vector<1x128xf32>
    %268 = arith.divf %266, %267 : vector<1x128xf32>
    %269 = math.tanh %263 : vector<1x128xf32>
    %270 = vector.extract_strided_slice %268 {offsets = [0, 0], sizes = [1, 32], strides = [1, 1]} : vector<1x128xf32> to vector<1x32xf32>
    %271 = vector.extract_strided_slice %268 {offsets = [0, 32], sizes = [1, 32], strides = [1, 1]} : vector<1x128xf32> to vector<1x32xf32>
    %272 = vector.extract_strided_slice %269 {offsets = [0, 64], sizes = [1, 32], strides = [1, 1]} : vector<1x128xf32> to vector<1x32xf32>
    %273 = vector.extract_strided_slice %268 {offsets = [0, 96], sizes = [1, 32], strides = [1, 1]} : vector<1x128xf32> to vector<1x32xf32>
    %274 = arith.mulf %271, %250 : vector<1x32xf32>
    %275 = arith.mulf %270, %272 : vector<1x32xf32>
    %276 = arith.addf %274, %275 : vector<1x32xf32>
    %277 = math.tanh %276 : vector<1x32xf32>
    %278 = arith.mulf %273, %277 : vector<1x32xf32>
    %279 = tpu.concatenate %278, %255 in 1 : vector<1x32xf32>, vector<1x32xf32> -> vector<1x64xf32>
    %cst_43 = arith.constant dense<0.000000e+00> : vector<1x128xf32>
    %280 = tpu.matmul %279, %1, %cst_43 {dimension_numbers = #tpu.dot_dimension_numbers<[1], [0], [0], [1], [0, 0, 1, 1], [], []>} : vector<1x64xf32>, vector<64x128xf32>, vector<1x128xf32> -> vector<1x128xf32>
    %281 = arith.addf %280, %2 : vector<1x128xf32>
    %282 = arith.negf %281 : vector<1x128xf32>
    %283 = math.exp %282 : vector<1x128xf32>
    %cst_44 = arith.constant 1.000000e+00 : f32
    %284 = vector.broadcast %cst_44 : f32 to vector<1x128xf32>
    %285 = arith.addf %284, %283 : vector<1x128xf32>
    %286 = arith.divf %284, %285 : vector<1x128xf32>
    %287 = math.tanh %281 : vector<1x128xf32>
    %288 = vector.extract_strided_slice %286 {offsets = [0, 0], sizes = [1, 32], strides = [1, 1]} : vector<1x128xf32> to vector<1x32xf32>
    %289 = vector.extract_strided_slice %286 {offsets = [0, 32], sizes = [1, 32], strides = [1, 1]} : vector<1x128xf32> to vector<1x32xf32>
    %290 = vector.extract_strided_slice %287 {offsets = [0, 64], sizes = [1, 32], strides = [1, 1]} : vector<1x128xf32> to vector<1x32xf32>
    %291 = vector.extract_strided_slice %286 {offsets = [0, 96], sizes = [1, 32], strides = [1, 1]} : vector<1x128xf32> to vector<1x32xf32>
    %292 = arith.mulf %289, %260 : vector<1x32xf32>
    %293 = arith.mulf %288, %290 : vector<1x32xf32>
    %294 = arith.addf %292, %293 : vector<1x32xf32>
    %295 = math.tanh %294 : vector<1x32xf32>
    %296 = arith.mulf %291, %295 : vector<1x32xf32>
    %c4_i32 = arith.constant 4 : i32
    %297 = arith.cmpi sgt, %7, %c4_i32 : i32
    %298 = arith.extui %297 : i1 to i32
    %299 = arith.sitofp %298 : i32 to f32
    %cst_45 = arith.constant 1.000000e+00 : f32
    %300 = arith.subf %cst_45, %299 : f32
    %301 = vector.broadcast %299 : f32 to vector<1x32xf32>
    %302 = arith.mulf %301, %278 : vector<1x32xf32>
    %303 = vector.broadcast %300 : f32 to vector<1x32xf32>
    %304 = arith.mulf %303, %245 : vector<1x32xf32>
    %305 = arith.addf %302, %304 : vector<1x32xf32>
    %306 = vector.broadcast %299 : f32 to vector<1x32xf32>
    %307 = arith.mulf %306, %276 : vector<1x32xf32>
    %308 = vector.broadcast %300 : f32 to vector<1x32xf32>
    %309 = arith.mulf %308, %250 : vector<1x32xf32>
    %310 = arith.addf %307, %309 : vector<1x32xf32>
    %311 = vector.broadcast %299 : f32 to vector<1x32xf32>
    %312 = arith.mulf %311, %296 : vector<1x32xf32>
    %313 = vector.broadcast %300 : f32 to vector<1x32xf32>
    %314 = arith.mulf %313, %255 : vector<1x32xf32>
    %315 = arith.addf %312, %314 : vector<1x32xf32>
    %316 = vector.broadcast %299 : f32 to vector<1x32xf32>
    %317 = arith.mulf %316, %294 : vector<1x32xf32>
    %318 = vector.broadcast %300 : f32 to vector<1x32xf32>
    %319 = arith.mulf %318, %260 : vector<1x32xf32>
    %320 = arith.addf %317, %319 : vector<1x32xf32>
    %321 = vector.extract_strided_slice %19 {offsets = [5, 0], sizes = [1, 128], strides = [1, 1]} : vector<8x128xf32> to vector<1x128xf32>
    %cst_46 = arith.constant dense<0.000000e+00> : vector<1x128xf32>
    %322 = tpu.matmul %305, %0, %cst_46 {dimension_numbers = #tpu.dot_dimension_numbers<[1], [0], [0], [1], [0, 0, 1, 1], [], []>} : vector<1x32xf32>, vector<32x128xf32>, vector<1x128xf32> -> vector<1x128xf32>
    %323 = arith.addf %321, %322 : vector<1x128xf32>
    %324 = arith.negf %323 : vector<1x128xf32>
    %325 = math.exp %324 : vector<1x128xf32>
    %cst_47 = arith.constant 1.000000e+00 : f32
    %326 = vector.broadcast %cst_47 : f32 to vector<1x128xf32>
    %327 = arith.addf %326, %325 : vector<1x128xf32>
    %328 = arith.divf %326, %327 : vector<1x128xf32>
    %329 = math.tanh %323 : vector<1x128xf32>
    %330 = vector.extract_strided_slice %328 {offsets = [0, 0], sizes = [1, 32], strides = [1, 1]} : vector<1x128xf32> to vector<1x32xf32>
    %331 = vector.extract_strided_slice %328 {offsets = [0, 32], sizes = [1, 32], strides = [1, 1]} : vector<1x128xf32> to vector<1x32xf32>
    %332 = vector.extract_strided_slice %329 {offsets = [0, 64], sizes = [1, 32], strides = [1, 1]} : vector<1x128xf32> to vector<1x32xf32>
    %333 = vector.extract_strided_slice %328 {offsets = [0, 96], sizes = [1, 32], strides = [1, 1]} : vector<1x128xf32> to vector<1x32xf32>
    %334 = arith.mulf %331, %310 : vector<1x32xf32>
    %335 = arith.mulf %330, %332 : vector<1x32xf32>
    %336 = arith.addf %334, %335 : vector<1x32xf32>
    %337 = math.tanh %336 : vector<1x32xf32>
    %338 = arith.mulf %333, %337 : vector<1x32xf32>
    %339 = tpu.concatenate %338, %315 in 1 : vector<1x32xf32>, vector<1x32xf32> -> vector<1x64xf32>
    %cst_48 = arith.constant dense<0.000000e+00> : vector<1x128xf32>
    %340 = tpu.matmul %339, %1, %cst_48 {dimension_numbers = #tpu.dot_dimension_numbers<[1], [0], [0], [1], [0, 0, 1, 1], [], []>} : vector<1x64xf32>, vector<64x128xf32>, vector<1x128xf32> -> vector<1x128xf32>
    %341 = arith.addf %340, %2 : vector<1x128xf32>
    %342 = arith.negf %341 : vector<1x128xf32>
    %343 = math.exp %342 : vector<1x128xf32>
    %cst_49 = arith.constant 1.000000e+00 : f32
    %344 = vector.broadcast %cst_49 : f32 to vector<1x128xf32>
    %345 = arith.addf %344, %343 : vector<1x128xf32>
    %346 = arith.divf %344, %345 : vector<1x128xf32>
    %347 = math.tanh %341 : vector<1x128xf32>
    %348 = vector.extract_strided_slice %346 {offsets = [0, 0], sizes = [1, 32], strides = [1, 1]} : vector<1x128xf32> to vector<1x32xf32>
    %349 = vector.extract_strided_slice %346 {offsets = [0, 32], sizes = [1, 32], strides = [1, 1]} : vector<1x128xf32> to vector<1x32xf32>
    %350 = vector.extract_strided_slice %347 {offsets = [0, 64], sizes = [1, 32], strides = [1, 1]} : vector<1x128xf32> to vector<1x32xf32>
    %351 = vector.extract_strided_slice %346 {offsets = [0, 96], sizes = [1, 32], strides = [1, 1]} : vector<1x128xf32> to vector<1x32xf32>
    %352 = arith.mulf %349, %320 : vector<1x32xf32>
    %353 = arith.mulf %348, %350 : vector<1x32xf32>
    %354 = arith.addf %352, %353 : vector<1x32xf32>
    %355 = math.tanh %354 : vector<1x32xf32>
    %356 = arith.mulf %351, %355 : vector<1x32xf32>
    %c5_i32 = arith.constant 5 : i32
    %357 = arith.cmpi sgt, %7, %c5_i32 : i32
    %358 = arith.extui %357 : i1 to i32
    %359 = arith.sitofp %358 : i32 to f32
    %cst_50 = arith.constant 1.000000e+00 : f32
    %360 = arith.subf %cst_50, %359 : f32
    %361 = vector.broadcast %359 : f32 to vector<1x32xf32>
    %362 = arith.mulf %361, %338 : vector<1x32xf32>
    %363 = vector.broadcast %360 : f32 to vector<1x32xf32>
    %364 = arith.mulf %363, %305 : vector<1x32xf32>
    %365 = arith.addf %362, %364 : vector<1x32xf32>
    %366 = vector.broadcast %359 : f32 to vector<1x32xf32>
    %367 = arith.mulf %366, %336 : vector<1x32xf32>
    %368 = vector.broadcast %360 : f32 to vector<1x32xf32>
    %369 = arith.mulf %368, %310 : vector<1x32xf32>
    %370 = arith.addf %367, %369 : vector<1x32xf32>
    %371 = vector.broadcast %359 : f32 to vector<1x32xf32>
    %372 = arith.mulf %371, %356 : vector<1x32xf32>
    %373 = vector.broadcast %360 : f32 to vector<1x32xf32>
    %374 = arith.mulf %373, %315 : vector<1x32xf32>
    %375 = arith.addf %372, %374 : vector<1x32xf32>
    %376 = vector.broadcast %359 : f32 to vector<1x32xf32>
    %377 = arith.mulf %376, %354 : vector<1x32xf32>
    %378 = vector.broadcast %360 : f32 to vector<1x32xf32>
    %379 = arith.mulf %378, %320 : vector<1x32xf32>
    %380 = arith.addf %377, %379 : vector<1x32xf32>
    %381 = vector.extract_strided_slice %19 {offsets = [6, 0], sizes = [1, 128], strides = [1, 1]} : vector<8x128xf32> to vector<1x128xf32>
    %cst_51 = arith.constant dense<0.000000e+00> : vector<1x128xf32>
    %382 = tpu.matmul %365, %0, %cst_51 {dimension_numbers = #tpu.dot_dimension_numbers<[1], [0], [0], [1], [0, 0, 1, 1], [], []>} : vector<1x32xf32>, vector<32x128xf32>, vector<1x128xf32> -> vector<1x128xf32>
    %383 = arith.addf %381, %382 : vector<1x128xf32>
    %384 = arith.negf %383 : vector<1x128xf32>
    %385 = math.exp %384 : vector<1x128xf32>
    %cst_52 = arith.constant 1.000000e+00 : f32
    %386 = vector.broadcast %cst_52 : f32 to vector<1x128xf32>
    %387 = arith.addf %386, %385 : vector<1x128xf32>
    %388 = arith.divf %386, %387 : vector<1x128xf32>
    %389 = math.tanh %383 : vector<1x128xf32>
    %390 = vector.extract_strided_slice %388 {offsets = [0, 0], sizes = [1, 32], strides = [1, 1]} : vector<1x128xf32> to vector<1x32xf32>
    %391 = vector.extract_strided_slice %388 {offsets = [0, 32], sizes = [1, 32], strides = [1, 1]} : vector<1x128xf32> to vector<1x32xf32>
    %392 = vector.extract_strided_slice %389 {offsets = [0, 64], sizes = [1, 32], strides = [1, 1]} : vector<1x128xf32> to vector<1x32xf32>
    %393 = vector.extract_strided_slice %388 {offsets = [0, 96], sizes = [1, 32], strides = [1, 1]} : vector<1x128xf32> to vector<1x32xf32>
    %394 = arith.mulf %391, %370 : vector<1x32xf32>
    %395 = arith.mulf %390, %392 : vector<1x32xf32>
    %396 = arith.addf %394, %395 : vector<1x32xf32>
    %397 = math.tanh %396 : vector<1x32xf32>
    %398 = arith.mulf %393, %397 : vector<1x32xf32>
    %399 = tpu.concatenate %398, %375 in 1 : vector<1x32xf32>, vector<1x32xf32> -> vector<1x64xf32>
    %cst_53 = arith.constant dense<0.000000e+00> : vector<1x128xf32>
    %400 = tpu.matmul %399, %1, %cst_53 {dimension_numbers = #tpu.dot_dimension_numbers<[1], [0], [0], [1], [0, 0, 1, 1], [], []>} : vector<1x64xf32>, vector<64x128xf32>, vector<1x128xf32> -> vector<1x128xf32>
    %401 = arith.addf %400, %2 : vector<1x128xf32>
    %402 = arith.negf %401 : vector<1x128xf32>
    %403 = math.exp %402 : vector<1x128xf32>
    %cst_54 = arith.constant 1.000000e+00 : f32
    %404 = vector.broadcast %cst_54 : f32 to vector<1x128xf32>
    %405 = arith.addf %404, %403 : vector<1x128xf32>
    %406 = arith.divf %404, %405 : vector<1x128xf32>
    %407 = math.tanh %401 : vector<1x128xf32>
    %408 = vector.extract_strided_slice %406 {offsets = [0, 0], sizes = [1, 32], strides = [1, 1]} : vector<1x128xf32> to vector<1x32xf32>
    %409 = vector.extract_strided_slice %406 {offsets = [0, 32], sizes = [1, 32], strides = [1, 1]} : vector<1x128xf32> to vector<1x32xf32>
    %410 = vector.extract_strided_slice %407 {offsets = [0, 64], sizes = [1, 32], strides = [1, 1]} : vector<1x128xf32> to vector<1x32xf32>
    %411 = vector.extract_strided_slice %406 {offsets = [0, 96], sizes = [1, 32], strides = [1, 1]} : vector<1x128xf32> to vector<1x32xf32>
    %412 = arith.mulf %409, %380 : vector<1x32xf32>
    %413 = arith.mulf %408, %410 : vector<1x32xf32>
    %414 = arith.addf %412, %413 : vector<1x32xf32>
    %415 = math.tanh %414 : vector<1x32xf32>
    %416 = arith.mulf %411, %415 : vector<1x32xf32>
    %c6_i32 = arith.constant 6 : i32
    %417 = arith.cmpi sgt, %7, %c6_i32 : i32
    %418 = arith.extui %417 : i1 to i32
    %419 = arith.sitofp %418 : i32 to f32
    %cst_55 = arith.constant 1.000000e+00 : f32
    %420 = arith.subf %cst_55, %419 : f32
    %421 = vector.broadcast %419 : f32 to vector<1x32xf32>
    %422 = arith.mulf %421, %398 : vector<1x32xf32>
    %423 = vector.broadcast %420 : f32 to vector<1x32xf32>
    %424 = arith.mulf %423, %365 : vector<1x32xf32>
    %425 = arith.addf %422, %424 : vector<1x32xf32>
    %426 = vector.broadcast %419 : f32 to vector<1x32xf32>
    %427 = arith.mulf %426, %396 : vector<1x32xf32>
    %428 = vector.broadcast %420 : f32 to vector<1x32xf32>
    %429 = arith.mulf %428, %370 : vector<1x32xf32>
    %430 = arith.addf %427, %429 : vector<1x32xf32>
    %431 = vector.broadcast %419 : f32 to vector<1x32xf32>
    %432 = arith.mulf %431, %416 : vector<1x32xf32>
    %433 = vector.broadcast %420 : f32 to vector<1x32xf32>
    %434 = arith.mulf %433, %375 : vector<1x32xf32>
    %435 = arith.addf %432, %434 : vector<1x32xf32>
    %436 = vector.broadcast %419 : f32 to vector<1x32xf32>
    %437 = arith.mulf %436, %414 : vector<1x32xf32>
    %438 = vector.broadcast %420 : f32 to vector<1x32xf32>
    %439 = arith.mulf %438, %380 : vector<1x32xf32>
    %440 = arith.addf %437, %439 : vector<1x32xf32>
    %441 = vector.extract_strided_slice %19 {offsets = [7, 0], sizes = [1, 128], strides = [1, 1]} : vector<8x128xf32> to vector<1x128xf32>
    %cst_56 = arith.constant dense<0.000000e+00> : vector<1x128xf32>
    %442 = tpu.matmul %425, %0, %cst_56 {dimension_numbers = #tpu.dot_dimension_numbers<[1], [0], [0], [1], [0, 0, 1, 1], [], []>} : vector<1x32xf32>, vector<32x128xf32>, vector<1x128xf32> -> vector<1x128xf32>
    %443 = arith.addf %441, %442 : vector<1x128xf32>
    %444 = arith.negf %443 : vector<1x128xf32>
    %445 = math.exp %444 : vector<1x128xf32>
    %cst_57 = arith.constant 1.000000e+00 : f32
    %446 = vector.broadcast %cst_57 : f32 to vector<1x128xf32>
    %447 = arith.addf %446, %445 : vector<1x128xf32>
    %448 = arith.divf %446, %447 : vector<1x128xf32>
    %449 = math.tanh %443 : vector<1x128xf32>
    %450 = vector.extract_strided_slice %448 {offsets = [0, 0], sizes = [1, 32], strides = [1, 1]} : vector<1x128xf32> to vector<1x32xf32>
    %451 = vector.extract_strided_slice %448 {offsets = [0, 32], sizes = [1, 32], strides = [1, 1]} : vector<1x128xf32> to vector<1x32xf32>
    %452 = vector.extract_strided_slice %449 {offsets = [0, 64], sizes = [1, 32], strides = [1, 1]} : vector<1x128xf32> to vector<1x32xf32>
    %453 = vector.extract_strided_slice %448 {offsets = [0, 96], sizes = [1, 32], strides = [1, 1]} : vector<1x128xf32> to vector<1x32xf32>
    %454 = arith.mulf %451, %430 : vector<1x32xf32>
    %455 = arith.mulf %450, %452 : vector<1x32xf32>
    %456 = arith.addf %454, %455 : vector<1x32xf32>
    %457 = math.tanh %456 : vector<1x32xf32>
    %458 = arith.mulf %453, %457 : vector<1x32xf32>
    %459 = tpu.concatenate %458, %435 in 1 : vector<1x32xf32>, vector<1x32xf32> -> vector<1x64xf32>
    %cst_58 = arith.constant dense<0.000000e+00> : vector<1x128xf32>
    %460 = tpu.matmul %459, %1, %cst_58 {dimension_numbers = #tpu.dot_dimension_numbers<[1], [0], [0], [1], [0, 0, 1, 1], [], []>} : vector<1x64xf32>, vector<64x128xf32>, vector<1x128xf32> -> vector<1x128xf32>
    %461 = arith.addf %460, %2 : vector<1x128xf32>
    %462 = arith.negf %461 : vector<1x128xf32>
    %463 = math.exp %462 : vector<1x128xf32>
    %cst_59 = arith.constant 1.000000e+00 : f32
    %464 = vector.broadcast %cst_59 : f32 to vector<1x128xf32>
    %465 = arith.addf %464, %463 : vector<1x128xf32>
    %466 = arith.divf %464, %465 : vector<1x128xf32>
    %467 = math.tanh %461 : vector<1x128xf32>
    %468 = vector.extract_strided_slice %466 {offsets = [0, 0], sizes = [1, 32], strides = [1, 1]} : vector<1x128xf32> to vector<1x32xf32>
    %469 = vector.extract_strided_slice %466 {offsets = [0, 32], sizes = [1, 32], strides = [1, 1]} : vector<1x128xf32> to vector<1x32xf32>
    %470 = vector.extract_strided_slice %467 {offsets = [0, 64], sizes = [1, 32], strides = [1, 1]} : vector<1x128xf32> to vector<1x32xf32>
    %471 = vector.extract_strided_slice %466 {offsets = [0, 96], sizes = [1, 32], strides = [1, 1]} : vector<1x128xf32> to vector<1x32xf32>
    %472 = arith.mulf %469, %440 : vector<1x32xf32>
    %473 = arith.mulf %468, %470 : vector<1x32xf32>
    %474 = arith.addf %472, %473 : vector<1x32xf32>
    %475 = math.tanh %474 : vector<1x32xf32>
    %476 = arith.mulf %471, %475 : vector<1x32xf32>
    %c7_i32 = arith.constant 7 : i32
    %477 = arith.cmpi sgt, %7, %c7_i32 : i32
    %478 = arith.extui %477 : i1 to i32
    %479 = arith.sitofp %478 : i32 to f32
    %cst_60 = arith.constant 1.000000e+00 : f32
    %480 = arith.subf %cst_60, %479 : f32
    %481 = vector.broadcast %479 : f32 to vector<1x32xf32>
    %482 = arith.mulf %481, %458 : vector<1x32xf32>
    %483 = vector.broadcast %480 : f32 to vector<1x32xf32>
    %484 = arith.mulf %483, %425 : vector<1x32xf32>
    %485 = arith.addf %482, %484 : vector<1x32xf32>
    %486 = vector.broadcast %479 : f32 to vector<1x32xf32>
    %487 = arith.mulf %486, %456 : vector<1x32xf32>
    %488 = vector.broadcast %480 : f32 to vector<1x32xf32>
    %489 = arith.mulf %488, %430 : vector<1x32xf32>
    %490 = arith.addf %487, %489 : vector<1x32xf32>
    %491 = vector.broadcast %479 : f32 to vector<1x32xf32>
    %492 = arith.mulf %491, %476 : vector<1x32xf32>
    %493 = vector.broadcast %480 : f32 to vector<1x32xf32>
    %494 = arith.mulf %493, %435 : vector<1x32xf32>
    %495 = arith.addf %492, %494 : vector<1x32xf32>
    %496 = vector.broadcast %479 : f32 to vector<1x32xf32>
    %497 = arith.mulf %496, %474 : vector<1x32xf32>
    %498 = vector.broadcast %480 : f32 to vector<1x32xf32>
    %499 = arith.mulf %498, %440 : vector<1x32xf32>
    %500 = arith.addf %497, %499 : vector<1x32xf32>
    %501 = arith.addf %485, %495 : vector<1x32xf32>
    %cst_61 = arith.constant 5.000000e-01 : f32
    %502 = vector.broadcast %cst_61 : f32 to vector<1x32xf32>
    %503 = arith.mulf %501, %502 : vector<1x32xf32>
    %504 = arith.addf %490, %500 : vector<1x32xf32>
    %cst_62 = arith.constant 5.000000e-01 : f32
    %505 = vector.broadcast %cst_62 : f32 to vector<1x32xf32>
    %506 = arith.mulf %504, %505 : vector<1x32xf32>
    %507 = tpu.iota {dimensions = array<i32: 1>} : vector<1x128xi32>
    %c1_i32_63 = arith.constant 1 : i32
    %508 = vector.broadcast %c1_i32_63 : i32 to vector<1x1xi32>
    %c0_i32_64 = arith.constant 0 : i32
    %509 = vector.broadcast %c0_i32_64 : i32 to vector<1x1xi32>
    %c-1_i32 = arith.constant -1 : i32
    %510 = vector.broadcast %c-1_i32 : i32 to vector<1x128xi32>
    %511 = vector.broadcast %508 : vector<1x1xi32> to vector<1x32xi32>
    %512 = arith.cmpi eq, %8, %511 : vector<1x32xi32>
    %513 = arith.extui %512 : vector<1x32xi1> to vector<1x32xi32>
    %514 = arith.sitofp %513 : vector<1x32xi32> to vector<1x32xf32>
    %515 = tpu.concatenate %514, %503 in 1 : vector<1x32xf32>, vector<1x32xf32> -> vector<1x64xf32>
    %cst_65 = arith.constant dense<0.000000e+00> : vector<1x128xf32>
    %516 = tpu.matmul %515, %3, %cst_65 {dimension_numbers = #tpu.dot_dimension_numbers<[1], [0], [0], [1], [0, 0, 1, 1], [], []>} : vector<1x64xf32>, vector<64x128xf32>, vector<1x128xf32> -> vector<1x128xf32>
    %517 = arith.addf %516, %4 : vector<1x128xf32>
    %518 = arith.negf %517 : vector<1x128xf32>
    %519 = math.exp %518 : vector<1x128xf32>
    %cst_66 = arith.constant 1.000000e+00 : f32
    %520 = vector.broadcast %cst_66 : f32 to vector<1x128xf32>
    %521 = arith.addf %520, %519 : vector<1x128xf32>
    %522 = arith.divf %520, %521 : vector<1x128xf32>
    %523 = math.tanh %517 : vector<1x128xf32>
    %524 = vector.extract_strided_slice %522 {offsets = [0, 0], sizes = [1, 32], strides = [1, 1]} : vector<1x128xf32> to vector<1x32xf32>
    %525 = vector.extract_strided_slice %522 {offsets = [0, 32], sizes = [1, 32], strides = [1, 1]} : vector<1x128xf32> to vector<1x32xf32>
    %526 = vector.extract_strided_slice %523 {offsets = [0, 64], sizes = [1, 32], strides = [1, 1]} : vector<1x128xf32> to vector<1x32xf32>
    %527 = vector.extract_strided_slice %522 {offsets = [0, 96], sizes = [1, 32], strides = [1, 1]} : vector<1x128xf32> to vector<1x32xf32>
    %528 = arith.mulf %525, %506 : vector<1x32xf32>
    %529 = arith.mulf %524, %526 : vector<1x32xf32>
    %530 = arith.addf %528, %529 : vector<1x32xf32>
    %531 = math.tanh %530 : vector<1x32xf32>
    %532 = arith.mulf %527, %531 : vector<1x32xf32>
    %cst_67 = arith.constant dense<0.000000e+00> : vector<1x32xf32>
    %533 = tpu.matmul %532, %5, %cst_67 {dimension_numbers = #tpu.dot_dimension_numbers<[1], [0], [0], [1], [0, 0, 1, 1], [], []>} : vector<1x32xf32>, vector<32x32xf32>, vector<1x32xf32> -> vector<1x32xf32>
    %534 = arith.addf %533, %6 : vector<1x32xf32>
    %cst_68 = arith.constant dense<0xFF800000> : vector<1xf32>
    %535 = vector.multi_reduction <maximumf>, %534, %cst_68 [1] : vector<1x32xf32> to vector<1xf32>
    %536 = vector.shape_cast %535 : vector<1xf32> to vector<1x1xf32>
    %537 = vector.broadcast %536 : vector<1x1xf32> to vector<1x32xf32>
    %538 = arith.cmpf oeq, %534, %537 : vector<1x32xf32>
    %c32_i32 = arith.constant 32 : i32
    %539 = vector.broadcast %c32_i32 : i32 to vector<1x32xi32>
    %540 = arith.select %538, %8, %539 : vector<1x32xi1>, vector<1x32xi32>
    %cst_69 = arith.constant dense<2147483647> : vector<1xi32>
    %541 = vector.multi_reduction <minsi>, %540, %cst_69 [1] : vector<1x32xi32> to vector<1xi32>
    %542 = vector.shape_cast %541 : vector<1xi32> to vector<1x1xi32>
    %c2_i32_70 = arith.constant 2 : i32
    %543 = vector.broadcast %c2_i32_70 : i32 to vector<1x1xi32>
    %544 = arith.cmpi eq, %542, %543 : vector<1x1xi32>
    %545 = arith.extui %544 : vector<1x1xi1> to vector<1x1xi32>
    %c1_i32_71 = arith.constant 1 : i32
    %546 = vector.broadcast %c1_i32_71 : i32 to vector<1x1xi32>
    %547 = arith.subi %546, %509 : vector<1x1xi32>
    %c1_i32_72 = arith.constant 1 : i32
    %548 = vector.broadcast %c1_i32_72 : i32 to vector<1x1xi32>
    %549 = arith.subi %548, %545 : vector<1x1xi32>
    %550 = arith.muli %547, %549 : vector<1x1xi32>
    %c0_i32_73 = arith.constant 0 : i32
    %551 = vector.broadcast %c0_i32_73 : i32 to vector<1x128xi32>
    %552 = arith.cmpi eq, %507, %551 : vector<1x128xi32>
    %553 = arith.extui %552 : vector<1x128xi1> to vector<1x128xi32>
    %554 = vector.broadcast %550 : vector<1x1xi32> to vector<1x128xi32>
    %555 = arith.muli %553, %554 : vector<1x128xi32>
    %556 = vector.broadcast %542 : vector<1x1xi32> to vector<1x128xi32>
    %557 = arith.muli %555, %556 : vector<1x128xi32>
    %c1_i32_74 = arith.constant 1 : i32
    %558 = vector.broadcast %c1_i32_74 : i32 to vector<1x128xi32>
    %559 = arith.subi %558, %555 : vector<1x128xi32>
    %560 = arith.muli %559, %510 : vector<1x128xi32>
    %561 = arith.addi %557, %560 : vector<1x128xi32>
    %562 = arith.sitofp %547 : vector<1x1xi32> to vector<1x1xf32>
    %563 = vector.broadcast %562 : vector<1x1xf32> to vector<1x32xf32>
    %564 = arith.mulf %563, %532 : vector<1x32xf32>
    %cst_75 = arith.constant 1.000000e+00 : f32
    %565 = vector.broadcast %cst_75 : f32 to vector<1x1xf32>
    %566 = arith.subf %565, %562 : vector<1x1xf32>
    %567 = vector.broadcast %566 : vector<1x1xf32> to vector<1x32xf32>
    %568 = arith.mulf %567, %503 : vector<1x32xf32>
    %569 = arith.addf %564, %568 : vector<1x32xf32>
    %570 = vector.broadcast %562 : vector<1x1xf32> to vector<1x32xf32>
    %571 = arith.mulf %570, %530 : vector<1x32xf32>
    %cst_76 = arith.constant 1.000000e+00 : f32
    %572 = vector.broadcast %cst_76 : f32 to vector<1x1xf32>
    %573 = arith.subf %572, %562 : vector<1x1xf32>
    %574 = vector.broadcast %573 : vector<1x1xf32> to vector<1x32xf32>
    %575 = arith.mulf %574, %506 : vector<1x32xf32>
    %576 = arith.addf %571, %575 : vector<1x32xf32>
    %577 = arith.muli %547, %542 : vector<1x1xi32>
    %c1_i32_77 = arith.constant 1 : i32
    %578 = vector.broadcast %c1_i32_77 : i32 to vector<1x1xi32>
    %579 = arith.subi %578, %547 : vector<1x1xi32>
    %580 = arith.muli %579, %508 : vector<1x1xi32>
    %581 = arith.addi %577, %580 : vector<1x1xi32>
    %582 = arith.maxsi %509, %545 : vector<1x1xi32>
    %583 = vector.broadcast %581 : vector<1x1xi32> to vector<1x32xi32>
    %584 = arith.cmpi eq, %8, %583 : vector<1x32xi32>
    %585 = arith.extui %584 : vector<1x32xi1> to vector<1x32xi32>
    %586 = arith.sitofp %585 : vector<1x32xi32> to vector<1x32xf32>
    %587 = tpu.concatenate %586, %569 in 1 : vector<1x32xf32>, vector<1x32xf32> -> vector<1x64xf32>
    %cst_78 = arith.constant dense<0.000000e+00> : vector<1x128xf32>
    %588 = tpu.matmul %587, %3, %cst_78 {dimension_numbers = #tpu.dot_dimension_numbers<[1], [0], [0], [1], [0, 0, 1, 1], [], []>} : vector<1x64xf32>, vector<64x128xf32>, vector<1x128xf32> -> vector<1x128xf32>
    %589 = arith.addf %588, %4 : vector<1x128xf32>
    %590 = arith.negf %589 : vector<1x128xf32>
    %591 = math.exp %590 : vector<1x128xf32>
    %cst_79 = arith.constant 1.000000e+00 : f32
    %592 = vector.broadcast %cst_79 : f32 to vector<1x128xf32>
    %593 = arith.addf %592, %591 : vector<1x128xf32>
    %594 = arith.divf %592, %593 : vector<1x128xf32>
    %595 = math.tanh %589 : vector<1x128xf32>
    %596 = vector.extract_strided_slice %594 {offsets = [0, 0], sizes = [1, 32], strides = [1, 1]} : vector<1x128xf32> to vector<1x32xf32>
    %597 = vector.extract_strided_slice %594 {offsets = [0, 32], sizes = [1, 32], strides = [1, 1]} : vector<1x128xf32> to vector<1x32xf32>
    %598 = vector.extract_strided_slice %595 {offsets = [0, 64], sizes = [1, 32], strides = [1, 1]} : vector<1x128xf32> to vector<1x32xf32>
    %599 = vector.extract_strided_slice %594 {offsets = [0, 96], sizes = [1, 32], strides = [1, 1]} : vector<1x128xf32> to vector<1x32xf32>
    %600 = arith.mulf %597, %576 : vector<1x32xf32>
    %601 = arith.mulf %596, %598 : vector<1x32xf32>
    %602 = arith.addf %600, %601 : vector<1x32xf32>
    %603 = math.tanh %602 : vector<1x32xf32>
    %604 = arith.mulf %599, %603 : vector<1x32xf32>
    %cst_80 = arith.constant dense<0.000000e+00> : vector<1x32xf32>
    %605 = tpu.matmul %604, %5, %cst_80 {dimension_numbers = #tpu.dot_dimension_numbers<[1], [0], [0], [1], [0, 0, 1, 1], [], []>} : vector<1x32xf32>, vector<32x32xf32>, vector<1x32xf32> -> vector<1x32xf32>
    %606 = arith.addf %605, %6 : vector<1x32xf32>
    %cst_81 = arith.constant dense<0xFF800000> : vector<1xf32>
    %607 = vector.multi_reduction <maximumf>, %606, %cst_81 [1] : vector<1x32xf32> to vector<1xf32>
    %608 = vector.shape_cast %607 : vector<1xf32> to vector<1x1xf32>
    %609 = vector.broadcast %608 : vector<1x1xf32> to vector<1x32xf32>
    %610 = arith.cmpf oeq, %606, %609 : vector<1x32xf32>
    %c32_i32_82 = arith.constant 32 : i32
    %611 = vector.broadcast %c32_i32_82 : i32 to vector<1x32xi32>
    %612 = arith.select %610, %8, %611 : vector<1x32xi1>, vector<1x32xi32>
    %cst_83 = arith.constant dense<2147483647> : vector<1xi32>
    %613 = vector.multi_reduction <minsi>, %612, %cst_83 [1] : vector<1x32xi32> to vector<1xi32>
    %614 = vector.shape_cast %613 : vector<1xi32> to vector<1x1xi32>
    %c2_i32_84 = arith.constant 2 : i32
    %615 = vector.broadcast %c2_i32_84 : i32 to vector<1x1xi32>
    %616 = arith.cmpi eq, %614, %615 : vector<1x1xi32>
    %617 = arith.extui %616 : vector<1x1xi1> to vector<1x1xi32>
    %c1_i32_85 = arith.constant 1 : i32
    %618 = vector.broadcast %c1_i32_85 : i32 to vector<1x1xi32>
    %619 = arith.subi %618, %582 : vector<1x1xi32>
    %c1_i32_86 = arith.constant 1 : i32
    %620 = vector.broadcast %c1_i32_86 : i32 to vector<1x1xi32>
    %621 = arith.subi %620, %617 : vector<1x1xi32>
    %622 = arith.muli %619, %621 : vector<1x1xi32>
    %c1_i32_87 = arith.constant 1 : i32
    %623 = vector.broadcast %c1_i32_87 : i32 to vector<1x128xi32>
    %624 = arith.cmpi eq, %507, %623 : vector<1x128xi32>
    %625 = arith.extui %624 : vector<1x128xi1> to vector<1x128xi32>
    %626 = vector.broadcast %622 : vector<1x1xi32> to vector<1x128xi32>
    %627 = arith.muli %625, %626 : vector<1x128xi32>
    %628 = vector.broadcast %614 : vector<1x1xi32> to vector<1x128xi32>
    %629 = arith.muli %627, %628 : vector<1x128xi32>
    %c1_i32_88 = arith.constant 1 : i32
    %630 = vector.broadcast %c1_i32_88 : i32 to vector<1x128xi32>
    %631 = arith.subi %630, %627 : vector<1x128xi32>
    %632 = arith.muli %631, %561 : vector<1x128xi32>
    %633 = arith.addi %629, %632 : vector<1x128xi32>
    %634 = arith.sitofp %619 : vector<1x1xi32> to vector<1x1xf32>
    %635 = vector.broadcast %634 : vector<1x1xf32> to vector<1x32xf32>
    %636 = arith.mulf %635, %604 : vector<1x32xf32>
    %cst_89 = arith.constant 1.000000e+00 : f32
    %637 = vector.broadcast %cst_89 : f32 to vector<1x1xf32>
    %638 = arith.subf %637, %634 : vector<1x1xf32>
    %639 = vector.broadcast %638 : vector<1x1xf32> to vector<1x32xf32>
    %640 = arith.mulf %639, %569 : vector<1x32xf32>
    %641 = arith.addf %636, %640 : vector<1x32xf32>
    %642 = vector.broadcast %634 : vector<1x1xf32> to vector<1x32xf32>
    %643 = arith.mulf %642, %602 : vector<1x32xf32>
    %cst_90 = arith.constant 1.000000e+00 : f32
    %644 = vector.broadcast %cst_90 : f32 to vector<1x1xf32>
    %645 = arith.subf %644, %634 : vector<1x1xf32>
    %646 = vector.broadcast %645 : vector<1x1xf32> to vector<1x32xf32>
    %647 = arith.mulf %646, %576 : vector<1x32xf32>
    %648 = arith.addf %643, %647 : vector<1x32xf32>
    %649 = arith.muli %619, %614 : vector<1x1xi32>
    %c1_i32_91 = arith.constant 1 : i32
    %650 = vector.broadcast %c1_i32_91 : i32 to vector<1x1xi32>
    %651 = arith.subi %650, %619 : vector<1x1xi32>
    %652 = arith.muli %651, %581 : vector<1x1xi32>
    %653 = arith.addi %649, %652 : vector<1x1xi32>
    %654 = arith.maxsi %582, %617 : vector<1x1xi32>
    %655 = vector.broadcast %653 : vector<1x1xi32> to vector<1x32xi32>
    %656 = arith.cmpi eq, %8, %655 : vector<1x32xi32>
    %657 = arith.extui %656 : vector<1x32xi1> to vector<1x32xi32>
    %658 = arith.sitofp %657 : vector<1x32xi32> to vector<1x32xf32>
    %659 = tpu.concatenate %658, %641 in 1 : vector<1x32xf32>, vector<1x32xf32> -> vector<1x64xf32>
    %cst_92 = arith.constant dense<0.000000e+00> : vector<1x128xf32>
    %660 = tpu.matmul %659, %3, %cst_92 {dimension_numbers = #tpu.dot_dimension_numbers<[1], [0], [0], [1], [0, 0, 1, 1], [], []>} : vector<1x64xf32>, vector<64x128xf32>, vector<1x128xf32> -> vector<1x128xf32>
    %661 = arith.addf %660, %4 : vector<1x128xf32>
    %662 = arith.negf %661 : vector<1x128xf32>
    %663 = math.exp %662 : vector<1x128xf32>
    %cst_93 = arith.constant 1.000000e+00 : f32
    %664 = vector.broadcast %cst_93 : f32 to vector<1x128xf32>
    %665 = arith.addf %664, %663 : vector<1x128xf32>
    %666 = arith.divf %664, %665 : vector<1x128xf32>
    %667 = math.tanh %661 : vector<1x128xf32>
    %668 = vector.extract_strided_slice %666 {offsets = [0, 0], sizes = [1, 32], strides = [1, 1]} : vector<1x128xf32> to vector<1x32xf32>
    %669 = vector.extract_strided_slice %666 {offsets = [0, 32], sizes = [1, 32], strides = [1, 1]} : vector<1x128xf32> to vector<1x32xf32>
    %670 = vector.extract_strided_slice %667 {offsets = [0, 64], sizes = [1, 32], strides = [1, 1]} : vector<1x128xf32> to vector<1x32xf32>
    %671 = vector.extract_strided_slice %666 {offsets = [0, 96], sizes = [1, 32], strides = [1, 1]} : vector<1x128xf32> to vector<1x32xf32>
    %672 = arith.mulf %669, %648 : vector<1x32xf32>
    %673 = arith.mulf %668, %670 : vector<1x32xf32>
    %674 = arith.addf %672, %673 : vector<1x32xf32>
    %675 = math.tanh %674 : vector<1x32xf32>
    %676 = arith.mulf %671, %675 : vector<1x32xf32>
    %cst_94 = arith.constant dense<0.000000e+00> : vector<1x32xf32>
    %677 = tpu.matmul %676, %5, %cst_94 {dimension_numbers = #tpu.dot_dimension_numbers<[1], [0], [0], [1], [0, 0, 1, 1], [], []>} : vector<1x32xf32>, vector<32x32xf32>, vector<1x32xf32> -> vector<1x32xf32>
    %678 = arith.addf %677, %6 : vector<1x32xf32>
    %cst_95 = arith.constant dense<0xFF800000> : vector<1xf32>
    %679 = vector.multi_reduction <maximumf>, %678, %cst_95 [1] : vector<1x32xf32> to vector<1xf32>
    %680 = vector.shape_cast %679 : vector<1xf32> to vector<1x1xf32>
    %681 = vector.broadcast %680 : vector<1x1xf32> to vector<1x32xf32>
    %682 = arith.cmpf oeq, %678, %681 : vector<1x32xf32>
    %c32_i32_96 = arith.constant 32 : i32
    %683 = vector.broadcast %c32_i32_96 : i32 to vector<1x32xi32>
    %684 = arith.select %682, %8, %683 : vector<1x32xi1>, vector<1x32xi32>
    %cst_97 = arith.constant dense<2147483647> : vector<1xi32>
    %685 = vector.multi_reduction <minsi>, %684, %cst_97 [1] : vector<1x32xi32> to vector<1xi32>
    %686 = vector.shape_cast %685 : vector<1xi32> to vector<1x1xi32>
    %c2_i32_98 = arith.constant 2 : i32
    %687 = vector.broadcast %c2_i32_98 : i32 to vector<1x1xi32>
    %688 = arith.cmpi eq, %686, %687 : vector<1x1xi32>
    %689 = arith.extui %688 : vector<1x1xi1> to vector<1x1xi32>
    %c1_i32_99 = arith.constant 1 : i32
    %690 = vector.broadcast %c1_i32_99 : i32 to vector<1x1xi32>
    %691 = arith.subi %690, %654 : vector<1x1xi32>
    %c1_i32_100 = arith.constant 1 : i32
    %692 = vector.broadcast %c1_i32_100 : i32 to vector<1x1xi32>
    %693 = arith.subi %692, %689 : vector<1x1xi32>
    %694 = arith.muli %691, %693 : vector<1x1xi32>
    %c2_i32_101 = arith.constant 2 : i32
    %695 = vector.broadcast %c2_i32_101 : i32 to vector<1x128xi32>
    %696 = arith.cmpi eq, %507, %695 : vector<1x128xi32>
    %697 = arith.extui %696 : vector<1x128xi1> to vector<1x128xi32>
    %698 = vector.broadcast %694 : vector<1x1xi32> to vector<1x128xi32>
    %699 = arith.muli %697, %698 : vector<1x128xi32>
    %700 = vector.broadcast %686 : vector<1x1xi32> to vector<1x128xi32>
    %701 = arith.muli %699, %700 : vector<1x128xi32>
    %c1_i32_102 = arith.constant 1 : i32
    %702 = vector.broadcast %c1_i32_102 : i32 to vector<1x128xi32>
    %703 = arith.subi %702, %699 : vector<1x128xi32>
    %704 = arith.muli %703, %633 : vector<1x128xi32>
    %705 = arith.addi %701, %704 : vector<1x128xi32>
    %706 = arith.sitofp %691 : vector<1x1xi32> to vector<1x1xf32>
    %707 = vector.broadcast %706 : vector<1x1xf32> to vector<1x32xf32>
    %708 = arith.mulf %707, %676 : vector<1x32xf32>
    %cst_103 = arith.constant 1.000000e+00 : f32
    %709 = vector.broadcast %cst_103 : f32 to vector<1x1xf32>
    %710 = arith.subf %709, %706 : vector<1x1xf32>
    %711 = vector.broadcast %710 : vector<1x1xf32> to vector<1x32xf32>
    %712 = arith.mulf %711, %641 : vector<1x32xf32>
    %713 = arith.addf %708, %712 : vector<1x32xf32>
    %714 = vector.broadcast %706 : vector<1x1xf32> to vector<1x32xf32>
    %715 = arith.mulf %714, %674 : vector<1x32xf32>
    %cst_104 = arith.constant 1.000000e+00 : f32
    %716 = vector.broadcast %cst_104 : f32 to vector<1x1xf32>
    %717 = arith.subf %716, %706 : vector<1x1xf32>
    %718 = vector.broadcast %717 : vector<1x1xf32> to vector<1x32xf32>
    %719 = arith.mulf %718, %648 : vector<1x32xf32>
    %720 = arith.addf %715, %719 : vector<1x32xf32>
    %721 = arith.muli %691, %686 : vector<1x1xi32>
    %c1_i32_105 = arith.constant 1 : i32
    %722 = vector.broadcast %c1_i32_105 : i32 to vector<1x1xi32>
    %723 = arith.subi %722, %691 : vector<1x1xi32>
    %724 = arith.muli %723, %653 : vector<1x1xi32>
    %725 = arith.addi %721, %724 : vector<1x1xi32>
    %726 = arith.maxsi %654, %689 : vector<1x1xi32>
    %727 = vector.broadcast %725 : vector<1x1xi32> to vector<1x32xi32>
    %728 = arith.cmpi eq, %8, %727 : vector<1x32xi32>
    %729 = arith.extui %728 : vector<1x32xi1> to vector<1x32xi32>
    %730 = arith.sitofp %729 : vector<1x32xi32> to vector<1x32xf32>
    %731 = tpu.concatenate %730, %713 in 1 : vector<1x32xf32>, vector<1x32xf32> -> vector<1x64xf32>
    %cst_106 = arith.constant dense<0.000000e+00> : vector<1x128xf32>
    %732 = tpu.matmul %731, %3, %cst_106 {dimension_numbers = #tpu.dot_dimension_numbers<[1], [0], [0], [1], [0, 0, 1, 1], [], []>} : vector<1x64xf32>, vector<64x128xf32>, vector<1x128xf32> -> vector<1x128xf32>
    %733 = arith.addf %732, %4 : vector<1x128xf32>
    %734 = arith.negf %733 : vector<1x128xf32>
    %735 = math.exp %734 : vector<1x128xf32>
    %cst_107 = arith.constant 1.000000e+00 : f32
    %736 = vector.broadcast %cst_107 : f32 to vector<1x128xf32>
    %737 = arith.addf %736, %735 : vector<1x128xf32>
    %738 = arith.divf %736, %737 : vector<1x128xf32>
    %739 = math.tanh %733 : vector<1x128xf32>
    %740 = vector.extract_strided_slice %738 {offsets = [0, 0], sizes = [1, 32], strides = [1, 1]} : vector<1x128xf32> to vector<1x32xf32>
    %741 = vector.extract_strided_slice %738 {offsets = [0, 32], sizes = [1, 32], strides = [1, 1]} : vector<1x128xf32> to vector<1x32xf32>
    %742 = vector.extract_strided_slice %739 {offsets = [0, 64], sizes = [1, 32], strides = [1, 1]} : vector<1x128xf32> to vector<1x32xf32>
    %743 = vector.extract_strided_slice %738 {offsets = [0, 96], sizes = [1, 32], strides = [1, 1]} : vector<1x128xf32> to vector<1x32xf32>
    %744 = arith.mulf %741, %720 : vector<1x32xf32>
    %745 = arith.mulf %740, %742 : vector<1x32xf32>
    %746 = arith.addf %744, %745 : vector<1x32xf32>
    %747 = math.tanh %746 : vector<1x32xf32>
    %748 = arith.mulf %743, %747 : vector<1x32xf32>
    %cst_108 = arith.constant dense<0.000000e+00> : vector<1x32xf32>
    %749 = tpu.matmul %748, %5, %cst_108 {dimension_numbers = #tpu.dot_dimension_numbers<[1], [0], [0], [1], [0, 0, 1, 1], [], []>} : vector<1x32xf32>, vector<32x32xf32>, vector<1x32xf32> -> vector<1x32xf32>
    %750 = arith.addf %749, %6 : vector<1x32xf32>
    %cst_109 = arith.constant dense<0xFF800000> : vector<1xf32>
    %751 = vector.multi_reduction <maximumf>, %750, %cst_109 [1] : vector<1x32xf32> to vector<1xf32>
    %752 = vector.shape_cast %751 : vector<1xf32> to vector<1x1xf32>
    %753 = vector.broadcast %752 : vector<1x1xf32> to vector<1x32xf32>
    %754 = arith.cmpf oeq, %750, %753 : vector<1x32xf32>
    %c32_i32_110 = arith.constant 32 : i32
    %755 = vector.broadcast %c32_i32_110 : i32 to vector<1x32xi32>
    %756 = arith.select %754, %8, %755 : vector<1x32xi1>, vector<1x32xi32>
    %cst_111 = arith.constant dense<2147483647> : vector<1xi32>
    %757 = vector.multi_reduction <minsi>, %756, %cst_111 [1] : vector<1x32xi32> to vector<1xi32>
    %758 = vector.shape_cast %757 : vector<1xi32> to vector<1x1xi32>
    %c2_i32_112 = arith.constant 2 : i32
    %759 = vector.broadcast %c2_i32_112 : i32 to vector<1x1xi32>
    %760 = arith.cmpi eq, %758, %759 : vector<1x1xi32>
    %761 = arith.extui %760 : vector<1x1xi1> to vector<1x1xi32>
    %c1_i32_113 = arith.constant 1 : i32
    %762 = vector.broadcast %c1_i32_113 : i32 to vector<1x1xi32>
    %763 = arith.subi %762, %726 : vector<1x1xi32>
    %c1_i32_114 = arith.constant 1 : i32
    %764 = vector.broadcast %c1_i32_114 : i32 to vector<1x1xi32>
    %765 = arith.subi %764, %761 : vector<1x1xi32>
    %766 = arith.muli %763, %765 : vector<1x1xi32>
    %c3_i32_115 = arith.constant 3 : i32
    %767 = vector.broadcast %c3_i32_115 : i32 to vector<1x128xi32>
    %768 = arith.cmpi eq, %507, %767 : vector<1x128xi32>
    %769 = arith.extui %768 : vector<1x128xi1> to vector<1x128xi32>
    %770 = vector.broadcast %766 : vector<1x1xi32> to vector<1x128xi32>
    %771 = arith.muli %769, %770 : vector<1x128xi32>
    %772 = vector.broadcast %758 : vector<1x1xi32> to vector<1x128xi32>
    %773 = arith.muli %771, %772 : vector<1x128xi32>
    %c1_i32_116 = arith.constant 1 : i32
    %774 = vector.broadcast %c1_i32_116 : i32 to vector<1x128xi32>
    %775 = arith.subi %774, %771 : vector<1x128xi32>
    %776 = arith.muli %775, %705 : vector<1x128xi32>
    %777 = arith.addi %773, %776 : vector<1x128xi32>
    %778 = arith.sitofp %763 : vector<1x1xi32> to vector<1x1xf32>
    %779 = vector.broadcast %778 : vector<1x1xf32> to vector<1x32xf32>
    %780 = arith.mulf %779, %748 : vector<1x32xf32>
    %cst_117 = arith.constant 1.000000e+00 : f32
    %781 = vector.broadcast %cst_117 : f32 to vector<1x1xf32>
    %782 = arith.subf %781, %778 : vector<1x1xf32>
    %783 = vector.broadcast %782 : vector<1x1xf32> to vector<1x32xf32>
    %784 = arith.mulf %783, %713 : vector<1x32xf32>
    %785 = arith.addf %780, %784 : vector<1x32xf32>
    %786 = vector.broadcast %778 : vector<1x1xf32> to vector<1x32xf32>
    %787 = arith.mulf %786, %746 : vector<1x32xf32>
    %cst_118 = arith.constant 1.000000e+00 : f32
    %788 = vector.broadcast %cst_118 : f32 to vector<1x1xf32>
    %789 = arith.subf %788, %778 : vector<1x1xf32>
    %790 = vector.broadcast %789 : vector<1x1xf32> to vector<1x32xf32>
    %791 = arith.mulf %790, %720 : vector<1x32xf32>
    %792 = arith.addf %787, %791 : vector<1x32xf32>
    %793 = arith.muli %763, %758 : vector<1x1xi32>
    %c1_i32_119 = arith.constant 1 : i32
    %794 = vector.broadcast %c1_i32_119 : i32 to vector<1x1xi32>
    %795 = arith.subi %794, %763 : vector<1x1xi32>
    %796 = arith.muli %795, %725 : vector<1x1xi32>
    %797 = arith.addi %793, %796 : vector<1x1xi32>
    %798 = arith.maxsi %726, %761 : vector<1x1xi32>
    %799 = vector.broadcast %797 : vector<1x1xi32> to vector<1x32xi32>
    %800 = arith.cmpi eq, %8, %799 : vector<1x32xi32>
    %801 = arith.extui %800 : vector<1x32xi1> to vector<1x32xi32>
    %802 = arith.sitofp %801 : vector<1x32xi32> to vector<1x32xf32>
    %803 = tpu.concatenate %802, %785 in 1 : vector<1x32xf32>, vector<1x32xf32> -> vector<1x64xf32>
    %cst_120 = arith.constant dense<0.000000e+00> : vector<1x128xf32>
    %804 = tpu.matmul %803, %3, %cst_120 {dimension_numbers = #tpu.dot_dimension_numbers<[1], [0], [0], [1], [0, 0, 1, 1], [], []>} : vector<1x64xf32>, vector<64x128xf32>, vector<1x128xf32> -> vector<1x128xf32>
    %805 = arith.addf %804, %4 : vector<1x128xf32>
    %806 = arith.negf %805 : vector<1x128xf32>
    %807 = math.exp %806 : vector<1x128xf32>
    %cst_121 = arith.constant 1.000000e+00 : f32
    %808 = vector.broadcast %cst_121 : f32 to vector<1x128xf32>
    %809 = arith.addf %808, %807 : vector<1x128xf32>
    %810 = arith.divf %808, %809 : vector<1x128xf32>
    %811 = math.tanh %805 : vector<1x128xf32>
    %812 = vector.extract_strided_slice %810 {offsets = [0, 0], sizes = [1, 32], strides = [1, 1]} : vector<1x128xf32> to vector<1x32xf32>
    %813 = vector.extract_strided_slice %810 {offsets = [0, 32], sizes = [1, 32], strides = [1, 1]} : vector<1x128xf32> to vector<1x32xf32>
    %814 = vector.extract_strided_slice %811 {offsets = [0, 64], sizes = [1, 32], strides = [1, 1]} : vector<1x128xf32> to vector<1x32xf32>
    %815 = vector.extract_strided_slice %810 {offsets = [0, 96], sizes = [1, 32], strides = [1, 1]} : vector<1x128xf32> to vector<1x32xf32>
    %816 = arith.mulf %813, %792 : vector<1x32xf32>
    %817 = arith.mulf %812, %814 : vector<1x32xf32>
    %818 = arith.addf %816, %817 : vector<1x32xf32>
    %819 = math.tanh %818 : vector<1x32xf32>
    %820 = arith.mulf %815, %819 : vector<1x32xf32>
    %cst_122 = arith.constant dense<0.000000e+00> : vector<1x32xf32>
    %821 = tpu.matmul %820, %5, %cst_122 {dimension_numbers = #tpu.dot_dimension_numbers<[1], [0], [0], [1], [0, 0, 1, 1], [], []>} : vector<1x32xf32>, vector<32x32xf32>, vector<1x32xf32> -> vector<1x32xf32>
    %822 = arith.addf %821, %6 : vector<1x32xf32>
    %cst_123 = arith.constant dense<0xFF800000> : vector<1xf32>
    %823 = vector.multi_reduction <maximumf>, %822, %cst_123 [1] : vector<1x32xf32> to vector<1xf32>
    %824 = vector.shape_cast %823 : vector<1xf32> to vector<1x1xf32>
    %825 = vector.broadcast %824 : vector<1x1xf32> to vector<1x32xf32>
    %826 = arith.cmpf oeq, %822, %825 : vector<1x32xf32>
    %c32_i32_124 = arith.constant 32 : i32
    %827 = vector.broadcast %c32_i32_124 : i32 to vector<1x32xi32>
    %828 = arith.select %826, %8, %827 : vector<1x32xi1>, vector<1x32xi32>
    %cst_125 = arith.constant dense<2147483647> : vector<1xi32>
    %829 = vector.multi_reduction <minsi>, %828, %cst_125 [1] : vector<1x32xi32> to vector<1xi32>
    %830 = vector.shape_cast %829 : vector<1xi32> to vector<1x1xi32>
    %c2_i32_126 = arith.constant 2 : i32
    %831 = vector.broadcast %c2_i32_126 : i32 to vector<1x1xi32>
    %832 = arith.cmpi eq, %830, %831 : vector<1x1xi32>
    %833 = arith.extui %832 : vector<1x1xi1> to vector<1x1xi32>
    %c1_i32_127 = arith.constant 1 : i32
    %834 = vector.broadcast %c1_i32_127 : i32 to vector<1x1xi32>
    %835 = arith.subi %834, %798 : vector<1x1xi32>
    %c1_i32_128 = arith.constant 1 : i32
    %836 = vector.broadcast %c1_i32_128 : i32 to vector<1x1xi32>
    %837 = arith.subi %836, %833 : vector<1x1xi32>
    %838 = arith.muli %835, %837 : vector<1x1xi32>
    %c4_i32_129 = arith.constant 4 : i32
    %839 = vector.broadcast %c4_i32_129 : i32 to vector<1x128xi32>
    %840 = arith.cmpi eq, %507, %839 : vector<1x128xi32>
    %841 = arith.extui %840 : vector<1x128xi1> to vector<1x128xi32>
    %842 = vector.broadcast %838 : vector<1x1xi32> to vector<1x128xi32>
    %843 = arith.muli %841, %842 : vector<1x128xi32>
    %844 = vector.broadcast %830 : vector<1x1xi32> to vector<1x128xi32>
    %845 = arith.muli %843, %844 : vector<1x128xi32>
    %c1_i32_130 = arith.constant 1 : i32
    %846 = vector.broadcast %c1_i32_130 : i32 to vector<1x128xi32>
    %847 = arith.subi %846, %843 : vector<1x128xi32>
    %848 = arith.muli %847, %777 : vector<1x128xi32>
    %849 = arith.addi %845, %848 : vector<1x128xi32>
    %850 = arith.sitofp %835 : vector<1x1xi32> to vector<1x1xf32>
    %851 = vector.broadcast %850 : vector<1x1xf32> to vector<1x32xf32>
    %852 = arith.mulf %851, %820 : vector<1x32xf32>
    %cst_131 = arith.constant 1.000000e+00 : f32
    %853 = vector.broadcast %cst_131 : f32 to vector<1x1xf32>
    %854 = arith.subf %853, %850 : vector<1x1xf32>
    %855 = vector.broadcast %854 : vector<1x1xf32> to vector<1x32xf32>
    %856 = arith.mulf %855, %785 : vector<1x32xf32>
    %857 = arith.addf %852, %856 : vector<1x32xf32>
    %858 = vector.broadcast %850 : vector<1x1xf32> to vector<1x32xf32>
    %859 = arith.mulf %858, %818 : vector<1x32xf32>
    %cst_132 = arith.constant 1.000000e+00 : f32
    %860 = vector.broadcast %cst_132 : f32 to vector<1x1xf32>
    %861 = arith.subf %860, %850 : vector<1x1xf32>
    %862 = vector.broadcast %861 : vector<1x1xf32> to vector<1x32xf32>
    %863 = arith.mulf %862, %792 : vector<1x32xf32>
    %864 = arith.addf %859, %863 : vector<1x32xf32>
    %865 = arith.muli %835, %830 : vector<1x1xi32>
    %c1_i32_133 = arith.constant 1 : i32
    %866 = vector.broadcast %c1_i32_133 : i32 to vector<1x1xi32>
    %867 = arith.subi %866, %835 : vector<1x1xi32>
    %868 = arith.muli %867, %797 : vector<1x1xi32>
    %869 = arith.addi %865, %868 : vector<1x1xi32>
    %870 = arith.maxsi %798, %833 : vector<1x1xi32>
    %871 = vector.broadcast %869 : vector<1x1xi32> to vector<1x32xi32>
    %872 = arith.cmpi eq, %8, %871 : vector<1x32xi32>
    %873 = arith.extui %872 : vector<1x32xi1> to vector<1x32xi32>
    %874 = arith.sitofp %873 : vector<1x32xi32> to vector<1x32xf32>
    %875 = tpu.concatenate %874, %857 in 1 : vector<1x32xf32>, vector<1x32xf32> -> vector<1x64xf32>
    %cst_134 = arith.constant dense<0.000000e+00> : vector<1x128xf32>
    %876 = tpu.matmul %875, %3, %cst_134 {dimension_numbers = #tpu.dot_dimension_numbers<[1], [0], [0], [1], [0, 0, 1, 1], [], []>} : vector<1x64xf32>, vector<64x128xf32>, vector<1x128xf32> -> vector<1x128xf32>
    %877 = arith.addf %876, %4 : vector<1x128xf32>
    %878 = arith.negf %877 : vector<1x128xf32>
    %879 = math.exp %878 : vector<1x128xf32>
    %cst_135 = arith.constant 1.000000e+00 : f32
    %880 = vector.broadcast %cst_135 : f32 to vector<1x128xf32>
    %881 = arith.addf %880, %879 : vector<1x128xf32>
    %882 = arith.divf %880, %881 : vector<1x128xf32>
    %883 = math.tanh %877 : vector<1x128xf32>
    %884 = vector.extract_strided_slice %882 {offsets = [0, 0], sizes = [1, 32], strides = [1, 1]} : vector<1x128xf32> to vector<1x32xf32>
    %885 = vector.extract_strided_slice %882 {offsets = [0, 32], sizes = [1, 32], strides = [1, 1]} : vector<1x128xf32> to vector<1x32xf32>
    %886 = vector.extract_strided_slice %883 {offsets = [0, 64], sizes = [1, 32], strides = [1, 1]} : vector<1x128xf32> to vector<1x32xf32>
    %887 = vector.extract_strided_slice %882 {offsets = [0, 96], sizes = [1, 32], strides = [1, 1]} : vector<1x128xf32> to vector<1x32xf32>
    %888 = arith.mulf %885, %864 : vector<1x32xf32>
    %889 = arith.mulf %884, %886 : vector<1x32xf32>
    %890 = arith.addf %888, %889 : vector<1x32xf32>
    %891 = math.tanh %890 : vector<1x32xf32>
    %892 = arith.mulf %887, %891 : vector<1x32xf32>
    %cst_136 = arith.constant dense<0.000000e+00> : vector<1x32xf32>
    %893 = tpu.matmul %892, %5, %cst_136 {dimension_numbers = #tpu.dot_dimension_numbers<[1], [0], [0], [1], [0, 0, 1, 1], [], []>} : vector<1x32xf32>, vector<32x32xf32>, vector<1x32xf32> -> vector<1x32xf32>
    %894 = arith.addf %893, %6 : vector<1x32xf32>
    %cst_137 = arith.constant dense<0xFF800000> : vector<1xf32>
    %895 = vector.multi_reduction <maximumf>, %894, %cst_137 [1] : vector<1x32xf32> to vector<1xf32>
    %896 = vector.shape_cast %895 : vector<1xf32> to vector<1x1xf32>
    %897 = vector.broadcast %896 : vector<1x1xf32> to vector<1x32xf32>
    %898 = arith.cmpf oeq, %894, %897 : vector<1x32xf32>
    %c32_i32_138 = arith.constant 32 : i32
    %899 = vector.broadcast %c32_i32_138 : i32 to vector<1x32xi32>
    %900 = arith.select %898, %8, %899 : vector<1x32xi1>, vector<1x32xi32>
    %cst_139 = arith.constant dense<2147483647> : vector<1xi32>
    %901 = vector.multi_reduction <minsi>, %900, %cst_139 [1] : vector<1x32xi32> to vector<1xi32>
    %902 = vector.shape_cast %901 : vector<1xi32> to vector<1x1xi32>
    %c2_i32_140 = arith.constant 2 : i32
    %903 = vector.broadcast %c2_i32_140 : i32 to vector<1x1xi32>
    %904 = arith.cmpi eq, %902, %903 : vector<1x1xi32>
    %905 = arith.extui %904 : vector<1x1xi1> to vector<1x1xi32>
    %c1_i32_141 = arith.constant 1 : i32
    %906 = vector.broadcast %c1_i32_141 : i32 to vector<1x1xi32>
    %907 = arith.subi %906, %870 : vector<1x1xi32>
    %c1_i32_142 = arith.constant 1 : i32
    %908 = vector.broadcast %c1_i32_142 : i32 to vector<1x1xi32>
    %909 = arith.subi %908, %905 : vector<1x1xi32>
    %910 = arith.muli %907, %909 : vector<1x1xi32>
    %c5_i32_143 = arith.constant 5 : i32
    %911 = vector.broadcast %c5_i32_143 : i32 to vector<1x128xi32>
    %912 = arith.cmpi eq, %507, %911 : vector<1x128xi32>
    %913 = arith.extui %912 : vector<1x128xi1> to vector<1x128xi32>
    %914 = vector.broadcast %910 : vector<1x1xi32> to vector<1x128xi32>
    %915 = arith.muli %913, %914 : vector<1x128xi32>
    %916 = vector.broadcast %902 : vector<1x1xi32> to vector<1x128xi32>
    %917 = arith.muli %915, %916 : vector<1x128xi32>
    %c1_i32_144 = arith.constant 1 : i32
    %918 = vector.broadcast %c1_i32_144 : i32 to vector<1x128xi32>
    %919 = arith.subi %918, %915 : vector<1x128xi32>
    %920 = arith.muli %919, %849 : vector<1x128xi32>
    %921 = arith.addi %917, %920 : vector<1x128xi32>
    %922 = arith.sitofp %907 : vector<1x1xi32> to vector<1x1xf32>
    %923 = vector.broadcast %922 : vector<1x1xf32> to vector<1x32xf32>
    %924 = arith.mulf %923, %892 : vector<1x32xf32>
    %cst_145 = arith.constant 1.000000e+00 : f32
    %925 = vector.broadcast %cst_145 : f32 to vector<1x1xf32>
    %926 = arith.subf %925, %922 : vector<1x1xf32>
    %927 = vector.broadcast %926 : vector<1x1xf32> to vector<1x32xf32>
    %928 = arith.mulf %927, %857 : vector<1x32xf32>
    %929 = arith.addf %924, %928 : vector<1x32xf32>
    %930 = vector.broadcast %922 : vector<1x1xf32> to vector<1x32xf32>
    %931 = arith.mulf %930, %890 : vector<1x32xf32>
    %cst_146 = arith.constant 1.000000e+00 : f32
    %932 = vector.broadcast %cst_146 : f32 to vector<1x1xf32>
    %933 = arith.subf %932, %922 : vector<1x1xf32>
    %934 = vector.broadcast %933 : vector<1x1xf32> to vector<1x32xf32>
    %935 = arith.mulf %934, %864 : vector<1x32xf32>
    %936 = arith.addf %931, %935 : vector<1x32xf32>
    %937 = arith.muli %907, %902 : vector<1x1xi32>
    %c1_i32_147 = arith.constant 1 : i32
    %938 = vector.broadcast %c1_i32_147 : i32 to vector<1x1xi32>
    %939 = arith.subi %938, %907 : vector<1x1xi32>
    %940 = arith.muli %939, %869 : vector<1x1xi32>
    %941 = arith.addi %937, %940 : vector<1x1xi32>
    %942 = arith.maxsi %870, %905 : vector<1x1xi32>
    %943 = vector.broadcast %941 : vector<1x1xi32> to vector<1x32xi32>
    %944 = arith.cmpi eq, %8, %943 : vector<1x32xi32>
    %945 = arith.extui %944 : vector<1x32xi1> to vector<1x32xi32>
    %946 = arith.sitofp %945 : vector<1x32xi32> to vector<1x32xf32>
    %947 = tpu.concatenate %946, %929 in 1 : vector<1x32xf32>, vector<1x32xf32> -> vector<1x64xf32>
    %cst_148 = arith.constant dense<0.000000e+00> : vector<1x128xf32>
    %948 = tpu.matmul %947, %3, %cst_148 {dimension_numbers = #tpu.dot_dimension_numbers<[1], [0], [0], [1], [0, 0, 1, 1], [], []>} : vector<1x64xf32>, vector<64x128xf32>, vector<1x128xf32> -> vector<1x128xf32>
    %949 = arith.addf %948, %4 : vector<1x128xf32>
    %950 = arith.negf %949 : vector<1x128xf32>
    %951 = math.exp %950 : vector<1x128xf32>
    %cst_149 = arith.constant 1.000000e+00 : f32
    %952 = vector.broadcast %cst_149 : f32 to vector<1x128xf32>
    %953 = arith.addf %952, %951 : vector<1x128xf32>
    %954 = arith.divf %952, %953 : vector<1x128xf32>
    %955 = math.tanh %949 : vector<1x128xf32>
    %956 = vector.extract_strided_slice %954 {offsets = [0, 0], sizes = [1, 32], strides = [1, 1]} : vector<1x128xf32> to vector<1x32xf32>
    %957 = vector.extract_strided_slice %954 {offsets = [0, 32], sizes = [1, 32], strides = [1, 1]} : vector<1x128xf32> to vector<1x32xf32>
    %958 = vector.extract_strided_slice %955 {offsets = [0, 64], sizes = [1, 32], strides = [1, 1]} : vector<1x128xf32> to vector<1x32xf32>
    %959 = vector.extract_strided_slice %954 {offsets = [0, 96], sizes = [1, 32], strides = [1, 1]} : vector<1x128xf32> to vector<1x32xf32>
    %960 = arith.mulf %957, %936 : vector<1x32xf32>
    %961 = arith.mulf %956, %958 : vector<1x32xf32>
    %962 = arith.addf %960, %961 : vector<1x32xf32>
    %963 = math.tanh %962 : vector<1x32xf32>
    %964 = arith.mulf %959, %963 : vector<1x32xf32>
    %cst_150 = arith.constant dense<0.000000e+00> : vector<1x32xf32>
    %965 = tpu.matmul %964, %5, %cst_150 {dimension_numbers = #tpu.dot_dimension_numbers<[1], [0], [0], [1], [0, 0, 1, 1], [], []>} : vector<1x32xf32>, vector<32x32xf32>, vector<1x32xf32> -> vector<1x32xf32>
    %966 = arith.addf %965, %6 : vector<1x32xf32>
    %cst_151 = arith.constant dense<0xFF800000> : vector<1xf32>
    %967 = vector.multi_reduction <maximumf>, %966, %cst_151 [1] : vector<1x32xf32> to vector<1xf32>
    %968 = vector.shape_cast %967 : vector<1xf32> to vector<1x1xf32>
    %969 = vector.broadcast %968 : vector<1x1xf32> to vector<1x32xf32>
    %970 = arith.cmpf oeq, %966, %969 : vector<1x32xf32>
    %c32_i32_152 = arith.constant 32 : i32
    %971 = vector.broadcast %c32_i32_152 : i32 to vector<1x32xi32>
    %972 = arith.select %970, %8, %971 : vector<1x32xi1>, vector<1x32xi32>
    %cst_153 = arith.constant dense<2147483647> : vector<1xi32>
    %973 = vector.multi_reduction <minsi>, %972, %cst_153 [1] : vector<1x32xi32> to vector<1xi32>
    %974 = vector.shape_cast %973 : vector<1xi32> to vector<1x1xi32>
    %c2_i32_154 = arith.constant 2 : i32
    %975 = vector.broadcast %c2_i32_154 : i32 to vector<1x1xi32>
    %976 = arith.cmpi eq, %974, %975 : vector<1x1xi32>
    %977 = arith.extui %976 : vector<1x1xi1> to vector<1x1xi32>
    %c1_i32_155 = arith.constant 1 : i32
    %978 = vector.broadcast %c1_i32_155 : i32 to vector<1x1xi32>
    %979 = arith.subi %978, %942 : vector<1x1xi32>
    %c1_i32_156 = arith.constant 1 : i32
    %980 = vector.broadcast %c1_i32_156 : i32 to vector<1x1xi32>
    %981 = arith.subi %980, %977 : vector<1x1xi32>
    %982 = arith.muli %979, %981 : vector<1x1xi32>
    %c6_i32_157 = arith.constant 6 : i32
    %983 = vector.broadcast %c6_i32_157 : i32 to vector<1x128xi32>
    %984 = arith.cmpi eq, %507, %983 : vector<1x128xi32>
    %985 = arith.extui %984 : vector<1x128xi1> to vector<1x128xi32>
    %986 = vector.broadcast %982 : vector<1x1xi32> to vector<1x128xi32>
    %987 = arith.muli %985, %986 : vector<1x128xi32>
    %988 = vector.broadcast %974 : vector<1x1xi32> to vector<1x128xi32>
    %989 = arith.muli %987, %988 : vector<1x128xi32>
    %c1_i32_158 = arith.constant 1 : i32
    %990 = vector.broadcast %c1_i32_158 : i32 to vector<1x128xi32>
    %991 = arith.subi %990, %987 : vector<1x128xi32>
    %992 = arith.muli %991, %921 : vector<1x128xi32>
    %993 = arith.addi %989, %992 : vector<1x128xi32>
    %994 = arith.sitofp %979 : vector<1x1xi32> to vector<1x1xf32>
    %995 = vector.broadcast %994 : vector<1x1xf32> to vector<1x32xf32>
    %996 = arith.mulf %995, %964 : vector<1x32xf32>
    %cst_159 = arith.constant 1.000000e+00 : f32
    %997 = vector.broadcast %cst_159 : f32 to vector<1x1xf32>
    %998 = arith.subf %997, %994 : vector<1x1xf32>
    %999 = vector.broadcast %998 : vector<1x1xf32> to vector<1x32xf32>
    %1000 = arith.mulf %999, %929 : vector<1x32xf32>
    %1001 = arith.addf %996, %1000 : vector<1x32xf32>
    %1002 = vector.broadcast %994 : vector<1x1xf32> to vector<1x32xf32>
    %1003 = arith.mulf %1002, %962 : vector<1x32xf32>
    %cst_160 = arith.constant 1.000000e+00 : f32
    %1004 = vector.broadcast %cst_160 : f32 to vector<1x1xf32>
    %1005 = arith.subf %1004, %994 : vector<1x1xf32>
    %1006 = vector.broadcast %1005 : vector<1x1xf32> to vector<1x32xf32>
    %1007 = arith.mulf %1006, %936 : vector<1x32xf32>
    %1008 = arith.addf %1003, %1007 : vector<1x32xf32>
    %1009 = arith.muli %979, %974 : vector<1x1xi32>
    %c1_i32_161 = arith.constant 1 : i32
    %1010 = vector.broadcast %c1_i32_161 : i32 to vector<1x1xi32>
    %1011 = arith.subi %1010, %979 : vector<1x1xi32>
    %1012 = arith.muli %1011, %941 : vector<1x1xi32>
    %1013 = arith.addi %1009, %1012 : vector<1x1xi32>
    %1014 = arith.maxsi %942, %977 : vector<1x1xi32>
    %1015 = vector.broadcast %1013 : vector<1x1xi32> to vector<1x32xi32>
    %1016 = arith.cmpi eq, %8, %1015 : vector<1x32xi32>
    %1017 = arith.extui %1016 : vector<1x32xi1> to vector<1x32xi32>
    %1018 = arith.sitofp %1017 : vector<1x32xi32> to vector<1x32xf32>
    %1019 = tpu.concatenate %1018, %1001 in 1 : vector<1x32xf32>, vector<1x32xf32> -> vector<1x64xf32>
    %cst_162 = arith.constant dense<0.000000e+00> : vector<1x128xf32>
    %1020 = tpu.matmul %1019, %3, %cst_162 {dimension_numbers = #tpu.dot_dimension_numbers<[1], [0], [0], [1], [0, 0, 1, 1], [], []>} : vector<1x64xf32>, vector<64x128xf32>, vector<1x128xf32> -> vector<1x128xf32>
    %1021 = arith.addf %1020, %4 : vector<1x128xf32>
    %1022 = arith.negf %1021 : vector<1x128xf32>
    %1023 = math.exp %1022 : vector<1x128xf32>
    %cst_163 = arith.constant 1.000000e+00 : f32
    %1024 = vector.broadcast %cst_163 : f32 to vector<1x128xf32>
    %1025 = arith.addf %1024, %1023 : vector<1x128xf32>
    %1026 = arith.divf %1024, %1025 : vector<1x128xf32>
    %1027 = math.tanh %1021 : vector<1x128xf32>
    %1028 = vector.extract_strided_slice %1026 {offsets = [0, 0], sizes = [1, 32], strides = [1, 1]} : vector<1x128xf32> to vector<1x32xf32>
    %1029 = vector.extract_strided_slice %1026 {offsets = [0, 32], sizes = [1, 32], strides = [1, 1]} : vector<1x128xf32> to vector<1x32xf32>
    %1030 = vector.extract_strided_slice %1027 {offsets = [0, 64], sizes = [1, 32], strides = [1, 1]} : vector<1x128xf32> to vector<1x32xf32>
    %1031 = vector.extract_strided_slice %1026 {offsets = [0, 96], sizes = [1, 32], strides = [1, 1]} : vector<1x128xf32> to vector<1x32xf32>
    %1032 = arith.mulf %1029, %1008 : vector<1x32xf32>
    %1033 = arith.mulf %1028, %1030 : vector<1x32xf32>
    %1034 = arith.addf %1032, %1033 : vector<1x32xf32>
    %1035 = math.tanh %1034 : vector<1x32xf32>
    %1036 = arith.mulf %1031, %1035 : vector<1x32xf32>
    %cst_164 = arith.constant dense<0.000000e+00> : vector<1x32xf32>
    %1037 = tpu.matmul %1036, %5, %cst_164 {dimension_numbers = #tpu.dot_dimension_numbers<[1], [0], [0], [1], [0, 0, 1, 1], [], []>} : vector<1x32xf32>, vector<32x32xf32>, vector<1x32xf32> -> vector<1x32xf32>
    %1038 = arith.addf %1037, %6 : vector<1x32xf32>
    %cst_165 = arith.constant dense<0xFF800000> : vector<1xf32>
    %1039 = vector.multi_reduction <maximumf>, %1038, %cst_165 [1] : vector<1x32xf32> to vector<1xf32>
    %1040 = vector.shape_cast %1039 : vector<1xf32> to vector<1x1xf32>
    %1041 = vector.broadcast %1040 : vector<1x1xf32> to vector<1x32xf32>
    %1042 = arith.cmpf oeq, %1038, %1041 : vector<1x32xf32>
    %c32_i32_166 = arith.constant 32 : i32
    %1043 = vector.broadcast %c32_i32_166 : i32 to vector<1x32xi32>
    %1044 = arith.select %1042, %8, %1043 : vector<1x32xi1>, vector<1x32xi32>
    %cst_167 = arith.constant dense<2147483647> : vector<1xi32>
    %1045 = vector.multi_reduction <minsi>, %1044, %cst_167 [1] : vector<1x32xi32> to vector<1xi32>
    %1046 = vector.shape_cast %1045 : vector<1xi32> to vector<1x1xi32>
    %c2_i32_168 = arith.constant 2 : i32
    %1047 = vector.broadcast %c2_i32_168 : i32 to vector<1x1xi32>
    %1048 = arith.cmpi eq, %1046, %1047 : vector<1x1xi32>
    %1049 = arith.extui %1048 : vector<1x1xi1> to vector<1x1xi32>
    %c1_i32_169 = arith.constant 1 : i32
    %1050 = vector.broadcast %c1_i32_169 : i32 to vector<1x1xi32>
    %1051 = arith.subi %1050, %1014 : vector<1x1xi32>
    %c1_i32_170 = arith.constant 1 : i32
    %1052 = vector.broadcast %c1_i32_170 : i32 to vector<1x1xi32>
    %1053 = arith.subi %1052, %1049 : vector<1x1xi32>
    %1054 = arith.muli %1051, %1053 : vector<1x1xi32>
    %c7_i32_171 = arith.constant 7 : i32
    %1055 = vector.broadcast %c7_i32_171 : i32 to vector<1x128xi32>
    %1056 = arith.cmpi eq, %507, %1055 : vector<1x128xi32>
    %1057 = arith.extui %1056 : vector<1x128xi1> to vector<1x128xi32>
    %1058 = vector.broadcast %1054 : vector<1x1xi32> to vector<1x128xi32>
    %1059 = arith.muli %1057, %1058 : vector<1x128xi32>
    %1060 = vector.broadcast %1046 : vector<1x1xi32> to vector<1x128xi32>
    %1061 = arith.muli %1059, %1060 : vector<1x128xi32>
    %c1_i32_172 = arith.constant 1 : i32
    %1062 = vector.broadcast %c1_i32_172 : i32 to vector<1x128xi32>
    %1063 = arith.subi %1062, %1059 : vector<1x128xi32>
    %1064 = arith.muli %1063, %993 : vector<1x128xi32>
    %1065 = arith.addi %1061, %1064 : vector<1x128xi32>
    %1066 = arith.sitofp %1051 : vector<1x1xi32> to vector<1x1xf32>
    %1067 = vector.broadcast %1066 : vector<1x1xf32> to vector<1x32xf32>
    %1068 = arith.mulf %1067, %1036 : vector<1x32xf32>
    %cst_173 = arith.constant 1.000000e+00 : f32
    %1069 = vector.broadcast %cst_173 : f32 to vector<1x1xf32>
    %1070 = arith.subf %1069, %1066 : vector<1x1xf32>
    %1071 = vector.broadcast %1070 : vector<1x1xf32> to vector<1x32xf32>
    %1072 = arith.mulf %1071, %1001 : vector<1x32xf32>
    %1073 = arith.addf %1068, %1072 : vector<1x32xf32>
    %1074 = vector.broadcast %1066 : vector<1x1xf32> to vector<1x32xf32>
    %1075 = arith.mulf %1074, %1034 : vector<1x32xf32>
    %cst_174 = arith.constant 1.000000e+00 : f32
    %1076 = vector.broadcast %cst_174 : f32 to vector<1x1xf32>
    %1077 = arith.subf %1076, %1066 : vector<1x1xf32>
    %1078 = vector.broadcast %1077 : vector<1x1xf32> to vector<1x32xf32>
    %1079 = arith.mulf %1078, %1008 : vector<1x32xf32>
    %1080 = arith.addf %1075, %1079 : vector<1x32xf32>
    %1081 = arith.muli %1051, %1046 : vector<1x1xi32>
    %c1_i32_175 = arith.constant 1 : i32
    %1082 = vector.broadcast %c1_i32_175 : i32 to vector<1x1xi32>
    %1083 = arith.subi %1082, %1051 : vector<1x1xi32>
    %1084 = arith.muli %1083, %1013 : vector<1x1xi32>
    %1085 = arith.addi %1081, %1084 : vector<1x1xi32>
    %1086 = arith.maxsi %1014, %1049 : vector<1x1xi32>
    %1087 = vector.broadcast %1085 : vector<1x1xi32> to vector<1x32xi32>
    %1088 = arith.cmpi eq, %8, %1087 : vector<1x32xi32>
    %1089 = arith.extui %1088 : vector<1x32xi1> to vector<1x32xi32>
    %1090 = arith.sitofp %1089 : vector<1x32xi32> to vector<1x32xf32>
    %1091 = tpu.concatenate %1090, %1073 in 1 : vector<1x32xf32>, vector<1x32xf32> -> vector<1x64xf32>
    %cst_176 = arith.constant dense<0.000000e+00> : vector<1x128xf32>
    %1092 = tpu.matmul %1091, %3, %cst_176 {dimension_numbers = #tpu.dot_dimension_numbers<[1], [0], [0], [1], [0, 0, 1, 1], [], []>} : vector<1x64xf32>, vector<64x128xf32>, vector<1x128xf32> -> vector<1x128xf32>
    %1093 = arith.addf %1092, %4 : vector<1x128xf32>
    %1094 = arith.negf %1093 : vector<1x128xf32>
    %1095 = math.exp %1094 : vector<1x128xf32>
    %cst_177 = arith.constant 1.000000e+00 : f32
    %1096 = vector.broadcast %cst_177 : f32 to vector<1x128xf32>
    %1097 = arith.addf %1096, %1095 : vector<1x128xf32>
    %1098 = arith.divf %1096, %1097 : vector<1x128xf32>
    %1099 = math.tanh %1093 : vector<1x128xf32>
    %1100 = vector.extract_strided_slice %1098 {offsets = [0, 0], sizes = [1, 32], strides = [1, 1]} : vector<1x128xf32> to vector<1x32xf32>
    %1101 = vector.extract_strided_slice %1098 {offsets = [0, 32], sizes = [1, 32], strides = [1, 1]} : vector<1x128xf32> to vector<1x32xf32>
    %1102 = vector.extract_strided_slice %1099 {offsets = [0, 64], sizes = [1, 32], strides = [1, 1]} : vector<1x128xf32> to vector<1x32xf32>
    %1103 = vector.extract_strided_slice %1098 {offsets = [0, 96], sizes = [1, 32], strides = [1, 1]} : vector<1x128xf32> to vector<1x32xf32>
    %1104 = arith.mulf %1101, %1080 : vector<1x32xf32>
    %1105 = arith.mulf %1100, %1102 : vector<1x32xf32>
    %1106 = arith.addf %1104, %1105 : vector<1x32xf32>
    %1107 = math.tanh %1106 : vector<1x32xf32>
    %1108 = arith.mulf %1103, %1107 : vector<1x32xf32>
    %cst_178 = arith.constant dense<0.000000e+00> : vector<1x32xf32>
    %1109 = tpu.matmul %1108, %5, %cst_178 {dimension_numbers = #tpu.dot_dimension_numbers<[1], [0], [0], [1], [0, 0, 1, 1], [], []>} : vector<1x32xf32>, vector<32x32xf32>, vector<1x32xf32> -> vector<1x32xf32>
    %1110 = arith.addf %1109, %6 : vector<1x32xf32>
    %cst_179 = arith.constant dense<0xFF800000> : vector<1xf32>
    %1111 = vector.multi_reduction <maximumf>, %1110, %cst_179 [1] : vector<1x32xf32> to vector<1xf32>
    %1112 = vector.shape_cast %1111 : vector<1xf32> to vector<1x1xf32>
    %1113 = vector.broadcast %1112 : vector<1x1xf32> to vector<1x32xf32>
    %1114 = arith.cmpf oeq, %1110, %1113 : vector<1x32xf32>
    %c32_i32_180 = arith.constant 32 : i32
    %1115 = vector.broadcast %c32_i32_180 : i32 to vector<1x32xi32>
    %1116 = arith.select %1114, %8, %1115 : vector<1x32xi1>, vector<1x32xi32>
    %cst_181 = arith.constant dense<2147483647> : vector<1xi32>
    %1117 = vector.multi_reduction <minsi>, %1116, %cst_181 [1] : vector<1x32xi32> to vector<1xi32>
    %1118 = vector.shape_cast %1117 : vector<1xi32> to vector<1x1xi32>
    %c2_i32_182 = arith.constant 2 : i32
    %1119 = vector.broadcast %c2_i32_182 : i32 to vector<1x1xi32>
    %1120 = arith.cmpi eq, %1118, %1119 : vector<1x1xi32>
    %1121 = arith.extui %1120 : vector<1x1xi1> to vector<1x1xi32>
    %c1_i32_183 = arith.constant 1 : i32
    %1122 = vector.broadcast %c1_i32_183 : i32 to vector<1x1xi32>
    %1123 = arith.subi %1122, %1086 : vector<1x1xi32>
    %c1_i32_184 = arith.constant 1 : i32
    %1124 = vector.broadcast %c1_i32_184 : i32 to vector<1x1xi32>
    %1125 = arith.subi %1124, %1121 : vector<1x1xi32>
    %1126 = arith.muli %1123, %1125 : vector<1x1xi32>
    %c8_i32 = arith.constant 8 : i32
    %1127 = vector.broadcast %c8_i32 : i32 to vector<1x128xi32>
    %1128 = arith.cmpi eq, %507, %1127 : vector<1x128xi32>
    %1129 = arith.extui %1128 : vector<1x128xi1> to vector<1x128xi32>
    %1130 = vector.broadcast %1126 : vector<1x1xi32> to vector<1x128xi32>
    %1131 = arith.muli %1129, %1130 : vector<1x128xi32>
    %1132 = vector.broadcast %1118 : vector<1x1xi32> to vector<1x128xi32>
    %1133 = arith.muli %1131, %1132 : vector<1x128xi32>
    %c1_i32_185 = arith.constant 1 : i32
    %1134 = vector.broadcast %c1_i32_185 : i32 to vector<1x128xi32>
    %1135 = arith.subi %1134, %1131 : vector<1x128xi32>
    %1136 = arith.muli %1135, %1065 : vector<1x128xi32>
    %1137 = arith.addi %1133, %1136 : vector<1x128xi32>
    %1138 = arith.sitofp %1123 : vector<1x1xi32> to vector<1x1xf32>
    %1139 = vector.broadcast %1138 : vector<1x1xf32> to vector<1x32xf32>
    %1140 = arith.mulf %1139, %1108 : vector<1x32xf32>
    %cst_186 = arith.constant 1.000000e+00 : f32
    %1141 = vector.broadcast %cst_186 : f32 to vector<1x1xf32>
    %1142 = arith.subf %1141, %1138 : vector<1x1xf32>
    %1143 = vector.broadcast %1142 : vector<1x1xf32> to vector<1x32xf32>
    %1144 = arith.mulf %1143, %1073 : vector<1x32xf32>
    %1145 = arith.addf %1140, %1144 : vector<1x32xf32>
    %1146 = vector.broadcast %1138 : vector<1x1xf32> to vector<1x32xf32>
    %1147 = arith.mulf %1146, %1106 : vector<1x32xf32>
    %cst_187 = arith.constant 1.000000e+00 : f32
    %1148 = vector.broadcast %cst_187 : f32 to vector<1x1xf32>
    %1149 = arith.subf %1148, %1138 : vector<1x1xf32>
    %1150 = vector.broadcast %1149 : vector<1x1xf32> to vector<1x32xf32>
    %1151 = arith.mulf %1150, %1080 : vector<1x32xf32>
    %1152 = arith.addf %1147, %1151 : vector<1x32xf32>
    %1153 = arith.muli %1123, %1118 : vector<1x1xi32>
    %c1_i32_188 = arith.constant 1 : i32
    %1154 = vector.broadcast %c1_i32_188 : i32 to vector<1x1xi32>
    %1155 = arith.subi %1154, %1123 : vector<1x1xi32>
    %1156 = arith.muli %1155, %1085 : vector<1x1xi32>
    %1157 = arith.addi %1153, %1156 : vector<1x1xi32>
    %1158 = arith.maxsi %1086, %1121 : vector<1x1xi32>
    %1159 = vector.broadcast %1157 : vector<1x1xi32> to vector<1x32xi32>
    %1160 = arith.cmpi eq, %8, %1159 : vector<1x32xi32>
    %1161 = arith.extui %1160 : vector<1x32xi1> to vector<1x32xi32>
    %1162 = arith.sitofp %1161 : vector<1x32xi32> to vector<1x32xf32>
    %1163 = tpu.concatenate %1162, %1145 in 1 : vector<1x32xf32>, vector<1x32xf32> -> vector<1x64xf32>
    %cst_189 = arith.constant dense<0.000000e+00> : vector<1x128xf32>
    %1164 = tpu.matmul %1163, %3, %cst_189 {dimension_numbers = #tpu.dot_dimension_numbers<[1], [0], [0], [1], [0, 0, 1, 1], [], []>} : vector<1x64xf32>, vector<64x128xf32>, vector<1x128xf32> -> vector<1x128xf32>
    %1165 = arith.addf %1164, %4 : vector<1x128xf32>
    %1166 = arith.negf %1165 : vector<1x128xf32>
    %1167 = math.exp %1166 : vector<1x128xf32>
    %cst_190 = arith.constant 1.000000e+00 : f32
    %1168 = vector.broadcast %cst_190 : f32 to vector<1x128xf32>
    %1169 = arith.addf %1168, %1167 : vector<1x128xf32>
    %1170 = arith.divf %1168, %1169 : vector<1x128xf32>
    %1171 = math.tanh %1165 : vector<1x128xf32>
    %1172 = vector.extract_strided_slice %1170 {offsets = [0, 0], sizes = [1, 32], strides = [1, 1]} : vector<1x128xf32> to vector<1x32xf32>
    %1173 = vector.extract_strided_slice %1170 {offsets = [0, 32], sizes = [1, 32], strides = [1, 1]} : vector<1x128xf32> to vector<1x32xf32>
    %1174 = vector.extract_strided_slice %1171 {offsets = [0, 64], sizes = [1, 32], strides = [1, 1]} : vector<1x128xf32> to vector<1x32xf32>
    %1175 = vector.extract_strided_slice %1170 {offsets = [0, 96], sizes = [1, 32], strides = [1, 1]} : vector<1x128xf32> to vector<1x32xf32>
    %1176 = arith.mulf %1173, %1152 : vector<1x32xf32>
    %1177 = arith.mulf %1172, %1174 : vector<1x32xf32>
    %1178 = arith.addf %1176, %1177 : vector<1x32xf32>
    %1179 = math.tanh %1178 : vector<1x32xf32>
    %1180 = arith.mulf %1175, %1179 : vector<1x32xf32>
    %cst_191 = arith.constant dense<0.000000e+00> : vector<1x32xf32>
    %1181 = tpu.matmul %1180, %5, %cst_191 {dimension_numbers = #tpu.dot_dimension_numbers<[1], [0], [0], [1], [0, 0, 1, 1], [], []>} : vector<1x32xf32>, vector<32x32xf32>, vector<1x32xf32> -> vector<1x32xf32>
    %1182 = arith.addf %1181, %6 : vector<1x32xf32>
    %cst_192 = arith.constant dense<0xFF800000> : vector<1xf32>
    %1183 = vector.multi_reduction <maximumf>, %1182, %cst_192 [1] : vector<1x32xf32> to vector<1xf32>
    %1184 = vector.shape_cast %1183 : vector<1xf32> to vector<1x1xf32>
    %1185 = vector.broadcast %1184 : vector<1x1xf32> to vector<1x32xf32>
    %1186 = arith.cmpf oeq, %1182, %1185 : vector<1x32xf32>
    %c32_i32_193 = arith.constant 32 : i32
    %1187 = vector.broadcast %c32_i32_193 : i32 to vector<1x32xi32>
    %1188 = arith.select %1186, %8, %1187 : vector<1x32xi1>, vector<1x32xi32>
    %cst_194 = arith.constant dense<2147483647> : vector<1xi32>
    %1189 = vector.multi_reduction <minsi>, %1188, %cst_194 [1] : vector<1x32xi32> to vector<1xi32>
    %1190 = vector.shape_cast %1189 : vector<1xi32> to vector<1x1xi32>
    %c2_i32_195 = arith.constant 2 : i32
    %1191 = vector.broadcast %c2_i32_195 : i32 to vector<1x1xi32>
    %1192 = arith.cmpi eq, %1190, %1191 : vector<1x1xi32>
    %1193 = arith.extui %1192 : vector<1x1xi1> to vector<1x1xi32>
    %c1_i32_196 = arith.constant 1 : i32
    %1194 = vector.broadcast %c1_i32_196 : i32 to vector<1x1xi32>
    %1195 = arith.subi %1194, %1158 : vector<1x1xi32>
    %c1_i32_197 = arith.constant 1 : i32
    %1196 = vector.broadcast %c1_i32_197 : i32 to vector<1x1xi32>
    %1197 = arith.subi %1196, %1193 : vector<1x1xi32>
    %1198 = arith.muli %1195, %1197 : vector<1x1xi32>
    %c9_i32 = arith.constant 9 : i32
    %1199 = vector.broadcast %c9_i32 : i32 to vector<1x128xi32>
    %1200 = arith.cmpi eq, %507, %1199 : vector<1x128xi32>
    %1201 = arith.extui %1200 : vector<1x128xi1> to vector<1x128xi32>
    %1202 = vector.broadcast %1198 : vector<1x1xi32> to vector<1x128xi32>
    %1203 = arith.muli %1201, %1202 : vector<1x128xi32>
    %1204 = vector.broadcast %1190 : vector<1x1xi32> to vector<1x128xi32>
    %1205 = arith.muli %1203, %1204 : vector<1x128xi32>
    %c1_i32_198 = arith.constant 1 : i32
    %1206 = vector.broadcast %c1_i32_198 : i32 to vector<1x128xi32>
    %1207 = arith.subi %1206, %1203 : vector<1x128xi32>
    %1208 = arith.muli %1207, %1137 : vector<1x128xi32>
    %1209 = arith.addi %1205, %1208 : vector<1x128xi32>
    %1210 = arith.sitofp %1195 : vector<1x1xi32> to vector<1x1xf32>
    %1211 = vector.broadcast %1210 : vector<1x1xf32> to vector<1x32xf32>
    %1212 = arith.mulf %1211, %1180 : vector<1x32xf32>
    %cst_199 = arith.constant 1.000000e+00 : f32
    %1213 = vector.broadcast %cst_199 : f32 to vector<1x1xf32>
    %1214 = arith.subf %1213, %1210 : vector<1x1xf32>
    %1215 = vector.broadcast %1214 : vector<1x1xf32> to vector<1x32xf32>
    %1216 = arith.mulf %1215, %1145 : vector<1x32xf32>
    %1217 = arith.addf %1212, %1216 : vector<1x32xf32>
    %1218 = vector.broadcast %1210 : vector<1x1xf32> to vector<1x32xf32>
    %1219 = arith.mulf %1218, %1178 : vector<1x32xf32>
    %cst_200 = arith.constant 1.000000e+00 : f32
    %1220 = vector.broadcast %cst_200 : f32 to vector<1x1xf32>
    %1221 = arith.subf %1220, %1210 : vector<1x1xf32>
    %1222 = vector.broadcast %1221 : vector<1x1xf32> to vector<1x32xf32>
    %1223 = arith.mulf %1222, %1152 : vector<1x32xf32>
    %1224 = arith.addf %1219, %1223 : vector<1x32xf32>
    %1225 = arith.muli %1195, %1190 : vector<1x1xi32>
    %c1_i32_201 = arith.constant 1 : i32
    %1226 = vector.broadcast %c1_i32_201 : i32 to vector<1x1xi32>
    %1227 = arith.subi %1226, %1195 : vector<1x1xi32>
    %1228 = arith.muli %1227, %1157 : vector<1x1xi32>
    %1229 = arith.addi %1225, %1228 : vector<1x1xi32>
    %1230 = arith.maxsi %1158, %1193 : vector<1x1xi32>
    %1231 = vector.broadcast %1229 : vector<1x1xi32> to vector<1x32xi32>
    %1232 = arith.cmpi eq, %8, %1231 : vector<1x32xi32>
    %1233 = arith.extui %1232 : vector<1x32xi1> to vector<1x32xi32>
    %1234 = arith.sitofp %1233 : vector<1x32xi32> to vector<1x32xf32>
    %1235 = tpu.concatenate %1234, %1217 in 1 : vector<1x32xf32>, vector<1x32xf32> -> vector<1x64xf32>
    %cst_202 = arith.constant dense<0.000000e+00> : vector<1x128xf32>
    %1236 = tpu.matmul %1235, %3, %cst_202 {dimension_numbers = #tpu.dot_dimension_numbers<[1], [0], [0], [1], [0, 0, 1, 1], [], []>} : vector<1x64xf32>, vector<64x128xf32>, vector<1x128xf32> -> vector<1x128xf32>
    %1237 = arith.addf %1236, %4 : vector<1x128xf32>
    %1238 = arith.negf %1237 : vector<1x128xf32>
    %1239 = math.exp %1238 : vector<1x128xf32>
    %cst_203 = arith.constant 1.000000e+00 : f32
    %1240 = vector.broadcast %cst_203 : f32 to vector<1x128xf32>
    %1241 = arith.addf %1240, %1239 : vector<1x128xf32>
    %1242 = arith.divf %1240, %1241 : vector<1x128xf32>
    %1243 = math.tanh %1237 : vector<1x128xf32>
    %1244 = vector.extract_strided_slice %1242 {offsets = [0, 0], sizes = [1, 32], strides = [1, 1]} : vector<1x128xf32> to vector<1x32xf32>
    %1245 = vector.extract_strided_slice %1242 {offsets = [0, 32], sizes = [1, 32], strides = [1, 1]} : vector<1x128xf32> to vector<1x32xf32>
    %1246 = vector.extract_strided_slice %1243 {offsets = [0, 64], sizes = [1, 32], strides = [1, 1]} : vector<1x128xf32> to vector<1x32xf32>
    %1247 = vector.extract_strided_slice %1242 {offsets = [0, 96], sizes = [1, 32], strides = [1, 1]} : vector<1x128xf32> to vector<1x32xf32>
    %1248 = arith.mulf %1245, %1224 : vector<1x32xf32>
    %1249 = arith.mulf %1244, %1246 : vector<1x32xf32>
    %1250 = arith.addf %1248, %1249 : vector<1x32xf32>
    %1251 = math.tanh %1250 : vector<1x32xf32>
    %1252 = arith.mulf %1247, %1251 : vector<1x32xf32>
    %cst_204 = arith.constant dense<0.000000e+00> : vector<1x32xf32>
    %1253 = tpu.matmul %1252, %5, %cst_204 {dimension_numbers = #tpu.dot_dimension_numbers<[1], [0], [0], [1], [0, 0, 1, 1], [], []>} : vector<1x32xf32>, vector<32x32xf32>, vector<1x32xf32> -> vector<1x32xf32>
    %1254 = arith.addf %1253, %6 : vector<1x32xf32>
    %cst_205 = arith.constant dense<0xFF800000> : vector<1xf32>
    %1255 = vector.multi_reduction <maximumf>, %1254, %cst_205 [1] : vector<1x32xf32> to vector<1xf32>
    %1256 = vector.shape_cast %1255 : vector<1xf32> to vector<1x1xf32>
    %1257 = vector.broadcast %1256 : vector<1x1xf32> to vector<1x32xf32>
    %1258 = arith.cmpf oeq, %1254, %1257 : vector<1x32xf32>
    %c32_i32_206 = arith.constant 32 : i32
    %1259 = vector.broadcast %c32_i32_206 : i32 to vector<1x32xi32>
    %1260 = arith.select %1258, %8, %1259 : vector<1x32xi1>, vector<1x32xi32>
    %cst_207 = arith.constant dense<2147483647> : vector<1xi32>
    %1261 = vector.multi_reduction <minsi>, %1260, %cst_207 [1] : vector<1x32xi32> to vector<1xi32>
    %1262 = vector.shape_cast %1261 : vector<1xi32> to vector<1x1xi32>
    %c2_i32_208 = arith.constant 2 : i32
    %1263 = vector.broadcast %c2_i32_208 : i32 to vector<1x1xi32>
    %1264 = arith.cmpi eq, %1262, %1263 : vector<1x1xi32>
    %1265 = arith.extui %1264 : vector<1x1xi1> to vector<1x1xi32>
    %c1_i32_209 = arith.constant 1 : i32
    %1266 = vector.broadcast %c1_i32_209 : i32 to vector<1x1xi32>
    %1267 = arith.subi %1266, %1230 : vector<1x1xi32>
    %c1_i32_210 = arith.constant 1 : i32
    %1268 = vector.broadcast %c1_i32_210 : i32 to vector<1x1xi32>
    %1269 = arith.subi %1268, %1265 : vector<1x1xi32>
    %1270 = arith.muli %1267, %1269 : vector<1x1xi32>
    %c10_i32 = arith.constant 10 : i32
    %1271 = vector.broadcast %c10_i32 : i32 to vector<1x128xi32>
    %1272 = arith.cmpi eq, %507, %1271 : vector<1x128xi32>
    %1273 = arith.extui %1272 : vector<1x128xi1> to vector<1x128xi32>
    %1274 = vector.broadcast %1270 : vector<1x1xi32> to vector<1x128xi32>
    %1275 = arith.muli %1273, %1274 : vector<1x128xi32>
    %1276 = vector.broadcast %1262 : vector<1x1xi32> to vector<1x128xi32>
    %1277 = arith.muli %1275, %1276 : vector<1x128xi32>
    %c1_i32_211 = arith.constant 1 : i32
    %1278 = vector.broadcast %c1_i32_211 : i32 to vector<1x128xi32>
    %1279 = arith.subi %1278, %1275 : vector<1x128xi32>
    %1280 = arith.muli %1279, %1209 : vector<1x128xi32>
    %1281 = arith.addi %1277, %1280 : vector<1x128xi32>
    %1282 = arith.sitofp %1267 : vector<1x1xi32> to vector<1x1xf32>
    %1283 = vector.broadcast %1282 : vector<1x1xf32> to vector<1x32xf32>
    %1284 = arith.mulf %1283, %1252 : vector<1x32xf32>
    %cst_212 = arith.constant 1.000000e+00 : f32
    %1285 = vector.broadcast %cst_212 : f32 to vector<1x1xf32>
    %1286 = arith.subf %1285, %1282 : vector<1x1xf32>
    %1287 = vector.broadcast %1286 : vector<1x1xf32> to vector<1x32xf32>
    %1288 = arith.mulf %1287, %1217 : vector<1x32xf32>
    %1289 = arith.addf %1284, %1288 : vector<1x32xf32>
    %1290 = vector.broadcast %1282 : vector<1x1xf32> to vector<1x32xf32>
    %1291 = arith.mulf %1290, %1250 : vector<1x32xf32>
    %cst_213 = arith.constant 1.000000e+00 : f32
    %1292 = vector.broadcast %cst_213 : f32 to vector<1x1xf32>
    %1293 = arith.subf %1292, %1282 : vector<1x1xf32>
    %1294 = vector.broadcast %1293 : vector<1x1xf32> to vector<1x32xf32>
    %1295 = arith.mulf %1294, %1224 : vector<1x32xf32>
    %1296 = arith.addf %1291, %1295 : vector<1x32xf32>
    %1297 = arith.muli %1267, %1262 : vector<1x1xi32>
    %c1_i32_214 = arith.constant 1 : i32
    %1298 = vector.broadcast %c1_i32_214 : i32 to vector<1x1xi32>
    %1299 = arith.subi %1298, %1267 : vector<1x1xi32>
    %1300 = arith.muli %1299, %1229 : vector<1x1xi32>
    %1301 = arith.addi %1297, %1300 : vector<1x1xi32>
    %1302 = arith.maxsi %1230, %1265 : vector<1x1xi32>
    %1303 = vector.broadcast %1301 : vector<1x1xi32> to vector<1x32xi32>
    %1304 = arith.cmpi eq, %8, %1303 : vector<1x32xi32>
    %1305 = arith.extui %1304 : vector<1x32xi1> to vector<1x32xi32>
    %1306 = arith.sitofp %1305 : vector<1x32xi32> to vector<1x32xf32>
    %1307 = tpu.concatenate %1306, %1289 in 1 : vector<1x32xf32>, vector<1x32xf32> -> vector<1x64xf32>
    %cst_215 = arith.constant dense<0.000000e+00> : vector<1x128xf32>
    %1308 = tpu.matmul %1307, %3, %cst_215 {dimension_numbers = #tpu.dot_dimension_numbers<[1], [0], [0], [1], [0, 0, 1, 1], [], []>} : vector<1x64xf32>, vector<64x128xf32>, vector<1x128xf32> -> vector<1x128xf32>
    %1309 = arith.addf %1308, %4 : vector<1x128xf32>
    %1310 = arith.negf %1309 : vector<1x128xf32>
    %1311 = math.exp %1310 : vector<1x128xf32>
    %cst_216 = arith.constant 1.000000e+00 : f32
    %1312 = vector.broadcast %cst_216 : f32 to vector<1x128xf32>
    %1313 = arith.addf %1312, %1311 : vector<1x128xf32>
    %1314 = arith.divf %1312, %1313 : vector<1x128xf32>
    %1315 = math.tanh %1309 : vector<1x128xf32>
    %1316 = vector.extract_strided_slice %1314 {offsets = [0, 0], sizes = [1, 32], strides = [1, 1]} : vector<1x128xf32> to vector<1x32xf32>
    %1317 = vector.extract_strided_slice %1314 {offsets = [0, 32], sizes = [1, 32], strides = [1, 1]} : vector<1x128xf32> to vector<1x32xf32>
    %1318 = vector.extract_strided_slice %1315 {offsets = [0, 64], sizes = [1, 32], strides = [1, 1]} : vector<1x128xf32> to vector<1x32xf32>
    %1319 = vector.extract_strided_slice %1314 {offsets = [0, 96], sizes = [1, 32], strides = [1, 1]} : vector<1x128xf32> to vector<1x32xf32>
    %1320 = arith.mulf %1317, %1296 : vector<1x32xf32>
    %1321 = arith.mulf %1316, %1318 : vector<1x32xf32>
    %1322 = arith.addf %1320, %1321 : vector<1x32xf32>
    %1323 = math.tanh %1322 : vector<1x32xf32>
    %1324 = arith.mulf %1319, %1323 : vector<1x32xf32>
    %cst_217 = arith.constant dense<0.000000e+00> : vector<1x32xf32>
    %1325 = tpu.matmul %1324, %5, %cst_217 {dimension_numbers = #tpu.dot_dimension_numbers<[1], [0], [0], [1], [0, 0, 1, 1], [], []>} : vector<1x32xf32>, vector<32x32xf32>, vector<1x32xf32> -> vector<1x32xf32>
    %1326 = arith.addf %1325, %6 : vector<1x32xf32>
    %cst_218 = arith.constant dense<0xFF800000> : vector<1xf32>
    %1327 = vector.multi_reduction <maximumf>, %1326, %cst_218 [1] : vector<1x32xf32> to vector<1xf32>
    %1328 = vector.shape_cast %1327 : vector<1xf32> to vector<1x1xf32>
    %1329 = vector.broadcast %1328 : vector<1x1xf32> to vector<1x32xf32>
    %1330 = arith.cmpf oeq, %1326, %1329 : vector<1x32xf32>
    %c32_i32_219 = arith.constant 32 : i32
    %1331 = vector.broadcast %c32_i32_219 : i32 to vector<1x32xi32>
    %1332 = arith.select %1330, %8, %1331 : vector<1x32xi1>, vector<1x32xi32>
    %cst_220 = arith.constant dense<2147483647> : vector<1xi32>
    %1333 = vector.multi_reduction <minsi>, %1332, %cst_220 [1] : vector<1x32xi32> to vector<1xi32>
    %1334 = vector.shape_cast %1333 : vector<1xi32> to vector<1x1xi32>
    %c2_i32_221 = arith.constant 2 : i32
    %1335 = vector.broadcast %c2_i32_221 : i32 to vector<1x1xi32>
    %1336 = arith.cmpi eq, %1334, %1335 : vector<1x1xi32>
    %1337 = arith.extui %1336 : vector<1x1xi1> to vector<1x1xi32>
    %c1_i32_222 = arith.constant 1 : i32
    %1338 = vector.broadcast %c1_i32_222 : i32 to vector<1x1xi32>
    %1339 = arith.subi %1338, %1302 : vector<1x1xi32>
    %c1_i32_223 = arith.constant 1 : i32
    %1340 = vector.broadcast %c1_i32_223 : i32 to vector<1x1xi32>
    %1341 = arith.subi %1340, %1337 : vector<1x1xi32>
    %1342 = arith.muli %1339, %1341 : vector<1x1xi32>
    %c11_i32 = arith.constant 11 : i32
    %1343 = vector.broadcast %c11_i32 : i32 to vector<1x128xi32>
    %1344 = arith.cmpi eq, %507, %1343 : vector<1x128xi32>
    %1345 = arith.extui %1344 : vector<1x128xi1> to vector<1x128xi32>
    %1346 = vector.broadcast %1342 : vector<1x1xi32> to vector<1x128xi32>
    %1347 = arith.muli %1345, %1346 : vector<1x128xi32>
    %1348 = vector.broadcast %1334 : vector<1x1xi32> to vector<1x128xi32>
    %1349 = arith.muli %1347, %1348 : vector<1x128xi32>
    %c1_i32_224 = arith.constant 1 : i32
    %1350 = vector.broadcast %c1_i32_224 : i32 to vector<1x128xi32>
    %1351 = arith.subi %1350, %1347 : vector<1x128xi32>
    %1352 = arith.muli %1351, %1281 : vector<1x128xi32>
    %1353 = arith.addi %1349, %1352 : vector<1x128xi32>
    %1354 = arith.sitofp %1339 : vector<1x1xi32> to vector<1x1xf32>
    %1355 = vector.broadcast %1354 : vector<1x1xf32> to vector<1x32xf32>
    %1356 = arith.mulf %1355, %1324 : vector<1x32xf32>
    %cst_225 = arith.constant 1.000000e+00 : f32
    %1357 = vector.broadcast %cst_225 : f32 to vector<1x1xf32>
    %1358 = arith.subf %1357, %1354 : vector<1x1xf32>
    %1359 = vector.broadcast %1358 : vector<1x1xf32> to vector<1x32xf32>
    %1360 = arith.mulf %1359, %1289 : vector<1x32xf32>
    %1361 = arith.addf %1356, %1360 : vector<1x32xf32>
    %1362 = vector.broadcast %1354 : vector<1x1xf32> to vector<1x32xf32>
    %1363 = arith.mulf %1362, %1322 : vector<1x32xf32>
    %cst_226 = arith.constant 1.000000e+00 : f32
    %1364 = vector.broadcast %cst_226 : f32 to vector<1x1xf32>
    %1365 = arith.subf %1364, %1354 : vector<1x1xf32>
    %1366 = vector.broadcast %1365 : vector<1x1xf32> to vector<1x32xf32>
    %1367 = arith.mulf %1366, %1296 : vector<1x32xf32>
    %1368 = arith.addf %1363, %1367 : vector<1x32xf32>
    %1369 = arith.muli %1339, %1334 : vector<1x1xi32>
    %c1_i32_227 = arith.constant 1 : i32
    %1370 = vector.broadcast %c1_i32_227 : i32 to vector<1x1xi32>
    %1371 = arith.subi %1370, %1339 : vector<1x1xi32>
    %1372 = arith.muli %1371, %1301 : vector<1x1xi32>
    %1373 = arith.addi %1369, %1372 : vector<1x1xi32>
    %1374 = arith.maxsi %1302, %1337 : vector<1x1xi32>
    %1375 = vector.broadcast %1373 : vector<1x1xi32> to vector<1x32xi32>
    %1376 = arith.cmpi eq, %8, %1375 : vector<1x32xi32>
    %1377 = arith.extui %1376 : vector<1x32xi1> to vector<1x32xi32>
    %1378 = arith.sitofp %1377 : vector<1x32xi32> to vector<1x32xf32>
    %1379 = tpu.concatenate %1378, %1361 in 1 : vector<1x32xf32>, vector<1x32xf32> -> vector<1x64xf32>
    %cst_228 = arith.constant dense<0.000000e+00> : vector<1x128xf32>
    %1380 = tpu.matmul %1379, %3, %cst_228 {dimension_numbers = #tpu.dot_dimension_numbers<[1], [0], [0], [1], [0, 0, 1, 1], [], []>} : vector<1x64xf32>, vector<64x128xf32>, vector<1x128xf32> -> vector<1x128xf32>
    %1381 = arith.addf %1380, %4 : vector<1x128xf32>
    %1382 = arith.negf %1381 : vector<1x128xf32>
    %1383 = math.exp %1382 : vector<1x128xf32>
    %cst_229 = arith.constant 1.000000e+00 : f32
    %1384 = vector.broadcast %cst_229 : f32 to vector<1x128xf32>
    %1385 = arith.addf %1384, %1383 : vector<1x128xf32>
    %1386 = arith.divf %1384, %1385 : vector<1x128xf32>
    %1387 = math.tanh %1381 : vector<1x128xf32>
    %1388 = vector.extract_strided_slice %1386 {offsets = [0, 0], sizes = [1, 32], strides = [1, 1]} : vector<1x128xf32> to vector<1x32xf32>
    %1389 = vector.extract_strided_slice %1386 {offsets = [0, 32], sizes = [1, 32], strides = [1, 1]} : vector<1x128xf32> to vector<1x32xf32>
    %1390 = vector.extract_strided_slice %1387 {offsets = [0, 64], sizes = [1, 32], strides = [1, 1]} : vector<1x128xf32> to vector<1x32xf32>
    %1391 = vector.extract_strided_slice %1386 {offsets = [0, 96], sizes = [1, 32], strides = [1, 1]} : vector<1x128xf32> to vector<1x32xf32>
    %1392 = arith.mulf %1389, %1368 : vector<1x32xf32>
    %1393 = arith.mulf %1388, %1390 : vector<1x32xf32>
    %1394 = arith.addf %1392, %1393 : vector<1x32xf32>
    %1395 = math.tanh %1394 : vector<1x32xf32>
    %1396 = arith.mulf %1391, %1395 : vector<1x32xf32>
    %cst_230 = arith.constant dense<0.000000e+00> : vector<1x32xf32>
    %1397 = tpu.matmul %1396, %5, %cst_230 {dimension_numbers = #tpu.dot_dimension_numbers<[1], [0], [0], [1], [0, 0, 1, 1], [], []>} : vector<1x32xf32>, vector<32x32xf32>, vector<1x32xf32> -> vector<1x32xf32>
    %1398 = arith.addf %1397, %6 : vector<1x32xf32>
    %cst_231 = arith.constant dense<0xFF800000> : vector<1xf32>
    %1399 = vector.multi_reduction <maximumf>, %1398, %cst_231 [1] : vector<1x32xf32> to vector<1xf32>
    %1400 = vector.shape_cast %1399 : vector<1xf32> to vector<1x1xf32>
    %1401 = vector.broadcast %1400 : vector<1x1xf32> to vector<1x32xf32>
    %1402 = arith.cmpf oeq, %1398, %1401 : vector<1x32xf32>
    %c32_i32_232 = arith.constant 32 : i32
    %1403 = vector.broadcast %c32_i32_232 : i32 to vector<1x32xi32>
    %1404 = arith.select %1402, %8, %1403 : vector<1x32xi1>, vector<1x32xi32>
    %cst_233 = arith.constant dense<2147483647> : vector<1xi32>
    %1405 = vector.multi_reduction <minsi>, %1404, %cst_233 [1] : vector<1x32xi32> to vector<1xi32>
    %1406 = vector.shape_cast %1405 : vector<1xi32> to vector<1x1xi32>
    %c2_i32_234 = arith.constant 2 : i32
    %1407 = vector.broadcast %c2_i32_234 : i32 to vector<1x1xi32>
    %1408 = arith.cmpi eq, %1406, %1407 : vector<1x1xi32>
    %1409 = arith.extui %1408 : vector<1x1xi1> to vector<1x1xi32>
    %c1_i32_235 = arith.constant 1 : i32
    %1410 = vector.broadcast %c1_i32_235 : i32 to vector<1x1xi32>
    %1411 = arith.subi %1410, %1374 : vector<1x1xi32>
    %c1_i32_236 = arith.constant 1 : i32
    %1412 = vector.broadcast %c1_i32_236 : i32 to vector<1x1xi32>
    %1413 = arith.subi %1412, %1409 : vector<1x1xi32>
    %1414 = arith.muli %1411, %1413 : vector<1x1xi32>
    %c12_i32 = arith.constant 12 : i32
    %1415 = vector.broadcast %c12_i32 : i32 to vector<1x128xi32>
    %1416 = arith.cmpi eq, %507, %1415 : vector<1x128xi32>
    %1417 = arith.extui %1416 : vector<1x128xi1> to vector<1x128xi32>
    %1418 = vector.broadcast %1414 : vector<1x1xi32> to vector<1x128xi32>
    %1419 = arith.muli %1417, %1418 : vector<1x128xi32>
    %1420 = vector.broadcast %1406 : vector<1x1xi32> to vector<1x128xi32>
    %1421 = arith.muli %1419, %1420 : vector<1x128xi32>
    %c1_i32_237 = arith.constant 1 : i32
    %1422 = vector.broadcast %c1_i32_237 : i32 to vector<1x128xi32>
    %1423 = arith.subi %1422, %1419 : vector<1x128xi32>
    %1424 = arith.muli %1423, %1353 : vector<1x128xi32>
    %1425 = arith.addi %1421, %1424 : vector<1x128xi32>
    %1426 = arith.sitofp %1411 : vector<1x1xi32> to vector<1x1xf32>
    %1427 = vector.broadcast %1426 : vector<1x1xf32> to vector<1x32xf32>
    %1428 = arith.mulf %1427, %1396 : vector<1x32xf32>
    %cst_238 = arith.constant 1.000000e+00 : f32
    %1429 = vector.broadcast %cst_238 : f32 to vector<1x1xf32>
    %1430 = arith.subf %1429, %1426 : vector<1x1xf32>
    %1431 = vector.broadcast %1430 : vector<1x1xf32> to vector<1x32xf32>
    %1432 = arith.mulf %1431, %1361 : vector<1x32xf32>
    %1433 = arith.addf %1428, %1432 : vector<1x32xf32>
    %1434 = vector.broadcast %1426 : vector<1x1xf32> to vector<1x32xf32>
    %1435 = arith.mulf %1434, %1394 : vector<1x32xf32>
    %cst_239 = arith.constant 1.000000e+00 : f32
    %1436 = vector.broadcast %cst_239 : f32 to vector<1x1xf32>
    %1437 = arith.subf %1436, %1426 : vector<1x1xf32>
    %1438 = vector.broadcast %1437 : vector<1x1xf32> to vector<1x32xf32>
    %1439 = arith.mulf %1438, %1368 : vector<1x32xf32>
    %1440 = arith.addf %1435, %1439 : vector<1x32xf32>
    %1441 = arith.muli %1411, %1406 : vector<1x1xi32>
    %c1_i32_240 = arith.constant 1 : i32
    %1442 = vector.broadcast %c1_i32_240 : i32 to vector<1x1xi32>
    %1443 = arith.subi %1442, %1411 : vector<1x1xi32>
    %1444 = arith.muli %1443, %1373 : vector<1x1xi32>
    %1445 = arith.addi %1441, %1444 : vector<1x1xi32>
    %1446 = arith.maxsi %1374, %1409 : vector<1x1xi32>
    %1447 = vector.broadcast %1445 : vector<1x1xi32> to vector<1x32xi32>
    %1448 = arith.cmpi eq, %8, %1447 : vector<1x32xi32>
    %1449 = arith.extui %1448 : vector<1x32xi1> to vector<1x32xi32>
    %1450 = arith.sitofp %1449 : vector<1x32xi32> to vector<1x32xf32>
    %1451 = tpu.concatenate %1450, %1433 in 1 : vector<1x32xf32>, vector<1x32xf32> -> vector<1x64xf32>
    %cst_241 = arith.constant dense<0.000000e+00> : vector<1x128xf32>
    %1452 = tpu.matmul %1451, %3, %cst_241 {dimension_numbers = #tpu.dot_dimension_numbers<[1], [0], [0], [1], [0, 0, 1, 1], [], []>} : vector<1x64xf32>, vector<64x128xf32>, vector<1x128xf32> -> vector<1x128xf32>
    %1453 = arith.addf %1452, %4 : vector<1x128xf32>
    %1454 = arith.negf %1453 : vector<1x128xf32>
    %1455 = math.exp %1454 : vector<1x128xf32>
    %cst_242 = arith.constant 1.000000e+00 : f32
    %1456 = vector.broadcast %cst_242 : f32 to vector<1x128xf32>
    %1457 = arith.addf %1456, %1455 : vector<1x128xf32>
    %1458 = arith.divf %1456, %1457 : vector<1x128xf32>
    %1459 = math.tanh %1453 : vector<1x128xf32>
    %1460 = vector.extract_strided_slice %1458 {offsets = [0, 0], sizes = [1, 32], strides = [1, 1]} : vector<1x128xf32> to vector<1x32xf32>
    %1461 = vector.extract_strided_slice %1458 {offsets = [0, 32], sizes = [1, 32], strides = [1, 1]} : vector<1x128xf32> to vector<1x32xf32>
    %1462 = vector.extract_strided_slice %1459 {offsets = [0, 64], sizes = [1, 32], strides = [1, 1]} : vector<1x128xf32> to vector<1x32xf32>
    %1463 = vector.extract_strided_slice %1458 {offsets = [0, 96], sizes = [1, 32], strides = [1, 1]} : vector<1x128xf32> to vector<1x32xf32>
    %1464 = arith.mulf %1461, %1440 : vector<1x32xf32>
    %1465 = arith.mulf %1460, %1462 : vector<1x32xf32>
    %1466 = arith.addf %1464, %1465 : vector<1x32xf32>
    %1467 = math.tanh %1466 : vector<1x32xf32>
    %1468 = arith.mulf %1463, %1467 : vector<1x32xf32>
    %cst_243 = arith.constant dense<0.000000e+00> : vector<1x32xf32>
    %1469 = tpu.matmul %1468, %5, %cst_243 {dimension_numbers = #tpu.dot_dimension_numbers<[1], [0], [0], [1], [0, 0, 1, 1], [], []>} : vector<1x32xf32>, vector<32x32xf32>, vector<1x32xf32> -> vector<1x32xf32>
    %1470 = arith.addf %1469, %6 : vector<1x32xf32>
    %cst_244 = arith.constant dense<0xFF800000> : vector<1xf32>
    %1471 = vector.multi_reduction <maximumf>, %1470, %cst_244 [1] : vector<1x32xf32> to vector<1xf32>
    %1472 = vector.shape_cast %1471 : vector<1xf32> to vector<1x1xf32>
    %1473 = vector.broadcast %1472 : vector<1x1xf32> to vector<1x32xf32>
    %1474 = arith.cmpf oeq, %1470, %1473 : vector<1x32xf32>
    %c32_i32_245 = arith.constant 32 : i32
    %1475 = vector.broadcast %c32_i32_245 : i32 to vector<1x32xi32>
    %1476 = arith.select %1474, %8, %1475 : vector<1x32xi1>, vector<1x32xi32>
    %cst_246 = arith.constant dense<2147483647> : vector<1xi32>
    %1477 = vector.multi_reduction <minsi>, %1476, %cst_246 [1] : vector<1x32xi32> to vector<1xi32>
    %1478 = vector.shape_cast %1477 : vector<1xi32> to vector<1x1xi32>
    %c2_i32_247 = arith.constant 2 : i32
    %1479 = vector.broadcast %c2_i32_247 : i32 to vector<1x1xi32>
    %1480 = arith.cmpi eq, %1478, %1479 : vector<1x1xi32>
    %1481 = arith.extui %1480 : vector<1x1xi1> to vector<1x1xi32>
    %c1_i32_248 = arith.constant 1 : i32
    %1482 = vector.broadcast %c1_i32_248 : i32 to vector<1x1xi32>
    %1483 = arith.subi %1482, %1446 : vector<1x1xi32>
    %c1_i32_249 = arith.constant 1 : i32
    %1484 = vector.broadcast %c1_i32_249 : i32 to vector<1x1xi32>
    %1485 = arith.subi %1484, %1481 : vector<1x1xi32>
    %1486 = arith.muli %1483, %1485 : vector<1x1xi32>
    %c13_i32 = arith.constant 13 : i32
    %1487 = vector.broadcast %c13_i32 : i32 to vector<1x128xi32>
    %1488 = arith.cmpi eq, %507, %1487 : vector<1x128xi32>
    %1489 = arith.extui %1488 : vector<1x128xi1> to vector<1x128xi32>
    %1490 = vector.broadcast %1486 : vector<1x1xi32> to vector<1x128xi32>
    %1491 = arith.muli %1489, %1490 : vector<1x128xi32>
    %1492 = vector.broadcast %1478 : vector<1x1xi32> to vector<1x128xi32>
    %1493 = arith.muli %1491, %1492 : vector<1x128xi32>
    %c1_i32_250 = arith.constant 1 : i32
    %1494 = vector.broadcast %c1_i32_250 : i32 to vector<1x128xi32>
    %1495 = arith.subi %1494, %1491 : vector<1x128xi32>
    %1496 = arith.muli %1495, %1425 : vector<1x128xi32>
    %1497 = arith.addi %1493, %1496 : vector<1x128xi32>
    %1498 = arith.sitofp %1483 : vector<1x1xi32> to vector<1x1xf32>
    %1499 = vector.broadcast %1498 : vector<1x1xf32> to vector<1x32xf32>
    %1500 = arith.mulf %1499, %1468 : vector<1x32xf32>
    %cst_251 = arith.constant 1.000000e+00 : f32
    %1501 = vector.broadcast %cst_251 : f32 to vector<1x1xf32>
    %1502 = arith.subf %1501, %1498 : vector<1x1xf32>
    %1503 = vector.broadcast %1502 : vector<1x1xf32> to vector<1x32xf32>
    %1504 = arith.mulf %1503, %1433 : vector<1x32xf32>
    %1505 = arith.addf %1500, %1504 : vector<1x32xf32>
    %1506 = vector.broadcast %1498 : vector<1x1xf32> to vector<1x32xf32>
    %1507 = arith.mulf %1506, %1466 : vector<1x32xf32>
    %cst_252 = arith.constant 1.000000e+00 : f32
    %1508 = vector.broadcast %cst_252 : f32 to vector<1x1xf32>
    %1509 = arith.subf %1508, %1498 : vector<1x1xf32>
    %1510 = vector.broadcast %1509 : vector<1x1xf32> to vector<1x32xf32>
    %1511 = arith.mulf %1510, %1440 : vector<1x32xf32>
    %1512 = arith.addf %1507, %1511 : vector<1x32xf32>
    %1513 = arith.muli %1483, %1478 : vector<1x1xi32>
    %c1_i32_253 = arith.constant 1 : i32
    %1514 = vector.broadcast %c1_i32_253 : i32 to vector<1x1xi32>
    %1515 = arith.subi %1514, %1483 : vector<1x1xi32>
    %1516 = arith.muli %1515, %1445 : vector<1x1xi32>
    %1517 = arith.addi %1513, %1516 : vector<1x1xi32>
    %1518 = arith.maxsi %1446, %1481 : vector<1x1xi32>
    %1519 = vector.broadcast %1517 : vector<1x1xi32> to vector<1x32xi32>
    %1520 = arith.cmpi eq, %8, %1519 : vector<1x32xi32>
    %1521 = arith.extui %1520 : vector<1x32xi1> to vector<1x32xi32>
    %1522 = arith.sitofp %1521 : vector<1x32xi32> to vector<1x32xf32>
    %1523 = tpu.concatenate %1522, %1505 in 1 : vector<1x32xf32>, vector<1x32xf32> -> vector<1x64xf32>
    %cst_254 = arith.constant dense<0.000000e+00> : vector<1x128xf32>
    %1524 = tpu.matmul %1523, %3, %cst_254 {dimension_numbers = #tpu.dot_dimension_numbers<[1], [0], [0], [1], [0, 0, 1, 1], [], []>} : vector<1x64xf32>, vector<64x128xf32>, vector<1x128xf32> -> vector<1x128xf32>
    %1525 = arith.addf %1524, %4 : vector<1x128xf32>
    %1526 = arith.negf %1525 : vector<1x128xf32>
    %1527 = math.exp %1526 : vector<1x128xf32>
    %cst_255 = arith.constant 1.000000e+00 : f32
    %1528 = vector.broadcast %cst_255 : f32 to vector<1x128xf32>
    %1529 = arith.addf %1528, %1527 : vector<1x128xf32>
    %1530 = arith.divf %1528, %1529 : vector<1x128xf32>
    %1531 = math.tanh %1525 : vector<1x128xf32>
    %1532 = vector.extract_strided_slice %1530 {offsets = [0, 0], sizes = [1, 32], strides = [1, 1]} : vector<1x128xf32> to vector<1x32xf32>
    %1533 = vector.extract_strided_slice %1530 {offsets = [0, 32], sizes = [1, 32], strides = [1, 1]} : vector<1x128xf32> to vector<1x32xf32>
    %1534 = vector.extract_strided_slice %1531 {offsets = [0, 64], sizes = [1, 32], strides = [1, 1]} : vector<1x128xf32> to vector<1x32xf32>
    %1535 = vector.extract_strided_slice %1530 {offsets = [0, 96], sizes = [1, 32], strides = [1, 1]} : vector<1x128xf32> to vector<1x32xf32>
    %1536 = arith.mulf %1533, %1512 : vector<1x32xf32>
    %1537 = arith.mulf %1532, %1534 : vector<1x32xf32>
    %1538 = arith.addf %1536, %1537 : vector<1x32xf32>
    %1539 = math.tanh %1538 : vector<1x32xf32>
    %1540 = arith.mulf %1535, %1539 : vector<1x32xf32>
    %cst_256 = arith.constant dense<0.000000e+00> : vector<1x32xf32>
    %1541 = tpu.matmul %1540, %5, %cst_256 {dimension_numbers = #tpu.dot_dimension_numbers<[1], [0], [0], [1], [0, 0, 1, 1], [], []>} : vector<1x32xf32>, vector<32x32xf32>, vector<1x32xf32> -> vector<1x32xf32>
    %1542 = arith.addf %1541, %6 : vector<1x32xf32>
    %cst_257 = arith.constant dense<0xFF800000> : vector<1xf32>
    %1543 = vector.multi_reduction <maximumf>, %1542, %cst_257 [1] : vector<1x32xf32> to vector<1xf32>
    %1544 = vector.shape_cast %1543 : vector<1xf32> to vector<1x1xf32>
    %1545 = vector.broadcast %1544 : vector<1x1xf32> to vector<1x32xf32>
    %1546 = arith.cmpf oeq, %1542, %1545 : vector<1x32xf32>
    %c32_i32_258 = arith.constant 32 : i32
    %1547 = vector.broadcast %c32_i32_258 : i32 to vector<1x32xi32>
    %1548 = arith.select %1546, %8, %1547 : vector<1x32xi1>, vector<1x32xi32>
    %cst_259 = arith.constant dense<2147483647> : vector<1xi32>
    %1549 = vector.multi_reduction <minsi>, %1548, %cst_259 [1] : vector<1x32xi32> to vector<1xi32>
    %1550 = vector.shape_cast %1549 : vector<1xi32> to vector<1x1xi32>
    %c2_i32_260 = arith.constant 2 : i32
    %1551 = vector.broadcast %c2_i32_260 : i32 to vector<1x1xi32>
    %1552 = arith.cmpi eq, %1550, %1551 : vector<1x1xi32>
    %1553 = arith.extui %1552 : vector<1x1xi1> to vector<1x1xi32>
    %c1_i32_261 = arith.constant 1 : i32
    %1554 = vector.broadcast %c1_i32_261 : i32 to vector<1x1xi32>
    %1555 = arith.subi %1554, %1518 : vector<1x1xi32>
    %c1_i32_262 = arith.constant 1 : i32
    %1556 = vector.broadcast %c1_i32_262 : i32 to vector<1x1xi32>
    %1557 = arith.subi %1556, %1553 : vector<1x1xi32>
    %1558 = arith.muli %1555, %1557 : vector<1x1xi32>
    %c14_i32 = arith.constant 14 : i32
    %1559 = vector.broadcast %c14_i32 : i32 to vector<1x128xi32>
    %1560 = arith.cmpi eq, %507, %1559 : vector<1x128xi32>
    %1561 = arith.extui %1560 : vector<1x128xi1> to vector<1x128xi32>
    %1562 = vector.broadcast %1558 : vector<1x1xi32> to vector<1x128xi32>
    %1563 = arith.muli %1561, %1562 : vector<1x128xi32>
    %1564 = vector.broadcast %1550 : vector<1x1xi32> to vector<1x128xi32>
    %1565 = arith.muli %1563, %1564 : vector<1x128xi32>
    %c1_i32_263 = arith.constant 1 : i32
    %1566 = vector.broadcast %c1_i32_263 : i32 to vector<1x128xi32>
    %1567 = arith.subi %1566, %1563 : vector<1x128xi32>
    %1568 = arith.muli %1567, %1497 : vector<1x128xi32>
    %1569 = arith.addi %1565, %1568 : vector<1x128xi32>
    %1570 = arith.sitofp %1555 : vector<1x1xi32> to vector<1x1xf32>
    %1571 = vector.broadcast %1570 : vector<1x1xf32> to vector<1x32xf32>
    %1572 = arith.mulf %1571, %1540 : vector<1x32xf32>
    %cst_264 = arith.constant 1.000000e+00 : f32
    %1573 = vector.broadcast %cst_264 : f32 to vector<1x1xf32>
    %1574 = arith.subf %1573, %1570 : vector<1x1xf32>
    %1575 = vector.broadcast %1574 : vector<1x1xf32> to vector<1x32xf32>
    %1576 = arith.mulf %1575, %1505 : vector<1x32xf32>
    %1577 = arith.addf %1572, %1576 : vector<1x32xf32>
    %1578 = vector.broadcast %1570 : vector<1x1xf32> to vector<1x32xf32>
    %1579 = arith.mulf %1578, %1538 : vector<1x32xf32>
    %cst_265 = arith.constant 1.000000e+00 : f32
    %1580 = vector.broadcast %cst_265 : f32 to vector<1x1xf32>
    %1581 = arith.subf %1580, %1570 : vector<1x1xf32>
    %1582 = vector.broadcast %1581 : vector<1x1xf32> to vector<1x32xf32>
    %1583 = arith.mulf %1582, %1512 : vector<1x32xf32>
    %1584 = arith.addf %1579, %1583 : vector<1x32xf32>
    %1585 = arith.muli %1555, %1550 : vector<1x1xi32>
    %c1_i32_266 = arith.constant 1 : i32
    %1586 = vector.broadcast %c1_i32_266 : i32 to vector<1x1xi32>
    %1587 = arith.subi %1586, %1555 : vector<1x1xi32>
    %1588 = arith.muli %1587, %1517 : vector<1x1xi32>
    %1589 = arith.addi %1585, %1588 : vector<1x1xi32>
    %1590 = arith.maxsi %1518, %1553 : vector<1x1xi32>
    %1591 = vector.broadcast %1589 : vector<1x1xi32> to vector<1x32xi32>
    %1592 = arith.cmpi eq, %8, %1591 : vector<1x32xi32>
    %1593 = arith.extui %1592 : vector<1x32xi1> to vector<1x32xi32>
    %1594 = arith.sitofp %1593 : vector<1x32xi32> to vector<1x32xf32>
    %1595 = tpu.concatenate %1594, %1577 in 1 : vector<1x32xf32>, vector<1x32xf32> -> vector<1x64xf32>
    %cst_267 = arith.constant dense<0.000000e+00> : vector<1x128xf32>
    %1596 = tpu.matmul %1595, %3, %cst_267 {dimension_numbers = #tpu.dot_dimension_numbers<[1], [0], [0], [1], [0, 0, 1, 1], [], []>} : vector<1x64xf32>, vector<64x128xf32>, vector<1x128xf32> -> vector<1x128xf32>
    %1597 = arith.addf %1596, %4 : vector<1x128xf32>
    %1598 = arith.negf %1597 : vector<1x128xf32>
    %1599 = math.exp %1598 : vector<1x128xf32>
    %cst_268 = arith.constant 1.000000e+00 : f32
    %1600 = vector.broadcast %cst_268 : f32 to vector<1x128xf32>
    %1601 = arith.addf %1600, %1599 : vector<1x128xf32>
    %1602 = arith.divf %1600, %1601 : vector<1x128xf32>
    %1603 = math.tanh %1597 : vector<1x128xf32>
    %1604 = vector.extract_strided_slice %1602 {offsets = [0, 0], sizes = [1, 32], strides = [1, 1]} : vector<1x128xf32> to vector<1x32xf32>
    %1605 = vector.extract_strided_slice %1602 {offsets = [0, 32], sizes = [1, 32], strides = [1, 1]} : vector<1x128xf32> to vector<1x32xf32>
    %1606 = vector.extract_strided_slice %1603 {offsets = [0, 64], sizes = [1, 32], strides = [1, 1]} : vector<1x128xf32> to vector<1x32xf32>
    %1607 = vector.extract_strided_slice %1602 {offsets = [0, 96], sizes = [1, 32], strides = [1, 1]} : vector<1x128xf32> to vector<1x32xf32>
    %1608 = arith.mulf %1605, %1584 : vector<1x32xf32>
    %1609 = arith.mulf %1604, %1606 : vector<1x32xf32>
    %1610 = arith.addf %1608, %1609 : vector<1x32xf32>
    %1611 = math.tanh %1610 : vector<1x32xf32>
    %1612 = arith.mulf %1607, %1611 : vector<1x32xf32>
    %cst_269 = arith.constant dense<0.000000e+00> : vector<1x32xf32>
    %1613 = tpu.matmul %1612, %5, %cst_269 {dimension_numbers = #tpu.dot_dimension_numbers<[1], [0], [0], [1], [0, 0, 1, 1], [], []>} : vector<1x32xf32>, vector<32x32xf32>, vector<1x32xf32> -> vector<1x32xf32>
    %1614 = arith.addf %1613, %6 : vector<1x32xf32>
    %cst_270 = arith.constant dense<0xFF800000> : vector<1xf32>
    %1615 = vector.multi_reduction <maximumf>, %1614, %cst_270 [1] : vector<1x32xf32> to vector<1xf32>
    %1616 = vector.shape_cast %1615 : vector<1xf32> to vector<1x1xf32>
    %1617 = vector.broadcast %1616 : vector<1x1xf32> to vector<1x32xf32>
    %1618 = arith.cmpf oeq, %1614, %1617 : vector<1x32xf32>
    %c32_i32_271 = arith.constant 32 : i32
    %1619 = vector.broadcast %c32_i32_271 : i32 to vector<1x32xi32>
    %1620 = arith.select %1618, %8, %1619 : vector<1x32xi1>, vector<1x32xi32>
    %cst_272 = arith.constant dense<2147483647> : vector<1xi32>
    %1621 = vector.multi_reduction <minsi>, %1620, %cst_272 [1] : vector<1x32xi32> to vector<1xi32>
    %1622 = vector.shape_cast %1621 : vector<1xi32> to vector<1x1xi32>
    %c2_i32_273 = arith.constant 2 : i32
    %1623 = vector.broadcast %c2_i32_273 : i32 to vector<1x1xi32>
    %1624 = arith.cmpi eq, %1622, %1623 : vector<1x1xi32>
    %1625 = arith.extui %1624 : vector<1x1xi1> to vector<1x1xi32>
    %c1_i32_274 = arith.constant 1 : i32
    %1626 = vector.broadcast %c1_i32_274 : i32 to vector<1x1xi32>
    %1627 = arith.subi %1626, %1590 : vector<1x1xi32>
    %c1_i32_275 = arith.constant 1 : i32
    %1628 = vector.broadcast %c1_i32_275 : i32 to vector<1x1xi32>
    %1629 = arith.subi %1628, %1625 : vector<1x1xi32>
    %1630 = arith.muli %1627, %1629 : vector<1x1xi32>
    %c15_i32 = arith.constant 15 : i32
    %1631 = vector.broadcast %c15_i32 : i32 to vector<1x128xi32>
    %1632 = arith.cmpi eq, %507, %1631 : vector<1x128xi32>
    %1633 = arith.extui %1632 : vector<1x128xi1> to vector<1x128xi32>
    %1634 = vector.broadcast %1630 : vector<1x1xi32> to vector<1x128xi32>
    %1635 = arith.muli %1633, %1634 : vector<1x128xi32>
    %1636 = vector.broadcast %1622 : vector<1x1xi32> to vector<1x128xi32>
    %1637 = arith.muli %1635, %1636 : vector<1x128xi32>
    %c1_i32_276 = arith.constant 1 : i32
    %1638 = vector.broadcast %c1_i32_276 : i32 to vector<1x128xi32>
    %1639 = arith.subi %1638, %1635 : vector<1x128xi32>
    %1640 = arith.muli %1639, %1569 : vector<1x128xi32>
    %1641 = arith.addi %1637, %1640 : vector<1x128xi32>
    %1642 = arith.sitofp %1627 : vector<1x1xi32> to vector<1x1xf32>
    %1643 = vector.broadcast %1642 : vector<1x1xf32> to vector<1x32xf32>
    %1644 = arith.mulf %1643, %1612 : vector<1x32xf32>
    %cst_277 = arith.constant 1.000000e+00 : f32
    %1645 = vector.broadcast %cst_277 : f32 to vector<1x1xf32>
    %1646 = arith.subf %1645, %1642 : vector<1x1xf32>
    %1647 = vector.broadcast %1646 : vector<1x1xf32> to vector<1x32xf32>
    %1648 = arith.mulf %1647, %1577 : vector<1x32xf32>
    %1649 = arith.addf %1644, %1648 : vector<1x32xf32>
    %1650 = vector.broadcast %1642 : vector<1x1xf32> to vector<1x32xf32>
    %1651 = arith.mulf %1650, %1610 : vector<1x32xf32>
    %cst_278 = arith.constant 1.000000e+00 : f32
    %1652 = vector.broadcast %cst_278 : f32 to vector<1x1xf32>
    %1653 = arith.subf %1652, %1642 : vector<1x1xf32>
    %1654 = vector.broadcast %1653 : vector<1x1xf32> to vector<1x32xf32>
    %1655 = arith.mulf %1654, %1584 : vector<1x32xf32>
    %1656 = arith.addf %1651, %1655 : vector<1x32xf32>
    %1657 = arith.muli %1627, %1622 : vector<1x1xi32>
    %c1_i32_279 = arith.constant 1 : i32
    %1658 = vector.broadcast %c1_i32_279 : i32 to vector<1x1xi32>
    %1659 = arith.subi %1658, %1627 : vector<1x1xi32>
    %1660 = arith.muli %1659, %1589 : vector<1x1xi32>
    %1661 = arith.addi %1657, %1660 : vector<1x1xi32>
    %1662 = arith.maxsi %1590, %1625 : vector<1x1xi32>
    %1663 = vector.broadcast %1661 : vector<1x1xi32> to vector<1x32xi32>
    %1664 = arith.cmpi eq, %8, %1663 : vector<1x32xi32>
    %1665 = arith.extui %1664 : vector<1x32xi1> to vector<1x32xi32>
    %1666 = arith.sitofp %1665 : vector<1x32xi32> to vector<1x32xf32>
    %1667 = tpu.concatenate %1666, %1649 in 1 : vector<1x32xf32>, vector<1x32xf32> -> vector<1x64xf32>
    %cst_280 = arith.constant dense<0.000000e+00> : vector<1x128xf32>
    %1668 = tpu.matmul %1667, %3, %cst_280 {dimension_numbers = #tpu.dot_dimension_numbers<[1], [0], [0], [1], [0, 0, 1, 1], [], []>} : vector<1x64xf32>, vector<64x128xf32>, vector<1x128xf32> -> vector<1x128xf32>
    %1669 = arith.addf %1668, %4 : vector<1x128xf32>
    %1670 = arith.negf %1669 : vector<1x128xf32>
    %1671 = math.exp %1670 : vector<1x128xf32>
    %cst_281 = arith.constant 1.000000e+00 : f32
    %1672 = vector.broadcast %cst_281 : f32 to vector<1x128xf32>
    %1673 = arith.addf %1672, %1671 : vector<1x128xf32>
    %1674 = arith.divf %1672, %1673 : vector<1x128xf32>
    %1675 = math.tanh %1669 : vector<1x128xf32>
    %1676 = vector.extract_strided_slice %1674 {offsets = [0, 0], sizes = [1, 32], strides = [1, 1]} : vector<1x128xf32> to vector<1x32xf32>
    %1677 = vector.extract_strided_slice %1674 {offsets = [0, 32], sizes = [1, 32], strides = [1, 1]} : vector<1x128xf32> to vector<1x32xf32>
    %1678 = vector.extract_strided_slice %1675 {offsets = [0, 64], sizes = [1, 32], strides = [1, 1]} : vector<1x128xf32> to vector<1x32xf32>
    %1679 = vector.extract_strided_slice %1674 {offsets = [0, 96], sizes = [1, 32], strides = [1, 1]} : vector<1x128xf32> to vector<1x32xf32>
    %1680 = arith.mulf %1677, %1656 : vector<1x32xf32>
    %1681 = arith.mulf %1676, %1678 : vector<1x32xf32>
    %1682 = arith.addf %1680, %1681 : vector<1x32xf32>
    %1683 = math.tanh %1682 : vector<1x32xf32>
    %1684 = arith.mulf %1679, %1683 : vector<1x32xf32>
    %cst_282 = arith.constant dense<0.000000e+00> : vector<1x32xf32>
    %1685 = tpu.matmul %1684, %5, %cst_282 {dimension_numbers = #tpu.dot_dimension_numbers<[1], [0], [0], [1], [0, 0, 1, 1], [], []>} : vector<1x32xf32>, vector<32x32xf32>, vector<1x32xf32> -> vector<1x32xf32>
    %1686 = arith.addf %1685, %6 : vector<1x32xf32>
    %cst_283 = arith.constant dense<0xFF800000> : vector<1xf32>
    %1687 = vector.multi_reduction <maximumf>, %1686, %cst_283 [1] : vector<1x32xf32> to vector<1xf32>
    %1688 = vector.shape_cast %1687 : vector<1xf32> to vector<1x1xf32>
    %1689 = vector.broadcast %1688 : vector<1x1xf32> to vector<1x32xf32>
    %1690 = arith.cmpf oeq, %1686, %1689 : vector<1x32xf32>
    %c32_i32_284 = arith.constant 32 : i32
    %1691 = vector.broadcast %c32_i32_284 : i32 to vector<1x32xi32>
    %1692 = arith.select %1690, %8, %1691 : vector<1x32xi1>, vector<1x32xi32>
    %cst_285 = arith.constant dense<2147483647> : vector<1xi32>
    %1693 = vector.multi_reduction <minsi>, %1692, %cst_285 [1] : vector<1x32xi32> to vector<1xi32>
    %1694 = vector.shape_cast %1693 : vector<1xi32> to vector<1x1xi32>
    %c2_i32_286 = arith.constant 2 : i32
    %1695 = vector.broadcast %c2_i32_286 : i32 to vector<1x1xi32>
    %1696 = arith.cmpi eq, %1694, %1695 : vector<1x1xi32>
    %1697 = arith.extui %1696 : vector<1x1xi1> to vector<1x1xi32>
    %c1_i32_287 = arith.constant 1 : i32
    %1698 = vector.broadcast %c1_i32_287 : i32 to vector<1x1xi32>
    %1699 = arith.subi %1698, %1662 : vector<1x1xi32>
    %c1_i32_288 = arith.constant 1 : i32
    %1700 = vector.broadcast %c1_i32_288 : i32 to vector<1x1xi32>
    %1701 = arith.subi %1700, %1697 : vector<1x1xi32>
    %1702 = arith.muli %1699, %1701 : vector<1x1xi32>
    %c16_i32 = arith.constant 16 : i32
    %1703 = vector.broadcast %c16_i32 : i32 to vector<1x128xi32>
    %1704 = arith.cmpi eq, %507, %1703 : vector<1x128xi32>
    %1705 = arith.extui %1704 : vector<1x128xi1> to vector<1x128xi32>
    %1706 = vector.broadcast %1702 : vector<1x1xi32> to vector<1x128xi32>
    %1707 = arith.muli %1705, %1706 : vector<1x128xi32>
    %1708 = vector.broadcast %1694 : vector<1x1xi32> to vector<1x128xi32>
    %1709 = arith.muli %1707, %1708 : vector<1x128xi32>
    %c1_i32_289 = arith.constant 1 : i32
    %1710 = vector.broadcast %c1_i32_289 : i32 to vector<1x128xi32>
    %1711 = arith.subi %1710, %1707 : vector<1x128xi32>
    %1712 = arith.muli %1711, %1641 : vector<1x128xi32>
    %1713 = arith.addi %1709, %1712 : vector<1x128xi32>
    %1714 = arith.sitofp %1699 : vector<1x1xi32> to vector<1x1xf32>
    %1715 = vector.broadcast %1714 : vector<1x1xf32> to vector<1x32xf32>
    %1716 = arith.mulf %1715, %1684 : vector<1x32xf32>
    %cst_290 = arith.constant 1.000000e+00 : f32
    %1717 = vector.broadcast %cst_290 : f32 to vector<1x1xf32>
    %1718 = arith.subf %1717, %1714 : vector<1x1xf32>
    %1719 = vector.broadcast %1718 : vector<1x1xf32> to vector<1x32xf32>
    %1720 = arith.mulf %1719, %1649 : vector<1x32xf32>
    %1721 = arith.addf %1716, %1720 : vector<1x32xf32>
    %1722 = vector.broadcast %1714 : vector<1x1xf32> to vector<1x32xf32>
    %1723 = arith.mulf %1722, %1682 : vector<1x32xf32>
    %cst_291 = arith.constant 1.000000e+00 : f32
    %1724 = vector.broadcast %cst_291 : f32 to vector<1x1xf32>
    %1725 = arith.subf %1724, %1714 : vector<1x1xf32>
    %1726 = vector.broadcast %1725 : vector<1x1xf32> to vector<1x32xf32>
    %1727 = arith.mulf %1726, %1656 : vector<1x32xf32>
    %1728 = arith.addf %1723, %1727 : vector<1x32xf32>
    %1729 = arith.muli %1699, %1694 : vector<1x1xi32>
    %c1_i32_292 = arith.constant 1 : i32
    %1730 = vector.broadcast %c1_i32_292 : i32 to vector<1x1xi32>
    %1731 = arith.subi %1730, %1699 : vector<1x1xi32>
    %1732 = arith.muli %1731, %1661 : vector<1x1xi32>
    %1733 = arith.addi %1729, %1732 : vector<1x1xi32>
    %1734 = arith.maxsi %1662, %1697 : vector<1x1xi32>
    %1735 = vector.broadcast %1733 : vector<1x1xi32> to vector<1x32xi32>
    %1736 = arith.cmpi eq, %8, %1735 : vector<1x32xi32>
    %1737 = arith.extui %1736 : vector<1x32xi1> to vector<1x32xi32>
    %1738 = arith.sitofp %1737 : vector<1x32xi32> to vector<1x32xf32>
    %1739 = tpu.concatenate %1738, %1721 in 1 : vector<1x32xf32>, vector<1x32xf32> -> vector<1x64xf32>
    %cst_293 = arith.constant dense<0.000000e+00> : vector<1x128xf32>
    %1740 = tpu.matmul %1739, %3, %cst_293 {dimension_numbers = #tpu.dot_dimension_numbers<[1], [0], [0], [1], [0, 0, 1, 1], [], []>} : vector<1x64xf32>, vector<64x128xf32>, vector<1x128xf32> -> vector<1x128xf32>
    %1741 = arith.addf %1740, %4 : vector<1x128xf32>
    %1742 = arith.negf %1741 : vector<1x128xf32>
    %1743 = math.exp %1742 : vector<1x128xf32>
    %cst_294 = arith.constant 1.000000e+00 : f32
    %1744 = vector.broadcast %cst_294 : f32 to vector<1x128xf32>
    %1745 = arith.addf %1744, %1743 : vector<1x128xf32>
    %1746 = arith.divf %1744, %1745 : vector<1x128xf32>
    %1747 = math.tanh %1741 : vector<1x128xf32>
    %1748 = vector.extract_strided_slice %1746 {offsets = [0, 0], sizes = [1, 32], strides = [1, 1]} : vector<1x128xf32> to vector<1x32xf32>
    %1749 = vector.extract_strided_slice %1746 {offsets = [0, 32], sizes = [1, 32], strides = [1, 1]} : vector<1x128xf32> to vector<1x32xf32>
    %1750 = vector.extract_strided_slice %1747 {offsets = [0, 64], sizes = [1, 32], strides = [1, 1]} : vector<1x128xf32> to vector<1x32xf32>
    %1751 = vector.extract_strided_slice %1746 {offsets = [0, 96], sizes = [1, 32], strides = [1, 1]} : vector<1x128xf32> to vector<1x32xf32>
    %1752 = arith.mulf %1749, %1728 : vector<1x32xf32>
    %1753 = arith.mulf %1748, %1750 : vector<1x32xf32>
    %1754 = arith.addf %1752, %1753 : vector<1x32xf32>
    %1755 = math.tanh %1754 : vector<1x32xf32>
    %1756 = arith.mulf %1751, %1755 : vector<1x32xf32>
    %cst_295 = arith.constant dense<0.000000e+00> : vector<1x32xf32>
    %1757 = tpu.matmul %1756, %5, %cst_295 {dimension_numbers = #tpu.dot_dimension_numbers<[1], [0], [0], [1], [0, 0, 1, 1], [], []>} : vector<1x32xf32>, vector<32x32xf32>, vector<1x32xf32> -> vector<1x32xf32>
    %1758 = arith.addf %1757, %6 : vector<1x32xf32>
    %cst_296 = arith.constant dense<0xFF800000> : vector<1xf32>
    %1759 = vector.multi_reduction <maximumf>, %1758, %cst_296 [1] : vector<1x32xf32> to vector<1xf32>
    %1760 = vector.shape_cast %1759 : vector<1xf32> to vector<1x1xf32>
    %1761 = vector.broadcast %1760 : vector<1x1xf32> to vector<1x32xf32>
    %1762 = arith.cmpf oeq, %1758, %1761 : vector<1x32xf32>
    %c32_i32_297 = arith.constant 32 : i32
    %1763 = vector.broadcast %c32_i32_297 : i32 to vector<1x32xi32>
    %1764 = arith.select %1762, %8, %1763 : vector<1x32xi1>, vector<1x32xi32>
    %cst_298 = arith.constant dense<2147483647> : vector<1xi32>
    %1765 = vector.multi_reduction <minsi>, %1764, %cst_298 [1] : vector<1x32xi32> to vector<1xi32>
    %1766 = vector.shape_cast %1765 : vector<1xi32> to vector<1x1xi32>
    %c2_i32_299 = arith.constant 2 : i32
    %1767 = vector.broadcast %c2_i32_299 : i32 to vector<1x1xi32>
    %1768 = arith.cmpi eq, %1766, %1767 : vector<1x1xi32>
    %1769 = arith.extui %1768 : vector<1x1xi1> to vector<1x1xi32>
    %c1_i32_300 = arith.constant 1 : i32
    %1770 = vector.broadcast %c1_i32_300 : i32 to vector<1x1xi32>
    %1771 = arith.subi %1770, %1734 : vector<1x1xi32>
    %c1_i32_301 = arith.constant 1 : i32
    %1772 = vector.broadcast %c1_i32_301 : i32 to vector<1x1xi32>
    %1773 = arith.subi %1772, %1769 : vector<1x1xi32>
    %1774 = arith.muli %1771, %1773 : vector<1x1xi32>
    %c17_i32 = arith.constant 17 : i32
    %1775 = vector.broadcast %c17_i32 : i32 to vector<1x128xi32>
    %1776 = arith.cmpi eq, %507, %1775 : vector<1x128xi32>
    %1777 = arith.extui %1776 : vector<1x128xi1> to vector<1x128xi32>
    %1778 = vector.broadcast %1774 : vector<1x1xi32> to vector<1x128xi32>
    %1779 = arith.muli %1777, %1778 : vector<1x128xi32>
    %1780 = vector.broadcast %1766 : vector<1x1xi32> to vector<1x128xi32>
    %1781 = arith.muli %1779, %1780 : vector<1x128xi32>
    %c1_i32_302 = arith.constant 1 : i32
    %1782 = vector.broadcast %c1_i32_302 : i32 to vector<1x128xi32>
    %1783 = arith.subi %1782, %1779 : vector<1x128xi32>
    %1784 = arith.muli %1783, %1713 : vector<1x128xi32>
    %1785 = arith.addi %1781, %1784 : vector<1x128xi32>
    %1786 = arith.sitofp %1771 : vector<1x1xi32> to vector<1x1xf32>
    %1787 = vector.broadcast %1786 : vector<1x1xf32> to vector<1x32xf32>
    %1788 = arith.mulf %1787, %1756 : vector<1x32xf32>
    %cst_303 = arith.constant 1.000000e+00 : f32
    %1789 = vector.broadcast %cst_303 : f32 to vector<1x1xf32>
    %1790 = arith.subf %1789, %1786 : vector<1x1xf32>
    %1791 = vector.broadcast %1790 : vector<1x1xf32> to vector<1x32xf32>
    %1792 = arith.mulf %1791, %1721 : vector<1x32xf32>
    %1793 = arith.addf %1788, %1792 : vector<1x32xf32>
    %1794 = vector.broadcast %1786 : vector<1x1xf32> to vector<1x32xf32>
    %1795 = arith.mulf %1794, %1754 : vector<1x32xf32>
    %cst_304 = arith.constant 1.000000e+00 : f32
    %1796 = vector.broadcast %cst_304 : f32 to vector<1x1xf32>
    %1797 = arith.subf %1796, %1786 : vector<1x1xf32>
    %1798 = vector.broadcast %1797 : vector<1x1xf32> to vector<1x32xf32>
    %1799 = arith.mulf %1798, %1728 : vector<1x32xf32>
    %1800 = arith.addf %1795, %1799 : vector<1x32xf32>
    %1801 = arith.muli %1771, %1766 : vector<1x1xi32>
    %c1_i32_305 = arith.constant 1 : i32
    %1802 = vector.broadcast %c1_i32_305 : i32 to vector<1x1xi32>
    %1803 = arith.subi %1802, %1771 : vector<1x1xi32>
    %1804 = arith.muli %1803, %1733 : vector<1x1xi32>
    %1805 = arith.addi %1801, %1804 : vector<1x1xi32>
    %1806 = arith.maxsi %1734, %1769 : vector<1x1xi32>
    %1807 = vector.broadcast %1805 : vector<1x1xi32> to vector<1x32xi32>
    %1808 = arith.cmpi eq, %8, %1807 : vector<1x32xi32>
    %1809 = arith.extui %1808 : vector<1x32xi1> to vector<1x32xi32>
    %1810 = arith.sitofp %1809 : vector<1x32xi32> to vector<1x32xf32>
    %1811 = tpu.concatenate %1810, %1793 in 1 : vector<1x32xf32>, vector<1x32xf32> -> vector<1x64xf32>
    %cst_306 = arith.constant dense<0.000000e+00> : vector<1x128xf32>
    %1812 = tpu.matmul %1811, %3, %cst_306 {dimension_numbers = #tpu.dot_dimension_numbers<[1], [0], [0], [1], [0, 0, 1, 1], [], []>} : vector<1x64xf32>, vector<64x128xf32>, vector<1x128xf32> -> vector<1x128xf32>
    %1813 = arith.addf %1812, %4 : vector<1x128xf32>
    %1814 = arith.negf %1813 : vector<1x128xf32>
    %1815 = math.exp %1814 : vector<1x128xf32>
    %cst_307 = arith.constant 1.000000e+00 : f32
    %1816 = vector.broadcast %cst_307 : f32 to vector<1x128xf32>
    %1817 = arith.addf %1816, %1815 : vector<1x128xf32>
    %1818 = arith.divf %1816, %1817 : vector<1x128xf32>
    %1819 = math.tanh %1813 : vector<1x128xf32>
    %1820 = vector.extract_strided_slice %1818 {offsets = [0, 0], sizes = [1, 32], strides = [1, 1]} : vector<1x128xf32> to vector<1x32xf32>
    %1821 = vector.extract_strided_slice %1818 {offsets = [0, 32], sizes = [1, 32], strides = [1, 1]} : vector<1x128xf32> to vector<1x32xf32>
    %1822 = vector.extract_strided_slice %1819 {offsets = [0, 64], sizes = [1, 32], strides = [1, 1]} : vector<1x128xf32> to vector<1x32xf32>
    %1823 = vector.extract_strided_slice %1818 {offsets = [0, 96], sizes = [1, 32], strides = [1, 1]} : vector<1x128xf32> to vector<1x32xf32>
    %1824 = arith.mulf %1821, %1800 : vector<1x32xf32>
    %1825 = arith.mulf %1820, %1822 : vector<1x32xf32>
    %1826 = arith.addf %1824, %1825 : vector<1x32xf32>
    %1827 = math.tanh %1826 : vector<1x32xf32>
    %1828 = arith.mulf %1823, %1827 : vector<1x32xf32>
    %cst_308 = arith.constant dense<0.000000e+00> : vector<1x32xf32>
    %1829 = tpu.matmul %1828, %5, %cst_308 {dimension_numbers = #tpu.dot_dimension_numbers<[1], [0], [0], [1], [0, 0, 1, 1], [], []>} : vector<1x32xf32>, vector<32x32xf32>, vector<1x32xf32> -> vector<1x32xf32>
    %1830 = arith.addf %1829, %6 : vector<1x32xf32>
    %cst_309 = arith.constant dense<0xFF800000> : vector<1xf32>
    %1831 = vector.multi_reduction <maximumf>, %1830, %cst_309 [1] : vector<1x32xf32> to vector<1xf32>
    %1832 = vector.shape_cast %1831 : vector<1xf32> to vector<1x1xf32>
    %1833 = vector.broadcast %1832 : vector<1x1xf32> to vector<1x32xf32>
    %1834 = arith.cmpf oeq, %1830, %1833 : vector<1x32xf32>
    %c32_i32_310 = arith.constant 32 : i32
    %1835 = vector.broadcast %c32_i32_310 : i32 to vector<1x32xi32>
    %1836 = arith.select %1834, %8, %1835 : vector<1x32xi1>, vector<1x32xi32>
    %cst_311 = arith.constant dense<2147483647> : vector<1xi32>
    %1837 = vector.multi_reduction <minsi>, %1836, %cst_311 [1] : vector<1x32xi32> to vector<1xi32>
    %1838 = vector.shape_cast %1837 : vector<1xi32> to vector<1x1xi32>
    %c2_i32_312 = arith.constant 2 : i32
    %1839 = vector.broadcast %c2_i32_312 : i32 to vector<1x1xi32>
    %1840 = arith.cmpi eq, %1838, %1839 : vector<1x1xi32>
    %1841 = arith.extui %1840 : vector<1x1xi1> to vector<1x1xi32>
    %c1_i32_313 = arith.constant 1 : i32
    %1842 = vector.broadcast %c1_i32_313 : i32 to vector<1x1xi32>
    %1843 = arith.subi %1842, %1806 : vector<1x1xi32>
    %c1_i32_314 = arith.constant 1 : i32
    %1844 = vector.broadcast %c1_i32_314 : i32 to vector<1x1xi32>
    %1845 = arith.subi %1844, %1841 : vector<1x1xi32>
    %1846 = arith.muli %1843, %1845 : vector<1x1xi32>
    %c18_i32 = arith.constant 18 : i32
    %1847 = vector.broadcast %c18_i32 : i32 to vector<1x128xi32>
    %1848 = arith.cmpi eq, %507, %1847 : vector<1x128xi32>
    %1849 = arith.extui %1848 : vector<1x128xi1> to vector<1x128xi32>
    %1850 = vector.broadcast %1846 : vector<1x1xi32> to vector<1x128xi32>
    %1851 = arith.muli %1849, %1850 : vector<1x128xi32>
    %1852 = vector.broadcast %1838 : vector<1x1xi32> to vector<1x128xi32>
    %1853 = arith.muli %1851, %1852 : vector<1x128xi32>
    %c1_i32_315 = arith.constant 1 : i32
    %1854 = vector.broadcast %c1_i32_315 : i32 to vector<1x128xi32>
    %1855 = arith.subi %1854, %1851 : vector<1x128xi32>
    %1856 = arith.muli %1855, %1785 : vector<1x128xi32>
    %1857 = arith.addi %1853, %1856 : vector<1x128xi32>
    %1858 = arith.sitofp %1843 : vector<1x1xi32> to vector<1x1xf32>
    %1859 = vector.broadcast %1858 : vector<1x1xf32> to vector<1x32xf32>
    %1860 = arith.mulf %1859, %1828 : vector<1x32xf32>
    %cst_316 = arith.constant 1.000000e+00 : f32
    %1861 = vector.broadcast %cst_316 : f32 to vector<1x1xf32>
    %1862 = arith.subf %1861, %1858 : vector<1x1xf32>
    %1863 = vector.broadcast %1862 : vector<1x1xf32> to vector<1x32xf32>
    %1864 = arith.mulf %1863, %1793 : vector<1x32xf32>
    %1865 = arith.addf %1860, %1864 : vector<1x32xf32>
    %1866 = vector.broadcast %1858 : vector<1x1xf32> to vector<1x32xf32>
    %1867 = arith.mulf %1866, %1826 : vector<1x32xf32>
    %cst_317 = arith.constant 1.000000e+00 : f32
    %1868 = vector.broadcast %cst_317 : f32 to vector<1x1xf32>
    %1869 = arith.subf %1868, %1858 : vector<1x1xf32>
    %1870 = vector.broadcast %1869 : vector<1x1xf32> to vector<1x32xf32>
    %1871 = arith.mulf %1870, %1800 : vector<1x32xf32>
    %1872 = arith.addf %1867, %1871 : vector<1x32xf32>
    %1873 = arith.muli %1843, %1838 : vector<1x1xi32>
    %c1_i32_318 = arith.constant 1 : i32
    %1874 = vector.broadcast %c1_i32_318 : i32 to vector<1x1xi32>
    %1875 = arith.subi %1874, %1843 : vector<1x1xi32>
    %1876 = arith.muli %1875, %1805 : vector<1x1xi32>
    %1877 = arith.addi %1873, %1876 : vector<1x1xi32>
    %1878 = arith.maxsi %1806, %1841 : vector<1x1xi32>
    %1879 = vector.broadcast %1877 : vector<1x1xi32> to vector<1x32xi32>
    %1880 = arith.cmpi eq, %8, %1879 : vector<1x32xi32>
    %1881 = arith.extui %1880 : vector<1x32xi1> to vector<1x32xi32>
    %1882 = arith.sitofp %1881 : vector<1x32xi32> to vector<1x32xf32>
    %1883 = tpu.concatenate %1882, %1865 in 1 : vector<1x32xf32>, vector<1x32xf32> -> vector<1x64xf32>
    %cst_319 = arith.constant dense<0.000000e+00> : vector<1x128xf32>
    %1884 = tpu.matmul %1883, %3, %cst_319 {dimension_numbers = #tpu.dot_dimension_numbers<[1], [0], [0], [1], [0, 0, 1, 1], [], []>} : vector<1x64xf32>, vector<64x128xf32>, vector<1x128xf32> -> vector<1x128xf32>
    %1885 = arith.addf %1884, %4 : vector<1x128xf32>
    %1886 = arith.negf %1885 : vector<1x128xf32>
    %1887 = math.exp %1886 : vector<1x128xf32>
    %cst_320 = arith.constant 1.000000e+00 : f32
    %1888 = vector.broadcast %cst_320 : f32 to vector<1x128xf32>
    %1889 = arith.addf %1888, %1887 : vector<1x128xf32>
    %1890 = arith.divf %1888, %1889 : vector<1x128xf32>
    %1891 = math.tanh %1885 : vector<1x128xf32>
    %1892 = vector.extract_strided_slice %1890 {offsets = [0, 0], sizes = [1, 32], strides = [1, 1]} : vector<1x128xf32> to vector<1x32xf32>
    %1893 = vector.extract_strided_slice %1890 {offsets = [0, 32], sizes = [1, 32], strides = [1, 1]} : vector<1x128xf32> to vector<1x32xf32>
    %1894 = vector.extract_strided_slice %1891 {offsets = [0, 64], sizes = [1, 32], strides = [1, 1]} : vector<1x128xf32> to vector<1x32xf32>
    %1895 = vector.extract_strided_slice %1890 {offsets = [0, 96], sizes = [1, 32], strides = [1, 1]} : vector<1x128xf32> to vector<1x32xf32>
    %1896 = arith.mulf %1893, %1872 : vector<1x32xf32>
    %1897 = arith.mulf %1892, %1894 : vector<1x32xf32>
    %1898 = arith.addf %1896, %1897 : vector<1x32xf32>
    %1899 = math.tanh %1898 : vector<1x32xf32>
    %1900 = arith.mulf %1895, %1899 : vector<1x32xf32>
    %cst_321 = arith.constant dense<0.000000e+00> : vector<1x32xf32>
    %1901 = tpu.matmul %1900, %5, %cst_321 {dimension_numbers = #tpu.dot_dimension_numbers<[1], [0], [0], [1], [0, 0, 1, 1], [], []>} : vector<1x32xf32>, vector<32x32xf32>, vector<1x32xf32> -> vector<1x32xf32>
    %1902 = arith.addf %1901, %6 : vector<1x32xf32>
    %cst_322 = arith.constant dense<0xFF800000> : vector<1xf32>
    %1903 = vector.multi_reduction <maximumf>, %1902, %cst_322 [1] : vector<1x32xf32> to vector<1xf32>
    %1904 = vector.shape_cast %1903 : vector<1xf32> to vector<1x1xf32>
    %1905 = vector.broadcast %1904 : vector<1x1xf32> to vector<1x32xf32>
    %1906 = arith.cmpf oeq, %1902, %1905 : vector<1x32xf32>
    %c32_i32_323 = arith.constant 32 : i32
    %1907 = vector.broadcast %c32_i32_323 : i32 to vector<1x32xi32>
    %1908 = arith.select %1906, %8, %1907 : vector<1x32xi1>, vector<1x32xi32>
    %cst_324 = arith.constant dense<2147483647> : vector<1xi32>
    %1909 = vector.multi_reduction <minsi>, %1908, %cst_324 [1] : vector<1x32xi32> to vector<1xi32>
    %1910 = vector.shape_cast %1909 : vector<1xi32> to vector<1x1xi32>
    %c2_i32_325 = arith.constant 2 : i32
    %1911 = vector.broadcast %c2_i32_325 : i32 to vector<1x1xi32>
    %1912 = arith.cmpi eq, %1910, %1911 : vector<1x1xi32>
    %1913 = arith.extui %1912 : vector<1x1xi1> to vector<1x1xi32>
    %c1_i32_326 = arith.constant 1 : i32
    %1914 = vector.broadcast %c1_i32_326 : i32 to vector<1x1xi32>
    %1915 = arith.subi %1914, %1878 : vector<1x1xi32>
    %c1_i32_327 = arith.constant 1 : i32
    %1916 = vector.broadcast %c1_i32_327 : i32 to vector<1x1xi32>
    %1917 = arith.subi %1916, %1913 : vector<1x1xi32>
    %1918 = arith.muli %1915, %1917 : vector<1x1xi32>
    %c19_i32 = arith.constant 19 : i32
    %1919 = vector.broadcast %c19_i32 : i32 to vector<1x128xi32>
    %1920 = arith.cmpi eq, %507, %1919 : vector<1x128xi32>
    %1921 = arith.extui %1920 : vector<1x128xi1> to vector<1x128xi32>
    %1922 = vector.broadcast %1918 : vector<1x1xi32> to vector<1x128xi32>
    %1923 = arith.muli %1921, %1922 : vector<1x128xi32>
    %1924 = vector.broadcast %1910 : vector<1x1xi32> to vector<1x128xi32>
    %1925 = arith.muli %1923, %1924 : vector<1x128xi32>
    %c1_i32_328 = arith.constant 1 : i32
    %1926 = vector.broadcast %c1_i32_328 : i32 to vector<1x128xi32>
    %1927 = arith.subi %1926, %1923 : vector<1x128xi32>
    %1928 = arith.muli %1927, %1857 : vector<1x128xi32>
    %1929 = arith.addi %1925, %1928 : vector<1x128xi32>
    %c0_329 = arith.constant 0 : index
    %c0_330 = arith.constant 0 : index
    %1930 = vector.load %arg11[%c0_329, %c0_330] : memref<1x128xi32, #tpu.memory_space<vmem>>, vector<1x128xi32>
    tpu.vector_store %arg11[%c0_329, %c0_330], %1929 {strides = array<i32>} : memref<1x128xi32, #tpu.memory_space<vmem>>, vector<1x128xi32>,
    return
  }
}

</mosaic_0001>

<llo_original>
// kernel: run_seq2seq.1
$region0: #{run_seq2seq.1}
  #allocation0 [shape = 'u32[]', space=smem, size = 0x4, offset = 0x4, fixed_abs, tag = 'smem constant byte address 0x4 - core index']
  #allocation1 [shape = 'u32[144,128]{1,0:T(1,128)}', space=vmem, size = 0x12000, scoped, tag = 'internal scratch']
  #allocation2 [shape = 's32[1]{0:T(128)S(6)}', space=smem, size = 0x200, scoped, tag = 'scoped memory for run_seq2seq.1']
  %s0 = inlined_call_operand.vmem [shape: s32[8,1], index: 0, kind: input, shape index: {}]
  %s1 = inlined_call_operand.<no memory space> [shape: s32[1], index: 1, kind: input, shape index: {}]
  %s2 = inlined_call_operand.vmem [shape: f32[32,128], index: 2, kind: input, shape index: {}]
  %s3 = inlined_call_operand.hbm [shape: f32[32,128], index: 3, kind: input, shape index: {}]
  %s4 = inlined_call_operand.vmem [shape: f32[1,128], index: 4, kind: input, shape index: {}]
  %s5 = inlined_call_operand.hbm [shape: f32[64,128], index: 5, kind: input, shape index: {}]
  %s6 = inlined_call_operand.vmem [shape: f32[1,128], index: 6, kind: input, shape index: {}]
  %s7 = inlined_call_operand.hbm [shape: f32[64,128], index: 7, kind: input, shape index: {}]
  %s8 = inlined_call_operand.vmem [shape: f32[1,128], index: 8, kind: input, shape index: {}]
  %s9 = inlined_call_operand.hbm [shape: f32[32,32], index: 9, kind: input, shape index: {}]
  %s10 = inlined_call_operand.hbm [shape: f32[1,32], index: 10, kind: input, shape index: {}]
  %s11 = inlined_call_operand.hbm [shape: s32[1,128], index: 11, kind: output, shape index: {}]
  %s12 = sld [smem:[#allocation0]]
  $region74: #{run_seq2seq.1} parent=0
    _
  %s14 = ssub.s32 1, %s12
  %s15 = scalar_select 0, %s14, %s12
  %16 = sst [smem:[#allocation2]] %s1
  $region1: #{run_seq2seq.1} parent=0
    #allocation3 [shape = 'u8[16384]{0}', space=vmem, size = 0x4000, scoped, tag = 'input window, operand 3, single buffered']
    #allocation4 [shape = 's32[1]{0}', space=sflag, size = 0x4, scoped, tag = 'scoped memory for run_seq2seq.1']
    #allocation5 [shape = 's32[1]{0}', space=sflag, size = 0x4, scoped, tag = 'scoped memory for run_seq2seq.1']
    #allocation6 [shape = 'u8[32768]{0}', space=vmem, size = 0x8000, scoped, tag = 'input window, operand 5, single buffered']
    #allocation7 [shape = 's32[1]{0}', space=sflag, size = 0x4, scoped, tag = 'scoped memory for run_seq2seq.1']
    #allocation8 [shape = 'u8[32768]{0}', space=vmem, size = 0x8000, scoped, tag = 'input window, operand 7, single buffered']
    #allocation9 [shape = 'u8[16384]{0}', space=vmem, size = 0x4000, scoped, tag = 'input window, operand 9, single buffered']
    #allocation10 [shape = 's32[1]{0}', space=sflag, size = 0x4, scoped, tag = 'scoped memory for run_seq2seq.1']
    #allocation11 [shape = 'u8[512]{0}', space=vmem, size = 0x400, scoped, tag = 'input window, operand 10, single buffered']
    #allocation12 [shape = 'u8[512]{0}', space=vmem, size = 0x400, scoped, tag = 'output window, operand 0, single buffered']
    %17 = vsyncpa [#allocation4], 0
    %18 = vsyncpa [#allocation7], 0
    %19 = vsyncpa [#allocation10], 0
    %20 = vsyncpa [#allocation5], 0
    // Predicated region
    $region2: #{run_seq2seq.1} parent=1 // pred_check
      _
    $region3: #{run_seq2seq.1} parent=1 // pred_check_branch
      %22 = sbr.rel (0) target = $region5
    $region4: #{run_seq2seq.1} parent=1 // pred_region
      _
    $region5: #{run_seq2seq.1} parent=1 // pred_fallthru
      _
    // Predicated region
    $region6: #{run_seq2seq.1} parent=1 // pred_check
      _
    $region7: #{run_seq2seq.1} parent=1 // pred_check_branch
      %24 = sbr.rel (0) target = $region9
    $region8: #{run_seq2seq.1} parent=1 // pred_region
      _
    $region9: #{run_seq2seq.1} parent=1 // pred_fallthru
      _
    // Predicated region
    $region10: #{run_seq2seq.1} parent=1 // pred_check
      _
    $region11: #{run_seq2seq.1} parent=1 // pred_check_branch
      %26 = sbr.rel (0) target = $region13
    $region12: #{run_seq2seq.1} parent=1 // pred_region
      _
    $region13: #{run_seq2seq.1} parent=1 // pred_fallthru
      _
    // Predicated region
    $region14: #{run_seq2seq.1} parent=1 // pred_check
      _
    $region15: #{run_seq2seq.1} parent=1 // pred_check_branch
      %28 = sbr.rel (0) target = $region17
    $region16: #{run_seq2seq.1} parent=1 // pred_region
      %s30 = ssub.s32 512, 512
      %31 = vsyncadd [#allocation4], %s30
      %s32 = sshll.u32 [#allocation3], 4
      %s33 = int_to_ptr.vmem [resolvable:$true] %s32
      %38 = dma.hbm_to_vmem [thread:$0]  %s3, 512, %s33, [#allocation4], 128, 128, 8
    $region17: #{run_seq2seq.1} parent=1 // pred_fallthru
      _
    // Predicated region
    $region18: #{run_seq2seq.1} parent=1 // pred_check
      _
    $region19: #{run_seq2seq.1} parent=1 // pred_check_branch
      %40 = sbr.rel (0) target = $region21
    $region20: #{run_seq2seq.1} parent=1 // pred_region
      _
    $region21: #{run_seq2seq.1} parent=1 // pred_fallthru
      _
    // Predicated region
    $region22: #{run_seq2seq.1} parent=1 // pred_check
      _
    $region23: #{run_seq2seq.1} parent=1 // pred_check_branch
      %42 = sbr.rel (0) target = $region25
    $region24: #{run_seq2seq.1} parent=1 // pred_region
      %s44 = ssub.s32 1024, 1024
      %45 = vsyncadd [#allocation7], %s44
      %s46 = sshll.u32 [#allocation6], 4
      %s47 = int_to_ptr.vmem [resolvable:$true] %s46
      %52 = dma.hbm_to_vmem [thread:$0]  %s5, 1024, %s47, [#allocation7], 128, 128, 8
    $region25: #{run_seq2seq.1} parent=1 // pred_fallthru
      _
    // Predicated region
    $region26: #{run_seq2seq.1} parent=1 // pred_check
      _
    $region27: #{run_seq2seq.1} parent=1 // pred_check_branch
      %54 = sbr.rel (0) target = $region29
    $region28: #{run_seq2seq.1} parent=1 // pred_region
      _
    $region29: #{run_seq2seq.1} parent=1 // pred_fallthru
      _
    // Predicated region
    $region30: #{run_seq2seq.1} parent=1 // pred_check
      _
    $region31: #{run_seq2seq.1} parent=1 // pred_check_branch
      %56 = sbr.rel (0) target = $region33
    $region32: #{run_seq2seq.1} parent=1 // pred_region
      %s58 = ssub.s32 1024, 1024
      %59 = vsyncadd [#allocation7], %s58
      %s60 = sshll.u32 [#allocation8], 4
      %s61 = int_to_ptr.vmem [resolvable:$true] %s60
      %66 = dma.hbm_to_vmem [thread:$0]  %s7, 1024, %s61, [#allocation7], 128, 128, 8
    $region33: #{run_seq2seq.1} parent=1 // pred_fallthru
      _
    // Predicated region
    $region34: #{run_seq2seq.1} parent=1 // pred_check
      _
    $region35: #{run_seq2seq.1} parent=1 // pred_check_branch
      %68 = sbr.rel (0) target = $region37
    $region36: #{run_seq2seq.1} parent=1 // pred_region
      _
    $region37: #{run_seq2seq.1} parent=1 // pred_fallthru
      _
    // Predicated region
    $region38: #{run_seq2seq.1} parent=1 // pred_check
      _
    $region39: #{run_seq2seq.1} parent=1 // pred_check_branch
      %70 = sbr.rel (0) target = $region41
    $region40: #{run_seq2seq.1} parent=1 // pred_region
      %s72 = ssub.s32 512, 512
      %73 = vsyncadd [#allocation10], %s72
      %s74 = sshll.u32 [#allocation9], 4
      %s75 = int_to_ptr.vmem [resolvable:$true] %s74
      %80 = dma.hbm_to_vmem [thread:$0]  %s9, 512, %s75, [#allocation10], 128, 128, 8
    $region41: #{run_seq2seq.1} parent=1 // pred_fallthru
      _
    // Predicated region
    $region42: #{run_seq2seq.1} parent=1 // pred_check
      _
    $region43: #{run_seq2seq.1} parent=1 // pred_check_branch
      %82 = sbr.rel (0) target = $region45
    $region44: #{run_seq2seq.1} parent=1 // pred_region
      %s84 = ssub.s32 16, 16
      %85 = vsyncadd [#allocation10], %s84
      %s87 = sshll.u32 [#allocation11], 4
      %s88 = int_to_ptr.vmem [resolvable:$true] %s87
      %90 = dma.hbm_to_vmem [thread:$0]  %s10, 16, %s88, [#allocation10]
    $region45: #{run_seq2seq.1} parent=1 // pred_fallthru
      _
    // Predicated region
    $region46: #{run_seq2seq.1} parent=1 // pred_check
      _
    $region47: #{run_seq2seq.1} parent=1 // pred_check_branch
      %92 = sbr.rel (0) target = $region49
    $region48: #{run_seq2seq.1} parent=1 // pred_region
      %93 = dma.done [#allocation4], 512
    $region49: #{run_seq2seq.1} parent=1 // pred_fallthru
      _
    // Predicated region
    $region50: #{run_seq2seq.1} parent=1 // pred_check
      _
    $region51: #{run_seq2seq.1} parent=1 // pred_check_branch
      %95 = sbr.rel (0) target = $region53
    $region52: #{run_seq2seq.1} parent=1 // pred_region
      %96 = dma.done [#allocation7], 1024
    $region53: #{run_seq2seq.1} parent=1 // pred_fallthru
      _
    // Predicated region
    $region54: #{run_seq2seq.1} parent=1 // pred_check
      _
    $region55: #{run_seq2seq.1} parent=1 // pred_check_branch
      %98 = sbr.rel (0) target = $region57
    $region56: #{run_seq2seq.1} parent=1 // pred_region
      %99 = dma.done [#allocation7], 1024
    $region57: #{run_seq2seq.1} parent=1 // pred_fallthru
      _
    // Predicated region
    $region58: #{run_seq2seq.1} parent=1 // pred_check
      _
    $region59: #{run_seq2seq.1} parent=1 // pred_check_branch
      %101 = sbr.rel (0) target = $region61
    $region60: #{run_seq2seq.1} parent=1 // pred_region
      %102 = dma.done [#allocation10], 512
    $region61: #{run_seq2seq.1} parent=1 // pred_fallthru
      _
    // Predicated region
    $region62: #{run_seq2seq.1} parent=1 // pred_check
      _
    $region63: #{run_seq2seq.1} parent=1 // pred_check_branch
      %104 = sbr.rel (0) target = $region65
    $region64: #{run_seq2seq.1} parent=1 // pred_region
      %105 = dma.done [#allocation10], 16
    $region65: #{run_seq2seq.1} parent=1 // pred_fallthru
      _
    %v106 = vld [vmem:[#allocation3] sm:$0xff]
    %v107 = vld [vmem:[#allocation3 + $0x8] sm:$0xff]
    %v108 = vld [vmem:[#allocation3 + $0x10] sm:$0xff]
    %v109 = vld [vmem:[#allocation3 + $0x18] sm:$0xff]
    %v110 = vld [vmem:[#allocation6] sm:$0xff]
    %v111 = vld [vmem:[#allocation6 + $0x8] sm:$0xff]
    %v112 = vld [vmem:[#allocation6 + $0x10] sm:$0xff]
    %v113 = vld [vmem:[#allocation6 + $0x18] sm:$0xff]
    %v114 = vld [vmem:[#allocation6 + $0x20] sm:$0xff]
    %v115 = vld [vmem:[#allocation6 + $0x28] sm:$0xff]
    %v116 = vld [vmem:[#allocation6 + $0x30] sm:$0xff]
    %v117 = vld [vmem:[#allocation6 + $0x38] sm:$0xff]
    %v118 = vld [vmem:[%s6] sm:$0x1]
    %v119 = vld [vmem:[#allocation8] sm:$0xff]
    %v120 = vld [vmem:[#allocation8 + $0x8] sm:$0xff]
    %v121 = vld [vmem:[#allocation8 + $0x10] sm:$0xff]
    %v122 = vld [vmem:[#allocation8 + $0x18] sm:$0xff]
    %v123 = vld [vmem:[#allocation8 + $0x20] sm:$0xff]
    %v124 = vld [vmem:[#allocation8 + $0x28] sm:$0xff]
    %v125 = vld [vmem:[#allocation8 + $0x30] sm:$0xff]
    %v126 = vld [vmem:[#allocation8 + $0x38] sm:$0xff]
    %v127 = vld [vmem:[%s8] sm:$0x1]
    %v128 = vld [vmem:[#allocation9] sm:$0xff]
    %v129 = vld [vmem:[#allocation9 + $0x8] sm:$0xff]
    %v130 = vld [vmem:[#allocation9 + $0x10] sm:$0xff]
    %v131 = vld [vmem:[#allocation9 + $0x18] sm:$0xff]
    %v132 = vld [vmem:[#allocation11] sm:$0x1]
    %s133 = sld [smem:[#allocation2]]
    %v134 = vlaneseq
    %v135 = vand.u32 %v134, 127
    %v136 = vld [vmem:[%s0] sm:$0xff]
    %137 = vset.pattern.permute.xlu0 0
    %138 = vperm.xlu0 %137, %v136
    %v139 = vpop.permute.xlu0 %138
    %vm140 = vcmp.eq.s32.totalorder %v135, %v139
    %v141 = vsel %vm140, 1, 0
    %v142 = vcvt.s32.f32 %v141
    %v143 = vld [vmem:[%s2] sm:$0xff]
    %v144 = vld [vmem:[%s2 + $0x8] sm:$0xff]
    %v145 = vld [vmem:[%s2 + $0x10] sm:$0xff]
    %v146 = vld [vmem:[%s2 + $0x18] sm:$0xff]
    %v147 = vld [vmem:[%s4] sm:$0x1]
    %v149 = vlaneseq
    %v150 = vshrl.u32 %v149, 7
    %v151 = vsub.s32 0, %v150
    %v152 = vrot.slane %v147, %v151
    %vm154 = vcmask 261120
    %v156 = vsel %vm154, %v142, 0
    %158 = vmatprep.subr.mxu0 0.0
    %159 = vmatpush1.msra.mxu0 %v143
    %160 = vmatprep.subr.mxu0 0.0
    %161 = vmatpush1.msra.mxu0 %v144
    %162 = vmatprep.subr.mxu0 0.0
    %163 = vmatpush1.msra.mxu0 %v145
    %164 = vmatprep.subr.mxu0 0.0
    %165 = vmatpush1.msra.mxu0 %v146
    %166 = vmatprep.subr.mxu0 0.0
    %167 = vmatpush1.msra.mxu0 0.0
    %168 = vmatprep.subr.mxu0 0.0
    %169 = vmatpush1.msra.mxu0 0.0
    %170 = vmatprep.subr.mxu0 0.0
    %171 = vmatpush1.msra.mxu0 0.0
    %172 = vmatprep.subr.mxu0 0.0
    %173 = vmatpush1.msra.mxu0 0.0
    %174 = vmatprep.subr.mxu0 0.0
    %175 = vmatpush1.msra.mxu0 0.0
    %176 = vmatprep.subr.mxu0 0.0
    %177 = vmatpush1.msra.mxu0 0.0
    %178 = vmatprep.subr.mxu0 0.0
    %179 = vmatpush1.msra.mxu0 0.0
    %180 = vmatprep.subr.mxu0 0.0
    %181 = vmatpush1.msra.mxu0 0.0
    %182 = vmatprep.subr.mxu0 0.0
    %183 = vmatpush1.msra.mxu0 0.0
    %184 = vmatprep.subr.mxu0 0.0
    %185 = vmatpush1.msra.mxu0 0.0
    %186 = vmatprep.subr.mxu0 0.0
    %187 = vmatpush1.msra.mxu0 0.0
    %188 = vmatprep.subr.mxu0 0.0
    %189 = vmatpush1.msra.mxu0 0.0
    %190 = vmatprep.subr.mxu0 0.0
    %191 = vmatpush1.msra.mxu0 0.0
    %192 = vmatprep.subr.mxu0 0.0
    %193 = vmatpush1.msra.mxu0 0.0
    %194 = vmatprep.subr.mxu0 0.0
    %195 = vmatpush1.msra.mxu0 0.0
    %196 = vmatprep.subr.mxu0 0.0
    %197 = vmatpush1.msra.mxu0 0.0
    %198 = vmatprep.subr.mxu0 0.0
    %199 = vmatpush1.msra.mxu0 0.0
    %200 = vmatprep.subr.mxu0 0.0
    %201 = vmatpush1.msra.mxu0 0.0
    %202 = vmatprep.subr.mxu0 0.0
    %203 = vmatpush1.msra.mxu0 0.0
    %204 = vmatprep.subr.mxu0 0.0
    %205 = vmatpush1.msra.mxu0 0.0
    %206 = vmatprep.subr.mxu0 0.0
    %207 = vmatpush1.msra.mxu0 0.0
    %208 = vmatprep.subr.mxu0 0.0
    %209 = vmatpush1.msra.mxu0 0.0
    %210 = vmatprep.subr.mxu0 0.0
    %211 = vmatpush1.msra.mxu0 0.0
    %212 = vmatprep.subr.mxu0 0.0
    %213 = vmatpush1.msra.mxu0 0.0
    %214 = vmatprep.subr.mxu0 0.0
    %215 = vmatpush1.msra.mxu0 0.0
    %216 = vmatprep.subr.mxu0 0.0
    %217 = vmatpush1.msra.mxu0 0.0
    %218 = vmatprep.subr.mxu0 0.0
    %219 = vmatpush1.msra.mxu0 0.0
    %220 = vmatprep.subr.mxu0 0.0
    %221 = vmatpush1.msra.mxu0 0.0
    %222 = vmatprep.mubr.f32.mxu0 0.0
    %223 = vmatmul.mubr.f32.gmra.mrb[0].mxu0 %v156
    %v224 = vpop.f32.mrb[0].mxu0
    %v225 = vadd.f32 %v152, %v224
    %v226 = vpop.f32.mrb[0].mxu0
    %227 = vdwg.mxu0
    %v229 = vsel %vm154, 0.0, 0
    %231 = vmatprep.subr.mxu0 0.0
    %232 = vmatpush1.msra.mxu0 %v106
    %233 = vmatprep.subr.mxu0 0.0
    %234 = vmatpush1.msra.mxu0 %v107
    %235 = vmatprep.subr.mxu0 0.0
    %236 = vmatpush1.msra.mxu0 %v108
    %237 = vmatprep.subr.mxu0 0.0
    %238 = vmatpush1.msra.mxu0 %v109
    %239 = vmatprep.subr.mxu0 0.0
    %240 = vmatpush1.msra.mxu0 0.0
    %241 = vmatprep.subr.mxu0 0.0
    %242 = vmatpush1.msra.mxu0 0.0
    %243 = vmatprep.subr.mxu0 0.0
    %244 = vmatpush1.msra.mxu0 0.0
    %245 = vmatprep.subr.mxu0 0.0
    %246 = vmatpush1.msra.mxu0 0.0
    %247 = vmatprep.subr.mxu0 0.0
    %248 = vmatpush1.msra.mxu0 0.0
    %249 = vmatprep.subr.mxu0 0.0
    %250 = vmatpush1.msra.mxu0 0.0
    %251 = vmatprep.subr.mxu0 0.0
    %252 = vmatpush1.msra.mxu0 0.0
    %253 = vmatprep.subr.mxu0 0.0
    %254 = vmatpush1.msra.mxu0 0.0
    %255 = vmatprep.subr.mxu0 0.0
    %256 = vmatpush1.msra.mxu0 0.0
    %257 = vmatprep.subr.mxu0 0.0
    %258 = vmatpush1.msra.mxu0 0.0
    %259 = vmatprep.subr.mxu0 0.0
    %260 = vmatpush1.msra.mxu0 0.0
    %261 = vmatprep.subr.mxu0 0.0
    %262 = vmatpush1.msra.mxu0 0.0
    %263 = vmatprep.subr.mxu0 0.0
    %264 = vmatpush1.msra.mxu0 0.0
    %265 = vmatprep.subr.mxu0 0.0
    %266 = vmatpush1.msra.mxu0 0.0
    %267 = vmatprep.subr.mxu0 0.0
    %268 = vmatpush1.msra.mxu0 0.0
    %269 = vmatprep.subr.mxu0 0.0
    %270 = vmatpush1.msra.mxu0 0.0
    %271 = vmatprep.subr.mxu0 0.0
    %272 = vmatpush1.msra.mxu0 0.0
    %273 = vmatprep.subr.mxu0 0.0
    %274 = vmatpush1.msra.mxu0 0.0
    %275 = vmatprep.subr.mxu0 0.0
    %276 = vmatpush1.msra.mxu0 0.0
    %277 = vmatprep.subr.mxu0 0.0
    %278 = vmatpush1.msra.mxu0 0.0
    %279 = vmatprep.subr.mxu0 0.0
    %280 = vmatpush1.msra.mxu0 0.0
    %281 = vmatprep.subr.mxu0 0.0
    %282 = vmatpush1.msra.mxu0 0.0
    %283 = vmatprep.subr.mxu0 0.0
    %284 = vmatpush1.msra.mxu0 0.0
    %285 = vmatprep.subr.mxu0 0.0
    %286 = vmatpush1.msra.mxu0 0.0
    %287 = vmatprep.subr.mxu0 0.0
    %288 = vmatpush1.msra.mxu0 0.0
    %289 = vmatprep.subr.mxu0 0.0
    %290 = vmatpush1.msra.mxu0 0.0
    %291 = vmatprep.subr.mxu0 0.0
    %292 = vmatpush1.msra.mxu0 0.0
    %293 = vmatprep.subr.mxu0 0.0
    %294 = vmatpush1.msra.mxu0 0.0
    %295 = vmatprep.mubr.f32.mxu0 0.0
    %296 = vmatmul.mubr.f32.gmra.mrb[0].mxu0 %v229
    %v297 = vpop.f32.mrb[0].mxu0
    %v298 = vadd.f32 0.0, %v297
    %v299 = vpop.f32.mrb[0].mxu0
    %300 = vdwg.mxu0
    %v301 = vadd.f32 %v225, %v298
    %v302 = vxor.u32 %v301, 2147483648
    %v303 = vmul.f32 %v302, 1.442695
    %v304 = vpow.pop %v303
    %v305 = vadd.f32 %v304, 1.0
    %v306 = vrcp.pop %v305
    %v307 = vmul.f32 1.0, %v306
    %v308 = vtanh.pop %v301
    %v309 = vmul.f32 %v307, 0.0
    %311 = vrot.lane.b32.xlu0 %v308, 64
    %v312 = vpop.permute.xlu0 %311
    %v314 = vmul.f32 %v307, %v312
    %316 = vrot.lane.b32.xlu0 %v314, 32
    %v317 = vpop.permute.xlu0 %316
    %v319 = vadd.f32 %v309, %v317
    %v320 = vtanh.pop %v319
    %322 = vrot.lane.b32.xlu0 %v320, 64
    %v323 = vpop.permute.xlu0 %322
    %v325 = vmul.f32 %v307, %v323
    %327 = vrot.lane.b32.xlu0 %v325, 32
    %v328 = vpop.permute.xlu0 %327
    %v330 = vsel %vm154, %v328, 0.0
    %vm331 = vcmask 523264
    %v333 = vsel %vm331, %v330, 0
    %335 = vmatprep.subr.mxu0 0.0
    %336 = vmatpush1.msra.mxu0 %v110
    %337 = vmatprep.subr.mxu0 0.0
    %338 = vmatpush1.msra.mxu0 %v111
    %339 = vmatprep.subr.mxu0 0.0
    %340 = vmatpush1.msra.mxu0 %v112
    %341 = vmatprep.subr.mxu0 0.0
    %342 = vmatpush1.msra.mxu0 %v113
    %343 = vmatprep.subr.mxu0 0.0
    %344 = vmatpush1.msra.mxu0 %v114
    %345 = vmatprep.subr.mxu0 0.0
    %346 = vmatpush1.msra.mxu0 %v115
    %347 = vmatprep.subr.mxu0 0.0
    %348 = vmatpush1.msra.mxu0 %v116
    %349 = vmatprep.subr.mxu0 0.0
    %350 = vmatpush1.msra.mxu0 %v117
    %351 = vmatprep.subr.mxu0 0.0
    %352 = vmatpush1.msra.mxu0 0.0
    %353 = vmatprep.subr.mxu0 0.0
    %354 = vmatpush1.msra.mxu0 0.0
    %355 = vmatprep.subr.mxu0 0.0
    %356 = vmatpush1.msra.mxu0 0.0
    %357 = vmatprep.subr.mxu0 0.0
    %358 = vmatpush1.msra.mxu0 0.0
    %359 = vmatprep.subr.mxu0 0.0
    %360 = vmatpush1.msra.mxu0 0.0
    %361 = vmatprep.subr.mxu0 0.0
    %362 = vmatpush1.msra.mxu0 0.0
    %363 = vmatprep.subr.mxu0 0.0
    %364 = vmatpush1.msra.mxu0 0.0
    %365 = vmatprep.subr.mxu0 0.0
    %366 = vmatpush1.msra.mxu0 0.0
    %367 = vmatprep.subr.mxu0 0.0
    %368 = vmatpush1.msra.mxu0 0.0
    %369 = vmatprep.subr.mxu0 0.0
    %370 = vmatpush1.msra.mxu0 0.0
    %371 = vmatprep.subr.mxu0 0.0
    %372 = vmatpush1.msra.mxu0 0.0
    %373 = vmatprep.subr.mxu0 0.0
    %374 = vmatpush1.msra.mxu0 0.0
    %375 = vmatprep.subr.mxu0 0.0
    %376 = vmatpush1.msra.mxu0 0.0
    %377 = vmatprep.subr.mxu0 0.0
    %378 = vmatpush1.msra.mxu0 0.0
    %379 = vmatprep.subr.mxu0 0.0
    %380 = vmatpush1.msra.mxu0 0.0
    %381 = vmatprep.subr.mxu0 0.0
    %382 = vmatpush1.msra.mxu0 0.0
    %383 = vmatprep.subr.mxu0 0.0
    %384 = vmatpush1.msra.mxu0 0.0
    %385 = vmatprep.subr.mxu0 0.0
    %386 = vmatpush1.msra.mxu0 0.0
    %387 = vmatprep.subr.mxu0 0.0
    %388 = vmatpush1.msra.mxu0 0.0
    %389 = vmatprep.subr.mxu0 0.0
    %390 = vmatpush1.msra.mxu0 0.0
    %391 = vmatprep.subr.mxu0 0.0
    %392 = vmatpush1.msra.mxu0 0.0
    %393 = vmatprep.subr.mxu0 0.0
    %394 = vmatpush1.msra.mxu0 0.0
    %395 = vmatprep.subr.mxu0 0.0
    %396 = vmatpush1.msra.mxu0 0.0
    %397 = vmatprep.subr.mxu0 0.0
    %398 = vmatpush1.msra.mxu0 0.0
    %399 = vmatprep.mubr.f32.mxu0 0.0
    %400 = vmatmul.mubr.f32.gmra.mrb[0].mxu0 %v333
    %v401 = vpop.f32.mrb[0].mxu0
    %v402 = vadd.f32 %v118, %v401
    %v403 = vpop.f32.mrb[0].mxu0
    %404 = vdwg.mxu0
    %v405 = vxor.u32 %v402, 2147483648
    %v406 = vmul.f32 %v405, 1.442695
    %v407 = vpow.pop %v406
    %v408 = vadd.f32 %v407, 1.0
    %v409 = vrcp.pop %v408
    %v410 = vmul.f32 1.0, %v409
    %v411 = vtanh.pop %v402
    %v412 = vmul.f32 %v410, 0.0
    %414 = vrot.lane.b32.xlu0 %v411, 64
    %v415 = vpop.permute.xlu0 %414
    %v417 = vmul.f32 %v410, %v415
    %419 = vrot.lane.b32.xlu0 %v417, 32
    %v420 = vpop.permute.xlu0 %419
    %v422 = vadd.f32 %v412, %v420
    %v423 = vtanh.pop %v422
    %425 = vrot.lane.b32.xlu0 %v423, 64
    %v426 = vpop.permute.xlu0 %425
    %v428 = vmul.f32 %v410, %v426
    %p429 = scmp.gt.s32.totalorder %s133, 0
    %s430 = scalar_select %p429, 1, 0
    %s431 = scvt.s32.f32 %s430
    %s432 = ssub.f32 1.0, %s431
    %v433 = vstv %s431
    %v434 = vmul.f32 %v433, %v325
    %v435 = vstv %s432
    %v436 = vmul.f32 %v435, 0.0
    %v437 = vadd.f32 %v434, %v436
    %v438 = vmul.f32 %v433, %v319
    %v439 = vadd.f32 %v438, %v436
    %v440 = vmul.f32 %v433, %v428
    %v441 = vadd.f32 %v440, %v436
    %v442 = vmul.f32 %v433, %v422
    %v443 = vadd.f32 %v442, %v436
    %445 = vrot.lane.b32.xlu0 %v437, 32
    %v446 = vpop.permute.xlu0 %445
    %v447 = vsel %vm154, %v446, 0
    %449 = vmatprep.subr.mxu0 0.0
    %450 = vmatpush1.msra.mxu0 %v106
    %451 = vmatprep.subr.mxu0 0.0
    %452 = vmatpush1.msra.mxu0 %v107
    %453 = vmatprep.subr.mxu0 0.0
    %454 = vmatpush1.msra.mxu0 %v108
    %455 = vmatprep.subr.mxu0 0.0
    %456 = vmatpush1.msra.mxu0 %v109
    %457 = vmatprep.subr.mxu0 0.0
    %458 = vmatpush1.msra.mxu0 0.0
    %459 = vmatprep.subr.mxu0 0.0
    %460 = vmatpush1.msra.mxu0 0.0
    %461 = vmatprep.subr.mxu0 0.0
    %462 = vmatpush1.msra.mxu0 0.0
    %463 = vmatprep.subr.mxu0 0.0
    %464 = vmatpush1.msra.mxu0 0.0
    %465 = vmatprep.subr.mxu0 0.0
    %466 = vmatpush1.msra.mxu0 0.0
    %467 = vmatprep.subr.mxu0 0.0
    %468 = vmatpush1.msra.mxu0 0.0
    %469 = vmatprep.subr.mxu0 0.0
    %470 = vmatpush1.msra.mxu0 0.0
    %471 = vmatprep.subr.mxu0 0.0
    %472 = vmatpush1.msra.mxu0 0.0
    %473 = vmatprep.subr.mxu0 0.0
    %474 = vmatpush1.msra.mxu0 0.0
    %475 = vmatprep.subr.mxu0 0.0
    %476 = vmatpush1.msra.mxu0 0.0
    %477 = vmatprep.subr.mxu0 0.0
    %478 = vmatpush1.msra.mxu0 0.0
    %479 = vmatprep.subr.mxu0 0.0
    %480 = vmatpush1.msra.mxu0 0.0
    %481 = vmatprep.subr.mxu0 0.0
    %482 = vmatpush1.msra.mxu0 0.0
    %483 = vmatprep.subr.mxu0 0.0
    %484 = vmatpush1.msra.mxu0 0.0
    %485 = vmatprep.subr.mxu0 0.0
    %486 = vmatpush1.msra.mxu0 0.0
    %487 = vmatprep.subr.mxu0 0.0
    %488 = vmatpush1.msra.mxu0 0.0
    %489 = vmatprep.subr.mxu0 0.0
    %490 = vmatpush1.msra.mxu0 0.0
    %491 = vmatprep.subr.mxu0 0.0
    %492 = vmatpush1.msra.mxu0 0.0
    %493 = vmatprep.subr.mxu0 0.0
    %494 = vmatpush1.msra.mxu0 0.0
    %495 = vmatprep.subr.mxu0 0.0
    %496 = vmatpush1.msra.mxu0 0.0
    %497 = vmatprep.subr.mxu0 0.0
    %498 = vmatpush1.msra.mxu0 0.0
    %499 = vmatprep.subr.mxu0 0.0
    %500 = vmatpush1.msra.mxu0 0.0
    %501 = vmatprep.subr.mxu0 0.0
    %502 = vmatpush1.msra.mxu0 0.0
    %503 = vmatprep.subr.mxu0 0.0
    %504 = vmatpush1.msra.mxu0 0.0
    %505 = vmatprep.subr.mxu0 0.0
    %506 = vmatpush1.msra.mxu0 0.0
    %507 = vmatprep.subr.mxu0 0.0
    %508 = vmatpush1.msra.mxu0 0.0
    %509 = vmatprep.subr.mxu0 0.0
    %510 = vmatpush1.msra.mxu0 0.0
    %511 = vmatprep.subr.mxu0 0.0
    %512 = vmatpush1.msra.mxu0 0.0
    %513 = vmatprep.mubr.f32.mxu0 0.0
    %514 = vmatmul.mubr.f32.gmra.mrb[0].mxu0 %v447
    %v515 = vpop.f32.mrb[0].mxu0
    %v516 = vadd.f32 0.0, %v515
    %v517 = vpop.f32.mrb[0].mxu0
    %518 = vdwg.mxu0
    %v520 = vrot.slane %v516, 7
    %v522 = vadd.f32 %v225, %v520
    %v523 = vxor.u32 %v522, 2147483648
    %v524 = vmul.f32 %v523, 1.442695
    %v525 = vpow.pop %v524
    %v526 = vadd.f32 %v525, 1.0
    %v527 = vrcp.pop %v526
    %v528 = vmul.f32 1.0, %v527
    %v529 = vtanh.pop %v522
    %v531 = vrot.slane %v439, 7
    %v533 = vmul.f32 %v528, %v531
    %535 = vrot.lane.b32.xlu0 %v529, 64
    %v536 = vpop.permute.xlu0 %535
    %v538 = vmul.f32 %v528, %v536
    %540 = vrot.lane.b32.xlu0 %v538, 32
    %v541 = vpop.permute.xlu0 %540
    %v543 = vadd.f32 %v533, %v541
    %v544 = vtanh.pop %v543
    %546 = vrot.lane.b32.xlu0 %v544, 64
    %v547 = vpop.permute.xlu0 %546
    %v549 = vmul.f32 %v528, %v547
    %551 = vrot.lane.b32.xlu0 %v549, 32
    %v552 = vpop.permute.xlu0 %551
    %v555 = vrot.slane %v441, 7
    %556 = vrot.lane.b32.xlu0 %v555, 64
    %v557 = vpop.permute.xlu0 %556
    %v559 = vsel %vm154, %v552, %v557
    %v561 = vrot.slane %v559, 1
    %v562 = vsel %vm331, %v561, 0
    %564 = vmatprep.subr.mxu0 0.0
    %565 = vmatpush1.msra.mxu0 %v110
    %566 = vmatprep.subr.mxu0 0.0
    %567 = vmatpush1.msra.mxu0 %v111
    %568 = vmatprep.subr.mxu0 0.0
    %569 = vmatpush1.msra.mxu0 %v112
    %570 = vmatprep.subr.mxu0 0.0
    %571 = vmatpush1.msra.mxu0 %v113
    %572 = vmatprep.subr.mxu0 0.0
    %573 = vmatpush1.msra.mxu0 %v114
    %574 = vmatprep.subr.mxu0 0.0
    %575 = vmatpush1.msra.mxu0 %v115
    %576 = vmatprep.subr.mxu0 0.0
    %577 = vmatpush1.msra.mxu0 %v116
    %578 = vmatprep.subr.mxu0 0.0
    %579 = vmatpush1.msra.mxu0 %v117
    %580 = vmatprep.subr.mxu0 0.0
    %581 = vmatpush1.msra.mxu0 0.0
    %582 = vmatprep.subr.mxu0 0.0
    %583 = vmatpush1.msra.mxu0 0.0
    %584 = vmatprep.subr.mxu0 0.0
    %585 = vmatpush1.msra.mxu0 0.0
    %586 = vmatprep.subr.mxu0 0.0
    %587 = vmatpush1.msra.mxu0 0.0
    %588 = vmatprep.subr.mxu0 0.0
    %589 = vmatpush1.msra.mxu0 0.0
    %590 = vmatprep.subr.mxu0 0.0
    %591 = vmatpush1.msra.mxu0 0.0
    %592 = vmatprep.subr.mxu0 0.0
    %593 = vmatpush1.msra.mxu0 0.0
    %594 = vmatprep.subr.mxu0 0.0
    %595 = vmatpush1.msra.mxu0 0.0
    %596 = vmatprep.subr.mxu0 0.0
    %597 = vmatpush1.msra.mxu0 0.0
    %598 = vmatprep.subr.mxu0 0.0
    %599 = vmatpush1.msra.mxu0 0.0
    %600 = vmatprep.subr.mxu0 0.0
    %601 = vmatpush1.msra.mxu0 0.0
    %602 = vmatprep.subr.mxu0 0.0
    %603 = vmatpush1.msra.mxu0 0.0
    %604 = vmatprep.subr.mxu0 0.0
    %605 = vmatpush1.msra.mxu0 0.0
    %606 = vmatprep.subr.mxu0 0.0
    %607 = vmatpush1.msra.mxu0 0.0
    %608 = vmatprep.subr.mxu0 0.0
    %609 = vmatpush1.msra.mxu0 0.0
    %610 = vmatprep.subr.mxu0 0.0
    %611 = vmatpush1.msra.mxu0 0.0
    %612 = vmatprep.subr.mxu0 0.0
    %613 = vmatpush1.msra.mxu0 0.0
    %614 = vmatprep.subr.mxu0 0.0
    %615 = vmatpush1.msra.mxu0 0.0
    %616 = vmatprep.subr.mxu0 0.0
    %617 = vmatpush1.msra.mxu0 0.0
    %618 = vmatprep.subr.mxu0 0.0
    %619 = vmatpush1.msra.mxu0 0.0
    %620 = vmatprep.subr.mxu0 0.0
    %621 = vmatpush1.msra.mxu0 0.0
    %622 = vmatprep.subr.mxu0 0.0
    %623 = vmatpush1.msra.mxu0 0.0
    %624 = vmatprep.subr.mxu0 0.0
    %625 = vmatpush1.msra.mxu0 0.0
    %626 = vmatprep.subr.mxu0 0.0
    %627 = vmatpush1.msra.mxu0 0.0
    %628 = vmatprep.mubr.f32.mxu0 0.0
    %629 = vmatmul.mubr.f32.gmra.mrb[0].mxu0 %v562
    %v630 = vpop.f32.mrb[0].mxu0
    %v631 = vadd.f32 %v118, %v630
    %v632 = vpop.f32.mrb[0].mxu0
    %633 = vdwg.mxu0
    %v634 = vxor.u32 %v631, 2147483648
    %v635 = vmul.f32 %v634, 1.442695
    %v636 = vpow.pop %v635
    %v637 = vadd.f32 %v636, 1.0
    %v638 = vrcp.pop %v637
    %v639 = vmul.f32 1.0, %v638
    %v640 = vtanh.pop %v631
    %v641 = vmul.f32 %v639, %v443
    %643 = vrot.lane.b32.xlu0 %v640, 64
    %v644 = vpop.permute.xlu0 %643
    %v646 = vmul.f32 %v639, %v644
    %648 = vrot.lane.b32.xlu0 %v646, 32
    %v649 = vpop.permute.xlu0 %648
    %v651 = vadd.f32 %v641, %v649
    %v652 = vtanh.pop %v651
    %654 = vrot.lane.b32.xlu0 %v652, 64
    %v655 = vpop.permute.xlu0 %654
    %v657 = vmul.f32 %v639, %v655
    %p658 = scmp.gt.s32.totalorder %s133, 1
    %s659 = scalar_select %p658, 1, 0
    %s660 = scvt.s32.f32 %s659
    %s661 = ssub.f32 1.0, %s660
    %v662 = vstv %s660
    %v663 = vmul.f32 %v662, %v549
    %v664 = vstv %s661
    %v665 = vmul.f32 %v664, %v437
    %v667 = vrot.slane %v665, 7
    %v669 = vadd.f32 %v663, %v667
    %v670 = vmul.f32 %v662, %v543
    %v671 = vmul.f32 %v664, %v439
    %v673 = vrot.slane %v671, 7
    %v675 = vadd.f32 %v670, %v673
    %v676 = vmul.f32 %v662, %v657
    %v677 = vmul.f32 %v664, %v441
    %v678 = vadd.f32 %v676, %v677
    %v679 = vmul.f32 %v662, %v651
    %v680 = vmul.f32 %v664, %v443
    %v681 = vadd.f32 %v679, %v680
    %v683 = vrot.slane %v669, 1
    %684 = vrot.lane.b32.xlu0 %v683, 32
    %v685 = vpop.permute.xlu0 %684
    %v686 = vsel %vm154, %v685, 0
    %688 = vmatprep.subr.mxu0 0.0
    %689 = vmatpush1.msra.mxu0 %v106
    %690 = vmatprep.subr.mxu0 0.0
    %691 = vmatpush1.msra.mxu0 %v107
    %692 = vmatprep.subr.mxu0 0.0
    %693 = vmatpush1.msra.mxu0 %v108
    %694 = vmatprep.subr.mxu0 0.0
    %695 = vmatpush1.msra.mxu0 %v109
    %696 = vmatprep.subr.mxu0 0.0
    %697 = vmatpush1.msra.mxu0 0.0
    %698 = vmatprep.subr.mxu0 0.0
    %699 = vmatpush1.msra.mxu0 0.0
    %700 = vmatprep.subr.mxu0 0.0
    %701 = vmatpush1.msra.mxu0 0.0
    %702 = vmatprep.subr.mxu0 0.0
    %703 = vmatpush1.msra.mxu0 0.0
    %704 = vmatprep.subr.mxu0 0.0
    %705 = vmatpush1.msra.mxu0 0.0
    %706 = vmatprep.subr.mxu0 0.0
    %707 = vmatpush1.msra.mxu0 0.0
    %708 = vmatprep.subr.mxu0 0.0
    %709 = vmatpush1.msra.mxu0 0.0
    %710 = vmatprep.subr.mxu0 0.0
    %711 = vmatpush1.msra.mxu0 0.0
    %712 = vmatprep.subr.mxu0 0.0
    %713 = vmatpush1.msra.mxu0 0.0
    %714 = vmatprep.subr.mxu0 0.0
    %715 = vmatpush1.msra.mxu0 0.0
    %716 = vmatprep.subr.mxu0 0.0
    %717 = vmatpush1.msra.mxu0 0.0
    %718 = vmatprep.subr.mxu0 0.0
    %719 = vmatpush1.msra.mxu0 0.0
    %720 = vmatprep.subr.mxu0 0.0
    %721 = vmatpush1.msra.mxu0 0.0
    %722 = vmatprep.subr.mxu0 0.0
    %723 = vmatpush1.msra.mxu0 0.0
    %724 = vmatprep.subr.mxu0 0.0
    %725 = vmatpush1.msra.mxu0 0.0
    %726 = vmatprep.subr.mxu0 0.0
    %727 = vmatpush1.msra.mxu0 0.0
    %728 = vmatprep.subr.mxu0 0.0
    %729 = vmatpush1.msra.mxu0 0.0
    %730 = vmatprep.subr.mxu0 0.0
    %731 = vmatpush1.msra.mxu0 0.0
    %732 = vmatprep.subr.mxu0 0.0
    %733 = vmatpush1.msra.mxu0 0.0
    %734 = vmatprep.subr.mxu0 0.0
    %735 = vmatpush1.msra.mxu0 0.0
    %736 = vmatprep.subr.mxu0 0.0
    %737 = vmatpush1.msra.mxu0 0.0
    %738 = vmatprep.subr.mxu0 0.0
    %739 = vmatpush1.msra.mxu0 0.0
    %740 = vmatprep.subr.mxu0 0.0
    %741 = vmatpush1.msra.mxu0 0.0
    %742 = vmatprep.subr.mxu0 0.0
    %743 = vmatpush1.msra.mxu0 0.0
    %744 = vmatprep.subr.mxu0 0.0
    %745 = vmatpush1.msra.mxu0 0.0
    %746 = vmatprep.subr.mxu0 0.0
    %747 = vmatpush1.msra.mxu0 0.0
    %748 = vmatprep.subr.mxu0 0.0
    %749 = vmatpush1.msra.mxu0 0.0
    %750 = vmatprep.subr.mxu0 0.0
    %751 = vmatpush1.msra.mxu0 0.0
    %752 = vmatprep.mubr.f32.mxu0 0.0
    %753 = vmatmul.mubr.f32.gmra.mrb[0].mxu0 %v686
    %v754 = vpop.f32.mrb[0].mxu0
    %v755 = vadd.f32 0.0, %v754
    %v756 = vpop.f32.mrb[0].mxu0
    %757 = vdwg.mxu0
    %v759 = vrot.slane %v755, 6
    %v761 = vadd.f32 %v225, %v759
    %v762 = vxor.u32 %v761, 2147483648
    %v763 = vmul.f32 %v762, 1.442695
    %v764 = vpow.pop %v763
    %v765 = vadd.f32 %v764, 1.0
    %v766 = vrcp.pop %v765
    %v767 = vmul.f32 1.0, %v766
    %v768 = vtanh.pop %v761
    %v770 = vrot.slane %v675, 7
    %v772 = vmul.f32 %v767, %v770
    %774 = vrot.lane.b32.xlu0 %v768, 64
    %v775 = vpop.permute.xlu0 %774
    %v777 = vmul.f32 %v767, %v775
    %779 = vrot.lane.b32.xlu0 %v777, 32
    %v780 = vpop.permute.xlu0 %779
    %v782 = vadd.f32 %v772, %v780
    %v783 = vtanh.pop %v782
    %785 = vrot.lane.b32.xlu0 %v783, 64
    %v786 = vpop.permute.xlu0 %785
    %v788 = vmul.f32 %v767, %v786
    %790 = vrot.lane.b32.xlu0 %v788, 32
    %v791 = vpop.permute.xlu0 %790
    %v794 = vrot.slane %v678, 6
    %795 = vrot.lane.b32.xlu0 %v794, 64
    %v796 = vpop.permute.xlu0 %795
    %v798 = vsel %vm154, %v791, %v796
    %v800 = vrot.slane %v798, 2
    %v801 = vsel %vm331, %v800, 0
    %803 = vmatprep.subr.mxu0 0.0
    %804 = vmatpush1.msra.mxu0 %v110
    %805 = vmatprep.subr.mxu0 0.0
    %806 = vmatpush1.msra.mxu0 %v111
    %807 = vmatprep.subr.mxu0 0.0
    %808 = vmatpush1.msra.mxu0 %v112
    %809 = vmatprep.subr.mxu0 0.0
    %810 = vmatpush1.msra.mxu0 %v113
    %811 = vmatprep.subr.mxu0 0.0
    %812 = vmatpush1.msra.mxu0 %v114
    %813 = vmatprep.subr.mxu0 0.0
    %814 = vmatpush1.msra.mxu0 %v115
    %815 = vmatprep.subr.mxu0 0.0
    %816 = vmatpush1.msra.mxu0 %v116
    %817 = vmatprep.subr.mxu0 0.0
    %818 = vmatpush1.msra.mxu0 %v117
    %819 = vmatprep.subr.mxu0 0.0
    %820 = vmatpush1.msra.mxu0 0.0
    %821 = vmatprep.subr.mxu0 0.0
    %822 = vmatpush1.msra.mxu0 0.0
    %823 = vmatprep.subr.mxu0 0.0
    %824 = vmatpush1.msra.mxu0 0.0
    %825 = vmatprep.subr.mxu0 0.0
    %826 = vmatpush1.msra.mxu0 0.0
    %827 = vmatprep.subr.mxu0 0.0
    %828 = vmatpush1.msra.mxu0 0.0
    %829 = vmatprep.subr.mxu0 0.0
    %830 = vmatpush1.msra.mxu0 0.0
    %831 = vmatprep.subr.mxu0 0.0
    %832 = vmatpush1.msra.mxu0 0.0
    %833 = vmatprep.subr.mxu0 0.0
    %834 = vmatpush1.msra.mxu0 0.0
    %835 = vmatprep.subr.mxu0 0.0
    %836 = vmatpush1.msra.mxu0 0.0
    %837 = vmatprep.subr.mxu0 0.0
    %838 = vmatpush1.msra.mxu0 0.0
    %839 = vmatprep.subr.mxu0 0.0
    %840 = vmatpush1.msra.mxu0 0.0
    %841 = vmatprep.subr.mxu0 0.0
    %842 = vmatpush1.msra.mxu0 0.0
    %843 = vmatprep.subr.mxu0 0.0
    %844 = vmatpush1.msra.mxu0 0.0
    %845 = vmatprep.subr.mxu0 0.0
    %846 = vmatpush1.msra.mxu0 0.0
    %847 = vmatprep.subr.mxu0 0.0
    %848 = vmatpush1.msra.mxu0 0.0
    %849 = vmatprep.subr.mxu0 0.0
    %850 = vmatpush1.msra.mxu0 0.0
    %851 = vmatprep.subr.mxu0 0.0
    %852 = vmatpush1.msra.mxu0 0.0
    %853 = vmatprep.subr.mxu0 0.0
    %854 = vmatpush1.msra.mxu0 0.0
    %855 = vmatprep.subr.mxu0 0.0
    %856 = vmatpush1.msra.mxu0 0.0
    %857 = vmatprep.subr.mxu0 0.0
    %858 = vmatpush1.msra.mxu0 0.0
    %859 = vmatprep.subr.mxu0 0.0
    %860 = vmatpush1.msra.mxu0 0.0
    %861 = vmatprep.subr.mxu0 0.0
    %862 = vmatpush1.msra.mxu0 0.0
    %863 = vmatprep.subr.mxu0 0.0
    %864 = vmatpush1.msra.mxu0 0.0
    %865 = vmatprep.subr.mxu0 0.0
    %866 = vmatpush1.msra.mxu0 0.0
    %867 = vmatprep.mubr.f32.mxu0 0.0
    %868 = vmatmul.mubr.f32.gmra.mrb[0].mxu0 %v801
    %v869 = vpop.f32.mrb[0].mxu0
    %v870 = vadd.f32 %v118, %v869
    %v871 = vpop.f32.mrb[0].mxu0
    %872 = vdwg.mxu0
    %v873 = vxor.u32 %v870, 2147483648
    %v874 = vmul.f32 %v873, 1.442695
    %v875 = vpow.pop %v874
    %v876 = vadd.f32 %v875, 1.0
    %v877 = vrcp.pop %v876
    %v878 = vmul.f32 1.0, %v877
    %v879 = vtanh.pop %v870
    %v880 = vmul.f32 %v878, %v681
    %882 = vrot.lane.b32.xlu0 %v879, 64
    %v883 = vpop.permute.xlu0 %882
    %v885 = vmul.f32 %v878, %v883
    %887 = vrot.lane.b32.xlu0 %v885, 32
    %v888 = vpop.permute.xlu0 %887
    %v890 = vadd.f32 %v880, %v888
    %v891 = vtanh.pop %v890
    %893 = vrot.lane.b32.xlu0 %v891, 64
    %v894 = vpop.permute.xlu0 %893
    %v896 = vmul.f32 %v878, %v894
    %p897 = scmp.gt.s32.totalorder %s133, 2
    %s898 = scalar_select %p897, 1, 0
    %s899 = scvt.s32.f32 %s898
    %s900 = ssub.f32 1.0, %s899
    %v901 = vstv %s899
    %v902 = vmul.f32 %v901, %v788
    %v903 = vstv %s900
    %v904 = vmul.f32 %v903, %v669
    %v906 = vrot.slane %v904, 7
    %v908 = vadd.f32 %v902, %v906
    %v909 = vmul.f32 %v901, %v782
    %v910 = vmul.f32 %v903, %v675
    %v912 = vrot.slane %v910, 7
    %v914 = vadd.f32 %v909, %v912
    %v915 = vmul.f32 %v901, %v896
    %v916 = vmul.f32 %v903, %v678
    %v917 = vadd.f32 %v915, %v916
    %v918 = vmul.f32 %v901, %v890
    %v919 = vmul.f32 %v903, %v681
    %v920 = vadd.f32 %v918, %v919
    %v922 = vrot.slane %v908, 2
    %923 = vrot.lane.b32.xlu0 %v922, 32
    %v924 = vpop.permute.xlu0 %923
    %v925 = vsel %vm154, %v924, 0
    %927 = vmatprep.subr.mxu0 0.0
    %928 = vmatpush1.msra.mxu0 %v106
    %929 = vmatprep.subr.mxu0 0.0
    %930 = vmatpush1.msra.mxu0 %v107
    %931 = vmatprep.subr.mxu0 0.0
    %932 = vmatpush1.msra.mxu0 %v108
    %933 = vmatprep.subr.mxu0 0.0
    %934 = vmatpush1.msra.mxu0 %v109
    %935 = vmatprep.subr.mxu0 0.0
    %936 = vmatpush1.msra.mxu0 0.0
    %937 = vmatprep.subr.mxu0 0.0
    %938 = vmatpush1.msra.mxu0 0.0
    %939 = vmatprep.subr.mxu0 0.0
    %940 = vmatpush1.msra.mxu0 0.0
    %941 = vmatprep.subr.mxu0 0.0
    %942 = vmatpush1.msra.mxu0 0.0
    %943 = vmatprep.subr.mxu0 0.0
    %944 = vmatpush1.msra.mxu0 0.0
    %945 = vmatprep.subr.mxu0 0.0
    %946 = vmatpush1.msra.mxu0 0.0
    %947 = vmatprep.subr.mxu0 0.0
    %948 = vmatpush1.msra.mxu0 0.0
    %949 = vmatprep.subr.mxu0 0.0
    %950 = vmatpush1.msra.mxu0 0.0
    %951 = vmatprep.subr.mxu0 0.0
    %952 = vmatpush1.msra.mxu0 0.0
    %953 = vmatprep.subr.mxu0 0.0
    %954 = vmatpush1.msra.mxu0 0.0
    %955 = vmatprep.subr.mxu0 0.0
    %956 = vmatpush1.msra.mxu0 0.0
    %957 = vmatprep.subr.mxu0 0.0
    %958 = vmatpush1.msra.mxu0 0.0
    %959 = vmatprep.subr.mxu0 0.0
    %960 = vmatpush1.msra.mxu0 0.0
    %961 = vmatprep.subr.mxu0 0.0
    %962 = vmatpush1.msra.mxu0 0.0
    %963 = vmatprep.subr.mxu0 0.0
    %964 = vmatpush1.msra.mxu0 0.0
    %965 = vmatprep.subr.mxu0 0.0
    %966 = vmatpush1.msra.mxu0 0.0
    %967 = vmatprep.subr.mxu0 0.0
    %968 = vmatpush1.msra.mxu0 0.0
    %969 = vmatprep.subr.mxu0 0.0
    %970 = vmatpush1.msra.mxu0 0.0
    %971 = vmatprep.subr.mxu0 0.0
    %972 = vmatpush1.msra.mxu0 0.0
    %973 = vmatprep.subr.mxu0 0.0
    %974 = vmatpush1.msra.mxu0 0.0
    %975 = vmatprep.subr.mxu0 0.0
    %976 = vmatpush1.msra.mxu0 0.0
    %977 = vmatprep.subr.mxu0 0.0
    %978 = vmatpush1.msra.mxu0 0.0
    %979 = vmatprep.subr.mxu0 0.0
    %980 = vmatpush1.msra.mxu0 0.0
    %981 = vmatprep.subr.mxu0 0.0
    %982 = vmatpush1.msra.mxu0 0.0
    %983 = vmatprep.subr.mxu0 0.0
    %984 = vmatpush1.msra.mxu0 0.0
    %985 = vmatprep.subr.mxu0 0.0
    %986 = vmatpush1.msra.mxu0 0.0
    %987 = vmatprep.subr.mxu0 0.0
    %988 = vmatpush1.msra.mxu0 0.0
    %989 = vmatprep.subr.mxu0 0.0
    %990 = vmatpush1.msra.mxu0 0.0
    %991 = vmatprep.mubr.f32.mxu0 0.0
    %992 = vmatmul.mubr.f32.gmra.mrb[0].mxu0 %v925
    %v993 = vpop.f32.mrb[0].mxu0
    %v994 = vadd.f32 0.0, %v993
    %v995 = vpop.f32.mrb[0].mxu0
    %996 = vdwg.mxu0
    %v998 = vrot.slane %v994, 5
    %v1000 = vadd.f32 %v225, %v998
    %v1001 = vxor.u32 %v1000, 2147483648
    %v1002 = vmul.f32 %v1001, 1.442695
    %v1003 = vpow.pop %v1002
    %v1004 = vadd.f32 %v1003, 1.0
    %v1005 = vrcp.pop %v1004
    %v1006 = vmul.f32 1.0, %v1005
    %v1007 = vtanh.pop %v1000
    %v1009 = vrot.slane %v914, 7
    %v1011 = vmul.f32 %v1006, %v1009
    %1013 = vrot.lane.b32.xlu0 %v1007, 64
    %v1014 = vpop.permute.xlu0 %1013
    %v1016 = vmul.f32 %v1006, %v1014
    %1018 = vrot.lane.b32.xlu0 %v1016, 32
    %v1019 = vpop.permute.xlu0 %1018
    %v1021 = vadd.f32 %v1011, %v1019
    %v1022 = vtanh.pop %v1021
    %1024 = vrot.lane.b32.xlu0 %v1022, 64
    %v1025 = vpop.permute.xlu0 %1024
    %v1027 = vmul.f32 %v1006, %v1025
    %1029 = vrot.lane.b32.xlu0 %v1027, 32
    %v1030 = vpop.permute.xlu0 %1029
    %v1033 = vrot.slane %v917, 5
    %1034 = vrot.lane.b32.xlu0 %v1033, 64
    %v1035 = vpop.permute.xlu0 %1034
    %v1037 = vsel %vm154, %v1030, %v1035
    %v1039 = vrot.slane %v1037, 3
    %v1040 = vsel %vm331, %v1039, 0
    %1042 = vmatprep.subr.mxu0 0.0
    %1043 = vmatpush1.msra.mxu0 %v110
    %1044 = vmatprep.subr.mxu0 0.0
    %1045 = vmatpush1.msra.mxu0 %v111
    %1046 = vmatprep.subr.mxu0 0.0
    %1047 = vmatpush1.msra.mxu0 %v112
    %1048 = vmatprep.subr.mxu0 0.0
    %1049 = vmatpush1.msra.mxu0 %v113
    %1050 = vmatprep.subr.mxu0 0.0
    %1051 = vmatpush1.msra.mxu0 %v114
    %1052 = vmatprep.subr.mxu0 0.0
    %1053 = vmatpush1.msra.mxu0 %v115
    %1054 = vmatprep.subr.mxu0 0.0
    %1055 = vmatpush1.msra.mxu0 %v116
    %1056 = vmatprep.subr.mxu0 0.0
    %1057 = vmatpush1.msra.mxu0 %v117
    %1058 = vmatprep.subr.mxu0 0.0
    %1059 = vmatpush1.msra.mxu0 0.0
    %1060 = vmatprep.subr.mxu0 0.0
    %1061 = vmatpush1.msra.mxu0 0.0
    %1062 = vmatprep.subr.mxu0 0.0
    %1063 = vmatpush1.msra.mxu0 0.0
    %1064 = vmatprep.subr.mxu0 0.0
    %1065 = vmatpush1.msra.mxu0 0.0
    %1066 = vmatprep.subr.mxu0 0.0
    %1067 = vmatpush1.msra.mxu0 0.0
    %1068 = vmatprep.subr.mxu0 0.0
    %1069 = vmatpush1.msra.mxu0 0.0
    %1070 = vmatprep.subr.mxu0 0.0
    %1071 = vmatpush1.msra.mxu0 0.0
    %1072 = vmatprep.subr.mxu0 0.0
    %1073 = vmatpush1.msra.mxu0 0.0
    %1074 = vmatprep.subr.mxu0 0.0
    %1075 = vmatpush1.msra.mxu0 0.0
    %1076 = vmatprep.subr.mxu0 0.0
    %1077 = vmatpush1.msra.mxu0 0.0
    %1078 = vmatprep.subr.mxu0 0.0
    %1079 = vmatpush1.msra.mxu0 0.0
    %1080 = vmatprep.subr.mxu0 0.0
    %1081 = vmatpush1.msra.mxu0 0.0
    %1082 = vmatprep.subr.mxu0 0.0
    %1083 = vmatpush1.msra.mxu0 0.0
    %1084 = vmatprep.subr.mxu0 0.0
    %1085 = vmatpush1.msra.mxu0 0.0
    %1086 = vmatprep.subr.mxu0 0.0
    %1087 = vmatpush1.msra.mxu0 0.0
    %1088 = vmatprep.subr.mxu0 0.0
    %1089 = vmatpush1.msra.mxu0 0.0
    %1090 = vmatprep.subr.mxu0 0.0
    %1091 = vmatpush1.msra.mxu0 0.0
    %1092 = vmatprep.subr.mxu0 0.0
    %1093 = vmatpush1.msra.mxu0 0.0
    %1094 = vmatprep.subr.mxu0 0.0
    %1095 = vmatpush1.msra.mxu0 0.0
    %1096 = vmatprep.subr.mxu0 0.0
    %1097 = vmatpush1.msra.mxu0 0.0
    %1098 = vmatprep.subr.mxu0 0.0
    %1099 = vmatpush1.msra.mxu0 0.0
    %1100 = vmatprep.subr.mxu0 0.0
    %1101 = vmatpush1.msra.mxu0 0.0
    %1102 = vmatprep.subr.mxu0 0.0
    %1103 = vmatpush1.msra.mxu0 0.0
    %1104 = vmatprep.subr.mxu0 0.0
    %1105 = vmatpush1.msra.mxu0 0.0
    %1106 = vmatprep.mubr.f32.mxu0 0.0
    %1107 = vmatmul.mubr.f32.gmra.mrb[0].mxu0 %v1040
    %v1108 = vpop.f32.mrb[0].mxu0
    %v1109 = vadd.f32 %v118, %v1108
    %v1110 = vpop.f32.mrb[0].mxu0
    %1111 = vdwg.mxu0
    %v1112 = vxor.u32 %v1109, 2147483648
    %v1113 = vmul.f32 %v1112, 1.442695
    %v1114 = vpow.pop %v1113
    %v1115 = vadd.f32 %v1114, 1.0
    %v1116 = vrcp.pop %v1115
    %v1117 = vmul.f32 1.0, %v1116
    %v1118 = vtanh.pop %v1109
    %v1119 = vmul.f32 %v1117, %v920
    %1121 = vrot.lane.b32.xlu0 %v1118, 64
    %v1122 = vpop.permute.xlu0 %1121
    %v1124 = vmul.f32 %v1117, %v1122
    %1126 = vrot.lane.b32.xlu0 %v1124, 32
    %v1127 = vpop.permute.xlu0 %1126
    %v1129 = vadd.f32 %v1119, %v1127
    %v1130 = vtanh.pop %v1129
    %1132 = vrot.lane.b32.xlu0 %v1130, 64
    %v1133 = vpop.permute.xlu0 %1132
    %v1135 = vmul.f32 %v1117, %v1133
    %p1136 = scmp.gt.s32.totalorder %s133, 3
    %s1137 = scalar_select %p1136, 1, 0
    %s1138 = scvt.s32.f32 %s1137
    %s1139 = ssub.f32 1.0, %s1138
    %v1140 = vstv %s1138
    %v1141 = vmul.f32 %v1140, %v1027
    %v1142 = vstv %s1139
    %v1143 = vmul.f32 %v1142, %v908
    %v1145 = vrot.slane %v1143, 7
    %v1147 = vadd.f32 %v1141, %v1145
    %v1148 = vmul.f32 %v1140, %v1021
    %v1149 = vmul.f32 %v1142, %v914
    %v1151 = vrot.slane %v1149, 7
    %v1153 = vadd.f32 %v1148, %v1151
    %v1154 = vmul.f32 %v1140, %v1135
    %v1155 = vmul.f32 %v1142, %v917
    %v1156 = vadd.f32 %v1154, %v1155
    %v1157 = vmul.f32 %v1140, %v1129
    %v1158 = vmul.f32 %v1142, %v920
    %v1159 = vadd.f32 %v1157, %v1158
    %v1161 = vrot.slane %v1147, 3
    %1162 = vrot.lane.b32.xlu0 %v1161, 32
    %v1163 = vpop.permute.xlu0 %1162
    %v1164 = vsel %vm154, %v1163, 0
    %1166 = vmatprep.subr.mxu0 0.0
    %1167 = vmatpush1.msra.mxu0 %v106
    %1168 = vmatprep.subr.mxu0 0.0
    %1169 = vmatpush1.msra.mxu0 %v107
    %1170 = vmatprep.subr.mxu0 0.0
    %1171 = vmatpush1.msra.mxu0 %v108
    %1172 = vmatprep.subr.mxu0 0.0
    %1173 = vmatpush1.msra.mxu0 %v109
    %1174 = vmatprep.subr.mxu0 0.0
    %1175 = vmatpush1.msra.mxu0 0.0
    %1176 = vmatprep.subr.mxu0 0.0
    %1177 = vmatpush1.msra.mxu0 0.0
    %1178 = vmatprep.subr.mxu0 0.0
    %1179 = vmatpush1.msra.mxu0 0.0
    %1180 = vmatprep.subr.mxu0 0.0
    %1181 = vmatpush1.msra.mxu0 0.0
    %1182 = vmatprep.subr.mxu0 0.0
    %1183 = vmatpush1.msra.mxu0 0.0
    %1184 = vmatprep.subr.mxu0 0.0
    %1185 = vmatpush1.msra.mxu0 0.0
    %1186 = vmatprep.subr.mxu0 0.0
    %1187 = vmatpush1.msra.mxu0 0.0
    %1188 = vmatprep.subr.mxu0 0.0
    %1189 = vmatpush1.msra.mxu0 0.0
    %1190 = vmatprep.subr.mxu0 0.0
    %1191 = vmatpush1.msra.mxu0 0.0
    %1192 = vmatprep.subr.mxu0 0.0
    %1193 = vmatpush1.msra.mxu0 0.0
    %1194 = vmatprep.subr.mxu0 0.0
    %1195 = vmatpush1.msra.mxu0 0.0
    %1196 = vmatprep.subr.mxu0 0.0
    %1197 = vmatpush1.msra.mxu0 0.0
    %1198 = vmatprep.subr.mxu0 0.0
    %1199 = vmatpush1.msra.mxu0 0.0
    %1200 = vmatprep.subr.mxu0 0.0
    %1201 = vmatpush1.msra.mxu0 0.0
    %1202 = vmatprep.subr.mxu0 0.0
    %1203 = vmatpush1.msra.mxu0 0.0
    %1204 = vmatprep.subr.mxu0 0.0
    %1205 = vmatpush1.msra.mxu0 0.0
    %1206 = vmatprep.subr.mxu0 0.0
    %1207 = vmatpush1.msra.mxu0 0.0
    %1208 = vmatprep.subr.mxu0 0.0
    %1209 = vmatpush1.msra.mxu0 0.0
    %1210 = vmatprep.subr.mxu0 0.0
    %1211 = vmatpush1.msra.mxu0 0.0
    %1212 = vmatprep.subr.mxu0 0.0
    %1213 = vmatpush1.msra.mxu0 0.0
    %1214 = vmatprep.subr.mxu0 0.0
    %1215 = vmatpush1.msra.mxu0 0.0
    %1216 = vmatprep.subr.mxu0 0.0
    %1217 = vmatpush1.msra.mxu0 0.0
    %1218 = vmatprep.subr.mxu0 0.0
    %1219 = vmatpush1.msra.mxu0 0.0
    %1220 = vmatprep.subr.mxu0 0.0
    %1221 = vmatpush1.msra.mxu0 0.0
    %1222 = vmatprep.subr.mxu0 0.0
    %1223 = vmatpush1.msra.mxu0 0.0
    %1224 = vmatprep.subr.mxu0 0.0
    %1225 = vmatpush1.msra.mxu0 0.0
    %1226 = vmatprep.subr.mxu0 0.0
    %1227 = vmatpush1.msra.mxu0 0.0
    %1228 = vmatprep.subr.mxu0 0.0
    %1229 = vmatpush1.msra.mxu0 0.0
    %1230 = vmatprep.mubr.f32.mxu0 0.0
    %1231 = vmatmul.mubr.f32.gmra.mrb[0].mxu0 %v1164
    %v1232 = vpop.f32.mrb[0].mxu0
    %v1233 = vadd.f32 0.0, %v1232
    %v1234 = vpop.f32.mrb[0].mxu0
    %1235 = vdwg.mxu0
    %v1237 = vrot.slane %v1233, 4
    %v1239 = vadd.f32 %v225, %v1237
    %v1240 = vxor.u32 %v1239, 2147483648
    %v1241 = vmul.f32 %v1240, 1.442695
    %v1242 = vpow.pop %v1241
    %v1243 = vadd.f32 %v1242, 1.0
    %v1244 = vrcp.pop %v1243
    %v1245 = vmul.f32 1.0, %v1244
    %v1246 = vtanh.pop %v1239
    %v1248 = vrot.slane %v1153, 7
    %v1250 = vmul.f32 %v1245, %v1248
    %1252 = vrot.lane.b32.xlu0 %v1246, 64
    %v1253 = vpop.permute.xlu0 %1252
    %v1255 = vmul.f32 %v1245, %v1253
    %1257 = vrot.lane.b32.xlu0 %v1255, 32
    %v1258 = vpop.permute.xlu0 %1257
    %v1260 = vadd.f32 %v1250, %v1258
    %v1261 = vtanh.pop %v1260
    %1263 = vrot.lane.b32.xlu0 %v1261, 64
    %v1264 = vpop.permute.xlu0 %1263
    %v1266 = vmul.f32 %v1245, %v1264
    %1268 = vrot.lane.b32.xlu0 %v1266, 32
    %v1269 = vpop.permute.xlu0 %1268
    %v1272 = vrot.slane %v1156, 4
    %1273 = vrot.lane.b32.xlu0 %v1272, 64
    %v1274 = vpop.permute.xlu0 %1273
    %v1276 = vsel %vm154, %v1269, %v1274
    %v1278 = vrot.slane %v1276, 4
    %v1279 = vsel %vm331, %v1278, 0
    %1281 = vmatprep.subr.mxu0 0.0
    %1282 = vmatpush1.msra.mxu0 %v110
    %1283 = vmatprep.subr.mxu0 0.0
    %1284 = vmatpush1.msra.mxu0 %v111
    %1285 = vmatprep.subr.mxu0 0.0
    %1286 = vmatpush1.msra.mxu0 %v112
    %1287 = vmatprep.subr.mxu0 0.0
    %1288 = vmatpush1.msra.mxu0 %v113
    %1289 = vmatprep.subr.mxu0 0.0
    %1290 = vmatpush1.msra.mxu0 %v114
    %1291 = vmatprep.subr.mxu0 0.0
    %1292 = vmatpush1.msra.mxu0 %v115
    %1293 = vmatprep.subr.mxu0 0.0
    %1294 = vmatpush1.msra.mxu0 %v116
    %1295 = vmatprep.subr.mxu0 0.0
    %1296 = vmatpush1.msra.mxu0 %v117
    %1297 = vmatprep.subr.mxu0 0.0
    %1298 = vmatpush1.msra.mxu0 0.0
    %1299 = vmatprep.subr.mxu0 0.0
    %1300 = vmatpush1.msra.mxu0 0.0
    %1301 = vmatprep.subr.mxu0 0.0
    %1302 = vmatpush1.msra.mxu0 0.0
    %1303 = vmatprep.subr.mxu0 0.0
    %1304 = vmatpush1.msra.mxu0 0.0
    %1305 = vmatprep.subr.mxu0 0.0
    %1306 = vmatpush1.msra.mxu0 0.0
    %1307 = vmatprep.subr.mxu0 0.0
    %1308 = vmatpush1.msra.mxu0 0.0
    %1309 = vmatprep.subr.mxu0 0.0
    %1310 = vmatpush1.msra.mxu0 0.0
    %1311 = vmatprep.subr.mxu0 0.0
    %1312 = vmatpush1.msra.mxu0 0.0
    %1313 = vmatprep.subr.mxu0 0.0
    %1314 = vmatpush1.msra.mxu0 0.0
    %1315 = vmatprep.subr.mxu0 0.0
    %1316 = vmatpush1.msra.mxu0 0.0
    %1317 = vmatprep.subr.mxu0 0.0
    %1318 = vmatpush1.msra.mxu0 0.0
    %1319 = vmatprep.subr.mxu0 0.0
    %1320 = vmatpush1.msra.mxu0 0.0
    %1321 = vmatprep.subr.mxu0 0.0
    %1322 = vmatpush1.msra.mxu0 0.0
    %1323 = vmatprep.subr.mxu0 0.0
    %1324 = vmatpush1.msra.mxu0 0.0
    %1325 = vmatprep.subr.mxu0 0.0
    %1326 = vmatpush1.msra.mxu0 0.0
    %1327 = vmatprep.subr.mxu0 0.0
    %1328 = vmatpush1.msra.mxu0 0.0
    %1329 = vmatprep.subr.mxu0 0.0
    %1330 = vmatpush1.msra.mxu0 0.0
    %1331 = vmatprep.subr.mxu0 0.0
    %1332 = vmatpush1.msra.mxu0 0.0
    %1333 = vmatprep.subr.mxu0 0.0
    %1334 = vmatpush1.msra.mxu0 0.0
    %1335 = vmatprep.subr.mxu0 0.0
    %1336 = vmatpush1.msra.mxu0 0.0
    %1337 = vmatprep.subr.mxu0 0.0
    %1338 = vmatpush1.msra.mxu0 0.0
    %1339 = vmatprep.subr.mxu0 0.0
    %1340 = vmatpush1.msra.mxu0 0.0
    %1341 = vmatprep.subr.mxu0 0.0
    %1342 = vmatpush1.msra.mxu0 0.0
    %1343 = vmatprep.subr.mxu0 0.0
    %1344 = vmatpush1.msra.mxu0 0.0
    %1345 = vmatprep.mubr.f32.mxu0 0.0
    %1346 = vmatmul.mubr.f32.gmra.mrb[0].mxu0 %v1279
    %v1347 = vpop.f32.mrb[0].mxu0
    %v1348 = vadd.f32 %v118, %v1347
    %v1349 = vpop.f32.mrb[0].mxu0
    %1350 = vdwg.mxu0
    %v1351 = vxor.u32 %v1348, 2147483648
    %v1352 = vmul.f32 %v1351, 1.442695
    %v1353 = vpow.pop %v1352
    %v1354 = vadd.f32 %v1353, 1.0
    %v1355 = vrcp.pop %v1354
    %v1356 = vmul.f32 1.0, %v1355
    %v1357 = vtanh.pop %v1348
    %v1358 = vmul.f32 %v1356, %v1159
    %1360 = vrot.lane.b32.xlu0 %v1357, 64
    %v1361 = vpop.permute.xlu0 %1360
    %v1363 = vmul.f32 %v1356, %v1361
    %1365 = vrot.lane.b32.xlu0 %v1363, 32
    %v1366 = vpop.permute.xlu0 %1365
    %v1368 = vadd.f32 %v1358, %v1366
    %v1369 = vtanh.pop %v1368
    %1371 = vrot.lane.b32.xlu0 %v1369, 64
    %v1372 = vpop.permute.xlu0 %1371
    %v1374 = vmul.f32 %v1356, %v1372
    %p1375 = scmp.gt.s32.totalorder %s133, 4
    %s1376 = scalar_select %p1375, 1, 0
    %s1377 = scvt.s32.f32 %s1376
    %s1378 = ssub.f32 1.0, %s1377
    %v1379 = vstv %s1377
    %v1380 = vmul.f32 %v1379, %v1266
    %v1381 = vstv %s1378
    %v1382 = vmul.f32 %v1381, %v1147
    %v1384 = vrot.slane %v1382, 7
    %v1386 = vadd.f32 %v1380, %v1384
    %v1387 = vmul.f32 %v1379, %v1260
    %v1388 = vmul.f32 %v1381, %v1153
    %v1390 = vrot.slane %v1388, 7
    %v1392 = vadd.f32 %v1387, %v1390
    %v1393 = vmul.f32 %v1379, %v1374
    %v1394 = vmul.f32 %v1381, %v1156
    %v1395 = vadd.f32 %v1393, %v1394
    %v1396 = vmul.f32 %v1379, %v1368
    %v1397 = vmul.f32 %v1381, %v1159
    %v1398 = vadd.f32 %v1396, %v1397
    %v1400 = vrot.slane %v1386, 4
    %1401 = vrot.lane.b32.xlu0 %v1400, 32
    %v1402 = vpop.permute.xlu0 %1401
    %v1403 = vsel %vm154, %v1402, 0
    %1405 = vmatprep.subr.mxu0 0.0
    %1406 = vmatpush1.msra.mxu0 %v106
    %1407 = vmatprep.subr.mxu0 0.0
    %1408 = vmatpush1.msra.mxu0 %v107
    %1409 = vmatprep.subr.mxu0 0.0
    %1410 = vmatpush1.msra.mxu0 %v108
    %1411 = vmatprep.subr.mxu0 0.0
    %1412 = vmatpush1.msra.mxu0 %v109
    %1413 = vmatprep.subr.mxu0 0.0
    %1414 = vmatpush1.msra.mxu0 0.0
    %1415 = vmatprep.subr.mxu0 0.0
    %1416 = vmatpush1.msra.mxu0 0.0
    %1417 = vmatprep.subr.mxu0 0.0
    %1418 = vmatpush1.msra.mxu0 0.0
    %1419 = vmatprep.subr.mxu0 0.0
    %1420 = vmatpush1.msra.mxu0 0.0
    %1421 = vmatprep.subr.mxu0 0.0
    %1422 = vmatpush1.msra.mxu0 0.0
    %1423 = vmatprep.subr.mxu0 0.0
    %1424 = vmatpush1.msra.mxu0 0.0
    %1425 = vmatprep.subr.mxu0 0.0
    %1426 = vmatpush1.msra.mxu0 0.0
    %1427 = vmatprep.subr.mxu0 0.0
    %1428 = vmatpush1.msra.mxu0 0.0
    %1429 = vmatprep.subr.mxu0 0.0
    %1430 = vmatpush1.msra.mxu0 0.0
    %1431 = vmatprep.subr.mxu0 0.0
    %1432 = vmatpush1.msra.mxu0 0.0
    %1433 = vmatprep.subr.mxu0 0.0
    %1434 = vmatpush1.msra.mxu0 0.0
    %1435 = vmatprep.subr.mxu0 0.0
    %1436 = vmatpush1.msra.mxu0 0.0
    %1437 = vmatprep.subr.mxu0 0.0
    %1438 = vmatpush1.msra.mxu0 0.0
    %1439 = vmatprep.subr.mxu0 0.0
    %1440 = vmatpush1.msra.mxu0 0.0
    %1441 = vmatprep.subr.mxu0 0.0
    %1442 = vmatpush1.msra.mxu0 0.0
    %1443 = vmatprep.subr.mxu0 0.0
    %1444 = vmatpush1.msra.mxu0 0.0
    %1445 = vmatprep.subr.mxu0 0.0
    %1446 = vmatpush1.msra.mxu0 0.0
    %1447 = vmatprep.subr.mxu0 0.0
    %1448 = vmatpush1.msra.mxu0 0.0
    %1449 = vmatprep.subr.mxu0 0.0
    %1450 = vmatpush1.msra.mxu0 0.0
    %1451 = vmatprep.subr.mxu0 0.0
    %1452 = vmatpush1.msra.mxu0 0.0
    %1453 = vmatprep.subr.mxu0 0.0
    %1454 = vmatpush1.msra.mxu0 0.0
    %1455 = vmatprep.subr.mxu0 0.0
    %1456 = vmatpush1.msra.mxu0 0.0
    %1457 = vmatprep.subr.mxu0 0.0
    %1458 = vmatpush1.msra.mxu0 0.0
    %1459 = vmatprep.subr.mxu0 0.0
    %1460 = vmatpush1.msra.mxu0 0.0
    %1461 = vmatprep.subr.mxu0 0.0
    %1462 = vmatpush1.msra.mxu0 0.0
    %1463 = vmatprep.subr.mxu0 0.0
    %1464 = vmatpush1.msra.mxu0 0.0
    %1465 = vmatprep.subr.mxu0 0.0
    %1466 = vmatpush1.msra.mxu0 0.0
    %1467 = vmatprep.subr.mxu0 0.0
    %1468 = vmatpush1.msra.mxu0 0.0
    %1469 = vmatprep.mubr.f32.mxu0 0.0
    %1470 = vmatmul.mubr.f32.gmra.mrb[0].mxu0 %v1403
    %v1471 = vpop.f32.mrb[0].mxu0
    %v1472 = vadd.f32 0.0, %v1471
    %v1473 = vpop.f32.mrb[0].mxu0
    %1474 = vdwg.mxu0
    %v1476 = vrot.slane %v1472, 3
    %v1478 = vadd.f32 %v225, %v1476
    %v1479 = vxor.u32 %v1478, 2147483648
    %v1480 = vmul.f32 %v1479, 1.442695
    %v1481 = vpow.pop %v1480
    %v1482 = vadd.f32 %v1481, 1.0
    %v1483 = vrcp.pop %v1482
    %v1484 = vmul.f32 1.0, %v1483
    %v1485 = vtanh.pop %v1478
    %v1487 = vrot.slane %v1392, 7
    %v1489 = vmul.f32 %v1484, %v1487
    %1491 = vrot.lane.b32.xlu0 %v1485, 64
    %v1492 = vpop.permute.xlu0 %1491
    %v1494 = vmul.f32 %v1484, %v1492
    %1496 = vrot.lane.b32.xlu0 %v1494, 32
    %v1497 = vpop.permute.xlu0 %1496
    %v1499 = vadd.f32 %v1489, %v1497
    %v1500 = vtanh.pop %v1499
    %1502 = vrot.lane.b32.xlu0 %v1500, 64
    %v1503 = vpop.permute.xlu0 %1502
    %v1505 = vmul.f32 %v1484, %v1503
    %1507 = vrot.lane.b32.xlu0 %v1505, 32
    %v1508 = vpop.permute.xlu0 %1507
    %v1511 = vrot.slane %v1395, 3
    %1512 = vrot.lane.b32.xlu0 %v1511, 64
    %v1513 = vpop.permute.xlu0 %1512
    %v1515 = vsel %vm154, %v1508, %v1513
    %v1517 = vrot.slane %v1515, 5
    %v1518 = vsel %vm331, %v1517, 0
    %1520 = vmatprep.subr.mxu0 0.0
    %1521 = vmatpush1.msra.mxu0 %v110
    %1522 = vmatprep.subr.mxu0 0.0
    %1523 = vmatpush1.msra.mxu0 %v111
    %1524 = vmatprep.subr.mxu0 0.0
    %1525 = vmatpush1.msra.mxu0 %v112
    %1526 = vmatprep.subr.mxu0 0.0
    %1527 = vmatpush1.msra.mxu0 %v113
    %1528 = vmatprep.subr.mxu0 0.0
    %1529 = vmatpush1.msra.mxu0 %v114
    %1530 = vmatprep.subr.mxu0 0.0
    %1531 = vmatpush1.msra.mxu0 %v115
    %1532 = vmatprep.subr.mxu0 0.0
    %1533 = vmatpush1.msra.mxu0 %v116
    %1534 = vmatprep.subr.mxu0 0.0
    %1535 = vmatpush1.msra.mxu0 %v117
    %1536 = vmatprep.subr.mxu0 0.0
    %1537 = vmatpush1.msra.mxu0 0.0
    %1538 = vmatprep.subr.mxu0 0.0
    %1539 = vmatpush1.msra.mxu0 0.0
    %1540 = vmatprep.subr.mxu0 0.0
    %1541 = vmatpush1.msra.mxu0 0.0
    %1542 = vmatprep.subr.mxu0 0.0
    %1543 = vmatpush1.msra.mxu0 0.0
    %1544 = vmatprep.subr.mxu0 0.0
    %1545 = vmatpush1.msra.mxu0 0.0
    %1546 = vmatprep.subr.mxu0 0.0
    %1547 = vmatpush1.msra.mxu0 0.0
    %1548 = vmatprep.subr.mxu0 0.0
    %1549 = vmatpush1.msra.mxu0 0.0
    %1550 = vmatprep.subr.mxu0 0.0
    %1551 = vmatpush1.msra.mxu0 0.0
    %1552 = vmatprep.subr.mxu0 0.0
    %1553 = vmatpush1.msra.mxu0 0.0
    %1554 = vmatprep.subr.mxu0 0.0
    %1555 = vmatpush1.msra.mxu0 0.0
    %1556 = vmatprep.subr.mxu0 0.0
    %1557 = vmatpush1.msra.mxu0 0.0
    %1558 = vmatprep.subr.mxu0 0.0
    %1559 = vmatpush1.msra.mxu0 0.0
    %1560 = vmatprep.subr.mxu0 0.0
    %1561 = vmatpush1.msra.mxu0 0.0
    %1562 = vmatprep.subr.mxu0 0.0
    %1563 = vmatpush1.msra.mxu0 0.0
    %1564 = vmatprep.subr.mxu0 0.0
    %1565 = vmatpush1.msra.mxu0 0.0
    %1566 = vmatprep.subr.mxu0 0.0
    %1567 = vmatpush1.msra.mxu0 0.0
    %1568 = vmatprep.subr.mxu0 0.0
    %1569 = vmatpush1.msra.mxu0 0.0
    %1570 = vmatprep.subr.mxu0 0.0
    %1571 = vmatpush1.msra.mxu0 0.0
    %1572 = vmatprep.subr.mxu0 0.0
    %1573 = vmatpush1.msra.mxu0 0.0
    %1574 = vmatprep.subr.mxu0 0.0
    %1575 = vmatpush1.msra.mxu0 0.0
    %1576 = vmatprep.subr.mxu0 0.0
    %1577 = vmatpush1.msra.mxu0 0.0
    %1578 = vmatprep.subr.mxu0 0.0
    %1579 = vmatpush1.msra.mxu0 0.0
    %1580 = vmatprep.subr.mxu0 0.0
    %1581 = vmatpush1.msra.mxu0 0.0
    %1582 = vmatprep.subr.mxu0 0.0
    %1583 = vmatpush1.msra.mxu0 0.0
    %1584 = vmatprep.mubr.f32.mxu0 0.0
    %1585 = vmatmul.mubr.f32.gmra.mrb[0].mxu0 %v1518
    %v1586 = vpop.f32.mrb[0].mxu0
    %v1587 = vadd.f32 %v118, %v1586
    %v1588 = vpop.f32.mrb[0].mxu0
    %1589 = vdwg.mxu0
    %v1590 = vxor.u32 %v1587, 2147483648
    %v1591 = vmul.f32 %v1590, 1.442695
    %v1592 = vpow.pop %v1591
    %v1593 = vadd.f32 %v1592, 1.0
    %v1594 = vrcp.pop %v1593
    %v1595 = vmul.f32 1.0, %v1594
    %v1596 = vtanh.pop %v1587
    %v1597 = vmul.f32 %v1595, %v1398
    %1599 = vrot.lane.b32.xlu0 %v1596, 64
    %v1600 = vpop.permute.xlu0 %1599
    %v1602 = vmul.f32 %v1595, %v1600
    %1604 = vrot.lane.b32.xlu0 %v1602, 32
    %v1605 = vpop.permute.xlu0 %1604
    %v1607 = vadd.f32 %v1597, %v1605
    %v1608 = vtanh.pop %v1607
    %1610 = vrot.lane.b32.xlu0 %v1608, 64
    %v1611 = vpop.permute.xlu0 %1610
    %v1613 = vmul.f32 %v1595, %v1611
    %p1614 = scmp.gt.s32.totalorder %s133, 5
    %s1615 = scalar_select %p1614, 1, 0
    %s1616 = scvt.s32.f32 %s1615
    %s1617 = ssub.f32 1.0, %s1616
    %v1618 = vstv %s1616
    %v1619 = vmul.f32 %v1618, %v1505
    %v1620 = vstv %s1617
    %v1621 = vmul.f32 %v1620, %v1386
    %v1623 = vrot.slane %v1621, 7
    %v1625 = vadd.f32 %v1619, %v1623
    %v1626 = vmul.f32 %v1618, %v1499
    %v1627 = vmul.f32 %v1620, %v1392
    %v1629 = vrot.slane %v1627, 7
    %v1631 = vadd.f32 %v1626, %v1629
    %v1632 = vmul.f32 %v1618, %v1613
    %v1633 = vmul.f32 %v1620, %v1395
    %v1634 = vadd.f32 %v1632, %v1633
    %v1635 = vmul.f32 %v1618, %v1607
    %v1636 = vmul.f32 %v1620, %v1398
    %v1637 = vadd.f32 %v1635, %v1636
    %v1639 = vrot.slane %v1625, 5
    %1640 = vrot.lane.b32.xlu0 %v1639, 32
    %v1641 = vpop.permute.xlu0 %1640
    %v1642 = vsel %vm154, %v1641, 0
    %1644 = vmatprep.subr.mxu0 0.0
    %1645 = vmatpush1.msra.mxu0 %v106
    %1646 = vmatprep.subr.mxu0 0.0
    %1647 = vmatpush1.msra.mxu0 %v107
    %1648 = vmatprep.subr.mxu0 0.0
    %1649 = vmatpush1.msra.mxu0 %v108
    %1650 = vmatprep.subr.mxu0 0.0
    %1651 = vmatpush1.msra.mxu0 %v109
    %1652 = vmatprep.subr.mxu0 0.0
    %1653 = vmatpush1.msra.mxu0 0.0
    %1654 = vmatprep.subr.mxu0 0.0
    %1655 = vmatpush1.msra.mxu0 0.0
    %1656 = vmatprep.subr.mxu0 0.0
    %1657 = vmatpush1.msra.mxu0 0.0
    %1658 = vmatprep.subr.mxu0 0.0
    %1659 = vmatpush1.msra.mxu0 0.0
    %1660 = vmatprep.subr.mxu0 0.0
    %1661 = vmatpush1.msra.mxu0 0.0
    %1662 = vmatprep.subr.mxu0 0.0
    %1663 = vmatpush1.msra.mxu0 0.0
    %1664 = vmatprep.subr.mxu0 0.0
    %1665 = vmatpush1.msra.mxu0 0.0
    %1666 = vmatprep.subr.mxu0 0.0
    %1667 = vmatpush1.msra.mxu0 0.0
    %1668 = vmatprep.subr.mxu0 0.0
    %1669 = vmatpush1.msra.mxu0 0.0
    %1670 = vmatprep.subr.mxu0 0.0
    %1671 = vmatpush1.msra.mxu0 0.0
    %1672 = vmatprep.subr.mxu0 0.0
    %1673 = vmatpush1.msra.mxu0 0.0
    %1674 = vmatprep.subr.mxu0 0.0
    %1675 = vmatpush1.msra.mxu0 0.0
    %1676 = vmatprep.subr.mxu0 0.0
    %1677 = vmatpush1.msra.mxu0 0.0
    %1678 = vmatprep.subr.mxu0 0.0
    %1679 = vmatpush1.msra.mxu0 0.0
    %1680 = vmatprep.subr.mxu0 0.0
    %1681 = vmatpush1.msra.mxu0 0.0
    %1682 = vmatprep.subr.mxu0 0.0
    %1683 = vmatpush1.msra.mxu0 0.0
    %1684 = vmatprep.subr.mxu0 0.0
    %1685 = vmatpush1.msra.mxu0 0.0
    %1686 = vmatprep.subr.mxu0 0.0
    %1687 = vmatpush1.msra.mxu0 0.0
    %1688 = vmatprep.subr.mxu0 0.0
    %1689 = vmatpush1.msra.mxu0 0.0
    %1690 = vmatprep.subr.mxu0 0.0
    %1691 = vmatpush1.msra.mxu0 0.0
    %1692 = vmatprep.subr.mxu0 0.0
    %1693 = vmatpush1.msra.mxu0 0.0
    %1694 = vmatprep.subr.mxu0 0.0
    %1695 = vmatpush1.msra.mxu0 0.0
    %1696 = vmatprep.subr.mxu0 0.0
    %1697 = vmatpush1.msra.mxu0 0.0
    %1698 = vmatprep.subr.mxu0 0.0
    %1699 = vmatpush1.msra.mxu0 0.0
    %1700 = vmatprep.subr.mxu0 0.0
    %1701 = vmatpush1.msra.mxu0 0.0
    %1702 = vmatprep.subr.mxu0 0.0
    %1703 = vmatpush1.msra.mxu0 0.0
    %1704 = vmatprep.subr.mxu0 0.0
    %1705 = vmatpush1.msra.mxu0 0.0
    %1706 = vmatprep.subr.mxu0 0.0
    %1707 = vmatpush1.msra.mxu0 0.0
    %1708 = vmatprep.mubr.f32.mxu0 0.0
    %1709 = vmatmul.mubr.f32.gmra.mrb[0].mxu0 %v1642
    %v1710 = vpop.f32.mrb[0].mxu0
    %v1711 = vadd.f32 0.0, %v1710
    %v1712 = vpop.f32.mrb[0].mxu0
    %1713 = vdwg.mxu0
    %v1715 = vrot.slane %v1711, 2
    %v1717 = vadd.f32 %v225, %v1715
    %v1718 = vxor.u32 %v1717, 2147483648
    %v1719 = vmul.f32 %v1718, 1.442695
    %v1720 = vpow.pop %v1719
    %v1721 = vadd.f32 %v1720, 1.0
    %v1722 = vrcp.pop %v1721
    %v1723 = vmul.f32 1.0, %v1722
    %v1724 = vtanh.pop %v1717
    %v1726 = vrot.slane %v1631, 7
    %v1728 = vmul.f32 %v1723, %v1726
    %1730 = vrot.lane.b32.xlu0 %v1724, 64
    %v1731 = vpop.permute.xlu0 %1730
    %v1733 = vmul.f32 %v1723, %v1731
    %1735 = vrot.lane.b32.xlu0 %v1733, 32
    %v1736 = vpop.permute.xlu0 %1735
    %v1738 = vadd.f32 %v1728, %v1736
    %v1739 = vtanh.pop %v1738
    %1741 = vrot.lane.b32.xlu0 %v1739, 64
    %v1742 = vpop.permute.xlu0 %1741
    %v1744 = vmul.f32 %v1723, %v1742
    %1746 = vrot.lane.b32.xlu0 %v1744, 32
    %v1747 = vpop.permute.xlu0 %1746
    %v1750 = vrot.slane %v1634, 2
    %1751 = vrot.lane.b32.xlu0 %v1750, 64
    %v1752 = vpop.permute.xlu0 %1751
    %v1754 = vsel %vm154, %v1747, %v1752
    %v1756 = vrot.slane %v1754, 6
    %v1757 = vsel %vm331, %v1756, 0
    %1759 = vmatprep.subr.mxu0 0.0
    %1760 = vmatpush1.msra.mxu0 %v110
    %1761 = vmatprep.subr.mxu0 0.0
    %1762 = vmatpush1.msra.mxu0 %v111
    %1763 = vmatprep.subr.mxu0 0.0
    %1764 = vmatpush1.msra.mxu0 %v112
    %1765 = vmatprep.subr.mxu0 0.0
    %1766 = vmatpush1.msra.mxu0 %v113
    %1767 = vmatprep.subr.mxu0 0.0
    %1768 = vmatpush1.msra.mxu0 %v114
    %1769 = vmatprep.subr.mxu0 0.0
    %1770 = vmatpush1.msra.mxu0 %v115
    %1771 = vmatprep.subr.mxu0 0.0
    %1772 = vmatpush1.msra.mxu0 %v116
    %1773 = vmatprep.subr.mxu0 0.0
    %1774 = vmatpush1.msra.mxu0 %v117
    %1775 = vmatprep.subr.mxu0 0.0
    %1776 = vmatpush1.msra.mxu0 0.0
    %1777 = vmatprep.subr.mxu0 0.0
    %1778 = vmatpush1.msra.mxu0 0.0
    %1779 = vmatprep.subr.mxu0 0.0
    %1780 = vmatpush1.msra.mxu0 0.0
    %1781 = vmatprep.subr.mxu0 0.0
    %1782 = vmatpush1.msra.mxu0 0.0
    %1783 = vmatprep.subr.mxu0 0.0
    %1784 = vmatpush1.msra.mxu0 0.0
    %1785 = vmatprep.subr.mxu0 0.0
    %1786 = vmatpush1.msra.mxu0 0.0
    %1787 = vmatprep.subr.mxu0 0.0
    %1788 = vmatpush1.msra.mxu0 0.0
    %1789 = vmatprep.subr.mxu0 0.0
    %1790 = vmatpush1.msra.mxu0 0.0
    %1791 = vmatprep.subr.mxu0 0.0
    %1792 = vmatpush1.msra.mxu0 0.0
    %1793 = vmatprep.subr.mxu0 0.0
    %1794 = vmatpush1.msra.mxu0 0.0
    %1795 = vmatprep.subr.mxu0 0.0
    %1796 = vmatpush1.msra.mxu0 0.0
    %1797 = vmatprep.subr.mxu0 0.0
    %1798 = vmatpush1.msra.mxu0 0.0
    %1799 = vmatprep.subr.mxu0 0.0
    %1800 = vmatpush1.msra.mxu0 0.0
    %1801 = vmatprep.subr.mxu0 0.0
    %1802 = vmatpush1.msra.mxu0 0.0
    %1803 = vmatprep.subr.mxu0 0.0
    %1804 = vmatpush1.msra.mxu0 0.0
    %1805 = vmatprep.subr.mxu0 0.0
    %1806 = vmatpush1.msra.mxu0 0.0
    %1807 = vmatprep.subr.mxu0 0.0
    %1808 = vmatpush1.msra.mxu0 0.0
    %1809 = vmatprep.subr.mxu0 0.0
    %1810 = vmatpush1.msra.mxu0 0.0
    %1811 = vmatprep.subr.mxu0 0.0
    %1812 = vmatpush1.msra.mxu0 0.0
    %1813 = vmatprep.subr.mxu0 0.0
    %1814 = vmatpush1.msra.mxu0 0.0
    %1815 = vmatprep.subr.mxu0 0.0
    %1816 = vmatpush1.msra.mxu0 0.0
    %1817 = vmatprep.subr.mxu0 0.0
    %1818 = vmatpush1.msra.mxu0 0.0
    %1819 = vmatprep.subr.mxu0 0.0
    %1820 = vmatpush1.msra.mxu0 0.0
    %1821 = vmatprep.subr.mxu0 0.0
    %1822 = vmatpush1.msra.mxu0 0.0
    %1823 = vmatprep.mubr.f32.mxu0 0.0
    %1824 = vmatmul.mubr.f32.gmra.mrb[0].mxu0 %v1757
    %v1825 = vpop.f32.mrb[0].mxu0
    %v1826 = vadd.f32 %v118, %v1825
    %v1827 = vpop.f32.mrb[0].mxu0
    %1828 = vdwg.mxu0
    %v1829 = vxor.u32 %v1826, 2147483648
    %v1830 = vmul.f32 %v1829, 1.442695
    %v1831 = vpow.pop %v1830
    %v1832 = vadd.f32 %v1831, 1.0
    %v1833 = vrcp.pop %v1832
    %v1834 = vmul.f32 1.0, %v1833
    %v1835 = vtanh.pop %v1826
    %v1836 = vmul.f32 %v1834, %v1637
    %1838 = vrot.lane.b32.xlu0 %v1835, 64
    %v1839 = vpop.permute.xlu0 %1838
    %v1841 = vmul.f32 %v1834, %v1839
    %1843 = vrot.lane.b32.xlu0 %v1841, 32
    %v1844 = vpop.permute.xlu0 %1843
    %v1846 = vadd.f32 %v1836, %v1844
    %v1847 = vtanh.pop %v1846
    %1849 = vrot.lane.b32.xlu0 %v1847, 64
    %v1850 = vpop.permute.xlu0 %1849
    %v1852 = vmul.f32 %v1834, %v1850
    %p1853 = scmp.gt.s32.totalorder %s133, 6
    %s1854 = scalar_select %p1853, 1, 0
    %s1855 = scvt.s32.f32 %s1854
    %s1856 = ssub.f32 1.0, %s1855
    %v1857 = vstv %s1855
    %v1858 = vmul.f32 %v1857, %v1744
    %v1859 = vstv %s1856
    %v1860 = vmul.f32 %v1859, %v1625
    %v1862 = vrot.slane %v1860, 7
    %v1864 = vadd.f32 %v1858, %v1862
    %v1865 = vmul.f32 %v1857, %v1738
    %v1866 = vmul.f32 %v1859, %v1631
    %v1868 = vrot.slane %v1866, 7
    %v1870 = vadd.f32 %v1865, %v1868
    %v1871 = vmul.f32 %v1857, %v1852
    %v1872 = vmul.f32 %v1859, %v1634
    %v1873 = vadd.f32 %v1871, %v1872
    %v1874 = vmul.f32 %v1857, %v1846
    %v1875 = vmul.f32 %v1859, %v1637
    %v1876 = vadd.f32 %v1874, %v1875
    %v1878 = vrot.slane %v1864, 6
    %1879 = vrot.lane.b32.xlu0 %v1878, 32
    %v1880 = vpop.permute.xlu0 %1879
    %v1881 = vsel %vm154, %v1880, 0
    %1883 = vmatprep.subr.mxu0 0.0
    %1884 = vmatpush1.msra.mxu0 %v106
    %1885 = vmatprep.subr.mxu0 0.0
    %1886 = vmatpush1.msra.mxu0 %v107
    %1887 = vmatprep.subr.mxu0 0.0
    %1888 = vmatpush1.msra.mxu0 %v108
    %1889 = vmatprep.subr.mxu0 0.0
    %1890 = vmatpush1.msra.mxu0 %v109
    %1891 = vmatprep.subr.mxu0 0.0
    %1892 = vmatpush1.msra.mxu0 0.0
    %1893 = vmatprep.subr.mxu0 0.0
    %1894 = vmatpush1.msra.mxu0 0.0
    %1895 = vmatprep.subr.mxu0 0.0
    %1896 = vmatpush1.msra.mxu0 0.0
    %1897 = vmatprep.subr.mxu0 0.0
    %1898 = vmatpush1.msra.mxu0 0.0
    %1899 = vmatprep.subr.mxu0 0.0
    %1900 = vmatpush1.msra.mxu0 0.0
    %1901 = vmatprep.subr.mxu0 0.0
    %1902 = vmatpush1.msra.mxu0 0.0
    %1903 = vmatprep.subr.mxu0 0.0
    %1904 = vmatpush1.msra.mxu0 0.0
    %1905 = vmatprep.subr.mxu0 0.0
    %1906 = vmatpush1.msra.mxu0 0.0
    %1907 = vmatprep.subr.mxu0 0.0
    %1908 = vmatpush1.msra.mxu0 0.0
    %1909 = vmatprep.subr.mxu0 0.0
    %1910 = vmatpush1.msra.mxu0 0.0
    %1911 = vmatprep.subr.mxu0 0.0
    %1912 = vmatpush1.msra.mxu0 0.0
    %1913 = vmatprep.subr.mxu0 0.0
    %1914 = vmatpush1.msra.mxu0 0.0
    %1915 = vmatprep.subr.mxu0 0.0
    %1916 = vmatpush1.msra.mxu0 0.0
    %1917 = vmatprep.subr.mxu0 0.0
    %1918 = vmatpush1.msra.mxu0 0.0
    %1919 = vmatprep.subr.mxu0 0.0
    %1920 = vmatpush1.msra.mxu0 0.0
    %1921 = vmatprep.subr.mxu0 0.0
    %1922 = vmatpush1.msra.mxu0 0.0
    %1923 = vmatprep.subr.mxu0 0.0
    %1924 = vmatpush1.msra.mxu0 0.0
    %1925 = vmatprep.subr.mxu0 0.0
    %1926 = vmatpush1.msra.mxu0 0.0
    %1927 = vmatprep.subr.mxu0 0.0
    %1928 = vmatpush1.msra.mxu0 0.0
    %1929 = vmatprep.subr.mxu0 0.0
    %1930 = vmatpush1.msra.mxu0 0.0
    %1931 = vmatprep.subr.mxu0 0.0
    %1932 = vmatpush1.msra.mxu0 0.0
    %1933 = vmatprep.subr.mxu0 0.0
    %1934 = vmatpush1.msra.mxu0 0.0
    %1935 = vmatprep.subr.mxu0 0.0
    %1936 = vmatpush1.msra.mxu0 0.0
    %1937 = vmatprep.subr.mxu0 0.0
    %1938 = vmatpush1.msra.mxu0 0.0
    %1939 = vmatprep.subr.mxu0 0.0
    %1940 = vmatpush1.msra.mxu0 0.0
    %1941 = vmatprep.subr.mxu0 0.0
    %1942 = vmatpush1.msra.mxu0 0.0
    %1943 = vmatprep.subr.mxu0 0.0
    %1944 = vmatpush1.msra.mxu0 0.0
    %1945 = vmatprep.subr.mxu0 0.0
    %1946 = vmatpush1.msra.mxu0 0.0
    %1947 = vmatprep.mubr.f32.mxu0 0.0
    %1948 = vmatmul.mubr.f32.gmra.mrb[0].mxu0 %v1881
    %v1949 = vpop.f32.mrb[0].mxu0
    %v1950 = vadd.f32 0.0, %v1949
    %v1951 = vpop.f32.mrb[0].mxu0
    %1952 = vdwg.mxu0
    %v1954 = vrot.slane %v1950, 1
    %v1956 = vadd.f32 %v225, %v1954
    %v1957 = vxor.u32 %v1956, 2147483648
    %v1958 = vmul.f32 %v1957, 1.442695
    %v1959 = vpow.pop %v1958
    %v1960 = vadd.f32 %v1959, 1.0
    %v1961 = vrcp.pop %v1960
    %v1962 = vmul.f32 1.0, %v1961
    %v1963 = vtanh.pop %v1956
    %v1965 = vrot.slane %v1870, 7
    %v1967 = vmul.f32 %v1962, %v1965
    %1969 = vrot.lane.b32.xlu0 %v1963, 64
    %v1970 = vpop.permute.xlu0 %1969
    %v1972 = vmul.f32 %v1962, %v1970
    %1974 = vrot.lane.b32.xlu0 %v1972, 32
    %v1975 = vpop.permute.xlu0 %1974
    %v1977 = vadd.f32 %v1967, %v1975
    %v1978 = vtanh.pop %v1977
    %1980 = vrot.lane.b32.xlu0 %v1978, 64
    %v1981 = vpop.permute.xlu0 %1980
    %v1983 = vmul.f32 %v1962, %v1981
    %1985 = vrot.lane.b32.xlu0 %v1983, 32
    %v1986 = vpop.permute.xlu0 %1985
    %v1989 = vrot.slane %v1873, 1
    %1990 = vrot.lane.b32.xlu0 %v1989, 64
    %v1991 = vpop.permute.xlu0 %1990
    %v1993 = vsel %vm154, %v1986, %v1991
    %v1995 = vrot.slane %v1993, 7
    %v1996 = vsel %vm331, %v1995, 0
    %1998 = vmatprep.subr.mxu0 0.0
    %1999 = vmatpush1.msra.mxu0 %v110
    %2000 = vmatprep.subr.mxu0 0.0
    %2001 = vmatpush1.msra.mxu0 %v111
    %2002 = vmatprep.subr.mxu0 0.0
    %2003 = vmatpush1.msra.mxu0 %v112
    %2004 = vmatprep.subr.mxu0 0.0
    %2005 = vmatpush1.msra.mxu0 %v113
    %2006 = vmatprep.subr.mxu0 0.0
    %2007 = vmatpush1.msra.mxu0 %v114
    %2008 = vmatprep.subr.mxu0 0.0
    %2009 = vmatpush1.msra.mxu0 %v115
    %2010 = vmatprep.subr.mxu0 0.0
    %2011 = vmatpush1.msra.mxu0 %v116
    %2012 = vmatprep.subr.mxu0 0.0
    %2013 = vmatpush1.msra.mxu0 %v117
    %2014 = vmatprep.subr.mxu0 0.0
    %2015 = vmatpush1.msra.mxu0 0.0
    %2016 = vmatprep.subr.mxu0 0.0
    %2017 = vmatpush1.msra.mxu0 0.0
    %2018 = vmatprep.subr.mxu0 0.0
    %2019 = vmatpush1.msra.mxu0 0.0
    %2020 = vmatprep.subr.mxu0 0.0
    %2021 = vmatpush1.msra.mxu0 0.0
    %2022 = vmatprep.subr.mxu0 0.0
    %2023 = vmatpush1.msra.mxu0 0.0
    %2024 = vmatprep.subr.mxu0 0.0
    %2025 = vmatpush1.msra.mxu0 0.0
    %2026 = vmatprep.subr.mxu0 0.0
    %2027 = vmatpush1.msra.mxu0 0.0
    %2028 = vmatprep.subr.mxu0 0.0
    %2029 = vmatpush1.msra.mxu0 0.0
    %2030 = vmatprep.subr.mxu0 0.0
    %2031 = vmatpush1.msra.mxu0 0.0
    %2032 = vmatprep.subr.mxu0 0.0
    %2033 = vmatpush1.msra.mxu0 0.0
    %2034 = vmatprep.subr.mxu0 0.0
    %2035 = vmatpush1.msra.mxu0 0.0
    %2036 = vmatprep.subr.mxu0 0.0
    %2037 = vmatpush1.msra.mxu0 0.0
    %2038 = vmatprep.subr.mxu0 0.0
    %2039 = vmatpush1.msra.mxu0 0.0
    %2040 = vmatprep.subr.mxu0 0.0
    %2041 = vmatpush1.msra.mxu0 0.0
    %2042 = vmatprep.subr.mxu0 0.0
    %2043 = vmatpush1.msra.mxu0 0.0
    %2044 = vmatprep.subr.mxu0 0.0
    %2045 = vmatpush1.msra.mxu0 0.0
    %2046 = vmatprep.subr.mxu0 0.0
    %2047 = vmatpush1.msra.mxu0 0.0
    %2048 = vmatprep.subr.mxu0 0.0
    %2049 = vmatpush1.msra.mxu0 0.0
    %2050 = vmatprep.subr.mxu0 0.0
    %2051 = vmatpush1.msra.mxu0 0.0
    %2052 = vmatprep.subr.mxu0 0.0
    %2053 = vmatpush1.msra.mxu0 0.0
    %2054 = vmatprep.subr.mxu0 0.0
    %2055 = vmatpush1.msra.mxu0 0.0
    %2056 = vmatprep.subr.mxu0 0.0
    %2057 = vmatpush1.msra.mxu0 0.0
    %2058 = vmatprep.subr.mxu0 0.0
    %2059 = vmatpush1.msra.mxu0 0.0
    %2060 = vmatprep.subr.mxu0 0.0
    %2061 = vmatpush1.msra.mxu0 0.0
    %2062 = vmatprep.mubr.f32.mxu0 0.0
    %2063 = vmatmul.mubr.f32.gmra.mrb[0].mxu0 %v1996
    %v2064 = vpop.f32.mrb[0].mxu0
    %v2065 = vadd.f32 %v118, %v2064
    %v2066 = vpop.f32.mrb[0].mxu0
    %2067 = vdwg.mxu0
    %v2068 = vxor.u32 %v2065, 2147483648
    %v2069 = vmul.f32 %v2068, 1.442695
    %v2070 = vpow.pop %v2069
    %v2071 = vadd.f32 %v2070, 1.0
    %v2072 = vrcp.pop %v2071
    %v2073 = vmul.f32 1.0, %v2072
    %v2074 = vtanh.pop %v2065
    %v2075 = vmul.f32 %v2073, %v1876
    %2077 = vrot.lane.b32.xlu0 %v2074, 64
    %v2078 = vpop.permute.xlu0 %2077
    %v2080 = vmul.f32 %v2073, %v2078
    %2082 = vrot.lane.b32.xlu0 %v2080, 32
    %v2083 = vpop.permute.xlu0 %2082
    %v2085 = vadd.f32 %v2075, %v2083
    %v2086 = vtanh.pop %v2085
    %2088 = vrot.lane.b32.xlu0 %v2086, 64
    %v2089 = vpop.permute.xlu0 %2088
    %v2091 = vmul.f32 %v2073, %v2089
    %p2092 = scmp.gt.s32.totalorder %s133, 7
    %s2093 = scalar_select %p2092, 1, 0
    %s2094 = scvt.s32.f32 %s2093
    %s2095 = ssub.f32 1.0, %s2094
    %v2096 = vstv %s2094
    %v2097 = vmul.f32 %v2096, %v1983
    %v2098 = vstv %s2095
    %v2099 = vmul.f32 %v2098, %v1864
    %v2101 = vrot.slane %v2099, 7
    %v2103 = vadd.f32 %v2097, %v2101
    %v2104 = vmul.f32 %v2096, %v1977
    %v2105 = vmul.f32 %v2098, %v1870
    %v2107 = vrot.slane %v2105, 7
    %v2109 = vadd.f32 %v2104, %v2107
    %v2110 = vmul.f32 %v2096, %v2091
    %v2111 = vmul.f32 %v2098, %v1873
    %v2112 = vadd.f32 %v2110, %v2111
    %v2113 = vmul.f32 %v2096, %v2085
    %v2114 = vmul.f32 %v2098, %v1876
    %v2115 = vadd.f32 %v2113, %v2114
    %v2117 = vrot.slane %v2112, 1
    %v2119 = vadd.f32 %v2103, %v2117
    %v2120 = vmul.f32 %v2119, 0.5
    %v2122 = vrot.slane %v2115, 1
    %v2124 = vadd.f32 %v2109, %v2122
    %v2125 = vmul.f32 %v2124, 0.5
    %vm2126 = vcmp.eq.s32.totalorder %v135, 1
    %v2127 = vsel %vm2126, 1, 0
    %v2128 = vcvt.s32.f32 %v2127
    %v2130 = vrot.slane %v2120, 7
    %2131 = vrot.lane.b32.xlu0 %v2130, 64
    %v2132 = vpop.permute.xlu0 %2131
    %v2134 = vsel %vm154, %v2128, %v2132
    %v2136 = vsel %vm331, %v2134, 0
    %2138 = vmatprep.subr.mxu0 0.0
    %2139 = vmatpush1.msra.mxu0 %v119
    %2140 = vmatprep.subr.mxu0 0.0
    %2141 = vmatpush1.msra.mxu0 %v120
    %2142 = vmatprep.subr.mxu0 0.0
    %2143 = vmatpush1.msra.mxu0 %v121
    %2144 = vmatprep.subr.mxu0 0.0
    %2145 = vmatpush1.msra.mxu0 %v122
    %2146 = vmatprep.subr.mxu0 0.0
    %2147 = vmatpush1.msra.mxu0 %v123
    %2148 = vmatprep.subr.mxu0 0.0
    %2149 = vmatpush1.msra.mxu0 %v124
    %2150 = vmatprep.subr.mxu0 0.0
    %2151 = vmatpush1.msra.mxu0 %v125
    %2152 = vmatprep.subr.mxu0 0.0
    %2153 = vmatpush1.msra.mxu0 %v126
    %2154 = vmatprep.subr.mxu0 0.0
    %2155 = vmatpush1.msra.mxu0 0.0
    %2156 = vmatprep.subr.mxu0 0.0
    %2157 = vmatpush1.msra.mxu0 0.0
    %2158 = vmatprep.subr.mxu0 0.0
    %2159 = vmatpush1.msra.mxu0 0.0
    %2160 = vmatprep.subr.mxu0 0.0
    %2161 = vmatpush1.msra.mxu0 0.0
    %2162 = vmatprep.subr.mxu0 0.0
    %2163 = vmatpush1.msra.mxu0 0.0
    %2164 = vmatprep.subr.mxu0 0.0
    %2165 = vmatpush1.msra.mxu0 0.0
    %2166 = vmatprep.subr.mxu0 0.0
    %2167 = vmatpush1.msra.mxu0 0.0
    %2168 = vmatprep.subr.mxu0 0.0
    %2169 = vmatpush1.msra.mxu0 0.0
    %2170 = vmatprep.subr.mxu0 0.0
    %2171 = vmatpush1.msra.mxu0 0.0
    %2172 = vmatprep.subr.mxu0 0.0
    %2173 = vmatpush1.msra.mxu0 0.0
    %2174 = vmatprep.subr.mxu0 0.0
    %2175 = vmatpush1.msra.mxu0 0.0
    %2176 = vmatprep.subr.mxu0 0.0
    %2177 = vmatpush1.msra.mxu0 0.0
    %2178 = vmatprep.subr.mxu0 0.0
    %2179 = vmatpush1.msra.mxu0 0.0
    %2180 = vmatprep.subr.mxu0 0.0
    %2181 = vmatpush1.msra.mxu0 0.0
    %2182 = vmatprep.subr.mxu0 0.0
    %2183 = vmatpush1.msra.mxu0 0.0
    %2184 = vmatprep.subr.mxu0 0.0
    %2185 = vmatpush1.msra.mxu0 0.0
    %2186 = vmatprep.subr.mxu0 0.0
    %2187 = vmatpush1.msra.mxu0 0.0
    %2188 = vmatprep.subr.mxu0 0.0
    %2189 = vmatpush1.msra.mxu0 0.0
    %2190 = vmatprep.subr.mxu0 0.0
    %2191 = vmatpush1.msra.mxu0 0.0
    %2192 = vmatprep.subr.mxu0 0.0
    %2193 = vmatpush1.msra.mxu0 0.0
    %2194 = vmatprep.subr.mxu0 0.0
    %2195 = vmatpush1.msra.mxu0 0.0
    %2196 = vmatprep.subr.mxu0 0.0
    %2197 = vmatpush1.msra.mxu0 0.0
    %2198 = vmatprep.subr.mxu0 0.0
    %2199 = vmatpush1.msra.mxu0 0.0
    %2200 = vmatprep.subr.mxu0 0.0
    %2201 = vmatpush1.msra.mxu0 0.0
    %2202 = vmatprep.mubr.f32.mxu0 0.0
    %2203 = vmatmul.mubr.f32.gmra.mrb[0].mxu0 %v2136
    %v2204 = vpop.f32.mrb[0].mxu0
    %v2205 = vadd.f32 %v127, %v2204
    %v2206 = vpop.f32.mrb[0].mxu0
    %2207 = vdwg.mxu0
    %v2208 = vxor.u32 %v2205, 2147483648
    %v2209 = vmul.f32 %v2208, 1.442695
    %v2210 = vpow.pop %v2209
    %v2211 = vadd.f32 %v2210, 1.0
    %v2212 = vrcp.pop %v2211
    %v2213 = vmul.f32 1.0, %v2212
    %v2214 = vtanh.pop %v2205
    %v2216 = vrot.slane %v2125, 7
    %v2218 = vmul.f32 %v2213, %v2216
    %2220 = vrot.lane.b32.xlu0 %v2214, 64
    %v2221 = vpop.permute.xlu0 %2220
    %v2223 = vmul.f32 %v2213, %v2221
    %2225 = vrot.lane.b32.xlu0 %v2223, 32
    %v2226 = vpop.permute.xlu0 %2225
    %v2228 = vadd.f32 %v2218, %v2226
    %v2229 = vtanh.pop %v2228
    %2231 = vrot.lane.b32.xlu0 %v2229, 64
    %v2232 = vpop.permute.xlu0 %2231
    %v2234 = vmul.f32 %v2213, %v2232
    %2236 = vrot.lane.b32.xlu0 %v2234, 32
    %v2237 = vpop.permute.xlu0 %2236
    %v2238 = vsel %vm154, %v2237, 0
    %2240 = vmatprep.subr.mxu0 0.0
    %2241 = vmatpush1.msra.mxu0 %v128
    %2242 = vmatprep.subr.mxu0 0.0
    %2243 = vmatpush1.msra.mxu0 %v129
    %2244 = vmatprep.subr.mxu0 0.0
    %2245 = vmatpush1.msra.mxu0 %v130
    %2246 = vmatprep.subr.mxu0 0.0
    %2247 = vmatpush1.msra.mxu0 %v131
    %2248 = vmatprep.subr.mxu0 0.0
    %2249 = vmatpush1.msra.mxu0 0.0
    %2250 = vmatprep.subr.mxu0 0.0
    %2251 = vmatpush1.msra.mxu0 0.0
    %2252 = vmatprep.subr.mxu0 0.0
    %2253 = vmatpush1.msra.mxu0 0.0
    %2254 = vmatprep.subr.mxu0 0.0
    %2255 = vmatpush1.msra.mxu0 0.0
    %2256 = vmatprep.subr.mxu0 0.0
    %2257 = vmatpush1.msra.mxu0 0.0
    %2258 = vmatprep.subr.mxu0 0.0
    %2259 = vmatpush1.msra.mxu0 0.0
    %2260 = vmatprep.subr.mxu0 0.0
    %2261 = vmatpush1.msra.mxu0 0.0
    %2262 = vmatprep.subr.mxu0 0.0
    %2263 = vmatpush1.msra.mxu0 0.0
    %2264 = vmatprep.subr.mxu0 0.0
    %2265 = vmatpush1.msra.mxu0 0.0
    %2266 = vmatprep.subr.mxu0 0.0
    %2267 = vmatpush1.msra.mxu0 0.0
    %2268 = vmatprep.subr.mxu0 0.0
    %2269 = vmatpush1.msra.mxu0 0.0
    %2270 = vmatprep.subr.mxu0 0.0
    %2271 = vmatpush1.msra.mxu0 0.0
    %2272 = vmatprep.subr.mxu0 0.0
    %2273 = vmatpush1.msra.mxu0 0.0
    %2274 = vmatprep.subr.mxu0 0.0
    %2275 = vmatpush1.msra.mxu0 0.0
    %2276 = vmatprep.subr.mxu0 0.0
    %2277 = vmatpush1.msra.mxu0 0.0
    %2278 = vmatprep.subr.mxu0 0.0
    %2279 = vmatpush1.msra.mxu0 0.0
    %2280 = vmatprep.subr.mxu0 0.0
    %2281 = vmatpush1.msra.mxu0 0.0
    %2282 = vmatprep.subr.mxu0 0.0
    %2283 = vmatpush1.msra.mxu0 0.0
    %2284 = vmatprep.subr.mxu0 0.0
    %2285 = vmatpush1.msra.mxu0 0.0
    %2286 = vmatprep.subr.mxu0 0.0
    %2287 = vmatpush1.msra.mxu0 0.0
    %2288 = vmatprep.subr.mxu0 0.0
    %2289 = vmatpush1.msra.mxu0 0.0
    %2290 = vmatprep.subr.mxu0 0.0
    %2291 = vmatpush1.msra.mxu0 0.0
    %2292 = vmatprep.subr.mxu0 0.0
    %2293 = vmatpush1.msra.mxu0 0.0
    %2294 = vmatprep.subr.mxu0 0.0
    %2295 = vmatpush1.msra.mxu0 0.0
    %2296 = vmatprep.subr.mxu0 0.0
    %2297 = vmatpush1.msra.mxu0 0.0
    %2298 = vmatprep.subr.mxu0 0.0
    %2299 = vmatpush1.msra.mxu0 0.0
    %2300 = vmatprep.subr.mxu0 0.0
    %2301 = vmatpush1.msra.mxu0 0.0
    %2302 = vmatprep.subr.mxu0 0.0
    %2303 = vmatpush1.msra.mxu0 0.0
    %2304 = vmatprep.mubr.f32.mxu0 0.0
    %2305 = vmatmul.mubr.f32.gmra.mrb[0].mxu0 %v2238
    %v2306 = vpop.f32.mrb[0].mxu0
    %v2307 = vadd.f32 %v132, %v2306
    %v2308 = vpop.f32.mrb[0].mxu0
    %2309 = vdwg.mxu0
    %vm2310 = vcmask 253952
    %v2311 = vsel %vm2310, %v2307, -inf
    %2312 = vmax.xlane.f32.xlu0 %v2311
    %v2313 = vpop.xlane.xlu0 %2312
    %vm2314 = vcmp.eq.f32.partialorder %v2307, %v2313
    %v2315 = vsel %vm2314, %v135, 32
    %v2316 = vsel %vm2310, %v2315, 2147483647
    %v2317 = vand.u32 %v2316, 65535
    %v2318 = vshra.s32 %v2316, 16
    %v2319 = vcvt.s32.f32 %v2317
    %v2320 = vcvt.s32.f32 %v2318
    %2321 = vmin.xlane.f32.xlu0 %v2320
    %v2322 = vpop.xlane.xlu0 %2321
    %vm2323 = vcmp.eq.f32.partialorder %v2320, %v2322
    %v2324 = vsel %vm2323, %v2319, inf
    %2325 = vmin.xlane.f32.xlu0 %v2324
    %v2326 = vpop.xlane.xlu0 %2325
    %v2327 = vcvt.f32.s32 %v2326
    %v2328 = vcvt.f32.s32 %v2322
    %v2329 = vshll.u32 %v2328, 16
    %v2330 = vadd.s32 %v2329, %v2327
    %vm2331 = vcmp.eq.s32.totalorder %v2330, 2
    %v2332 = vsel %vm2331, 1, 0
    %v2333 = vsub.s32 1, %v2332
    %vm2334 = vcmp.eq.s32.totalorder %v135, 0
    %v2335 = vsel %vm2334, 1, 0
    %v2336 = vmul.u32 %v2335, %v2333
    %v2337 = vmul.u32 %v2336, %v2330
    %v2338 = vsub.s32 1, %v2336
    %v2339 = vsub.s32 %v2337, %v2338
    %v2340 = vmul.f32 %v2120, 0.0
    %v2342 = vrot.slane %v2340, 7
    %v2344 = vadd.f32 %v2234, %v2342
    %v2345 = vmul.f32 %v2125, 0.0
    %v2347 = vrot.slane %v2345, 7
    %v2349 = vadd.f32 %v2228, %v2347
    %v2350 = vsel %vm2331, %v2332, 0
    %vm2351 = vcmp.eq.s32.totalorder %v135, %v2330
    %v2352 = vsel %vm2351, 1, 0
    %v2353 = vcvt.s32.f32 %v2352
    %2355 = vrot.lane.b32.xlu0 %v2344, 64
    %v2356 = vpop.permute.xlu0 %2355
    %v2358 = vsel %vm154, %v2353, %v2356
    %v2360 = vsel %vm331, %v2358, 0
    %2362 = vmatprep.subr.mxu0 0.0
    %2363 = vmatpush1.msra.mxu0 %v119
    %2364 = vmatprep.subr.mxu0 0.0
    %2365 = vmatpush1.msra.mxu0 %v120
    %2366 = vmatprep.subr.mxu0 0.0
    %2367 = vmatpush1.msra.mxu0 %v121
    %2368 = vmatprep.subr.mxu0 0.0
    %2369 = vmatpush1.msra.mxu0 %v122
    %2370 = vmatprep.subr.mxu0 0.0
    %2371 = vmatpush1.msra.mxu0 %v123
    %2372 = vmatprep.subr.mxu0 0.0
    %2373 = vmatpush1.msra.mxu0 %v124
    %2374 = vmatprep.subr.mxu0 0.0
    %2375 = vmatpush1.msra.mxu0 %v125
    %2376 = vmatprep.subr.mxu0 0.0
    %2377 = vmatpush1.msra.mxu0 %v126
    %2378 = vmatprep.subr.mxu0 0.0
    %2379 = vmatpush1.msra.mxu0 0.0
    %2380 = vmatprep.subr.mxu0 0.0
    %2381 = vmatpush1.msra.mxu0 0.0
    %2382 = vmatprep.subr.mxu0 0.0
    %2383 = vmatpush1.msra.mxu0 0.0
    %2384 = vmatprep.subr.mxu0 0.0
    %2385 = vmatpush1.msra.mxu0 0.0
    %2386 = vmatprep.subr.mxu0 0.0
    %2387 = vmatpush1.msra.mxu0 0.0
    %2388 = vmatprep.subr.mxu0 0.0
    %2389 = vmatpush1.msra.mxu0 0.0
    %2390 = vmatprep.subr.mxu0 0.0
    %2391 = vmatpush1.msra.mxu0 0.0
    %2392 = vmatprep.subr.mxu0 0.0
    %2393 = vmatpush1.msra.mxu0 0.0
    %2394 = vmatprep.subr.mxu0 0.0
    %2395 = vmatpush1.msra.mxu0 0.0
    %2396 = vmatprep.subr.mxu0 0.0
    %2397 = vmatpush1.msra.mxu0 0.0
    %2398 = vmatprep.subr.mxu0 0.0
    %2399 = vmatpush1.msra.mxu0 0.0
    %2400 = vmatprep.subr.mxu0 0.0
    %2401 = vmatpush1.msra.mxu0 0.0
    %2402 = vmatprep.subr.mxu0 0.0
    %2403 = vmatpush1.msra.mxu0 0.0
    %2404 = vmatprep.subr.mxu0 0.0
    %2405 = vmatpush1.msra.mxu0 0.0
    %2406 = vmatprep.subr.mxu0 0.0
    %2407 = vmatpush1.msra.mxu0 0.0
    %2408 = vmatprep.subr.mxu0 0.0
    %2409 = vmatpush1.msra.mxu0 0.0
    %2410 = vmatprep.subr.mxu0 0.0
    %2411 = vmatpush1.msra.mxu0 0.0
    %2412 = vmatprep.subr.mxu0 0.0
    %2413 = vmatpush1.msra.mxu0 0.0
    %2414 = vmatprep.subr.mxu0 0.0
    %2415 = vmatpush1.msra.mxu0 0.0
    %2416 = vmatprep.subr.mxu0 0.0
    %2417 = vmatpush1.msra.mxu0 0.0
    %2418 = vmatprep.subr.mxu0 0.0
    %2419 = vmatpush1.msra.mxu0 0.0
    %2420 = vmatprep.subr.mxu0 0.0
    %2421 = vmatpush1.msra.mxu0 0.0
    %2422 = vmatprep.subr.mxu0 0.0
    %2423 = vmatpush1.msra.mxu0 0.0
    %2424 = vmatprep.subr.mxu0 0.0
    %2425 = vmatpush1.msra.mxu0 0.0
    %2426 = vmatprep.mubr.f32.mxu0 0.0
    %2427 = vmatmul.mubr.f32.gmra.mrb[0].mxu0 %v2360
    %v2428 = vpop.f32.mrb[0].mxu0
    %v2429 = vadd.f32 %v127, %v2428
    %v2430 = vpop.f32.mrb[0].mxu0
    %2431 = vdwg.mxu0
    %v2432 = vxor.u32 %v2429, 2147483648
    %v2433 = vmul.f32 %v2432, 1.442695
    %v2434 = vpow.pop %v2433
    %v2435 = vadd.f32 %v2434, 1.0
    %v2436 = vrcp.pop %v2435
    %v2437 = vmul.f32 1.0, %v2436
    %v2438 = vtanh.pop %v2429
    %v2439 = vmul.f32 %v2437, %v2349
    %2441 = vrot.lane.b32.xlu0 %v2438, 64
    %v2442 = vpop.permute.xlu0 %2441
    %v2444 = vmul.f32 %v2437, %v2442
    %2446 = vrot.lane.b32.xlu0 %v2444, 32
    %v2447 = vpop.permute.xlu0 %2446
    %v2449 = vadd.f32 %v2439, %v2447
    %v2450 = vtanh.pop %v2449
    %2452 = vrot.lane.b32.xlu0 %v2450, 64
    %v2453 = vpop.permute.xlu0 %2452
    %v2455 = vmul.f32 %v2437, %v2453
    %2457 = vrot.lane.b32.xlu0 %v2455, 32
    %v2458 = vpop.permute.xlu0 %2457
    %v2459 = vsel %vm154, %v2458, 0
    %2461 = vmatprep.subr.mxu0 0.0
    %2462 = vmatpush1.msra.mxu0 %v128
    %2463 = vmatprep.subr.mxu0 0.0
    %2464 = vmatpush1.msra.mxu0 %v129
    %2465 = vmatprep.subr.mxu0 0.0
    %2466 = vmatpush1.msra.mxu0 %v130
    %2467 = vmatprep.subr.mxu0 0.0
    %2468 = vmatpush1.msra.mxu0 %v131
    %2469 = vmatprep.subr.mxu0 0.0
    %2470 = vmatpush1.msra.mxu0 0.0
    %2471 = vmatprep.subr.mxu0 0.0
    %2472 = vmatpush1.msra.mxu0 0.0
    %2473 = vmatprep.subr.mxu0 0.0
    %2474 = vmatpush1.msra.mxu0 0.0
    %2475 = vmatprep.subr.mxu0 0.0
    %2476 = vmatpush1.msra.mxu0 0.0
    %2477 = vmatprep.subr.mxu0 0.0
    %2478 = vmatpush1.msra.mxu0 0.0
    %2479 = vmatprep.subr.mxu0 0.0
    %2480 = vmatpush1.msra.mxu0 0.0
    %2481 = vmatprep.subr.mxu0 0.0
    %2482 = vmatpush1.msra.mxu0 0.0
    %2483 = vmatprep.subr.mxu0 0.0
    %2484 = vmatpush1.msra.mxu0 0.0
    %2485 = vmatprep.subr.mxu0 0.0
    %2486 = vmatpush1.msra.mxu0 0.0
    %2487 = vmatprep.subr.mxu0 0.0
    %2488 = vmatpush1.msra.mxu0 0.0
    %2489 = vmatprep.subr.mxu0 0.0
    %2490 = vmatpush1.msra.mxu0 0.0
    %2491 = vmatprep.subr.mxu0 0.0
    %2492 = vmatpush1.msra.mxu0 0.0
    %2493 = vmatprep.subr.mxu0 0.0
    %2494 = vmatpush1.msra.mxu0 0.0
    %2495 = vmatprep.subr.mxu0 0.0
    %2496 = vmatpush1.msra.mxu0 0.0
    %2497 = vmatprep.subr.mxu0 0.0
    %2498 = vmatpush1.msra.mxu0 0.0
    %2499 = vmatprep.subr.mxu0 0.0
    %2500 = vmatpush1.msra.mxu0 0.0
    %2501 = vmatprep.subr.mxu0 0.0
    %2502 = vmatpush1.msra.mxu0 0.0
    %2503 = vmatprep.subr.mxu0 0.0
    %2504 = vmatpush1.msra.mxu0 0.0
    %2505 = vmatprep.subr.mxu0 0.0
    %2506 = vmatpush1.msra.mxu0 0.0
    %2507 = vmatprep.subr.mxu0 0.0
    %2508 = vmatpush1.msra.mxu0 0.0
    %2509 = vmatprep.subr.mxu0 0.0
    %2510 = vmatpush1.msra.mxu0 0.0
    %2511 = vmatprep.subr.mxu0 0.0
    %2512 = vmatpush1.msra.mxu0 0.0
    %2513 = vmatprep.subr.mxu0 0.0
    %2514 = vmatpush1.msra.mxu0 0.0
    %2515 = vmatprep.subr.mxu0 0.0
    %2516 = vmatpush1.msra.mxu0 0.0
    %2517 = vmatprep.subr.mxu0 0.0
    %2518 = vmatpush1.msra.mxu0 0.0
    %2519 = vmatprep.subr.mxu0 0.0
    %2520 = vmatpush1.msra.mxu0 0.0
    %2521 = vmatprep.subr.mxu0 0.0
    %2522 = vmatpush1.msra.mxu0 0.0
    %2523 = vmatprep.subr.mxu0 0.0
    %2524 = vmatpush1.msra.mxu0 0.0
    %2525 = vmatprep.mubr.f32.mxu0 0.0
    %2526 = vmatmul.mubr.f32.gmra.mrb[0].mxu0 %v2459
    %v2527 = vpop.f32.mrb[0].mxu0
    %v2528 = vadd.f32 %v132, %v2527
    %v2529 = vpop.f32.mrb[0].mxu0
    %2530 = vdwg.mxu0
    %v2531 = vsel %vm2310, %v2528, -inf
    %2532 = vmax.xlane.f32.xlu0 %v2531
    %v2533 = vpop.xlane.xlu0 %2532
    %vm2534 = vcmp.eq.f32.partialorder %v2528, %v2533
    %v2535 = vsel %vm2534, %v135, 32
    %v2536 = vsel %vm2310, %v2535, 2147483647
    %v2537 = vand.u32 %v2536, 65535
    %v2538 = vshra.s32 %v2536, 16
    %v2539 = vcvt.s32.f32 %v2537
    %v2540 = vcvt.s32.f32 %v2538
    %2541 = vmin.xlane.f32.xlu0 %v2540
    %v2542 = vpop.xlane.xlu0 %2541
    %vm2543 = vcmp.eq.f32.partialorder %v2540, %v2542
    %v2544 = vsel %vm2543, %v2539, inf
    %2545 = vmin.xlane.f32.xlu0 %v2544
    %v2546 = vpop.xlane.xlu0 %2545
    %v2547 = vcvt.f32.s32 %v2546
    %v2548 = vcvt.f32.s32 %v2542
    %v2549 = vshll.u32 %v2548, 16
    %v2550 = vadd.s32 %v2549, %v2547
    %vm2551 = vcmp.eq.s32.totalorder %v2550, 2
    %v2552 = vsel %vm2551, 1, 0
    %v2553 = vsub.s32 1, %v2350
    %v2554 = vsub.s32 1, %v2552
    %v2555 = vmul.u32 %v2553, %v2554
    %v2556 = vmul.u32 %v2127, %v2555
    %v2557 = vmul.u32 %v2556, %v2550
    %v2558 = vsub.s32 1, %v2556
    %v2559 = vmul.u32 %v2558, %v2339
    %v2560 = vadd.s32 %v2557, %v2559
    %v2561 = vcvt.s32.f32 %v2553
    %v2562 = vmul.f32 %v2561, %v2455
    %v2563 = vsub.f32 1.0, %v2561
    %v2564 = vmul.f32 %v2563, %v2344
    %v2565 = vadd.f32 %v2562, %v2564
    %v2566 = vmul.f32 %v2561, %v2449
    %v2567 = vmul.f32 %v2563, %v2349
    %v2568 = vadd.f32 %v2566, %v2567
    %v2569 = vmul.u32 %v2553, %v2550
    %v2570 = vsub.s32 1, %v2553
    %v2571 = vmul.u32 %v2570, %v2330
    %v2572 = vadd.s32 %v2569, %v2571
    %vm2573 = vcmp.gt.s32.totalorder %v2350, %v2552
    %v2574 = vsel %vm2573, %v2350, %v2552
    %vm2575 = vcmp.eq.s32.totalorder %v135, %v2572
    %v2576 = vsel %vm2575, 1, 0
    %v2577 = vcvt.s32.f32 %v2576
    %2579 = vrot.lane.b32.xlu0 %v2565, 64
    %v2580 = vpop.permute.xlu0 %2579
    %v2582 = vsel %vm154, %v2577, %v2580
    %v2584 = vsel %vm331, %v2582, 0
    %2586 = vmatprep.subr.mxu0 0.0
    %2587 = vmatpush1.msra.mxu0 %v119
    %2588 = vmatprep.subr.mxu0 0.0
    %2589 = vmatpush1.msra.mxu0 %v120
    %2590 = vmatprep.subr.mxu0 0.0
    %2591 = vmatpush1.msra.mxu0 %v121
    %2592 = vmatprep.subr.mxu0 0.0
    %2593 = vmatpush1.msra.mxu0 %v122
    %2594 = vmatprep.subr.mxu0 0.0
    %2595 = vmatpush1.msra.mxu0 %v123
    %2596 = vmatprep.subr.mxu0 0.0
    %2597 = vmatpush1.msra.mxu0 %v124
    %2598 = vmatprep.subr.mxu0 0.0
    %2599 = vmatpush1.msra.mxu0 %v125
    %2600 = vmatprep.subr.mxu0 0.0
    %2601 = vmatpush1.msra.mxu0 %v126
    %2602 = vmatprep.subr.mxu0 0.0
    %2603 = vmatpush1.msra.mxu0 0.0
    %2604 = vmatprep.subr.mxu0 0.0
    %2605 = vmatpush1.msra.mxu0 0.0
    %2606 = vmatprep.subr.mxu0 0.0
    %2607 = vmatpush1.msra.mxu0 0.0
    %2608 = vmatprep.subr.mxu0 0.0
    %2609 = vmatpush1.msra.mxu0 0.0
    %2610 = vmatprep.subr.mxu0 0.0
    %2611 = vmatpush1.msra.mxu0 0.0
    %2612 = vmatprep.subr.mxu0 0.0
    %2613 = vmatpush1.msra.mxu0 0.0
    %2614 = vmatprep.subr.mxu0 0.0
    %2615 = vmatpush1.msra.mxu0 0.0
    %2616 = vmatprep.subr.mxu0 0.0
    %2617 = vmatpush1.msra.mxu0 0.0
    %2618 = vmatprep.subr.mxu0 0.0
    %2619 = vmatpush1.msra.mxu0 0.0
    %2620 = vmatprep.subr.mxu0 0.0
    %2621 = vmatpush1.msra.mxu0 0.0
    %2622 = vmatprep.subr.mxu0 0.0
    %2623 = vmatpush1.msra.mxu0 0.0
    %2624 = vmatprep.subr.mxu0 0.0
    %2625 = vmatpush1.msra.mxu0 0.0
    %2626 = vmatprep.subr.mxu0 0.0
    %2627 = vmatpush1.msra.mxu0 0.0
    %2628 = vmatprep.subr.mxu0 0.0
    %2629 = vmatpush1.msra.mxu0 0.0
    %2630 = vmatprep.subr.mxu0 0.0
    %2631 = vmatpush1.msra.mxu0 0.0
    %2632 = vmatprep.subr.mxu0 0.0
    %2633 = vmatpush1.msra.mxu0 0.0
    %2634 = vmatprep.subr.mxu0 0.0
    %2635 = vmatpush1.msra.mxu0 0.0
    %2636 = vmatprep.subr.mxu0 0.0
    %2637 = vmatpush1.msra.mxu0 0.0
    %2638 = vmatprep.subr.mxu0 0.0
    %2639 = vmatpush1.msra.mxu0 0.0
    %2640 = vmatprep.subr.mxu0 0.0
    %2641 = vmatpush1.msra.mxu0 0.0
    %2642 = vmatprep.subr.mxu0 0.0
    %2643 = vmatpush1.msra.mxu0 0.0
    %2644 = vmatprep.subr.mxu0 0.0
    %2645 = vmatpush1.msra.mxu0 0.0
    %2646 = vmatprep.subr.mxu0 0.0
    %2647 = vmatpush1.msra.mxu0 0.0
    %2648 = vmatprep.subr.mxu0 0.0
    %2649 = vmatpush1.msra.mxu0 0.0
    %2650 = vmatprep.mubr.f32.mxu0 0.0
    %2651 = vmatmul.mubr.f32.gmra.mrb[0].mxu0 %v2584
    %v2652 = vpop.f32.mrb[0].mxu0
    %v2653 = vadd.f32 %v127, %v2652
    %v2654 = vpop.f32.mrb[0].mxu0
    %2655 = vdwg.mxu0
    %v2656 = vxor.u32 %v2653, 2147483648
    %v2657 = vmul.f32 %v2656, 1.442695
    %v2658 = vpow.pop %v2657
    %v2659 = vadd.f32 %v2658, 1.0
    %v2660 = vrcp.pop %v2659
    %v2661 = vmul.f32 1.0, %v2660
    %v2662 = vtanh.pop %v2653
    %v2663 = vmul.f32 %v2661, %v2568
    %2665 = vrot.lane.b32.xlu0 %v2662, 64
    %v2666 = vpop.permute.xlu0 %2665
    %v2668 = vmul.f32 %v2661, %v2666
    %2670 = vrot.lane.b32.xlu0 %v2668, 32
    %v2671 = vpop.permute.xlu0 %2670
    %v2673 = vadd.f32 %v2663, %v2671
    %v2674 = vtanh.pop %v2673
    %2676 = vrot.lane.b32.xlu0 %v2674, 64
    %v2677 = vpop.permute.xlu0 %2676
    %v2679 = vmul.f32 %v2661, %v2677
    %2681 = vrot.lane.b32.xlu0 %v2679, 32
    %v2682 = vpop.permute.xlu0 %2681
    %v2683 = vsel %vm154, %v2682, 0
    %2685 = vmatprep.subr.mxu0 0.0
    %2686 = vmatpush1.msra.mxu0 %v128
    %2687 = vmatprep.subr.mxu0 0.0
    %2688 = vmatpush1.msra.mxu0 %v129
    %2689 = vmatprep.subr.mxu0 0.0
    %2690 = vmatpush1.msra.mxu0 %v130
    %2691 = vmatprep.subr.mxu0 0.0
    %2692 = vmatpush1.msra.mxu0 %v131
    %2693 = vmatprep.subr.mxu0 0.0
    %2694 = vmatpush1.msra.mxu0 0.0
    %2695 = vmatprep.subr.mxu0 0.0
    %2696 = vmatpush1.msra.mxu0 0.0
    %2697 = vmatprep.subr.mxu0 0.0
    %2698 = vmatpush1.msra.mxu0 0.0
    %2699 = vmatprep.subr.mxu0 0.0
    %2700 = vmatpush1.msra.mxu0 0.0
    %2701 = vmatprep.subr.mxu0 0.0
    %2702 = vmatpush1.msra.mxu0 0.0
    %2703 = vmatprep.subr.mxu0 0.0
    %2704 = vmatpush1.msra.mxu0 0.0
    %2705 = vmatprep.subr.mxu0 0.0
    %2706 = vmatpush1.msra.mxu0 0.0
    %2707 = vmatprep.subr.mxu0 0.0
    %2708 = vmatpush1.msra.mxu0 0.0
    %2709 = vmatprep.subr.mxu0 0.0
    %2710 = vmatpush1.msra.mxu0 0.0
    %2711 = vmatprep.subr.mxu0 0.0
    %2712 = vmatpush1.msra.mxu0 0.0
    %2713 = vmatprep.subr.mxu0 0.0
    %2714 = vmatpush1.msra.mxu0 0.0
    %2715 = vmatprep.subr.mxu0 0.0
    %2716 = vmatpush1.msra.mxu0 0.0
    %2717 = vmatprep.subr.mxu0 0.0
    %2718 = vmatpush1.msra.mxu0 0.0
    %2719 = vmatprep.subr.mxu0 0.0
    %2720 = vmatpush1.msra.mxu0 0.0
    %2721 = vmatprep.subr.mxu0 0.0
    %2722 = vmatpush1.msra.mxu0 0.0
    %2723 = vmatprep.subr.mxu0 0.0
    %2724 = vmatpush1.msra.mxu0 0.0
    %2725 = vmatprep.subr.mxu0 0.0
    %2726 = vmatpush1.msra.mxu0 0.0
    %2727 = vmatprep.subr.mxu0 0.0
    %2728 = vmatpush1.msra.mxu0 0.0
    %2729 = vmatprep.subr.mxu0 0.0
    %2730 = vmatpush1.msra.mxu0 0.0
    %2731 = vmatprep.subr.mxu0 0.0
    %2732 = vmatpush1.msra.mxu0 0.0
    %2733 = vmatprep.subr.mxu0 0.0
    %2734 = vmatpush1.msra.mxu0 0.0
    %2735 = vmatprep.subr.mxu0 0.0
    %2736 = vmatpush1.msra.mxu0 0.0
    %2737 = vmatprep.subr.mxu0 0.0
    %2738 = vmatpush1.msra.mxu0 0.0
    %2739 = vmatprep.subr.mxu0 0.0
    %2740 = vmatpush1.msra.mxu0 0.0
    %2741 = vmatprep.subr.mxu0 0.0
    %2742 = vmatpush1.msra.mxu0 0.0
    %2743 = vmatprep.subr.mxu0 0.0
    %2744 = vmatpush1.msra.mxu0 0.0
    %2745 = vmatprep.subr.mxu0 0.0
    %2746 = vmatpush1.msra.mxu0 0.0
    %2747 = vmatprep.subr.mxu0 0.0
    %2748 = vmatpush1.msra.mxu0 0.0
    %2749 = vmatprep.mubr.f32.mxu0 0.0
    %2750 = vmatmul.mubr.f32.gmra.mrb[0].mxu0 %v2683
    %v2751 = vpop.f32.mrb[0].mxu0
    %v2752 = vadd.f32 %v132, %v2751
    %v2753 = vpop.f32.mrb[0].mxu0
    %2754 = vdwg.mxu0
    %v2755 = vsel %vm2310, %v2752, -inf
    %2756 = vmax.xlane.f32.xlu0 %v2755
    %v2757 = vpop.xlane.xlu0 %2756
    %vm2758 = vcmp.eq.f32.partialorder %v2752, %v2757
    %v2759 = vsel %vm2758, %v135, 32
    %v2760 = vsel %vm2310, %v2759, 2147483647
    %v2761 = vand.u32 %v2760, 65535
    %v2762 = vshra.s32 %v2760, 16
    %v2763 = vcvt.s32.f32 %v2761
    %v2764 = vcvt.s32.f32 %v2762
    %2765 = vmin.xlane.f32.xlu0 %v2764
    %v2766 = vpop.xlane.xlu0 %2765
    %vm2767 = vcmp.eq.f32.partialorder %v2764, %v2766
    %v2768 = vsel %vm2767, %v2763, inf
    %2769 = vmin.xlane.f32.xlu0 %v2768
    %v2770 = vpop.xlane.xlu0 %2769
    %v2771 = vcvt.f32.s32 %v2770
    %v2772 = vcvt.f32.s32 %v2766
    %v2773 = vshll.u32 %v2772, 16
    %v2774 = vadd.s32 %v2773, %v2771
    %vm2775 = vcmp.eq.s32.totalorder %v2774, 2
    %v2776 = vsel %vm2775, 1, 0
    %v2777 = vsub.s32 1, %v2574
    %v2778 = vsub.s32 1, %v2776
    %v2779 = vmul.u32 %v2777, %v2778
    %vm2780 = vcmp.eq.s32.totalorder %v135, 2
    %v2781 = vsel %vm2780, 1, 0
    %v2782 = vmul.u32 %v2781, %v2779
    %v2783 = vmul.u32 %v2782, %v2774
    %v2784 = vsub.s32 1, %v2782
    %v2785 = vmul.u32 %v2784, %v2560
    %v2786 = vadd.s32 %v2783, %v2785
    %v2787 = vcvt.s32.f32 %v2777
    %v2788 = vmul.f32 %v2787, %v2679
    %v2789 = vsub.f32 1.0, %v2787
    %v2790 = vmul.f32 %v2789, %v2565
    %v2791 = vadd.f32 %v2788, %v2790
    %v2792 = vmul.f32 %v2787, %v2673
    %v2793 = vmul.f32 %v2789, %v2568
    %v2794 = vadd.f32 %v2792, %v2793
    %v2795 = vmul.u32 %v2777, %v2774
    %v2796 = vsub.s32 1, %v2777
    %v2797 = vmul.u32 %v2796, %v2572
    %v2798 = vadd.s32 %v2795, %v2797
    %vm2799 = vcmp.gt.s32.totalorder %v2574, %v2776
    %v2800 = vsel %vm2799, %v2574, %v2776
    %vm2801 = vcmp.eq.s32.totalorder %v135, %v2798
    %v2802 = vsel %vm2801, 1, 0
    %v2803 = vcvt.s32.f32 %v2802
    %2805 = vrot.lane.b32.xlu0 %v2791, 64
    %v2806 = vpop.permute.xlu0 %2805
    %v2808 = vsel %vm154, %v2803, %v2806
    %v2810 = vsel %vm331, %v2808, 0
    %2812 = vmatprep.subr.mxu0 0.0
    %2813 = vmatpush1.msra.mxu0 %v119
    %2814 = vmatprep.subr.mxu0 0.0
    %2815 = vmatpush1.msra.mxu0 %v120
    %2816 = vmatprep.subr.mxu0 0.0
    %2817 = vmatpush1.msra.mxu0 %v121
    %2818 = vmatprep.subr.mxu0 0.0
    %2819 = vmatpush1.msra.mxu0 %v122
    %2820 = vmatprep.subr.mxu0 0.0
    %2821 = vmatpush1.msra.mxu0 %v123
    %2822 = vmatprep.subr.mxu0 0.0
    %2823 = vmatpush1.msra.mxu0 %v124
    %2824 = vmatprep.subr.mxu0 0.0
    %2825 = vmatpush1.msra.mxu0 %v125
    %2826 = vmatprep.subr.mxu0 0.0
    %2827 = vmatpush1.msra.mxu0 %v126
    %2828 = vmatprep.subr.mxu0 0.0
    %2829 = vmatpush1.msra.mxu0 0.0
    %2830 = vmatprep.subr.mxu0 0.0
    %2831 = vmatpush1.msra.mxu0 0.0
    %2832 = vmatprep.subr.mxu0 0.0
    %2833 = vmatpush1.msra.mxu0 0.0
    %2834 = vmatprep.subr.mxu0 0.0
    %2835 = vmatpush1.msra.mxu0 0.0
    %2836 = vmatprep.subr.mxu0 0.0
    %2837 = vmatpush1.msra.mxu0 0.0
    %2838 = vmatprep.subr.mxu0 0.0
    %2839 = vmatpush1.msra.mxu0 0.0
    %2840 = vmatprep.subr.mxu0 0.0
    %2841 = vmatpush1.msra.mxu0 0.0
    %2842 = vmatprep.subr.mxu0 0.0
    %2843 = vmatpush1.msra.mxu0 0.0
    %2844 = vmatprep.subr.mxu0 0.0
    %2845 = vmatpush1.msra.mxu0 0.0
    %2846 = vmatprep.subr.mxu0 0.0
    %2847 = vmatpush1.msra.mxu0 0.0
    %2848 = vmatprep.subr.mxu0 0.0
    %2849 = vmatpush1.msra.mxu0 0.0
    %2850 = vmatprep.subr.mxu0 0.0
    %2851 = vmatpush1.msra.mxu0 0.0
    %2852 = vmatprep.subr.mxu0 0.0
    %2853 = vmatpush1.msra.mxu0 0.0
    %2854 = vmatprep.subr.mxu0 0.0
    %2855 = vmatpush1.msra.mxu0 0.0
    %2856 = vmatprep.subr.mxu0 0.0
    %2857 = vmatpush1.msra.mxu0 0.0
    %2858 = vmatprep.subr.mxu0 0.0
    %2859 = vmatpush1.msra.mxu0 0.0
    %2860 = vmatprep.subr.mxu0 0.0
    %2861 = vmatpush1.msra.mxu0 0.0
    %2862 = vmatprep.subr.mxu0 0.0
    %2863 = vmatpush1.msra.mxu0 0.0
    %2864 = vmatprep.subr.mxu0 0.0
    %2865 = vmatpush1.msra.mxu0 0.0
    %2866 = vmatprep.subr.mxu0 0.0
    %2867 = vmatpush1.msra.mxu0 0.0
    %2868 = vmatprep.subr.mxu0 0.0
    %2869 = vmatpush1.msra.mxu0 0.0
    %2870 = vmatprep.subr.mxu0 0.0
    %2871 = vmatpush1.msra.mxu0 0.0
    %2872 = vmatprep.subr.mxu0 0.0
    %2873 = vmatpush1.msra.mxu0 0.0
    %2874 = vmatprep.subr.mxu0 0.0
    %2875 = vmatpush1.msra.mxu0 0.0
    %2876 = vmatprep.mubr.f32.mxu0 0.0
    %2877 = vmatmul.mubr.f32.gmra.mrb[0].mxu0 %v2810
    %v2878 = vpop.f32.mrb[0].mxu0
    %v2879 = vadd.f32 %v127, %v2878
    %v2880 = vpop.f32.mrb[0].mxu0
    %2881 = vdwg.mxu0
    %v2882 = vxor.u32 %v2879, 2147483648
    %v2883 = vmul.f32 %v2882, 1.442695
    %v2884 = vpow.pop %v2883
    %v2885 = vadd.f32 %v2884, 1.0
    %v2886 = vrcp.pop %v2885
    %v2887 = vmul.f32 1.0, %v2886
    %v2888 = vtanh.pop %v2879
    %v2889 = vmul.f32 %v2887, %v2794
    %2891 = vrot.lane.b32.xlu0 %v2888, 64
    %v2892 = vpop.permute.xlu0 %2891
    %v2894 = vmul.f32 %v2887, %v2892
    %2896 = vrot.lane.b32.xlu0 %v2894, 32
    %v2897 = vpop.permute.xlu0 %2896
    %v2899 = vadd.f32 %v2889, %v2897
    %v2900 = vtanh.pop %v2899
    %2902 = vrot.lane.b32.xlu0 %v2900, 64
    %v2903 = vpop.permute.xlu0 %2902
    %v2905 = vmul.f32 %v2887, %v2903
    %2907 = vrot.lane.b32.xlu0 %v2905, 32
    %v2908 = vpop.permute.xlu0 %2907
    %v2909 = vsel %vm154, %v2908, 0
    %2911 = vmatprep.subr.mxu0 0.0
    %2912 = vmatpush1.msra.mxu0 %v128
    %2913 = vmatprep.subr.mxu0 0.0
    %2914 = vmatpush1.msra.mxu0 %v129
    %2915 = vmatprep.subr.mxu0 0.0
    %2916 = vmatpush1.msra.mxu0 %v130
    %2917 = vmatprep.subr.mxu0 0.0
    %2918 = vmatpush1.msra.mxu0 %v131
    %2919 = vmatprep.subr.mxu0 0.0
    %2920 = vmatpush1.msra.mxu0 0.0
    %2921 = vmatprep.subr.mxu0 0.0
    %2922 = vmatpush1.msra.mxu0 0.0
    %2923 = vmatprep.subr.mxu0 0.0
    %2924 = vmatpush1.msra.mxu0 0.0
    %2925 = vmatprep.subr.mxu0 0.0
    %2926 = vmatpush1.msra.mxu0 0.0
    %2927 = vmatprep.subr.mxu0 0.0
    %2928 = vmatpush1.msra.mxu0 0.0
    %2929 = vmatprep.subr.mxu0 0.0
    %2930 = vmatpush1.msra.mxu0 0.0
    %2931 = vmatprep.subr.mxu0 0.0
    %2932 = vmatpush1.msra.mxu0 0.0
    %2933 = vmatprep.subr.mxu0 0.0
    %2934 = vmatpush1.msra.mxu0 0.0
    %2935 = vmatprep.subr.mxu0 0.0
    %2936 = vmatpush1.msra.mxu0 0.0
    %2937 = vmatprep.subr.mxu0 0.0
    %2938 = vmatpush1.msra.mxu0 0.0
    %2939 = vmatprep.subr.mxu0 0.0
    %2940 = vmatpush1.msra.mxu0 0.0
    %2941 = vmatprep.subr.mxu0 0.0
    %2942 = vmatpush1.msra.mxu0 0.0
    %2943 = vmatprep.subr.mxu0 0.0
    %2944 = vmatpush1.msra.mxu0 0.0
    %2945 = vmatprep.subr.mxu0 0.0
    %2946 = vmatpush1.msra.mxu0 0.0
    %2947 = vmatprep.subr.mxu0 0.0
    %2948 = vmatpush1.msra.mxu0 0.0
    %2949 = vmatprep.subr.mxu0 0.0
    %2950 = vmatpush1.msra.mxu0 0.0
    %2951 = vmatprep.subr.mxu0 0.0
    %2952 = vmatpush1.msra.mxu0 0.0
    %2953 = vmatprep.subr.mxu0 0.0
    %2954 = vmatpush1.msra.mxu0 0.0
    %2955 = vmatprep.subr.mxu0 0.0
    %2956 = vmatpush1.msra.mxu0 0.0
    %2957 = vmatprep.subr.mxu0 0.0
    %2958 = vmatpush1.msra.mxu0 0.0
    %2959 = vmatprep.subr.mxu0 0.0
    %2960 = vmatpush1.msra.mxu0 0.0
    %2961 = vmatprep.subr.mxu0 0.0
    %2962 = vmatpush1.msra.mxu0 0.0
    %2963 = vmatprep.subr.mxu0 0.0
    %2964 = vmatpush1.msra.mxu0 0.0
    %2965 = vmatprep.subr.mxu0 0.0
    %2966 = vmatpush1.msra.mxu0 0.0
    %2967 = vmatprep.subr.mxu0 0.0
    %2968 = vmatpush1.msra.mxu0 0.0
    %2969 = vmatprep.subr.mxu0 0.0
    %2970 = vmatpush1.msra.mxu0 0.0
    %2971 = vmatprep.subr.mxu0 0.0
    %2972 = vmatpush1.msra.mxu0 0.0
    %2973 = vmatprep.subr.mxu0 0.0
    %2974 = vmatpush1.msra.mxu0 0.0
    %2975 = vmatprep.mubr.f32.mxu0 0.0
    %2976 = vmatmul.mubr.f32.gmra.mrb[0].mxu0 %v2909
    %v2977 = vpop.f32.mrb[0].mxu0
    %v2978 = vadd.f32 %v132, %v2977
    %v2979 = vpop.f32.mrb[0].mxu0
    %2980 = vdwg.mxu0
    %v2981 = vsel %vm2310, %v2978, -inf
    %2982 = vmax.xlane.f32.xlu0 %v2981
    %v2983 = vpop.xlane.xlu0 %2982
    %vm2984 = vcmp.eq.f32.partialorder %v2978, %v2983
    %v2985 = vsel %vm2984, %v135, 32
    %v2986 = vsel %vm2310, %v2985, 2147483647
    %v2987 = vand.u32 %v2986, 65535
    %v2988 = vshra.s32 %v2986, 16
    %v2989 = vcvt.s32.f32 %v2987
    %v2990 = vcvt.s32.f32 %v2988
    %2991 = vmin.xlane.f32.xlu0 %v2990
    %v2992 = vpop.xlane.xlu0 %2991
    %vm2993 = vcmp.eq.f32.partialorder %v2990, %v2992
    %v2994 = vsel %vm2993, %v2989, inf
    %2995 = vmin.xlane.f32.xlu0 %v2994
    %v2996 = vpop.xlane.xlu0 %2995
    %v2997 = vcvt.f32.s32 %v2996
    %v2998 = vcvt.f32.s32 %v2992
    %v2999 = vshll.u32 %v2998, 16
    %v3000 = vadd.s32 %v2999, %v2997
    %vm3001 = vcmp.eq.s32.totalorder %v3000, 2
    %v3002 = vsel %vm3001, 1, 0
    %v3003 = vsub.s32 1, %v2800
    %v3004 = vsub.s32 1, %v3002
    %v3005 = vmul.u32 %v3003, %v3004
    %vm3006 = vcmp.eq.s32.totalorder %v135, 3
    %v3007 = vsel %vm3006, 1, 0
    %v3008 = vmul.u32 %v3007, %v3005
    %v3009 = vmul.u32 %v3008, %v3000
    %v3010 = vsub.s32 1, %v3008
    %v3011 = vmul.u32 %v3010, %v2786
    %v3012 = vadd.s32 %v3009, %v3011
    %v3013 = vcvt.s32.f32 %v3003
    %v3014 = vmul.f32 %v3013, %v2905
    %v3015 = vsub.f32 1.0, %v3013
    %v3016 = vmul.f32 %v3015, %v2791
    %v3017 = vadd.f32 %v3014, %v3016
    %v3018 = vmul.f32 %v3013, %v2899
    %v3019 = vmul.f32 %v3015, %v2794
    %v3020 = vadd.f32 %v3018, %v3019
    %v3021 = vmul.u32 %v3003, %v3000
    %v3022 = vsub.s32 1, %v3003
    %v3023 = vmul.u32 %v3022, %v2798
    %v3024 = vadd.s32 %v3021, %v3023
    %vm3025 = vcmp.gt.s32.totalorder %v2800, %v3002
    %v3026 = vsel %vm3025, %v2800, %v3002
    %vm3027 = vcmp.eq.s32.totalorder %v135, %v3024
    %v3028 = vsel %vm3027, 1, 0
    %v3029 = vcvt.s32.f32 %v3028
    %3031 = vrot.lane.b32.xlu0 %v3017, 64
    %v3032 = vpop.permute.xlu0 %3031
    %v3034 = vsel %vm154, %v3029, %v3032
    %v3036 = vsel %vm331, %v3034, 0
    %3038 = vmatprep.subr.mxu0 0.0
    %3039 = vmatpush1.msra.mxu0 %v119
    %3040 = vmatprep.subr.mxu0 0.0
    %3041 = vmatpush1.msra.mxu0 %v120
    %3042 = vmatprep.subr.mxu0 0.0
    %3043 = vmatpush1.msra.mxu0 %v121
    %3044 = vmatprep.subr.mxu0 0.0
    %3045 = vmatpush1.msra.mxu0 %v122
    %3046 = vmatprep.subr.mxu0 0.0
    %3047 = vmatpush1.msra.mxu0 %v123
    %3048 = vmatprep.subr.mxu0 0.0
    %3049 = vmatpush1.msra.mxu0 %v124
    %3050 = vmatprep.subr.mxu0 0.0
    %3051 = vmatpush1.msra.mxu0 %v125
    %3052 = vmatprep.subr.mxu0 0.0
    %3053 = vmatpush1.msra.mxu0 %v126
    %3054 = vmatprep.subr.mxu0 0.0
    %3055 = vmatpush1.msra.mxu0 0.0
    %3056 = vmatprep.subr.mxu0 0.0
    %3057 = vmatpush1.msra.mxu0 0.0
    %3058 = vmatprep.subr.mxu0 0.0
    %3059 = vmatpush1.msra.mxu0 0.0
    %3060 = vmatprep.subr.mxu0 0.0
    %3061 = vmatpush1.msra.mxu0 0.0
    %3062 = vmatprep.subr.mxu0 0.0
    %3063 = vmatpush1.msra.mxu0 0.0
    %3064 = vmatprep.subr.mxu0 0.0
    %3065 = vmatpush1.msra.mxu0 0.0
    %3066 = vmatprep.subr.mxu0 0.0
    %3067 = vmatpush1.msra.mxu0 0.0
    %3068 = vmatprep.subr.mxu0 0.0
    %3069 = vmatpush1.msra.mxu0 0.0
    %3070 = vmatprep.subr.mxu0 0.0
    %3071 = vmatpush1.msra.mxu0 0.0
    %3072 = vmatprep.subr.mxu0 0.0
    %3073 = vmatpush1.msra.mxu0 0.0
    %3074 = vmatprep.subr.mxu0 0.0
    %3075 = vmatpush1.msra.mxu0 0.0
    %3076 = vmatprep.subr.mxu0 0.0
    %3077 = vmatpush1.msra.mxu0 0.0
    %3078 = vmatprep.subr.mxu0 0.0
    %3079 = vmatpush1.msra.mxu0 0.0
    %3080 = vmatprep.subr.mxu0 0.0
    %3081 = vmatpush1.msra.mxu0 0.0
    %3082 = vmatprep.subr.mxu0 0.0
    %3083 = vmatpush1.msra.mxu0 0.0
    %3084 = vmatprep.subr.mxu0 0.0
    %3085 = vmatpush1.msra.mxu0 0.0
    %3086 = vmatprep.subr.mxu0 0.0
    %3087 = vmatpush1.msra.mxu0 0.0
    %3088 = vmatprep.subr.mxu0 0.0
    %3089 = vmatpush1.msra.mxu0 0.0
    %3090 = vmatprep.subr.mxu0 0.0
    %3091 = vmatpush1.msra.mxu0 0.0
    %3092 = vmatprep.subr.mxu0 0.0
    %3093 = vmatpush1.msra.mxu0 0.0
    %3094 = vmatprep.subr.mxu0 0.0
    %3095 = vmatpush1.msra.mxu0 0.0
    %3096 = vmatprep.subr.mxu0 0.0
    %3097 = vmatpush1.msra.mxu0 0.0
    %3098 = vmatprep.subr.mxu0 0.0
    %3099 = vmatpush1.msra.mxu0 0.0
    %3100 = vmatprep.subr.mxu0 0.0
    %3101 = vmatpush1.msra.mxu0 0.0
    %3102 = vmatprep.mubr.f32.mxu0 0.0
    %3103 = vmatmul.mubr.f32.gmra.mrb[0].mxu0 %v3036
    %v3104 = vpop.f32.mrb[0].mxu0
    %v3105 = vadd.f32 %v127, %v3104
    %v3106 = vpop.f32.mrb[0].mxu0
    %3107 = vdwg.mxu0
    %v3108 = vxor.u32 %v3105, 2147483648
    %v3109 = vmul.f32 %v3108, 1.442695
    %v3110 = vpow.pop %v3109
    %v3111 = vadd.f32 %v3110, 1.0
    %v3112 = vrcp.pop %v3111
    %v3113 = vmul.f32 1.0, %v3112
    %v3114 = vtanh.pop %v3105
    %v3115 = vmul.f32 %v3113, %v3020
    %3117 = vrot.lane.b32.xlu0 %v3114, 64
    %v3118 = vpop.permute.xlu0 %3117
    %v3120 = vmul.f32 %v3113, %v3118
    %3122 = vrot.lane.b32.xlu0 %v3120, 32
    %v3123 = vpop.permute.xlu0 %3122
    %v3125 = vadd.f32 %v3115, %v3123
    %v3126 = vtanh.pop %v3125
    %3128 = vrot.lane.b32.xlu0 %v3126, 64
    %v3129 = vpop.permute.xlu0 %3128
    %v3131 = vmul.f32 %v3113, %v3129
    %3133 = vrot.lane.b32.xlu0 %v3131, 32
    %v3134 = vpop.permute.xlu0 %3133
    %v3135 = vsel %vm154, %v3134, 0
    %3137 = vmatprep.subr.mxu0 0.0
    %3138 = vmatpush1.msra.mxu0 %v128
    %3139 = vmatprep.subr.mxu0 0.0
    %3140 = vmatpush1.msra.mxu0 %v129
    %3141 = vmatprep.subr.mxu0 0.0
    %3142 = vmatpush1.msra.mxu0 %v130
    %3143 = vmatprep.subr.mxu0 0.0
    %3144 = vmatpush1.msra.mxu0 %v131
    %3145 = vmatprep.subr.mxu0 0.0
    %3146 = vmatpush1.msra.mxu0 0.0
    %3147 = vmatprep.subr.mxu0 0.0
    %3148 = vmatpush1.msra.mxu0 0.0
    %3149 = vmatprep.subr.mxu0 0.0
    %3150 = vmatpush1.msra.mxu0 0.0
    %3151 = vmatprep.subr.mxu0 0.0
    %3152 = vmatpush1.msra.mxu0 0.0
    %3153 = vmatprep.subr.mxu0 0.0
    %3154 = vmatpush1.msra.mxu0 0.0
    %3155 = vmatprep.subr.mxu0 0.0
    %3156 = vmatpush1.msra.mxu0 0.0
    %3157 = vmatprep.subr.mxu0 0.0
    %3158 = vmatpush1.msra.mxu0 0.0
    %3159 = vmatprep.subr.mxu0 0.0
    %3160 = vmatpush1.msra.mxu0 0.0
    %3161 = vmatprep.subr.mxu0 0.0
    %3162 = vmatpush1.msra.mxu0 0.0
    %3163 = vmatprep.subr.mxu0 0.0
    %3164 = vmatpush1.msra.mxu0 0.0
    %3165 = vmatprep.subr.mxu0 0.0
    %3166 = vmatpush1.msra.mxu0 0.0
    %3167 = vmatprep.subr.mxu0 0.0
    %3168 = vmatpush1.msra.mxu0 0.0
    %3169 = vmatprep.subr.mxu0 0.0
    %3170 = vmatpush1.msra.mxu0 0.0
    %3171 = vmatprep.subr.mxu0 0.0
    %3172 = vmatpush1.msra.mxu0 0.0
    %3173 = vmatprep.subr.mxu0 0.0
    %3174 = vmatpush1.msra.mxu0 0.0
    %3175 = vmatprep.subr.mxu0 0.0
    %3176 = vmatpush1.msra.mxu0 0.0
    %3177 = vmatprep.subr.mxu0 0.0
    %3178 = vmatpush1.msra.mxu0 0.0
    %3179 = vmatprep.subr.mxu0 0.0
    %3180 = vmatpush1.msra.mxu0 0.0
    %3181 = vmatprep.subr.mxu0 0.0
    %3182 = vmatpush1.msra.mxu0 0.0
    %3183 = vmatprep.subr.mxu0 0.0
    %3184 = vmatpush1.msra.mxu0 0.0
    %3185 = vmatprep.subr.mxu0 0.0
    %3186 = vmatpush1.msra.mxu0 0.0
    %3187 = vmatprep.subr.mxu0 0.0
    %3188 = vmatpush1.msra.mxu0 0.0
    %3189 = vmatprep.subr.mxu0 0.0
    %3190 = vmatpush1.msra.mxu0 0.0
    %3191 = vmatprep.subr.mxu0 0.0
    %3192 = vmatpush1.msra.mxu0 0.0
    %3193 = vmatprep.subr.mxu0 0.0
    %3194 = vmatpush1.msra.mxu0 0.0
    %3195 = vmatprep.subr.mxu0 0.0
    %3196 = vmatpush1.msra.mxu0 0.0
    %3197 = vmatprep.subr.mxu0 0.0
    %3198 = vmatpush1.msra.mxu0 0.0
    %3199 = vmatprep.subr.mxu0 0.0
    %3200 = vmatpush1.msra.mxu0 0.0
    %3201 = vmatprep.mubr.f32.mxu0 0.0
    %3202 = vmatmul.mubr.f32.gmra.mrb[0].mxu0 %v3135
    %v3203 = vpop.f32.mrb[0].mxu0
    %v3204 = vadd.f32 %v132, %v3203
    %v3205 = vpop.f32.mrb[0].mxu0
    %3206 = vdwg.mxu0
    %v3207 = vsel %vm2310, %v3204, -inf
    %3208 = vmax.xlane.f32.xlu0 %v3207
    %v3209 = vpop.xlane.xlu0 %3208
    %vm3210 = vcmp.eq.f32.partialorder %v3204, %v3209
    %v3211 = vsel %vm3210, %v135, 32
    %v3212 = vsel %vm2310, %v3211, 2147483647
    %v3213 = vand.u32 %v3212, 65535
    %v3214 = vshra.s32 %v3212, 16
    %v3215 = vcvt.s32.f32 %v3213
    %v3216 = vcvt.s32.f32 %v3214
    %3217 = vmin.xlane.f32.xlu0 %v3216
    %v3218 = vpop.xlane.xlu0 %3217
    %vm3219 = vcmp.eq.f32.partialorder %v3216, %v3218
    %v3220 = vsel %vm3219, %v3215, inf
    %3221 = vmin.xlane.f32.xlu0 %v3220
    %v3222 = vpop.xlane.xlu0 %3221
    %v3223 = vcvt.f32.s32 %v3222
    %v3224 = vcvt.f32.s32 %v3218
    %v3225 = vshll.u32 %v3224, 16
    %v3226 = vadd.s32 %v3225, %v3223
    %vm3227 = vcmp.eq.s32.totalorder %v3226, 2
    %v3228 = vsel %vm3227, 1, 0
    %v3229 = vsub.s32 1, %v3026
    %v3230 = vsub.s32 1, %v3228
    %v3231 = vmul.u32 %v3229, %v3230
    %vm3232 = vcmp.eq.s32.totalorder %v135, 4
    %v3233 = vsel %vm3232, 1, 0
    %v3234 = vmul.u32 %v3233, %v3231
    %v3235 = vmul.u32 %v3234, %v3226
    %v3236 = vsub.s32 1, %v3234
    %v3237 = vmul.u32 %v3236, %v3012
    %v3238 = vadd.s32 %v3235, %v3237
    %v3239 = vcvt.s32.f32 %v3229
    %v3240 = vmul.f32 %v3239, %v3131
    %v3241 = vsub.f32 1.0, %v3239
    %v3242 = vmul.f32 %v3241, %v3017
    %v3243 = vadd.f32 %v3240, %v3242
    %v3244 = vmul.f32 %v3239, %v3125
    %v3245 = vmul.f32 %v3241, %v3020
    %v3246 = vadd.f32 %v3244, %v3245
    %v3247 = vmul.u32 %v3229, %v3226
    %v3248 = vsub.s32 1, %v3229
    %v3249 = vmul.u32 %v3248, %v3024
    %v3250 = vadd.s32 %v3247, %v3249
    %vm3251 = vcmp.gt.s32.totalorder %v3026, %v3228
    %v3252 = vsel %vm3251, %v3026, %v3228
    %vm3253 = vcmp.eq.s32.totalorder %v135, %v3250
    %v3254 = vsel %vm3253, 1, 0
    %v3255 = vcvt.s32.f32 %v3254
    %3257 = vrot.lane.b32.xlu0 %v3243, 64
    %v3258 = vpop.permute.xlu0 %3257
    %v3260 = vsel %vm154, %v3255, %v3258
    %v3262 = vsel %vm331, %v3260, 0
    %3264 = vmatprep.subr.mxu0 0.0
    %3265 = vmatpush1.msra.mxu0 %v119
    %3266 = vmatprep.subr.mxu0 0.0
    %3267 = vmatpush1.msra.mxu0 %v120
    %3268 = vmatprep.subr.mxu0 0.0
    %3269 = vmatpush1.msra.mxu0 %v121
    %3270 = vmatprep.subr.mxu0 0.0
    %3271 = vmatpush1.msra.mxu0 %v122
    %3272 = vmatprep.subr.mxu0 0.0
    %3273 = vmatpush1.msra.mxu0 %v123
    %3274 = vmatprep.subr.mxu0 0.0
    %3275 = vmatpush1.msra.mxu0 %v124
    %3276 = vmatprep.subr.mxu0 0.0
    %3277 = vmatpush1.msra.mxu0 %v125
    %3278 = vmatprep.subr.mxu0 0.0
    %3279 = vmatpush1.msra.mxu0 %v126
    %3280 = vmatprep.subr.mxu0 0.0
    %3281 = vmatpush1.msra.mxu0 0.0
    %3282 = vmatprep.subr.mxu0 0.0
    %3283 = vmatpush1.msra.mxu0 0.0
    %3284 = vmatprep.subr.mxu0 0.0
    %3285 = vmatpush1.msra.mxu0 0.0
    %3286 = vmatprep.subr.mxu0 0.0
    %3287 = vmatpush1.msra.mxu0 0.0
    %3288 = vmatprep.subr.mxu0 0.0
    %3289 = vmatpush1.msra.mxu0 0.0
    %3290 = vmatprep.subr.mxu0 0.0
    %3291 = vmatpush1.msra.mxu0 0.0
    %3292 = vmatprep.subr.mxu0 0.0
    %3293 = vmatpush1.msra.mxu0 0.0
    %3294 = vmatprep.subr.mxu0 0.0
    %3295 = vmatpush1.msra.mxu0 0.0
    %3296 = vmatprep.subr.mxu0 0.0
    %3297 = vmatpush1.msra.mxu0 0.0
    %3298 = vmatprep.subr.mxu0 0.0
    %3299 = vmatpush1.msra.mxu0 0.0
    %3300 = vmatprep.subr.mxu0 0.0
    %3301 = vmatpush1.msra.mxu0 0.0
    %3302 = vmatprep.subr.mxu0 0.0
    %3303 = vmatpush1.msra.mxu0 0.0
    %3304 = vmatprep.subr.mxu0 0.0
    %3305 = vmatpush1.msra.mxu0 0.0
    %3306 = vmatprep.subr.mxu0 0.0
    %3307 = vmatpush1.msra.mxu0 0.0
    %3308 = vmatprep.subr.mxu0 0.0
    %3309 = vmatpush1.msra.mxu0 0.0
    %3310 = vmatprep.subr.mxu0 0.0
    %3311 = vmatpush1.msra.mxu0 0.0
    %3312 = vmatprep.subr.mxu0 0.0
    %3313 = vmatpush1.msra.mxu0 0.0
    %3314 = vmatprep.subr.mxu0 0.0
    %3315 = vmatpush1.msra.mxu0 0.0
    %3316 = vmatprep.subr.mxu0 0.0
    %3317 = vmatpush1.msra.mxu0 0.0
    %3318 = vmatprep.subr.mxu0 0.0
    %3319 = vmatpush1.msra.mxu0 0.0
    %3320 = vmatprep.subr.mxu0 0.0
    %3321 = vmatpush1.msra.mxu0 0.0
    %3322 = vmatprep.subr.mxu0 0.0
    %3323 = vmatpush1.msra.mxu0 0.0
    %3324 = vmatprep.subr.mxu0 0.0
    %3325 = vmatpush1.msra.mxu0 0.0
    %3326 = vmatprep.subr.mxu0 0.0
    %3327 = vmatpush1.msra.mxu0 0.0
    %3328 = vmatprep.mubr.f32.mxu0 0.0
    %3329 = vmatmul.mubr.f32.gmra.mrb[0].mxu0 %v3262
    %v3330 = vpop.f32.mrb[0].mxu0
    %v3331 = vadd.f32 %v127, %v3330
    %v3332 = vpop.f32.mrb[0].mxu0
    %3333 = vdwg.mxu0
    %v3334 = vxor.u32 %v3331, 2147483648
    %v3335 = vmul.f32 %v3334, 1.442695
    %v3336 = vpow.pop %v3335
    %v3337 = vadd.f32 %v3336, 1.0
    %v3338 = vrcp.pop %v3337
    %v3339 = vmul.f32 1.0, %v3338
    %v3340 = vtanh.pop %v3331
    %v3341 = vmul.f32 %v3339, %v3246
    %3343 = vrot.lane.b32.xlu0 %v3340, 64
    %v3344 = vpop.permute.xlu0 %3343
    %v3346 = vmul.f32 %v3339, %v3344
    %3348 = vrot.lane.b32.xlu0 %v3346, 32
    %v3349 = vpop.permute.xlu0 %3348
    %v3351 = vadd.f32 %v3341, %v3349
    %v3352 = vtanh.pop %v3351
    %3354 = vrot.lane.b32.xlu0 %v3352, 64
    %v3355 = vpop.permute.xlu0 %3354
    %v3357 = vmul.f32 %v3339, %v3355
    %3359 = vrot.lane.b32.xlu0 %v3357, 32
    %v3360 = vpop.permute.xlu0 %3359
    %v3361 = vsel %vm154, %v3360, 0
    %3363 = vmatprep.subr.mxu0 0.0
    %3364 = vmatpush1.msra.mxu0 %v128
    %3365 = vmatprep.subr.mxu0 0.0
    %3366 = vmatpush1.msra.mxu0 %v129
    %3367 = vmatprep.subr.mxu0 0.0
    %3368 = vmatpush1.msra.mxu0 %v130
    %3369 = vmatprep.subr.mxu0 0.0
    %3370 = vmatpush1.msra.mxu0 %v131
    %3371 = vmatprep.subr.mxu0 0.0
    %3372 = vmatpush1.msra.mxu0 0.0
    %3373 = vmatprep.subr.mxu0 0.0
    %3374 = vmatpush1.msra.mxu0 0.0
    %3375 = vmatprep.subr.mxu0 0.0
    %3376 = vmatpush1.msra.mxu0 0.0
    %3377 = vmatprep.subr.mxu0 0.0
    %3378 = vmatpush1.msra.mxu0 0.0
    %3379 = vmatprep.subr.mxu0 0.0
    %3380 = vmatpush1.msra.mxu0 0.0
    %3381 = vmatprep.subr.mxu0 0.0
    %3382 = vmatpush1.msra.mxu0 0.0
    %3383 = vmatprep.subr.mxu0 0.0
    %3384 = vmatpush1.msra.mxu0 0.0
    %3385 = vmatprep.subr.mxu0 0.0
    %3386 = vmatpush1.msra.mxu0 0.0
    %3387 = vmatprep.subr.mxu0 0.0
    %3388 = vmatpush1.msra.mxu0 0.0
    %3389 = vmatprep.subr.mxu0 0.0
    %3390 = vmatpush1.msra.mxu0 0.0
    %3391 = vmatprep.subr.mxu0 0.0
    %3392 = vmatpush1.msra.mxu0 0.0
    %3393 = vmatprep.subr.mxu0 0.0
    %3394 = vmatpush1.msra.mxu0 0.0
    %3395 = vmatprep.subr.mxu0 0.0
    %3396 = vmatpush1.msra.mxu0 0.0
    %3397 = vmatprep.subr.mxu0 0.0
    %3398 = vmatpush1.msra.mxu0 0.0
    %3399 = vmatprep.subr.mxu0 0.0
    %3400 = vmatpush1.msra.mxu0 0.0
    %3401 = vmatprep.subr.mxu0 0.0
    %3402 = vmatpush1.msra.mxu0 0.0
    %3403 = vmatprep.subr.mxu0 0.0
    %3404 = vmatpush1.msra.mxu0 0.0
    %3405 = vmatprep.subr.mxu0 0.0
    %3406 = vmatpush1.msra.mxu0 0.0
    %3407 = vmatprep.subr.mxu0 0.0
    %3408 = vmatpush1.msra.mxu0 0.0
    %3409 = vmatprep.subr.mxu0 0.0
    %3410 = vmatpush1.msra.mxu0 0.0
    %3411 = vmatprep.subr.mxu0 0.0
    %3412 = vmatpush1.msra.mxu0 0.0
    %3413 = vmatprep.subr.mxu0 0.0
    %3414 = vmatpush1.msra.mxu0 0.0
    %3415 = vmatprep.subr.mxu0 0.0
    %3416 = vmatpush1.msra.mxu0 0.0
    %3417 = vmatprep.subr.mxu0 0.0
    %3418 = vmatpush1.msra.mxu0 0.0
    %3419 = vmatprep.subr.mxu0 0.0
    %3420 = vmatpush1.msra.mxu0 0.0
    %3421 = vmatprep.subr.mxu0 0.0
    %3422 = vmatpush1.msra.mxu0 0.0
    %3423 = vmatprep.subr.mxu0 0.0
    %3424 = vmatpush1.msra.mxu0 0.0
    %3425 = vmatprep.subr.mxu0 0.0
    %3426 = vmatpush1.msra.mxu0 0.0
    %3427 = vmatprep.mubr.f32.mxu0 0.0
    %3428 = vmatmul.mubr.f32.gmra.mrb[0].mxu0 %v3361
    %v3429 = vpop.f32.mrb[0].mxu0
    %v3430 = vadd.f32 %v132, %v3429
    %v3431 = vpop.f32.mrb[0].mxu0
    %3432 = vdwg.mxu0
    %v3433 = vsel %vm2310, %v3430, -inf
    %3434 = vmax.xlane.f32.xlu0 %v3433
    %v3435 = vpop.xlane.xlu0 %3434
    %vm3436 = vcmp.eq.f32.partialorder %v3430, %v3435
    %v3437 = vsel %vm3436, %v135, 32
    %v3438 = vsel %vm2310, %v3437, 2147483647
    %v3439 = vand.u32 %v3438, 65535
    %v3440 = vshra.s32 %v3438, 16
    %v3441 = vcvt.s32.f32 %v3439
    %v3442 = vcvt.s32.f32 %v3440
    %3443 = vmin.xlane.f32.xlu0 %v3442
    %v3444 = vpop.xlane.xlu0 %3443
    %vm3445 = vcmp.eq.f32.partialorder %v3442, %v3444
    %v3446 = vsel %vm3445, %v3441, inf
    %3447 = vmin.xlane.f32.xlu0 %v3446
    %v3448 = vpop.xlane.xlu0 %3447
    %v3449 = vcvt.f32.s32 %v3448
    %v3450 = vcvt.f32.s32 %v3444
    %v3451 = vshll.u32 %v3450, 16
    %v3452 = vadd.s32 %v3451, %v3449
    %vm3453 = vcmp.eq.s32.totalorder %v3452, 2
    %v3454 = vsel %vm3453, 1, 0
    %v3455 = vsub.s32 1, %v3252
    %v3456 = vsub.s32 1, %v3454
    %v3457 = vmul.u32 %v3455, %v3456
    %vm3458 = vcmp.eq.s32.totalorder %v135, 5
    %v3459 = vsel %vm3458, 1, 0
    %v3460 = vmul.u32 %v3459, %v3457
    %v3461 = vmul.u32 %v3460, %v3452
    %v3462 = vsub.s32 1, %v3460
    %v3463 = vmul.u32 %v3462, %v3238
    %v3464 = vadd.s32 %v3461, %v3463
    %v3465 = vcvt.s32.f32 %v3455
    %v3466 = vmul.f32 %v3465, %v3357
    %v3467 = vsub.f32 1.0, %v3465
    %v3468 = vmul.f32 %v3467, %v3243
    %v3469 = vadd.f32 %v3466, %v3468
    %v3470 = vmul.f32 %v3465, %v3351
    %v3471 = vmul.f32 %v3467, %v3246
    %v3472 = vadd.f32 %v3470, %v3471
    %v3473 = vmul.u32 %v3455, %v3452
    %v3474 = vsub.s32 1, %v3455
    %v3475 = vmul.u32 %v3474, %v3250
    %v3476 = vadd.s32 %v3473, %v3475
    %vm3477 = vcmp.gt.s32.totalorder %v3252, %v3454
    %v3478 = vsel %vm3477, %v3252, %v3454
    %vm3479 = vcmp.eq.s32.totalorder %v135, %v3476
    %v3480 = vsel %vm3479, 1, 0
    %v3481 = vcvt.s32.f32 %v3480
    %3483 = vrot.lane.b32.xlu0 %v3469, 64
    %v3484 = vpop.permute.xlu0 %3483
    %v3486 = vsel %vm154, %v3481, %v3484
    %v3488 = vsel %vm331, %v3486, 0
    %3490 = vmatprep.subr.mxu0 0.0
    %3491 = vmatpush1.msra.mxu0 %v119
    %3492 = vmatprep.subr.mxu0 0.0
    %3493 = vmatpush1.msra.mxu0 %v120
    %3494 = vmatprep.subr.mxu0 0.0
    %3495 = vmatpush1.msra.mxu0 %v121
    %3496 = vmatprep.subr.mxu0 0.0
    %3497 = vmatpush1.msra.mxu0 %v122
    %3498 = vmatprep.subr.mxu0 0.0
    %3499 = vmatpush1.msra.mxu0 %v123
    %3500 = vmatprep.subr.mxu0 0.0
    %3501 = vmatpush1.msra.mxu0 %v124
    %3502 = vmatprep.subr.mxu0 0.0
    %3503 = vmatpush1.msra.mxu0 %v125
    %3504 = vmatprep.subr.mxu0 0.0
    %3505 = vmatpush1.msra.mxu0 %v126
    %3506 = vmatprep.subr.mxu0 0.0
    %3507 = vmatpush1.msra.mxu0 0.0
    %3508 = vmatprep.subr.mxu0 0.0
    %3509 = vmatpush1.msra.mxu0 0.0
    %3510 = vmatprep.subr.mxu0 0.0
    %3511 = vmatpush1.msra.mxu0 0.0
    %3512 = vmatprep.subr.mxu0 0.0
    %3513 = vmatpush1.msra.mxu0 0.0
    %3514 = vmatprep.subr.mxu0 0.0
    %3515 = vmatpush1.msra.mxu0 0.0
    %3516 = vmatprep.subr.mxu0 0.0
    %3517 = vmatpush1.msra.mxu0 0.0
    %3518 = vmatprep.subr.mxu0 0.0
    %3519 = vmatpush1.msra.mxu0 0.0
    %3520 = vmatprep.subr.mxu0 0.0
    %3521 = vmatpush1.msra.mxu0 0.0
    %3522 = vmatprep.subr.mxu0 0.0
    %3523 = vmatpush1.msra.mxu0 0.0
    %3524 = vmatprep.subr.mxu0 0.0
    %3525 = vmatpush1.msra.mxu0 0.0
    %3526 = vmatprep.subr.mxu0 0.0
    %3527 = vmatpush1.msra.mxu0 0.0
    %3528 = vmatprep.subr.mxu0 0.0
    %3529 = vmatpush1.msra.mxu0 0.0
    %3530 = vmatprep.subr.mxu0 0.0
    %3531 = vmatpush1.msra.mxu0 0.0
    %3532 = vmatprep.subr.mxu0 0.0
    %3533 = vmatpush1.msra.mxu0 0.0
    %3534 = vmatprep.subr.mxu0 0.0
    %3535 = vmatpush1.msra.mxu0 0.0
    %3536 = vmatprep.subr.mxu0 0.0
    %3537 = vmatpush1.msra.mxu0 0.0
    %3538 = vmatprep.subr.mxu0 0.0
    %3539 = vmatpush1.msra.mxu0 0.0
    %3540 = vmatprep.subr.mxu0 0.0
    %3541 = vmatpush1.msra.mxu0 0.0
    %3542 = vmatprep.subr.mxu0 0.0
    %3543 = vmatpush1.msra.mxu0 0.0
    %3544 = vmatprep.subr.mxu0 0.0
    %3545 = vmatpush1.msra.mxu0 0.0
    %3546 = vmatprep.subr.mxu0 0.0
    %3547 = vmatpush1.msra.mxu0 0.0
    %3548 = vmatprep.subr.mxu0 0.0
    %3549 = vmatpush1.msra.mxu0 0.0
    %3550 = vmatprep.subr.mxu0 0.0
    %3551 = vmatpush1.msra.mxu0 0.0
    %3552 = vmatprep.subr.mxu0 0.0
    %3553 = vmatpush1.msra.mxu0 0.0
    %3554 = vmatprep.mubr.f32.mxu0 0.0
    %3555 = vmatmul.mubr.f32.gmra.mrb[0].mxu0 %v3488
    %v3556 = vpop.f32.mrb[0].mxu0
    %v3557 = vadd.f32 %v127, %v3556
    %v3558 = vpop.f32.mrb[0].mxu0
    %3559 = vdwg.mxu0
    %v3560 = vxor.u32 %v3557, 2147483648
    %v3561 = vmul.f32 %v3560, 1.442695
    %v3562 = vpow.pop %v3561
    %v3563 = vadd.f32 %v3562, 1.0
    %v3564 = vrcp.pop %v3563
    %v3565 = vmul.f32 1.0, %v3564
    %v3566 = vtanh.pop %v3557
    %v3567 = vmul.f32 %v3565, %v3472
    %3569 = vrot.lane.b32.xlu0 %v3566, 64
    %v3570 = vpop.permute.xlu0 %3569
    %v3572 = vmul.f32 %v3565, %v3570
    %3574 = vrot.lane.b32.xlu0 %v3572, 32
    %v3575 = vpop.permute.xlu0 %3574
    %v3577 = vadd.f32 %v3567, %v3575
    %v3578 = vtanh.pop %v3577
    %3580 = vrot.lane.b32.xlu0 %v3578, 64
    %v3581 = vpop.permute.xlu0 %3580
    %v3583 = vmul.f32 %v3565, %v3581
    %3585 = vrot.lane.b32.xlu0 %v3583, 32
    %v3586 = vpop.permute.xlu0 %3585
    %v3587 = vsel %vm154, %v3586, 0
    %3589 = vmatprep.subr.mxu0 0.0
    %3590 = vmatpush1.msra.mxu0 %v128
    %3591 = vmatprep.subr.mxu0 0.0
    %3592 = vmatpush1.msra.mxu0 %v129
    %3593 = vmatprep.subr.mxu0 0.0
    %3594 = vmatpush1.msra.mxu0 %v130
    %3595 = vmatprep.subr.mxu0 0.0
    %3596 = vmatpush1.msra.mxu0 %v131
    %3597 = vmatprep.subr.mxu0 0.0
    %3598 = vmatpush1.msra.mxu0 0.0
    %3599 = vmatprep.subr.mxu0 0.0
    %3600 = vmatpush1.msra.mxu0 0.0
    %3601 = vmatprep.subr.mxu0 0.0
    %3602 = vmatpush1.msra.mxu0 0.0
    %3603 = vmatprep.subr.mxu0 0.0
    %3604 = vmatpush1.msra.mxu0 0.0
    %3605 = vmatprep.subr.mxu0 0.0
    %3606 = vmatpush1.msra.mxu0 0.0
    %3607 = vmatprep.subr.mxu0 0.0
    %3608 = vmatpush1.msra.mxu0 0.0
    %3609 = vmatprep.subr.mxu0 0.0
    %3610 = vmatpush1.msra.mxu0 0.0
    %3611 = vmatprep.subr.mxu0 0.0
    %3612 = vmatpush1.msra.mxu0 0.0
    %3613 = vmatprep.subr.mxu0 0.0
    %3614 = vmatpush1.msra.mxu0 0.0
    %3615 = vmatprep.subr.mxu0 0.0
    %3616 = vmatpush1.msra.mxu0 0.0
    %3617 = vmatprep.subr.mxu0 0.0
    %3618 = vmatpush1.msra.mxu0 0.0
    %3619 = vmatprep.subr.mxu0 0.0
    %3620 = vmatpush1.msra.mxu0 0.0
    %3621 = vmatprep.subr.mxu0 0.0
    %3622 = vmatpush1.msra.mxu0 0.0
    %3623 = vmatprep.subr.mxu0 0.0
    %3624 = vmatpush1.msra.mxu0 0.0
    %3625 = vmatprep.subr.mxu0 0.0
    %3626 = vmatpush1.msra.mxu0 0.0
    %3627 = vmatprep.subr.mxu0 0.0
    %3628 = vmatpush1.msra.mxu0 0.0
    %3629 = vmatprep.subr.mxu0 0.0
    %3630 = vmatpush1.msra.mxu0 0.0
    %3631 = vmatprep.subr.mxu0 0.0
    %3632 = vmatpush1.msra.mxu0 0.0
    %3633 = vmatprep.subr.mxu0 0.0
    %3634 = vmatpush1.msra.mxu0 0.0
    %3635 = vmatprep.subr.mxu0 0.0
    %3636 = vmatpush1.msra.mxu0 0.0
    %3637 = vmatprep.subr.mxu0 0.0
    %3638 = vmatpush1.msra.mxu0 0.0
    %3639 = vmatprep.subr.mxu0 0.0
    %3640 = vmatpush1.msra.mxu0 0.0
    %3641 = vmatprep.subr.mxu0 0.0
    %3642 = vmatpush1.msra.mxu0 0.0
    %3643 = vmatprep.subr.mxu0 0.0
    %3644 = vmatpush1.msra.mxu0 0.0
    %3645 = vmatprep.subr.mxu0 0.0
    %3646 = vmatpush1.msra.mxu0 0.0
    %3647 = vmatprep.subr.mxu0 0.0
    %3648 = vmatpush1.msra.mxu0 0.0
    %3649 = vmatprep.subr.mxu0 0.0
    %3650 = vmatpush1.msra.mxu0 0.0
    %3651 = vmatprep.subr.mxu0 0.0
    %3652 = vmatpush1.msra.mxu0 0.0
    %3653 = vmatprep.mubr.f32.mxu0 0.0
    %3654 = vmatmul.mubr.f32.gmra.mrb[0].mxu0 %v3587
    %v3655 = vpop.f32.mrb[0].mxu0
    %v3656 = vadd.f32 %v132, %v3655
    %v3657 = vpop.f32.mrb[0].mxu0
    %3658 = vdwg.mxu0
    %v3659 = vsel %vm2310, %v3656, -inf
    %3660 = vmax.xlane.f32.xlu0 %v3659
    %v3661 = vpop.xlane.xlu0 %3660
    %vm3662 = vcmp.eq.f32.partialorder %v3656, %v3661
    %v3663 = vsel %vm3662, %v135, 32
    %v3664 = vsel %vm2310, %v3663, 2147483647
    %v3665 = vand.u32 %v3664, 65535
    %v3666 = vshra.s32 %v3664, 16
    %v3667 = vcvt.s32.f32 %v3665
    %v3668 = vcvt.s32.f32 %v3666
    %3669 = vmin.xlane.f32.xlu0 %v3668
    %v3670 = vpop.xlane.xlu0 %3669
    %vm3671 = vcmp.eq.f32.partialorder %v3668, %v3670
    %v3672 = vsel %vm3671, %v3667, inf
    %3673 = vmin.xlane.f32.xlu0 %v3672
    %v3674 = vpop.xlane.xlu0 %3673
    %v3675 = vcvt.f32.s32 %v3674
    %v3676 = vcvt.f32.s32 %v3670
    %v3677 = vshll.u32 %v3676, 16
    %v3678 = vadd.s32 %v3677, %v3675
    %vm3679 = vcmp.eq.s32.totalorder %v3678, 2
    %v3680 = vsel %vm3679, 1, 0
    %v3681 = vsub.s32 1, %v3478
    %v3682 = vsub.s32 1, %v3680
    %v3683 = vmul.u32 %v3681, %v3682
    %vm3684 = vcmp.eq.s32.totalorder %v135, 6
    %v3685 = vsel %vm3684, 1, 0
    %v3686 = vmul.u32 %v3685, %v3683
    %v3687 = vmul.u32 %v3686, %v3678
    %v3688 = vsub.s32 1, %v3686
    %v3689 = vmul.u32 %v3688, %v3464
    %v3690 = vadd.s32 %v3687, %v3689
    %v3691 = vcvt.s32.f32 %v3681
    %v3692 = vmul.f32 %v3691, %v3583
    %v3693 = vsub.f32 1.0, %v3691
    %v3694 = vmul.f32 %v3693, %v3469
    %v3695 = vadd.f32 %v3692, %v3694
    %v3696 = vmul.f32 %v3691, %v3577
    %v3697 = vmul.f32 %v3693, %v3472
    %v3698 = vadd.f32 %v3696, %v3697
    %v3699 = vmul.u32 %v3681, %v3678
    %v3700 = vsub.s32 1, %v3681
    %v3701 = vmul.u32 %v3700, %v3476
    %v3702 = vadd.s32 %v3699, %v3701
    %vm3703 = vcmp.gt.s32.totalorder %v3478, %v3680
    %v3704 = vsel %vm3703, %v3478, %v3680
    %vm3705 = vcmp.eq.s32.totalorder %v135, %v3702
    %v3706 = vsel %vm3705, 1, 0
    %v3707 = vcvt.s32.f32 %v3706
    %3709 = vrot.lane.b32.xlu0 %v3695, 64
    %v3710 = vpop.permute.xlu0 %3709
    %v3712 = vsel %vm154, %v3707, %v3710
    %v3714 = vsel %vm331, %v3712, 0
    %3716 = vmatprep.subr.mxu0 0.0
    %3717 = vmatpush1.msra.mxu0 %v119
    %3718 = vmatprep.subr.mxu0 0.0
    %3719 = vmatpush1.msra.mxu0 %v120
    %3720 = vmatprep.subr.mxu0 0.0
    %3721 = vmatpush1.msra.mxu0 %v121
    %3722 = vmatprep.subr.mxu0 0.0
    %3723 = vmatpush1.msra.mxu0 %v122
    %3724 = vmatprep.subr.mxu0 0.0
    %3725 = vmatpush1.msra.mxu0 %v123
    %3726 = vmatprep.subr.mxu0 0.0
    %3727 = vmatpush1.msra.mxu0 %v124
    %3728 = vmatprep.subr.mxu0 0.0
    %3729 = vmatpush1.msra.mxu0 %v125
    %3730 = vmatprep.subr.mxu0 0.0
    %3731 = vmatpush1.msra.mxu0 %v126
    %3732 = vmatprep.subr.mxu0 0.0
    %3733 = vmatpush1.msra.mxu0 0.0
    %3734 = vmatprep.subr.mxu0 0.0
    %3735 = vmatpush1.msra.mxu0 0.0
    %3736 = vmatprep.subr.mxu0 0.0
    %3737 = vmatpush1.msra.mxu0 0.0
    %3738 = vmatprep.subr.mxu0 0.0
    %3739 = vmatpush1.msra.mxu0 0.0
    %3740 = vmatprep.subr.mxu0 0.0
    %3741 = vmatpush1.msra.mxu0 0.0
    %3742 = vmatprep.subr.mxu0 0.0
    %3743 = vmatpush1.msra.mxu0 0.0
    %3744 = vmatprep.subr.mxu0 0.0
    %3745 = vmatpush1.msra.mxu0 0.0
    %3746 = vmatprep.subr.mxu0 0.0
    %3747 = vmatpush1.msra.mxu0 0.0
    %3748 = vmatprep.subr.mxu0 0.0
    %3749 = vmatpush1.msra.mxu0 0.0
    %3750 = vmatprep.subr.mxu0 0.0
    %3751 = vmatpush1.msra.mxu0 0.0
    %3752 = vmatprep.subr.mxu0 0.0
    %3753 = vmatpush1.msra.mxu0 0.0
    %3754 = vmatprep.subr.mxu0 0.0
    %3755 = vmatpush1.msra.mxu0 0.0
    %3756 = vmatprep.subr.mxu0 0.0
    %3757 = vmatpush1.msra.mxu0 0.0
    %3758 = vmatprep.subr.mxu0 0.0
    %3759 = vmatpush1.msra.mxu0 0.0
    %3760 = vmatprep.subr.mxu0 0.0
    %3761 = vmatpush1.msra.mxu0 0.0
    %3762 = vmatprep.subr.mxu0 0.0
    %3763 = vmatpush1.msra.mxu0 0.0
    %3764 = vmatprep.subr.mxu0 0.0
    %3765 = vmatpush1.msra.mxu0 0.0
    %3766 = vmatprep.subr.mxu0 0.0
    %3767 = vmatpush1.msra.mxu0 0.0
    %3768 = vmatprep.subr.mxu0 0.0
    %3769 = vmatpush1.msra.mxu0 0.0
    %3770 = vmatprep.subr.mxu0 0.0
    %3771 = vmatpush1.msra.mxu0 0.0
    %3772 = vmatprep.subr.mxu0 0.0
    %3773 = vmatpush1.msra.mxu0 0.0
    %3774 = vmatprep.subr.mxu0 0.0
    %3775 = vmatpush1.msra.mxu0 0.0
    %3776 = vmatprep.subr.mxu0 0.0
    %3777 = vmatpush1.msra.mxu0 0.0
    %3778 = vmatprep.subr.mxu0 0.0
    %3779 = vmatpush1.msra.mxu0 0.0
    %3780 = vmatprep.mubr.f32.mxu0 0.0
    %3781 = vmatmul.mubr.f32.gmra.mrb[0].mxu0 %v3714
    %v3782 = vpop.f32.mrb[0].mxu0
    %v3783 = vadd.f32 %v127, %v3782
    %v3784 = vpop.f32.mrb[0].mxu0
    %3785 = vdwg.mxu0
    %v3786 = vxor.u32 %v3783, 2147483648
    %v3787 = vmul.f32 %v3786, 1.442695
    %v3788 = vpow.pop %v3787
    %v3789 = vadd.f32 %v3788, 1.0
    %v3790 = vrcp.pop %v3789
    %v3791 = vmul.f32 1.0, %v3790
    %v3792 = vtanh.pop %v3783
    %v3793 = vmul.f32 %v3791, %v3698
    %3795 = vrot.lane.b32.xlu0 %v3792, 64
    %v3796 = vpop.permute.xlu0 %3795
    %v3798 = vmul.f32 %v3791, %v3796
    %3800 = vrot.lane.b32.xlu0 %v3798, 32
    %v3801 = vpop.permute.xlu0 %3800
    %v3803 = vadd.f32 %v3793, %v3801
    %v3804 = vtanh.pop %v3803
    %3806 = vrot.lane.b32.xlu0 %v3804, 64
    %v3807 = vpop.permute.xlu0 %3806
    %v3809 = vmul.f32 %v3791, %v3807
    %3811 = vrot.lane.b32.xlu0 %v3809, 32
    %v3812 = vpop.permute.xlu0 %3811
    %v3813 = vsel %vm154, %v3812, 0
    %3815 = vmatprep.subr.mxu0 0.0
    %3816 = vmatpush1.msra.mxu0 %v128
    %3817 = vmatprep.subr.mxu0 0.0
    %3818 = vmatpush1.msra.mxu0 %v129
    %3819 = vmatprep.subr.mxu0 0.0
    %3820 = vmatpush1.msra.mxu0 %v130
    %3821 = vmatprep.subr.mxu0 0.0
    %3822 = vmatpush1.msra.mxu0 %v131
    %3823 = vmatprep.subr.mxu0 0.0
    %3824 = vmatpush1.msra.mxu0 0.0
    %3825 = vmatprep.subr.mxu0 0.0
    %3826 = vmatpush1.msra.mxu0 0.0
    %3827 = vmatprep.subr.mxu0 0.0
    %3828 = vmatpush1.msra.mxu0 0.0
    %3829 = vmatprep.subr.mxu0 0.0
    %3830 = vmatpush1.msra.mxu0 0.0
    %3831 = vmatprep.subr.mxu0 0.0
    %3832 = vmatpush1.msra.mxu0 0.0
    %3833 = vmatprep.subr.mxu0 0.0
    %3834 = vmatpush1.msra.mxu0 0.0
    %3835 = vmatprep.subr.mxu0 0.0
    %3836 = vmatpush1.msra.mxu0 0.0
    %3837 = vmatprep.subr.mxu0 0.0
    %3838 = vmatpush1.msra.mxu0 0.0
    %3839 = vmatprep.subr.mxu0 0.0
    %3840 = vmatpush1.msra.mxu0 0.0
    %3841 = vmatprep.subr.mxu0 0.0
    %3842 = vmatpush1.msra.mxu0 0.0
    %3843 = vmatprep.subr.mxu0 0.0
    %3844 = vmatpush1.msra.mxu0 0.0
    %3845 = vmatprep.subr.mxu0 0.0
    %3846 = vmatpush1.msra.mxu0 0.0
    %3847 = vmatprep.subr.mxu0 0.0
    %3848 = vmatpush1.msra.mxu0 0.0
    %3849 = vmatprep.subr.mxu0 0.0
    %3850 = vmatpush1.msra.mxu0 0.0
    %3851 = vmatprep.subr.mxu0 0.0
    %3852 = vmatpush1.msra.mxu0 0.0
    %3853 = vmatprep.subr.mxu0 0.0
    %3854 = vmatpush1.msra.mxu0 0.0
    %3855 = vmatprep.subr.mxu0 0.0
    %3856 = vmatpush1.msra.mxu0 0.0
    %3857 = vmatprep.subr.mxu0 0.0
    %3858 = vmatpush1.msra.mxu0 0.0
    %3859 = vmatprep.subr.mxu0 0.0
    %3860 = vmatpush1.msra.mxu0 0.0
    %3861 = vmatprep.subr.mxu0 0.0
    %3862 = vmatpush1.msra.mxu0 0.0
    %3863 = vmatprep.subr.mxu0 0.0
    %3864 = vmatpush1.msra.mxu0 0.0
    %3865 = vmatprep.subr.mxu0 0.0
    %3866 = vmatpush1.msra.mxu0 0.0
    %3867 = vmatprep.subr.mxu0 0.0
    %3868 = vmatpush1.msra.mxu0 0.0
    %3869 = vmatprep.subr.mxu0 0.0
    %3870 = vmatpush1.msra.mxu0 0.0
    %3871 = vmatprep.subr.mxu0 0.0
    %3872 = vmatpush1.msra.mxu0 0.0
    %3873 = vmatprep.subr.mxu0 0.0
    %3874 = vmatpush1.msra.mxu0 0.0
    %3875 = vmatprep.subr.mxu0 0.0
    %3876 = vmatpush1.msra.mxu0 0.0
    %3877 = vmatprep.subr.mxu0 0.0
    %3878 = vmatpush1.msra.mxu0 0.0
    %3879 = vmatprep.mubr.f32.mxu0 0.0
    %3880 = vmatmul.mubr.f32.gmra.mrb[0].mxu0 %v3813
    %v3881 = vpop.f32.mrb[0].mxu0
    %v3882 = vadd.f32 %v132, %v3881
    %v3883 = vpop.f32.mrb[0].mxu0
    %3884 = vdwg.mxu0
    %v3885 = vsel %vm2310, %v3882, -inf
    %3886 = vmax.xlane.f32.xlu0 %v3885
    %v3887 = vpop.xlane.xlu0 %3886
    %vm3888 = vcmp.eq.f32.partialorder %v3882, %v3887
    %v3889 = vsel %vm3888, %v135, 32
    %v3890 = vsel %vm2310, %v3889, 2147483647
    %v3891 = vand.u32 %v3890, 65535
    %v3892 = vshra.s32 %v3890, 16
    %v3893 = vcvt.s32.f32 %v3891
    %v3894 = vcvt.s32.f32 %v3892
    %3895 = vmin.xlane.f32.xlu0 %v3894
    %v3896 = vpop.xlane.xlu0 %3895
    %vm3897 = vcmp.eq.f32.partialorder %v3894, %v3896
    %v3898 = vsel %vm3897, %v3893, inf
    %3899 = vmin.xlane.f32.xlu0 %v3898
    %v3900 = vpop.xlane.xlu0 %3899
    %v3901 = vcvt.f32.s32 %v3900
    %v3902 = vcvt.f32.s32 %v3896
    %v3903 = vshll.u32 %v3902, 16
    %v3904 = vadd.s32 %v3903, %v3901
    %vm3905 = vcmp.eq.s32.totalorder %v3904, 2
    %v3906 = vsel %vm3905, 1, 0
    %v3907 = vsub.s32 1, %v3704
    %v3908 = vsub.s32 1, %v3906
    %v3909 = vmul.u32 %v3907, %v3908
    %vm3910 = vcmp.eq.s32.totalorder %v135, 7
    %v3911 = vsel %vm3910, 1, 0
    %v3912 = vmul.u32 %v3911, %v3909
    %v3913 = vmul.u32 %v3912, %v3904
    %v3914 = vsub.s32 1, %v3912
    %v3915 = vmul.u32 %v3914, %v3690
    %v3916 = vadd.s32 %v3913, %v3915
    %v3917 = vcvt.s32.f32 %v3907
    %v3918 = vmul.f32 %v3917, %v3809
    %v3919 = vsub.f32 1.0, %v3917
    %v3920 = vmul.f32 %v3919, %v3695
    %v3921 = vadd.f32 %v3918, %v3920
    %v3922 = vmul.f32 %v3917, %v3803
    %v3923 = vmul.f32 %v3919, %v3698
    %v3924 = vadd.f32 %v3922, %v3923
    %v3925 = vmul.u32 %v3907, %v3904
    %v3926 = vsub.s32 1, %v3907
    %v3927 = vmul.u32 %v3926, %v3702
    %v3928 = vadd.s32 %v3925, %v3927
    %vm3929 = vcmp.gt.s32.totalorder %v3704, %v3906
    %v3930 = vsel %vm3929, %v3704, %v3906
    %vm3931 = vcmp.eq.s32.totalorder %v135, %v3928
    %v3932 = vsel %vm3931, 1, 0
    %v3933 = vcvt.s32.f32 %v3932
    %3935 = vrot.lane.b32.xlu0 %v3921, 64
    %v3936 = vpop.permute.xlu0 %3935
    %v3938 = vsel %vm154, %v3933, %v3936
    %v3940 = vsel %vm331, %v3938, 0
    %3942 = vmatprep.subr.mxu0 0.0
    %3943 = vmatpush1.msra.mxu0 %v119
    %3944 = vmatprep.subr.mxu0 0.0
    %3945 = vmatpush1.msra.mxu0 %v120
    %3946 = vmatprep.subr.mxu0 0.0
    %3947 = vmatpush1.msra.mxu0 %v121
    %3948 = vmatprep.subr.mxu0 0.0
    %3949 = vmatpush1.msra.mxu0 %v122
    %3950 = vmatprep.subr.mxu0 0.0
    %3951 = vmatpush1.msra.mxu0 %v123
    %3952 = vmatprep.subr.mxu0 0.0
    %3953 = vmatpush1.msra.mxu0 %v124
    %3954 = vmatprep.subr.mxu0 0.0
    %3955 = vmatpush1.msra.mxu0 %v125
    %3956 = vmatprep.subr.mxu0 0.0
    %3957 = vmatpush1.msra.mxu0 %v126
    %3958 = vmatprep.subr.mxu0 0.0
    %3959 = vmatpush1.msra.mxu0 0.0
    %3960 = vmatprep.subr.mxu0 0.0
    %3961 = vmatpush1.msra.mxu0 0.0
    %3962 = vmatprep.subr.mxu0 0.0
    %3963 = vmatpush1.msra.mxu0 0.0
    %3964 = vmatprep.subr.mxu0 0.0
    %3965 = vmatpush1.msra.mxu0 0.0
    %3966 = vmatprep.subr.mxu0 0.0
    %3967 = vmatpush1.msra.mxu0 0.0
    %3968 = vmatprep.subr.mxu0 0.0
    %3969 = vmatpush1.msra.mxu0 0.0
    %3970 = vmatprep.subr.mxu0 0.0
    %3971 = vmatpush1.msra.mxu0 0.0
    %3972 = vmatprep.subr.mxu0 0.0
    %3973 = vmatpush1.msra.mxu0 0.0
    %3974 = vmatprep.subr.mxu0 0.0
    %3975 = vmatpush1.msra.mxu0 0.0
    %3976 = vmatprep.subr.mxu0 0.0
    %3977 = vmatpush1.msra.mxu0 0.0
    %3978 = vmatprep.subr.mxu0 0.0
    %3979 = vmatpush1.msra.mxu0 0.0
    %3980 = vmatprep.subr.mxu0 0.0
    %3981 = vmatpush1.msra.mxu0 0.0
    %3982 = vmatprep.subr.mxu0 0.0
    %3983 = vmatpush1.msra.mxu0 0.0
    %3984 = vmatprep.subr.mxu0 0.0
    %3985 = vmatpush1.msra.mxu0 0.0
    %3986 = vmatprep.subr.mxu0 0.0
    %3987 = vmatpush1.msra.mxu0 0.0
    %3988 = vmatprep.subr.mxu0 0.0
    %3989 = vmatpush1.msra.mxu0 0.0
    %3990 = vmatprep.subr.mxu0 0.0
    %3991 = vmatpush1.msra.mxu0 0.0
    %3992 = vmatprep.subr.mxu0 0.0
    %3993 = vmatpush1.msra.mxu0 0.0
    %3994 = vmatprep.subr.mxu0 0.0
    %3995 = vmatpush1.msra.mxu0 0.0
    %3996 = vmatprep.subr.mxu0 0.0
    %3997 = vmatpush1.msra.mxu0 0.0
    %3998 = vmatprep.subr.mxu0 0.0
    %3999 = vmatpush1.msra.mxu0 0.0
    %4000 = vmatprep.subr.mxu0 0.0
    %4001 = vmatpush1.msra.mxu0 0.0
    %4002 = vmatprep.subr.mxu0 0.0
    %4003 = vmatpush1.msra.mxu0 0.0
    %4004 = vmatprep.subr.mxu0 0.0
    %4005 = vmatpush1.msra.mxu0 0.0
    %4006 = vmatprep.mubr.f32.mxu0 0.0
    %4007 = vmatmul.mubr.f32.gmra.mrb[0].mxu0 %v3940
    %v4008 = vpop.f32.mrb[0].mxu0
    %v4009 = vadd.f32 %v127, %v4008
    %v4010 = vpop.f32.mrb[0].mxu0
    %4011 = vdwg.mxu0
    %v4012 = vxor.u32 %v4009, 2147483648
    %v4013 = vmul.f32 %v4012, 1.442695
    %v4014 = vpow.pop %v4013
    %v4015 = vadd.f32 %v4014, 1.0
    %v4016 = vrcp.pop %v4015
    %v4017 = vmul.f32 1.0, %v4016
    %v4018 = vtanh.pop %v4009
    %v4019 = vmul.f32 %v4017, %v3924
    %4021 = vrot.lane.b32.xlu0 %v4018, 64
    %v4022 = vpop.permute.xlu0 %4021
    %v4024 = vmul.f32 %v4017, %v4022
    %4026 = vrot.lane.b32.xlu0 %v4024, 32
    %v4027 = vpop.permute.xlu0 %4026
    %v4029 = vadd.f32 %v4019, %v4027
    %v4030 = vtanh.pop %v4029
    %4032 = vrot.lane.b32.xlu0 %v4030, 64
    %v4033 = vpop.permute.xlu0 %4032
    %v4035 = vmul.f32 %v4017, %v4033
    %4037 = vrot.lane.b32.xlu0 %v4035, 32
    %v4038 = vpop.permute.xlu0 %4037
    %v4039 = vsel %vm154, %v4038, 0
    %4041 = vmatprep.subr.mxu0 0.0
    %4042 = vmatpush1.msra.mxu0 %v128
    %4043 = vmatprep.subr.mxu0 0.0
    %4044 = vmatpush1.msra.mxu0 %v129
    %4045 = vmatprep.subr.mxu0 0.0
    %4046 = vmatpush1.msra.mxu0 %v130
    %4047 = vmatprep.subr.mxu0 0.0
    %4048 = vmatpush1.msra.mxu0 %v131
    %4049 = vmatprep.subr.mxu0 0.0
    %4050 = vmatpush1.msra.mxu0 0.0
    %4051 = vmatprep.subr.mxu0 0.0
    %4052 = vmatpush1.msra.mxu0 0.0
    %4053 = vmatprep.subr.mxu0 0.0
    %4054 = vmatpush1.msra.mxu0 0.0
    %4055 = vmatprep.subr.mxu0 0.0
    %4056 = vmatpush1.msra.mxu0 0.0
    %4057 = vmatprep.subr.mxu0 0.0
    %4058 = vmatpush1.msra.mxu0 0.0
    %4059 = vmatprep.subr.mxu0 0.0
    %4060 = vmatpush1.msra.mxu0 0.0
    %4061 = vmatprep.subr.mxu0 0.0
    %4062 = vmatpush1.msra.mxu0 0.0
    %4063 = vmatprep.subr.mxu0 0.0
    %4064 = vmatpush1.msra.mxu0 0.0
    %4065 = vmatprep.subr.mxu0 0.0
    %4066 = vmatpush1.msra.mxu0 0.0
    %4067 = vmatprep.subr.mxu0 0.0
    %4068 = vmatpush1.msra.mxu0 0.0
    %4069 = vmatprep.subr.mxu0 0.0
    %4070 = vmatpush1.msra.mxu0 0.0
    %4071 = vmatprep.subr.mxu0 0.0
    %4072 = vmatpush1.msra.mxu0 0.0
    %4073 = vmatprep.subr.mxu0 0.0
    %4074 = vmatpush1.msra.mxu0 0.0
    %4075 = vmatprep.subr.mxu0 0.0
    %4076 = vmatpush1.msra.mxu0 0.0
    %4077 = vmatprep.subr.mxu0 0.0
    %4078 = vmatpush1.msra.mxu0 0.0
    %4079 = vmatprep.subr.mxu0 0.0
    %4080 = vmatpush1.msra.mxu0 0.0
    %4081 = vmatprep.subr.mxu0 0.0
    %4082 = vmatpush1.msra.mxu0 0.0
    %4083 = vmatprep.subr.mxu0 0.0
    %4084 = vmatpush1.msra.mxu0 0.0
    %4085 = vmatprep.subr.mxu0 0.0
    %4086 = vmatpush1.msra.mxu0 0.0
    %4087 = vmatprep.subr.mxu0 0.0
    %4088 = vmatpush1.msra.mxu0 0.0
    %4089 = vmatprep.subr.mxu0 0.0
    %4090 = vmatpush1.msra.mxu0 0.0
    %4091 = vmatprep.subr.mxu0 0.0
    %4092 = vmatpush1.msra.mxu0 0.0
    %4093 = vmatprep.subr.mxu0 0.0
    %4094 = vmatpush1.msra.mxu0 0.0
    %4095 = vmatprep.subr.mxu0 0.0
    %4096 = vmatpush1.msra.mxu0 0.0
    %4097 = vmatprep.subr.mxu0 0.0
    %4098 = vmatpush1.msra.mxu0 0.0
    %4099 = vmatprep.subr.mxu0 0.0
    %4100 = vmatpush1.msra.mxu0 0.0
    %4101 = vmatprep.subr.mxu0 0.0
    %4102 = vmatpush1.msra.mxu0 0.0
    %4103 = vmatprep.subr.mxu0 0.0
    %4104 = vmatpush1.msra.mxu0 0.0
    %4105 = vmatprep.mubr.f32.mxu0 0.0
    %4106 = vmatmul.mubr.f32.gmra.mrb[0].mxu0 %v4039
    %v4107 = vpop.f32.mrb[0].mxu0
    %v4108 = vadd.f32 %v132, %v4107
    %v4109 = vpop.f32.mrb[0].mxu0
    %4110 = vdwg.mxu0
    %v4111 = vsel %vm2310, %v4108, -inf
    %4112 = vmax.xlane.f32.xlu0 %v4111
    %v4113 = vpop.xlane.xlu0 %4112
    %vm4114 = vcmp.eq.f32.partialorder %v4108, %v4113
    %v4115 = vsel %vm4114, %v135, 32
    %v4116 = vsel %vm2310, %v4115, 2147483647
    %v4117 = vand.u32 %v4116, 65535
    %v4118 = vshra.s32 %v4116, 16
    %v4119 = vcvt.s32.f32 %v4117
    %v4120 = vcvt.s32.f32 %v4118
    %4121 = vmin.xlane.f32.xlu0 %v4120
    %v4122 = vpop.xlane.xlu0 %4121
    %vm4123 = vcmp.eq.f32.partialorder %v4120, %v4122
    %v4124 = vsel %vm4123, %v4119, inf
    %4125 = vmin.xlane.f32.xlu0 %v4124
    %v4126 = vpop.xlane.xlu0 %4125
    %v4127 = vcvt.f32.s32 %v4126
    %v4128 = vcvt.f32.s32 %v4122
    %v4129 = vshll.u32 %v4128, 16
    %v4130 = vadd.s32 %v4129, %v4127
    %vm4131 = vcmp.eq.s32.totalorder %v4130, 2
    %v4132 = vsel %vm4131, 1, 0
    %v4133 = vsub.s32 1, %v3930
    %v4134 = vsub.s32 1, %v4132
    %v4135 = vmul.u32 %v4133, %v4134
    %vm4136 = vcmp.eq.s32.totalorder %v135, 8
    %v4137 = vsel %vm4136, 1, 0
    %v4138 = vmul.u32 %v4137, %v4135
    %v4139 = vmul.u32 %v4138, %v4130
    %v4140 = vsub.s32 1, %v4138
    %v4141 = vmul.u32 %v4140, %v3916
    %v4142 = vadd.s32 %v4139, %v4141
    %v4143 = vcvt.s32.f32 %v4133
    %v4144 = vmul.f32 %v4143, %v4035
    %v4145 = vsub.f32 1.0, %v4143
    %v4146 = vmul.f32 %v4145, %v3921
    %v4147 = vadd.f32 %v4144, %v4146
    %v4148 = vmul.f32 %v4143, %v4029
    %v4149 = vmul.f32 %v4145, %v3924
    %v4150 = vadd.f32 %v4148, %v4149
    %v4151 = vmul.u32 %v4133, %v4130
    %v4152 = vsub.s32 1, %v4133
    %v4153 = vmul.u32 %v4152, %v3928
    %v4154 = vadd.s32 %v4151, %v4153
    %vm4155 = vcmp.gt.s32.totalorder %v3930, %v4132
    %v4156 = vsel %vm4155, %v3930, %v4132
    %vm4157 = vcmp.eq.s32.totalorder %v135, %v4154
    %v4158 = vsel %vm4157, 1, 0
    %v4159 = vcvt.s32.f32 %v4158
    %4161 = vrot.lane.b32.xlu0 %v4147, 64
    %v4162 = vpop.permute.xlu0 %4161
    %v4164 = vsel %vm154, %v4159, %v4162
    %v4166 = vsel %vm331, %v4164, 0
    %4168 = vmatprep.subr.mxu0 0.0
    %4169 = vmatpush1.msra.mxu0 %v119
    %4170 = vmatprep.subr.mxu0 0.0
    %4171 = vmatpush1.msra.mxu0 %v120
    %4172 = vmatprep.subr.mxu0 0.0
    %4173 = vmatpush1.msra.mxu0 %v121
    %4174 = vmatprep.subr.mxu0 0.0
    %4175 = vmatpush1.msra.mxu0 %v122
    %4176 = vmatprep.subr.mxu0 0.0
    %4177 = vmatpush1.msra.mxu0 %v123
    %4178 = vmatprep.subr.mxu0 0.0
    %4179 = vmatpush1.msra.mxu0 %v124
    %4180 = vmatprep.subr.mxu0 0.0
    %4181 = vmatpush1.msra.mxu0 %v125
    %4182 = vmatprep.subr.mxu0 0.0
    %4183 = vmatpush1.msra.mxu0 %v126
    %4184 = vmatprep.subr.mxu0 0.0
    %4185 = vmatpush1.msra.mxu0 0.0
    %4186 = vmatprep.subr.mxu0 0.0
    %4187 = vmatpush1.msra.mxu0 0.0
    %4188 = vmatprep.subr.mxu0 0.0
    %4189 = vmatpush1.msra.mxu0 0.0
    %4190 = vmatprep.subr.mxu0 0.0
    %4191 = vmatpush1.msra.mxu0 0.0
    %4192 = vmatprep.subr.mxu0 0.0
    %4193 = vmatpush1.msra.mxu0 0.0
    %4194 = vmatprep.subr.mxu0 0.0
    %4195 = vmatpush1.msra.mxu0 0.0
    %4196 = vmatprep.subr.mxu0 0.0
    %4197 = vmatpush1.msra.mxu0 0.0
    %4198 = vmatprep.subr.mxu0 0.0
    %4199 = vmatpush1.msra.mxu0 0.0
    %4200 = vmatprep.subr.mxu0 0.0
    %4201 = vmatpush1.msra.mxu0 0.0
    %4202 = vmatprep.subr.mxu0 0.0
    %4203 = vmatpush1.msra.mxu0 0.0
    %4204 = vmatprep.subr.mxu0 0.0
    %4205 = vmatpush1.msra.mxu0 0.0
    %4206 = vmatprep.subr.mxu0 0.0
    %4207 = vmatpush1.msra.mxu0 0.0
    %4208 = vmatprep.subr.mxu0 0.0
    %4209 = vmatpush1.msra.mxu0 0.0
    %4210 = vmatprep.subr.mxu0 0.0
    %4211 = vmatpush1.msra.mxu0 0.0
    %4212 = vmatprep.subr.mxu0 0.0
    %4213 = vmatpush1.msra.mxu0 0.0
    %4214 = vmatprep.subr.mxu0 0.0
    %4215 = vmatpush1.msra.mxu0 0.0
    %4216 = vmatprep.subr.mxu0 0.0
    %4217 = vmatpush1.msra.mxu0 0.0
    %4218 = vmatprep.subr.mxu0 0.0
    %4219 = vmatpush1.msra.mxu0 0.0
    %4220 = vmatprep.subr.mxu0 0.0
    %4221 = vmatpush1.msra.mxu0 0.0
    %4222 = vmatprep.subr.mxu0 0.0
    %4223 = vmatpush1.msra.mxu0 0.0
    %4224 = vmatprep.subr.mxu0 0.0
    %4225 = vmatpush1.msra.mxu0 0.0
    %4226 = vmatprep.subr.mxu0 0.0
    %4227 = vmatpush1.msra.mxu0 0.0
    %4228 = vmatprep.subr.mxu0 0.0
    %4229 = vmatpush1.msra.mxu0 0.0
    %4230 = vmatprep.subr.mxu0 0.0
    %4231 = vmatpush1.msra.mxu0 0.0
    %4232 = vmatprep.mubr.f32.mxu0 0.0
    %4233 = vmatmul.mubr.f32.gmra.mrb[0].mxu0 %v4166
    %v4234 = vpop.f32.mrb[0].mxu0
    %v4235 = vadd.f32 %v127, %v4234
    %v4236 = vpop.f32.mrb[0].mxu0
    %4237 = vdwg.mxu0
    %v4238 = vxor.u32 %v4235, 2147483648
    %v4239 = vmul.f32 %v4238, 1.442695
    %v4240 = vpow.pop %v4239
    %v4241 = vadd.f32 %v4240, 1.0
    %v4242 = vrcp.pop %v4241
    %v4243 = vmul.f32 1.0, %v4242
    %v4244 = vtanh.pop %v4235
    %v4245 = vmul.f32 %v4243, %v4150
    %4247 = vrot.lane.b32.xlu0 %v4244, 64
    %v4248 = vpop.permute.xlu0 %4247
    %v4250 = vmul.f32 %v4243, %v4248
    %4252 = vrot.lane.b32.xlu0 %v4250, 32
    %v4253 = vpop.permute.xlu0 %4252
    %v4255 = vadd.f32 %v4245, %v4253
    %v4256 = vtanh.pop %v4255
    %4258 = vrot.lane.b32.xlu0 %v4256, 64
    %v4259 = vpop.permute.xlu0 %4258
    %v4261 = vmul.f32 %v4243, %v4259
    %4263 = vrot.lane.b32.xlu0 %v4261, 32
    %v4264 = vpop.permute.xlu0 %4263
    %v4265 = vsel %vm154, %v4264, 0
    %4267 = vmatprep.subr.mxu0 0.0
    %4268 = vmatpush1.msra.mxu0 %v128
    %4269 = vmatprep.subr.mxu0 0.0
    %4270 = vmatpush1.msra.mxu0 %v129
    %4271 = vmatprep.subr.mxu0 0.0
    %4272 = vmatpush1.msra.mxu0 %v130
    %4273 = vmatprep.subr.mxu0 0.0
    %4274 = vmatpush1.msra.mxu0 %v131
    %4275 = vmatprep.subr.mxu0 0.0
    %4276 = vmatpush1.msra.mxu0 0.0
    %4277 = vmatprep.subr.mxu0 0.0
    %4278 = vmatpush1.msra.mxu0 0.0
    %4279 = vmatprep.subr.mxu0 0.0
    %4280 = vmatpush1.msra.mxu0 0.0
    %4281 = vmatprep.subr.mxu0 0.0
    %4282 = vmatpush1.msra.mxu0 0.0
    %4283 = vmatprep.subr.mxu0 0.0
    %4284 = vmatpush1.msra.mxu0 0.0
    %4285 = vmatprep.subr.mxu0 0.0
    %4286 = vmatpush1.msra.mxu0 0.0
    %4287 = vmatprep.subr.mxu0 0.0
    %4288 = vmatpush1.msra.mxu0 0.0
    %4289 = vmatprep.subr.mxu0 0.0
    %4290 = vmatpush1.msra.mxu0 0.0
    %4291 = vmatprep.subr.mxu0 0.0
    %4292 = vmatpush1.msra.mxu0 0.0
    %4293 = vmatprep.subr.mxu0 0.0
    %4294 = vmatpush1.msra.mxu0 0.0
    %4295 = vmatprep.subr.mxu0 0.0
    %4296 = vmatpush1.msra.mxu0 0.0
    %4297 = vmatprep.subr.mxu0 0.0
    %4298 = vmatpush1.msra.mxu0 0.0
    %4299 = vmatprep.subr.mxu0 0.0
    %4300 = vmatpush1.msra.mxu0 0.0
    %4301 = vmatprep.subr.mxu0 0.0
    %4302 = vmatpush1.msra.mxu0 0.0
    %4303 = vmatprep.subr.mxu0 0.0
    %4304 = vmatpush1.msra.mxu0 0.0
    %4305 = vmatprep.subr.mxu0 0.0
    %4306 = vmatpush1.msra.mxu0 0.0
    %4307 = vmatprep.subr.mxu0 0.0
    %4308 = vmatpush1.msra.mxu0 0.0
    %4309 = vmatprep.subr.mxu0 0.0
    %4310 = vmatpush1.msra.mxu0 0.0
    %4311 = vmatprep.subr.mxu0 0.0
    %4312 = vmatpush1.msra.mxu0 0.0
    %4313 = vmatprep.subr.mxu0 0.0
    %4314 = vmatpush1.msra.mxu0 0.0
    %4315 = vmatprep.subr.mxu0 0.0
    %4316 = vmatpush1.msra.mxu0 0.0
    %4317 = vmatprep.subr.mxu0 0.0
    %4318 = vmatpush1.msra.mxu0 0.0
    %4319 = vmatprep.subr.mxu0 0.0
    %4320 = vmatpush1.msra.mxu0 0.0
    %4321 = vmatprep.subr.mxu0 0.0
    %4322 = vmatpush1.msra.mxu0 0.0
    %4323 = vmatprep.subr.mxu0 0.0
    %4324 = vmatpush1.msra.mxu0 0.0
    %4325 = vmatprep.subr.mxu0 0.0
    %4326 = vmatpush1.msra.mxu0 0.0
    %4327 = vmatprep.subr.mxu0 0.0
    %4328 = vmatpush1.msra.mxu0 0.0
    %4329 = vmatprep.subr.mxu0 0.0
    %4330 = vmatpush1.msra.mxu0 0.0
    %4331 = vmatprep.mubr.f32.mxu0 0.0
    %4332 = vmatmul.mubr.f32.gmra.mrb[0].mxu0 %v4265
    %v4333 = vpop.f32.mrb[0].mxu0
    %v4334 = vadd.f32 %v132, %v4333
    %v4335 = vpop.f32.mrb[0].mxu0
    %4336 = vdwg.mxu0
    %v4337 = vsel %vm2310, %v4334, -inf
    %4338 = vmax.xlane.f32.xlu0 %v4337
    %v4339 = vpop.xlane.xlu0 %4338
    %vm4340 = vcmp.eq.f32.partialorder %v4334, %v4339
    %v4341 = vsel %vm4340, %v135, 32
    %v4342 = vsel %vm2310, %v4341, 2147483647
    %v4343 = vand.u32 %v4342, 65535
    %v4344 = vshra.s32 %v4342, 16
    %v4345 = vcvt.s32.f32 %v4343
    %v4346 = vcvt.s32.f32 %v4344
    %4347 = vmin.xlane.f32.xlu0 %v4346
    %v4348 = vpop.xlane.xlu0 %4347
    %vm4349 = vcmp.eq.f32.partialorder %v4346, %v4348
    %v4350 = vsel %vm4349, %v4345, inf
    %4351 = vmin.xlane.f32.xlu0 %v4350
    %v4352 = vpop.xlane.xlu0 %4351
    %v4353 = vcvt.f32.s32 %v4352
    %v4354 = vcvt.f32.s32 %v4348
    %v4355 = vshll.u32 %v4354, 16
    %v4356 = vadd.s32 %v4355, %v4353
    %vm4357 = vcmp.eq.s32.totalorder %v4356, 2
    %v4358 = vsel %vm4357, 1, 0
    %v4359 = vsub.s32 1, %v4156
    %v4360 = vsub.s32 1, %v4358
    %v4361 = vmul.u32 %v4359, %v4360
    %vm4362 = vcmp.eq.s32.totalorder %v135, 9
    %v4363 = vsel %vm4362, 1, 0
    %v4364 = vmul.u32 %v4363, %v4361
    %v4365 = vmul.u32 %v4364, %v4356
    %v4366 = vsub.s32 1, %v4364
    %v4367 = vmul.u32 %v4366, %v4142
    %v4368 = vadd.s32 %v4365, %v4367
    %v4369 = vcvt.s32.f32 %v4359
    %v4370 = vmul.f32 %v4369, %v4261
    %v4371 = vsub.f32 1.0, %v4369
    %v4372 = vmul.f32 %v4371, %v4147
    %v4373 = vadd.f32 %v4370, %v4372
    %v4374 = vmul.f32 %v4369, %v4255
    %v4375 = vmul.f32 %v4371, %v4150
    %v4376 = vadd.f32 %v4374, %v4375
    %v4377 = vmul.u32 %v4359, %v4356
    %v4378 = vsub.s32 1, %v4359
    %v4379 = vmul.u32 %v4378, %v4154
    %v4380 = vadd.s32 %v4377, %v4379
    %vm4381 = vcmp.gt.s32.totalorder %v4156, %v4358
    %v4382 = vsel %vm4381, %v4156, %v4358
    %vm4383 = vcmp.eq.s32.totalorder %v135, %v4380
    %v4384 = vsel %vm4383, 1, 0
    %v4385 = vcvt.s32.f32 %v4384
    %4387 = vrot.lane.b32.xlu0 %v4373, 64
    %v4388 = vpop.permute.xlu0 %4387
    %v4390 = vsel %vm154, %v4385, %v4388
    %v4392 = vsel %vm331, %v4390, 0
    %4394 = vmatprep.subr.mxu0 0.0
    %4395 = vmatpush1.msra.mxu0 %v119
    %4396 = vmatprep.subr.mxu0 0.0
    %4397 = vmatpush1.msra.mxu0 %v120
    %4398 = vmatprep.subr.mxu0 0.0
    %4399 = vmatpush1.msra.mxu0 %v121
    %4400 = vmatprep.subr.mxu0 0.0
    %4401 = vmatpush1.msra.mxu0 %v122
    %4402 = vmatprep.subr.mxu0 0.0
    %4403 = vmatpush1.msra.mxu0 %v123
    %4404 = vmatprep.subr.mxu0 0.0
    %4405 = vmatpush1.msra.mxu0 %v124
    %4406 = vmatprep.subr.mxu0 0.0
    %4407 = vmatpush1.msra.mxu0 %v125
    %4408 = vmatprep.subr.mxu0 0.0
    %4409 = vmatpush1.msra.mxu0 %v126
    %4410 = vmatprep.subr.mxu0 0.0
    %4411 = vmatpush1.msra.mxu0 0.0
    %4412 = vmatprep.subr.mxu0 0.0
    %4413 = vmatpush1.msra.mxu0 0.0
    %4414 = vmatprep.subr.mxu0 0.0
    %4415 = vmatpush1.msra.mxu0 0.0
    %4416 = vmatprep.subr.mxu0 0.0
    %4417 = vmatpush1.msra.mxu0 0.0
    %4418 = vmatprep.subr.mxu0 0.0
    %4419 = vmatpush1.msra.mxu0 0.0
    %4420 = vmatprep.subr.mxu0 0.0
    %4421 = vmatpush1.msra.mxu0 0.0
    %4422 = vmatprep.subr.mxu0 0.0
    %4423 = vmatpush1.msra.mxu0 0.0
    %4424 = vmatprep.subr.mxu0 0.0
    %4425 = vmatpush1.msra.mxu0 0.0
    %4426 = vmatprep.subr.mxu0 0.0
    %4427 = vmatpush1.msra.mxu0 0.0
    %4428 = vmatprep.subr.mxu0 0.0
    %4429 = vmatpush1.msra.mxu0 0.0
    %4430 = vmatprep.subr.mxu0 0.0
    %4431 = vmatpush1.msra.mxu0 0.0
    %4432 = vmatprep.subr.mxu0 0.0
    %4433 = vmatpush1.msra.mxu0 0.0
    %4434 = vmatprep.subr.mxu0 0.0
    %4435 = vmatpush1.msra.mxu0 0.0
    %4436 = vmatprep.subr.mxu0 0.0
    %4437 = vmatpush1.msra.mxu0 0.0
    %4438 = vmatprep.subr.mxu0 0.0
    %4439 = vmatpush1.msra.mxu0 0.0
    %4440 = vmatprep.subr.mxu0 0.0
    %4441 = vmatpush1.msra.mxu0 0.0
    %4442 = vmatprep.subr.mxu0 0.0
    %4443 = vmatpush1.msra.mxu0 0.0
    %4444 = vmatprep.subr.mxu0 0.0
    %4445 = vmatpush1.msra.mxu0 0.0
    %4446 = vmatprep.subr.mxu0 0.0
    %4447 = vmatpush1.msra.mxu0 0.0
    %4448 = vmatprep.subr.mxu0 0.0
    %4449 = vmatpush1.msra.mxu0 0.0
    %4450 = vmatprep.subr.mxu0 0.0
    %4451 = vmatpush1.msra.mxu0 0.0
    %4452 = vmatprep.subr.mxu0 0.0
    %4453 = vmatpush1.msra.mxu0 0.0
    %4454 = vmatprep.subr.mxu0 0.0
    %4455 = vmatpush1.msra.mxu0 0.0
    %4456 = vmatprep.subr.mxu0 0.0
    %4457 = vmatpush1.msra.mxu0 0.0
    %4458 = vmatprep.mubr.f32.mxu0 0.0
    %4459 = vmatmul.mubr.f32.gmra.mrb[0].mxu0 %v4392
    %v4460 = vpop.f32.mrb[0].mxu0
    %v4461 = vadd.f32 %v127, %v4460
    %v4462 = vpop.f32.mrb[0].mxu0
    %4463 = vdwg.mxu0
    %v4464 = vxor.u32 %v4461, 2147483648
    %v4465 = vmul.f32 %v4464, 1.442695
    %v4466 = vpow.pop %v4465
    %v4467 = vadd.f32 %v4466, 1.0
    %v4468 = vrcp.pop %v4467
    %v4469 = vmul.f32 1.0, %v4468
    %v4470 = vtanh.pop %v4461
    %v4471 = vmul.f32 %v4469, %v4376
    %4473 = vrot.lane.b32.xlu0 %v4470, 64
    %v4474 = vpop.permute.xlu0 %4473
    %v4476 = vmul.f32 %v4469, %v4474
    %4478 = vrot.lane.b32.xlu0 %v4476, 32
    %v4479 = vpop.permute.xlu0 %4478
    %v4481 = vadd.f32 %v4471, %v4479
    %v4482 = vtanh.pop %v4481
    %4484 = vrot.lane.b32.xlu0 %v4482, 64
    %v4485 = vpop.permute.xlu0 %4484
    %v4487 = vmul.f32 %v4469, %v4485
    %4489 = vrot.lane.b32.xlu0 %v4487, 32
    %v4490 = vpop.permute.xlu0 %4489
    %v4491 = vsel %vm154, %v4490, 0
    %4493 = vmatprep.subr.mxu0 0.0
    %4494 = vmatpush1.msra.mxu0 %v128
    %4495 = vmatprep.subr.mxu0 0.0
    %4496 = vmatpush1.msra.mxu0 %v129
    %4497 = vmatprep.subr.mxu0 0.0
    %4498 = vmatpush1.msra.mxu0 %v130
    %4499 = vmatprep.subr.mxu0 0.0
    %4500 = vmatpush1.msra.mxu0 %v131
    %4501 = vmatprep.subr.mxu0 0.0
    %4502 = vmatpush1.msra.mxu0 0.0
    %4503 = vmatprep.subr.mxu0 0.0
    %4504 = vmatpush1.msra.mxu0 0.0
    %4505 = vmatprep.subr.mxu0 0.0
    %4506 = vmatpush1.msra.mxu0 0.0
    %4507 = vmatprep.subr.mxu0 0.0
    %4508 = vmatpush1.msra.mxu0 0.0
    %4509 = vmatprep.subr.mxu0 0.0
    %4510 = vmatpush1.msra.mxu0 0.0
    %4511 = vmatprep.subr.mxu0 0.0
    %4512 = vmatpush1.msra.mxu0 0.0
    %4513 = vmatprep.subr.mxu0 0.0
    %4514 = vmatpush1.msra.mxu0 0.0
    %4515 = vmatprep.subr.mxu0 0.0
    %4516 = vmatpush1.msra.mxu0 0.0
    %4517 = vmatprep.subr.mxu0 0.0
    %4518 = vmatpush1.msra.mxu0 0.0
    %4519 = vmatprep.subr.mxu0 0.0
    %4520 = vmatpush1.msra.mxu0 0.0
    %4521 = vmatprep.subr.mxu0 0.0
    %4522 = vmatpush1.msra.mxu0 0.0
    %4523 = vmatprep.subr.mxu0 0.0
    %4524 = vmatpush1.msra.mxu0 0.0
    %4525 = vmatprep.subr.mxu0 0.0
    %4526 = vmatpush1.msra.mxu0 0.0
    %4527 = vmatprep.subr.mxu0 0.0
    %4528 = vmatpush1.msra.mxu0 0.0
    %4529 = vmatprep.subr.mxu0 0.0
    %4530 = vmatpush1.msra.mxu0 0.0
    %4531 = vmatprep.subr.mxu0 0.0
    %4532 = vmatpush1.msra.mxu0 0.0
    %4533 = vmatprep.subr.mxu0 0.0
    %4534 = vmatpush1.msra.mxu0 0.0
    %4535 = vmatprep.subr.mxu0 0.0
    %4536 = vmatpush1.msra.mxu0 0.0
    %4537 = vmatprep.subr.mxu0 0.0
    %4538 = vmatpush1.msra.mxu0 0.0
    %4539 = vmatprep.subr.mxu0 0.0
    %4540 = vmatpush1.msra.mxu0 0.0
    %4541 = vmatprep.subr.mxu0 0.0
    %4542 = vmatpush1.msra.mxu0 0.0
    %4543 = vmatprep.subr.mxu0 0.0
    %4544 = vmatpush1.msra.mxu0 0.0
    %4545 = vmatprep.subr.mxu0 0.0
    %4546 = vmatpush1.msra.mxu0 0.0
    %4547 = vmatprep.subr.mxu0 0.0
    %4548 = vmatpush1.msra.mxu0 0.0
    %4549 = vmatprep.subr.mxu0 0.0
    %4550 = vmatpush1.msra.mxu0 0.0
    %4551 = vmatprep.subr.mxu0 0.0
    %4552 = vmatpush1.msra.mxu0 0.0
    %4553 = vmatprep.subr.mxu0 0.0
    %4554 = vmatpush1.msra.mxu0 0.0
    %4555 = vmatprep.subr.mxu0 0.0
    %4556 = vmatpush1.msra.mxu0 0.0
    %4557 = vmatprep.mubr.f32.mxu0 0.0
    %4558 = vmatmul.mubr.f32.gmra.mrb[0].mxu0 %v4491
    %v4559 = vpop.f32.mrb[0].mxu0
    %v4560 = vadd.f32 %v132, %v4559
    %v4561 = vpop.f32.mrb[0].mxu0
    %4562 = vdwg.mxu0
    %v4563 = vsel %vm2310, %v4560, -inf
    %4564 = vmax.xlane.f32.xlu0 %v4563
    %v4565 = vpop.xlane.xlu0 %4564
    %vm4566 = vcmp.eq.f32.partialorder %v4560, %v4565
    %v4567 = vsel %vm4566, %v135, 32
    %v4568 = vsel %vm2310, %v4567, 2147483647
    %v4569 = vand.u32 %v4568, 65535
    %v4570 = vshra.s32 %v4568, 16
    %v4571 = vcvt.s32.f32 %v4569
    %v4572 = vcvt.s32.f32 %v4570
    %4573 = vmin.xlane.f32.xlu0 %v4572
    %v4574 = vpop.xlane.xlu0 %4573
    %vm4575 = vcmp.eq.f32.partialorder %v4572, %v4574
    %v4576 = vsel %vm4575, %v4571, inf
    %4577 = vmin.xlane.f32.xlu0 %v4576
    %v4578 = vpop.xlane.xlu0 %4577
    %v4579 = vcvt.f32.s32 %v4578
    %v4580 = vcvt.f32.s32 %v4574
    %v4581 = vshll.u32 %v4580, 16
    %v4582 = vadd.s32 %v4581, %v4579
    %vm4583 = vcmp.eq.s32.totalorder %v4582, 2
    %v4584 = vsel %vm4583, 1, 0
    %v4585 = vsub.s32 1, %v4382
    %v4586 = vsub.s32 1, %v4584
    %v4587 = vmul.u32 %v4585, %v4586
    %vm4588 = vcmp.eq.s32.totalorder %v135, 10
    %v4589 = vsel %vm4588, 1, 0
    %v4590 = vmul.u32 %v4589, %v4587
    %v4591 = vmul.u32 %v4590, %v4582
    %v4592 = vsub.s32 1, %v4590
    %v4593 = vmul.u32 %v4592, %v4368
    %v4594 = vadd.s32 %v4591, %v4593
    %v4595 = vcvt.s32.f32 %v4585
    %v4596 = vmul.f32 %v4595, %v4487
    %v4597 = vsub.f32 1.0, %v4595
    %v4598 = vmul.f32 %v4597, %v4373
    %v4599 = vadd.f32 %v4596, %v4598
    %v4600 = vmul.f32 %v4595, %v4481
    %v4601 = vmul.f32 %v4597, %v4376
    %v4602 = vadd.f32 %v4600, %v4601
    %v4603 = vmul.u32 %v4585, %v4582
    %v4604 = vsub.s32 1, %v4585
    %v4605 = vmul.u32 %v4604, %v4380
    %v4606 = vadd.s32 %v4603, %v4605
    %vm4607 = vcmp.gt.s32.totalorder %v4382, %v4584
    %v4608 = vsel %vm4607, %v4382, %v4584
    %vm4609 = vcmp.eq.s32.totalorder %v135, %v4606
    %v4610 = vsel %vm4609, 1, 0
    %v4611 = vcvt.s32.f32 %v4610
    %4613 = vrot.lane.b32.xlu0 %v4599, 64
    %v4614 = vpop.permute.xlu0 %4613
    %v4616 = vsel %vm154, %v4611, %v4614
    %v4618 = vsel %vm331, %v4616, 0
    %4620 = vmatprep.subr.mxu0 0.0
    %4621 = vmatpush1.msra.mxu0 %v119
    %4622 = vmatprep.subr.mxu0 0.0
    %4623 = vmatpush1.msra.mxu0 %v120
    %4624 = vmatprep.subr.mxu0 0.0
    %4625 = vmatpush1.msra.mxu0 %v121
    %4626 = vmatprep.subr.mxu0 0.0
    %4627 = vmatpush1.msra.mxu0 %v122
    %4628 = vmatprep.subr.mxu0 0.0
    %4629 = vmatpush1.msra.mxu0 %v123
    %4630 = vmatprep.subr.mxu0 0.0
    %4631 = vmatpush1.msra.mxu0 %v124
    %4632 = vmatprep.subr.mxu0 0.0
    %4633 = vmatpush1.msra.mxu0 %v125
    %4634 = vmatprep.subr.mxu0 0.0
    %4635 = vmatpush1.msra.mxu0 %v126
    %4636 = vmatprep.subr.mxu0 0.0
    %4637 = vmatpush1.msra.mxu0 0.0
    %4638 = vmatprep.subr.mxu0 0.0
    %4639 = vmatpush1.msra.mxu0 0.0
    %4640 = vmatprep.subr.mxu0 0.0
    %4641 = vmatpush1.msra.mxu0 0.0
    %4642 = vmatprep.subr.mxu0 0.0
    %4643 = vmatpush1.msra.mxu0 0.0
    %4644 = vmatprep.subr.mxu0 0.0
    %4645 = vmatpush1.msra.mxu0 0.0
    %4646 = vmatprep.subr.mxu0 0.0
    %4647 = vmatpush1.msra.mxu0 0.0
    %4648 = vmatprep.subr.mxu0 0.0
    %4649 = vmatpush1.msra.mxu0 0.0
    %4650 = vmatprep.subr.mxu0 0.0
    %4651 = vmatpush1.msra.mxu0 0.0
    %4652 = vmatprep.subr.mxu0 0.0
    %4653 = vmatpush1.msra.mxu0 0.0
    %4654 = vmatprep.subr.mxu0 0.0
    %4655 = vmatpush1.msra.mxu0 0.0
    %4656 = vmatprep.subr.mxu0 0.0
    %4657 = vmatpush1.msra.mxu0 0.0
    %4658 = vmatprep.subr.mxu0 0.0
    %4659 = vmatpush1.msra.mxu0 0.0
    %4660 = vmatprep.subr.mxu0 0.0
    %4661 = vmatpush1.msra.mxu0 0.0
    %4662 = vmatprep.subr.mxu0 0.0
    %4663 = vmatpush1.msra.mxu0 0.0
    %4664 = vmatprep.subr.mxu0 0.0
    %4665 = vmatpush1.msra.mxu0 0.0
    %4666 = vmatprep.subr.mxu0 0.0
    %4667 = vmatpush1.msra.mxu0 0.0
    %4668 = vmatprep.subr.mxu0 0.0
    %4669 = vmatpush1.msra.mxu0 0.0
    %4670 = vmatprep.subr.mxu0 0.0
    %4671 = vmatpush1.msra.mxu0 0.0
    %4672 = vmatprep.subr.mxu0 0.0
    %4673 = vmatpush1.msra.mxu0 0.0
    %4674 = vmatprep.subr.mxu0 0.0
    %4675 = vmatpush1.msra.mxu0 0.0
    %4676 = vmatprep.subr.mxu0 0.0
    %4677 = vmatpush1.msra.mxu0 0.0
    %4678 = vmatprep.subr.mxu0 0.0
    %4679 = vmatpush1.msra.mxu0 0.0
    %4680 = vmatprep.subr.mxu0 0.0
    %4681 = vmatpush1.msra.mxu0 0.0
    %4682 = vmatprep.subr.mxu0 0.0
    %4683 = vmatpush1.msra.mxu0 0.0
    %4684 = vmatprep.mubr.f32.mxu0 0.0
    %4685 = vmatmul.mubr.f32.gmra.mrb[0].mxu0 %v4618
    %v4686 = vpop.f32.mrb[0].mxu0
    %v4687 = vadd.f32 %v127, %v4686
    %v4688 = vpop.f32.mrb[0].mxu0
    %4689 = vdwg.mxu0
    %v4690 = vxor.u32 %v4687, 2147483648
    %v4691 = vmul.f32 %v4690, 1.442695
    %v4692 = vpow.pop %v4691
    %v4693 = vadd.f32 %v4692, 1.0
    %v4694 = vrcp.pop %v4693
    %v4695 = vmul.f32 1.0, %v4694
    %v4696 = vtanh.pop %v4687
    %v4697 = vmul.f32 %v4695, %v4602
    %4699 = vrot.lane.b32.xlu0 %v4696, 64
    %v4700 = vpop.permute.xlu0 %4699
    %v4702 = vmul.f32 %v4695, %v4700
    %4704 = vrot.lane.b32.xlu0 %v4702, 32
    %v4705 = vpop.permute.xlu0 %4704
    %v4707 = vadd.f32 %v4697, %v4705
    %v4708 = vtanh.pop %v4707
    %4710 = vrot.lane.b32.xlu0 %v4708, 64
    %v4711 = vpop.permute.xlu0 %4710
    %v4713 = vmul.f32 %v4695, %v4711
    %4715 = vrot.lane.b32.xlu0 %v4713, 32
    %v4716 = vpop.permute.xlu0 %4715
    %v4717 = vsel %vm154, %v4716, 0
    %4719 = vmatprep.subr.mxu0 0.0
    %4720 = vmatpush1.msra.mxu0 %v128
    %4721 = vmatprep.subr.mxu0 0.0
    %4722 = vmatpush1.msra.mxu0 %v129
    %4723 = vmatprep.subr.mxu0 0.0
    %4724 = vmatpush1.msra.mxu0 %v130
    %4725 = vmatprep.subr.mxu0 0.0
    %4726 = vmatpush1.msra.mxu0 %v131
    %4727 = vmatprep.subr.mxu0 0.0
    %4728 = vmatpush1.msra.mxu0 0.0
    %4729 = vmatprep.subr.mxu0 0.0
    %4730 = vmatpush1.msra.mxu0 0.0
    %4731 = vmatprep.subr.mxu0 0.0
    %4732 = vmatpush1.msra.mxu0 0.0
    %4733 = vmatprep.subr.mxu0 0.0
    %4734 = vmatpush1.msra.mxu0 0.0
    %4735 = vmatprep.subr.mxu0 0.0
    %4736 = vmatpush1.msra.mxu0 0.0
    %4737 = vmatprep.subr.mxu0 0.0
    %4738 = vmatpush1.msra.mxu0 0.0
    %4739 = vmatprep.subr.mxu0 0.0
    %4740 = vmatpush1.msra.mxu0 0.0
    %4741 = vmatprep.subr.mxu0 0.0
    %4742 = vmatpush1.msra.mxu0 0.0
    %4743 = vmatprep.subr.mxu0 0.0
    %4744 = vmatpush1.msra.mxu0 0.0
    %4745 = vmatprep.subr.mxu0 0.0
    %4746 = vmatpush1.msra.mxu0 0.0
    %4747 = vmatprep.subr.mxu0 0.0
    %4748 = vmatpush1.msra.mxu0 0.0
    %4749 = vmatprep.subr.mxu0 0.0
    %4750 = vmatpush1.msra.mxu0 0.0
    %4751 = vmatprep.subr.mxu0 0.0
    %4752 = vmatpush1.msra.mxu0 0.0
    %4753 = vmatprep.subr.mxu0 0.0
    %4754 = vmatpush1.msra.mxu0 0.0
    %4755 = vmatprep.subr.mxu0 0.0
    %4756 = vmatpush1.msra.mxu0 0.0
    %4757 = vmatprep.subr.mxu0 0.0
    %4758 = vmatpush1.msra.mxu0 0.0
    %4759 = vmatprep.subr.mxu0 0.0
    %4760 = vmatpush1.msra.mxu0 0.0
    %4761 = vmatprep.subr.mxu0 0.0
    %4762 = vmatpush1.msra.mxu0 0.0
    %4763 = vmatprep.subr.mxu0 0.0
    %4764 = vmatpush1.msra.mxu0 0.0
    %4765 = vmatprep.subr.mxu0 0.0
    %4766 = vmatpush1.msra.mxu0 0.0
    %4767 = vmatprep.subr.mxu0 0.0
    %4768 = vmatpush1.msra.mxu0 0.0
    %4769 = vmatprep.subr.mxu0 0.0
    %4770 = vmatpush1.msra.mxu0 0.0
    %4771 = vmatprep.subr.mxu0 0.0
    %4772 = vmatpush1.msra.mxu0 0.0
    %4773 = vmatprep.subr.mxu0 0.0
    %4774 = vmatpush1.msra.mxu0 0.0
    %4775 = vmatprep.subr.mxu0 0.0
    %4776 = vmatpush1.msra.mxu0 0.0
    %4777 = vmatprep.subr.mxu0 0.0
    %4778 = vmatpush1.msra.mxu0 0.0
    %4779 = vmatprep.subr.mxu0 0.0
    %4780 = vmatpush1.msra.mxu0 0.0
    %4781 = vmatprep.subr.mxu0 0.0
    %4782 = vmatpush1.msra.mxu0 0.0
    %4783 = vmatprep.mubr.f32.mxu0 0.0
    %4784 = vmatmul.mubr.f32.gmra.mrb[0].mxu0 %v4717
    %v4785 = vpop.f32.mrb[0].mxu0
    %v4786 = vadd.f32 %v132, %v4785
    %v4787 = vpop.f32.mrb[0].mxu0
    %4788 = vdwg.mxu0
    %v4789 = vsel %vm2310, %v4786, -inf
    %4790 = vmax.xlane.f32.xlu0 %v4789
    %v4791 = vpop.xlane.xlu0 %4790
    %vm4792 = vcmp.eq.f32.partialorder %v4786, %v4791
    %v4793 = vsel %vm4792, %v135, 32
    %v4794 = vsel %vm2310, %v4793, 2147483647
    %v4795 = vand.u32 %v4794, 65535
    %v4796 = vshra.s32 %v4794, 16
    %v4797 = vcvt.s32.f32 %v4795
    %v4798 = vcvt.s32.f32 %v4796
    %4799 = vmin.xlane.f32.xlu0 %v4798
    %v4800 = vpop.xlane.xlu0 %4799
    %vm4801 = vcmp.eq.f32.partialorder %v4798, %v4800
    %v4802 = vsel %vm4801, %v4797, inf
    %4803 = vmin.xlane.f32.xlu0 %v4802
    %v4804 = vpop.xlane.xlu0 %4803
    %v4805 = vcvt.f32.s32 %v4804
    %v4806 = vcvt.f32.s32 %v4800
    %v4807 = vshll.u32 %v4806, 16
    %v4808 = vadd.s32 %v4807, %v4805
    %vm4809 = vcmp.eq.s32.totalorder %v4808, 2
    %v4810 = vsel %vm4809, 1, 0
    %v4811 = vsub.s32 1, %v4608
    %v4812 = vsub.s32 1, %v4810
    %v4813 = vmul.u32 %v4811, %v4812
    %vm4814 = vcmp.eq.s32.totalorder %v135, 11
    %v4815 = vsel %vm4814, 1, 0
    %v4816 = vmul.u32 %v4815, %v4813
    %v4817 = vmul.u32 %v4816, %v4808
    %v4818 = vsub.s32 1, %v4816
    %v4819 = vmul.u32 %v4818, %v4594
    %v4820 = vadd.s32 %v4817, %v4819
    %v4821 = vcvt.s32.f32 %v4811
    %v4822 = vmul.f32 %v4821, %v4713
    %v4823 = vsub.f32 1.0, %v4821
    %v4824 = vmul.f32 %v4823, %v4599
    %v4825 = vadd.f32 %v4822, %v4824
    %v4826 = vmul.f32 %v4821, %v4707
    %v4827 = vmul.f32 %v4823, %v4602
    %v4828 = vadd.f32 %v4826, %v4827
    %v4829 = vmul.u32 %v4811, %v4808
    %v4830 = vsub.s32 1, %v4811
    %v4831 = vmul.u32 %v4830, %v4606
    %v4832 = vadd.s32 %v4829, %v4831
    %vm4833 = vcmp.gt.s32.totalorder %v4608, %v4810
    %v4834 = vsel %vm4833, %v4608, %v4810
    %vm4835 = vcmp.eq.s32.totalorder %v135, %v4832
    %v4836 = vsel %vm4835, 1, 0
    %v4837 = vcvt.s32.f32 %v4836
    %4839 = vrot.lane.b32.xlu0 %v4825, 64
    %v4840 = vpop.permute.xlu0 %4839
    %v4842 = vsel %vm154, %v4837, %v4840
    %v4844 = vsel %vm331, %v4842, 0
    %4846 = vmatprep.subr.mxu0 0.0
    %4847 = vmatpush1.msra.mxu0 %v119
    %4848 = vmatprep.subr.mxu0 0.0
    %4849 = vmatpush1.msra.mxu0 %v120
    %4850 = vmatprep.subr.mxu0 0.0
    %4851 = vmatpush1.msra.mxu0 %v121
    %4852 = vmatprep.subr.mxu0 0.0
    %4853 = vmatpush1.msra.mxu0 %v122
    %4854 = vmatprep.subr.mxu0 0.0
    %4855 = vmatpush1.msra.mxu0 %v123
    %4856 = vmatprep.subr.mxu0 0.0
    %4857 = vmatpush1.msra.mxu0 %v124
    %4858 = vmatprep.subr.mxu0 0.0
    %4859 = vmatpush1.msra.mxu0 %v125
    %4860 = vmatprep.subr.mxu0 0.0
    %4861 = vmatpush1.msra.mxu0 %v126
    %4862 = vmatprep.subr.mxu0 0.0
    %4863 = vmatpush1.msra.mxu0 0.0
    %4864 = vmatprep.subr.mxu0 0.0
    %4865 = vmatpush1.msra.mxu0 0.0
    %4866 = vmatprep.subr.mxu0 0.0
    %4867 = vmatpush1.msra.mxu0 0.0
    %4868 = vmatprep.subr.mxu0 0.0
    %4869 = vmatpush1.msra.mxu0 0.0
    %4870 = vmatprep.subr.mxu0 0.0
    %4871 = vmatpush1.msra.mxu0 0.0
    %4872 = vmatprep.subr.mxu0 0.0
    %4873 = vmatpush1.msra.mxu0 0.0
    %4874 = vmatprep.subr.mxu0 0.0
    %4875 = vmatpush1.msra.mxu0 0.0
    %4876 = vmatprep.subr.mxu0 0.0
    %4877 = vmatpush1.msra.mxu0 0.0
    %4878 = vmatprep.subr.mxu0 0.0
    %4879 = vmatpush1.msra.mxu0 0.0
    %4880 = vmatprep.subr.mxu0 0.0
    %4881 = vmatpush1.msra.mxu0 0.0
    %4882 = vmatprep.subr.mxu0 0.0
    %4883 = vmatpush1.msra.mxu0 0.0
    %4884 = vmatprep.subr.mxu0 0.0
    %4885 = vmatpush1.msra.mxu0 0.0
    %4886 = vmatprep.subr.mxu0 0.0
    %4887 = vmatpush1.msra.mxu0 0.0
    %4888 = vmatprep.subr.mxu0 0.0
    %4889 = vmatpush1.msra.mxu0 0.0
    %4890 = vmatprep.subr.mxu0 0.0
    %4891 = vmatpush1.msra.mxu0 0.0
    %4892 = vmatprep.subr.mxu0 0.0
    %4893 = vmatpush1.msra.mxu0 0.0
    %4894 = vmatprep.subr.mxu0 0.0
    %4895 = vmatpush1.msra.mxu0 0.0
    %4896 = vmatprep.subr.mxu0 0.0
    %4897 = vmatpush1.msra.mxu0 0.0
    %4898 = vmatprep.subr.mxu0 0.0
    %4899 = vmatpush1.msra.mxu0 0.0
    %4900 = vmatprep.subr.mxu0 0.0
    %4901 = vmatpush1.msra.mxu0 0.0
    %4902 = vmatprep.subr.mxu0 0.0
    %4903 = vmatpush1.msra.mxu0 0.0
    %4904 = vmatprep.subr.mxu0 0.0
    %4905 = vmatpush1.msra.mxu0 0.0
    %4906 = vmatprep.subr.mxu0 0.0
    %4907 = vmatpush1.msra.mxu0 0.0
    %4908 = vmatprep.subr.mxu0 0.0
    %4909 = vmatpush1.msra.mxu0 0.0
    %4910 = vmatprep.mubr.f32.mxu0 0.0
    %4911 = vmatmul.mubr.f32.gmra.mrb[0].mxu0 %v4844
    %v4912 = vpop.f32.mrb[0].mxu0
    %v4913 = vadd.f32 %v127, %v4912
    %v4914 = vpop.f32.mrb[0].mxu0
    %4915 = vdwg.mxu0
    %v4916 = vxor.u32 %v4913, 2147483648
    %v4917 = vmul.f32 %v4916, 1.442695
    %v4918 = vpow.pop %v4917
    %v4919 = vadd.f32 %v4918, 1.0
    %v4920 = vrcp.pop %v4919
    %v4921 = vmul.f32 1.0, %v4920
    %v4922 = vtanh.pop %v4913
    %v4923 = vmul.f32 %v4921, %v4828
    %4925 = vrot.lane.b32.xlu0 %v4922, 64
    %v4926 = vpop.permute.xlu0 %4925
    %v4928 = vmul.f32 %v4921, %v4926
    %4930 = vrot.lane.b32.xlu0 %v4928, 32
    %v4931 = vpop.permute.xlu0 %4930
    %v4933 = vadd.f32 %v4923, %v4931
    %v4934 = vtanh.pop %v4933
    %4936 = vrot.lane.b32.xlu0 %v4934, 64
    %v4937 = vpop.permute.xlu0 %4936
    %v4939 = vmul.f32 %v4921, %v4937
    %4941 = vrot.lane.b32.xlu0 %v4939, 32
    %v4942 = vpop.permute.xlu0 %4941
    %v4943 = vsel %vm154, %v4942, 0
    %4945 = vmatprep.subr.mxu0 0.0
    %4946 = vmatpush1.msra.mxu0 %v128
    %4947 = vmatprep.subr.mxu0 0.0
    %4948 = vmatpush1.msra.mxu0 %v129
    %4949 = vmatprep.subr.mxu0 0.0
    %4950 = vmatpush1.msra.mxu0 %v130
    %4951 = vmatprep.subr.mxu0 0.0
    %4952 = vmatpush1.msra.mxu0 %v131
    %4953 = vmatprep.subr.mxu0 0.0
    %4954 = vmatpush1.msra.mxu0 0.0
    %4955 = vmatprep.subr.mxu0 0.0
    %4956 = vmatpush1.msra.mxu0 0.0
    %4957 = vmatprep.subr.mxu0 0.0
    %4958 = vmatpush1.msra.mxu0 0.0
    %4959 = vmatprep.subr.mxu0 0.0
    %4960 = vmatpush1.msra.mxu0 0.0
    %4961 = vmatprep.subr.mxu0 0.0
    %4962 = vmatpush1.msra.mxu0 0.0
    %4963 = vmatprep.subr.mxu0 0.0
    %4964 = vmatpush1.msra.mxu0 0.0
    %4965 = vmatprep.subr.mxu0 0.0
    %4966 = vmatpush1.msra.mxu0 0.0
    %4967 = vmatprep.subr.mxu0 0.0
    %4968 = vmatpush1.msra.mxu0 0.0
    %4969 = vmatprep.subr.mxu0 0.0
    %4970 = vmatpush1.msra.mxu0 0.0
    %4971 = vmatprep.subr.mxu0 0.0
    %4972 = vmatpush1.msra.mxu0 0.0
    %4973 = vmatprep.subr.mxu0 0.0
    %4974 = vmatpush1.msra.mxu0 0.0
    %4975 = vmatprep.subr.mxu0 0.0
    %4976 = vmatpush1.msra.mxu0 0.0
    %4977 = vmatprep.subr.mxu0 0.0
    %4978 = vmatpush1.msra.mxu0 0.0
    %4979 = vmatprep.subr.mxu0 0.0
    %4980 = vmatpush1.msra.mxu0 0.0
    %4981 = vmatprep.subr.mxu0 0.0
    %4982 = vmatpush1.msra.mxu0 0.0
    %4983 = vmatprep.subr.mxu0 0.0
    %4984 = vmatpush1.msra.mxu0 0.0
    %4985 = vmatprep.subr.mxu0 0.0
    %4986 = vmatpush1.msra.mxu0 0.0
    %4987 = vmatprep.subr.mxu0 0.0
    %4988 = vmatpush1.msra.mxu0 0.0
    %4989 = vmatprep.subr.mxu0 0.0
    %4990 = vmatpush1.msra.mxu0 0.0
    %4991 = vmatprep.subr.mxu0 0.0
    %4992 = vmatpush1.msra.mxu0 0.0
    %4993 = vmatprep.subr.mxu0 0.0
    %4994 = vmatpush1.msra.mxu0 0.0
    %4995 = vmatprep.subr.mxu0 0.0
    %4996 = vmatpush1.msra.mxu0 0.0
    %4997 = vmatprep.subr.mxu0 0.0
    %4998 = vmatpush1.msra.mxu0 0.0
    %4999 = vmatprep.subr.mxu0 0.0
    %5000 = vmatpush1.msra.mxu0 0.0
    %5001 = vmatprep.subr.mxu0 0.0
    %5002 = vmatpush1.msra.mxu0 0.0
    %5003 = vmatprep.subr.mxu0 0.0
    %5004 = vmatpush1.msra.mxu0 0.0
    %5005 = vmatprep.subr.mxu0 0.0
    %5006 = vmatpush1.msra.mxu0 0.0
    %5007 = vmatprep.subr.mxu0 0.0
    %5008 = vmatpush1.msra.mxu0 0.0
    %5009 = vmatprep.mubr.f32.mxu0 0.0
    %5010 = vmatmul.mubr.f32.gmra.mrb[0].mxu0 %v4943
    %v5011 = vpop.f32.mrb[0].mxu0
    %v5012 = vadd.f32 %v132, %v5011
    %v5013 = vpop.f32.mrb[0].mxu0
    %5014 = vdwg.mxu0
    %v5015 = vsel %vm2310, %v5012, -inf
    %5016 = vmax.xlane.f32.xlu0 %v5015
    %v5017 = vpop.xlane.xlu0 %5016
    %vm5018 = vcmp.eq.f32.partialorder %v5012, %v5017
    %v5019 = vsel %vm5018, %v135, 32
    %v5020 = vsel %vm2310, %v5019, 2147483647
    %v5021 = vand.u32 %v5020, 65535
    %v5022 = vshra.s32 %v5020, 16
    %v5023 = vcvt.s32.f32 %v5021
    %v5024 = vcvt.s32.f32 %v5022
    %5025 = vmin.xlane.f32.xlu0 %v5024
    %v5026 = vpop.xlane.xlu0 %5025
    %vm5027 = vcmp.eq.f32.partialorder %v5024, %v5026
    %v5028 = vsel %vm5027, %v5023, inf
    %5029 = vmin.xlane.f32.xlu0 %v5028
    %v5030 = vpop.xlane.xlu0 %5029
    %v5031 = vcvt.f32.s32 %v5030
    %v5032 = vcvt.f32.s32 %v5026
    %v5033 = vshll.u32 %v5032, 16
    %v5034 = vadd.s32 %v5033, %v5031
    %vm5035 = vcmp.eq.s32.totalorder %v5034, 2
    %v5036 = vsel %vm5035, 1, 0
    %v5037 = vsub.s32 1, %v4834
    %v5038 = vsub.s32 1, %v5036
    %v5039 = vmul.u32 %v5037, %v5038
    %vm5040 = vcmp.eq.s32.totalorder %v135, 12
    %v5041 = vsel %vm5040, 1, 0
    %v5042 = vmul.u32 %v5041, %v5039
    %v5043 = vmul.u32 %v5042, %v5034
    %v5044 = vsub.s32 1, %v5042
    %v5045 = vmul.u32 %v5044, %v4820
    %v5046 = vadd.s32 %v5043, %v5045
    %v5047 = vcvt.s32.f32 %v5037
    %v5048 = vmul.f32 %v5047, %v4939
    %v5049 = vsub.f32 1.0, %v5047
    %v5050 = vmul.f32 %v5049, %v4825
    %v5051 = vadd.f32 %v5048, %v5050
    %v5052 = vmul.f32 %v5047, %v4933
    %v5053 = vmul.f32 %v5049, %v4828
    %v5054 = vadd.f32 %v5052, %v5053
    %v5055 = vmul.u32 %v5037, %v5034
    %v5056 = vsub.s32 1, %v5037
    %v5057 = vmul.u32 %v5056, %v4832
    %v5058 = vadd.s32 %v5055, %v5057
    %vm5059 = vcmp.gt.s32.totalorder %v4834, %v5036
    %v5060 = vsel %vm5059, %v4834, %v5036
    %vm5061 = vcmp.eq.s32.totalorder %v135, %v5058
    %v5062 = vsel %vm5061, 1, 0
    %v5063 = vcvt.s32.f32 %v5062
    %5065 = vrot.lane.b32.xlu0 %v5051, 64
    %v5066 = vpop.permute.xlu0 %5065
    %v5068 = vsel %vm154, %v5063, %v5066
    %v5070 = vsel %vm331, %v5068, 0
    %5072 = vmatprep.subr.mxu0 0.0
    %5073 = vmatpush1.msra.mxu0 %v119
    %5074 = vmatprep.subr.mxu0 0.0
    %5075 = vmatpush1.msra.mxu0 %v120
    %5076 = vmatprep.subr.mxu0 0.0
    %5077 = vmatpush1.msra.mxu0 %v121
    %5078 = vmatprep.subr.mxu0 0.0
    %5079 = vmatpush1.msra.mxu0 %v122
    %5080 = vmatprep.subr.mxu0 0.0
    %5081 = vmatpush1.msra.mxu0 %v123
    %5082 = vmatprep.subr.mxu0 0.0
    %5083 = vmatpush1.msra.mxu0 %v124
    %5084 = vmatprep.subr.mxu0 0.0
    %5085 = vmatpush1.msra.mxu0 %v125
    %5086 = vmatprep.subr.mxu0 0.0
    %5087 = vmatpush1.msra.mxu0 %v126
    %5088 = vmatprep.subr.mxu0 0.0
    %5089 = vmatpush1.msra.mxu0 0.0
    %5090 = vmatprep.subr.mxu0 0.0
    %5091 = vmatpush1.msra.mxu0 0.0
    %5092 = vmatprep.subr.mxu0 0.0
    %5093 = vmatpush1.msra.mxu0 0.0
    %5094 = vmatprep.subr.mxu0 0.0
    %5095 = vmatpush1.msra.mxu0 0.0
    %5096 = vmatprep.subr.mxu0 0.0
    %5097 = vmatpush1.msra.mxu0 0.0
    %5098 = vmatprep.subr.mxu0 0.0
    %5099 = vmatpush1.msra.mxu0 0.0
    %5100 = vmatprep.subr.mxu0 0.0
    %5101 = vmatpush1.msra.mxu0 0.0
    %5102 = vmatprep.subr.mxu0 0.0
    %5103 = vmatpush1.msra.mxu0 0.0
    %5104 = vmatprep.subr.mxu0 0.0
    %5105 = vmatpush1.msra.mxu0 0.0
    %5106 = vmatprep.subr.mxu0 0.0
    %5107 = vmatpush1.msra.mxu0 0.0
    %5108 = vmatprep.subr.mxu0 0.0
    %5109 = vmatpush1.msra.mxu0 0.0
    %5110 = vmatprep.subr.mxu0 0.0
    %5111 = vmatpush1.msra.mxu0 0.0
    %5112 = vmatprep.subr.mxu0 0.0
    %5113 = vmatpush1.msra.mxu0 0.0
    %5114 = vmatprep.subr.mxu0 0.0
    %5115 = vmatpush1.msra.mxu0 0.0
    %5116 = vmatprep.subr.mxu0 0.0
    %5117 = vmatpush1.msra.mxu0 0.0
    %5118 = vmatprep.subr.mxu0 0.0
    %5119 = vmatpush1.msra.mxu0 0.0
    %5120 = vmatprep.subr.mxu0 0.0
    %5121 = vmatpush1.msra.mxu0 0.0
    %5122 = vmatprep.subr.mxu0 0.0
    %5123 = vmatpush1.msra.mxu0 0.0
    %5124 = vmatprep.subr.mxu0 0.0
    %5125 = vmatpush1.msra.mxu0 0.0
    %5126 = vmatprep.subr.mxu0 0.0
    %5127 = vmatpush1.msra.mxu0 0.0
    %5128 = vmatprep.subr.mxu0 0.0
    %5129 = vmatpush1.msra.mxu0 0.0
    %5130 = vmatprep.subr.mxu0 0.0
    %5131 = vmatpush1.msra.mxu0 0.0
    %5132 = vmatprep.subr.mxu0 0.0
    %5133 = vmatpush1.msra.mxu0 0.0
    %5134 = vmatprep.subr.mxu0 0.0
    %5135 = vmatpush1.msra.mxu0 0.0
    %5136 = vmatprep.mubr.f32.mxu0 0.0
    %5137 = vmatmul.mubr.f32.gmra.mrb[0].mxu0 %v5070
    %v5138 = vpop.f32.mrb[0].mxu0
    %v5139 = vadd.f32 %v127, %v5138
    %v5140 = vpop.f32.mrb[0].mxu0
    %5141 = vdwg.mxu0
    %v5142 = vxor.u32 %v5139, 2147483648
    %v5143 = vmul.f32 %v5142, 1.442695
    %v5144 = vpow.pop %v5143
    %v5145 = vadd.f32 %v5144, 1.0
    %v5146 = vrcp.pop %v5145
    %v5147 = vmul.f32 1.0, %v5146
    %v5148 = vtanh.pop %v5139
    %v5149 = vmul.f32 %v5147, %v5054
    %5151 = vrot.lane.b32.xlu0 %v5148, 64
    %v5152 = vpop.permute.xlu0 %5151
    %v5154 = vmul.f32 %v5147, %v5152
    %5156 = vrot.lane.b32.xlu0 %v5154, 32
    %v5157 = vpop.permute.xlu0 %5156
    %v5159 = vadd.f32 %v5149, %v5157
    %v5160 = vtanh.pop %v5159
    %5162 = vrot.lane.b32.xlu0 %v5160, 64
    %v5163 = vpop.permute.xlu0 %5162
    %v5165 = vmul.f32 %v5147, %v5163
    %5167 = vrot.lane.b32.xlu0 %v5165, 32
    %v5168 = vpop.permute.xlu0 %5167
    %v5169 = vsel %vm154, %v5168, 0
    %5171 = vmatprep.subr.mxu0 0.0
    %5172 = vmatpush1.msra.mxu0 %v128
    %5173 = vmatprep.subr.mxu0 0.0
    %5174 = vmatpush1.msra.mxu0 %v129
    %5175 = vmatprep.subr.mxu0 0.0
    %5176 = vmatpush1.msra.mxu0 %v130
    %5177 = vmatprep.subr.mxu0 0.0
    %5178 = vmatpush1.msra.mxu0 %v131
    %5179 = vmatprep.subr.mxu0 0.0
    %5180 = vmatpush1.msra.mxu0 0.0
    %5181 = vmatprep.subr.mxu0 0.0
    %5182 = vmatpush1.msra.mxu0 0.0
    %5183 = vmatprep.subr.mxu0 0.0
    %5184 = vmatpush1.msra.mxu0 0.0
    %5185 = vmatprep.subr.mxu0 0.0
    %5186 = vmatpush1.msra.mxu0 0.0
    %5187 = vmatprep.subr.mxu0 0.0
    %5188 = vmatpush1.msra.mxu0 0.0
    %5189 = vmatprep.subr.mxu0 0.0
    %5190 = vmatpush1.msra.mxu0 0.0
    %5191 = vmatprep.subr.mxu0 0.0
    %5192 = vmatpush1.msra.mxu0 0.0
    %5193 = vmatprep.subr.mxu0 0.0
    %5194 = vmatpush1.msra.mxu0 0.0
    %5195 = vmatprep.subr.mxu0 0.0
    %5196 = vmatpush1.msra.mxu0 0.0
    %5197 = vmatprep.subr.mxu0 0.0
    %5198 = vmatpush1.msra.mxu0 0.0
    %5199 = vmatprep.subr.mxu0 0.0
    %5200 = vmatpush1.msra.mxu0 0.0
    %5201 = vmatprep.subr.mxu0 0.0
    %5202 = vmatpush1.msra.mxu0 0.0
    %5203 = vmatprep.subr.mxu0 0.0
    %5204 = vmatpush1.msra.mxu0 0.0
    %5205 = vmatprep.subr.mxu0 0.0
    %5206 = vmatpush1.msra.mxu0 0.0
    %5207 = vmatprep.subr.mxu0 0.0
    %5208 = vmatpush1.msra.mxu0 0.0
    %5209 = vmatprep.subr.mxu0 0.0
    %5210 = vmatpush1.msra.mxu0 0.0
    %5211 = vmatprep.subr.mxu0 0.0
    %5212 = vmatpush1.msra.mxu0 0.0
    %5213 = vmatprep.subr.mxu0 0.0
    %5214 = vmatpush1.msra.mxu0 0.0
    %5215 = vmatprep.subr.mxu0 0.0
    %5216 = vmatpush1.msra.mxu0 0.0
    %5217 = vmatprep.subr.mxu0 0.0
    %5218 = vmatpush1.msra.mxu0 0.0
    %5219 = vmatprep.subr.mxu0 0.0
    %5220 = vmatpush1.msra.mxu0 0.0
    %5221 = vmatprep.subr.mxu0 0.0
    %5222 = vmatpush1.msra.mxu0 0.0
    %5223 = vmatprep.subr.mxu0 0.0
    %5224 = vmatpush1.msra.mxu0 0.0
    %5225 = vmatprep.subr.mxu0 0.0
    %5226 = vmatpush1.msra.mxu0 0.0
    %5227 = vmatprep.subr.mxu0 0.0
    %5228 = vmatpush1.msra.mxu0 0.0
    %5229 = vmatprep.subr.mxu0 0.0
    %5230 = vmatpush1.msra.mxu0 0.0
    %5231 = vmatprep.subr.mxu0 0.0
    %5232 = vmatpush1.msra.mxu0 0.0
    %5233 = vmatprep.subr.mxu0 0.0
    %5234 = vmatpush1.msra.mxu0 0.0
    %5235 = vmatprep.mubr.f32.mxu0 0.0
    %5236 = vmatmul.mubr.f32.gmra.mrb[0].mxu0 %v5169
    %v5237 = vpop.f32.mrb[0].mxu0
    %v5238 = vadd.f32 %v132, %v5237
    %v5239 = vpop.f32.mrb[0].mxu0
    %5240 = vdwg.mxu0
    %v5241 = vsel %vm2310, %v5238, -inf
    %5242 = vmax.xlane.f32.xlu0 %v5241
    %v5243 = vpop.xlane.xlu0 %5242
    %vm5244 = vcmp.eq.f32.partialorder %v5238, %v5243
    %v5245 = vsel %vm5244, %v135, 32
    %v5246 = vsel %vm2310, %v5245, 2147483647
    %v5247 = vand.u32 %v5246, 65535
    %v5248 = vshra.s32 %v5246, 16
    %v5249 = vcvt.s32.f32 %v5247
    %v5250 = vcvt.s32.f32 %v5248
    %5251 = vmin.xlane.f32.xlu0 %v5250
    %v5252 = vpop.xlane.xlu0 %5251
    %vm5253 = vcmp.eq.f32.partialorder %v5250, %v5252
    %v5254 = vsel %vm5253, %v5249, inf
    %5255 = vmin.xlane.f32.xlu0 %v5254
    %v5256 = vpop.xlane.xlu0 %5255
    %v5257 = vcvt.f32.s32 %v5256
    %v5258 = vcvt.f32.s32 %v5252
    %v5259 = vshll.u32 %v5258, 16
    %v5260 = vadd.s32 %v5259, %v5257
    %vm5261 = vcmp.eq.s32.totalorder %v5260, 2
    %v5262 = vsel %vm5261, 1, 0
    %v5263 = vsub.s32 1, %v5060
    %v5264 = vsub.s32 1, %v5262
    %v5265 = vmul.u32 %v5263, %v5264
    %vm5266 = vcmp.eq.s32.totalorder %v135, 13
    %v5267 = vsel %vm5266, 1, 0
    %v5268 = vmul.u32 %v5267, %v5265
    %v5269 = vmul.u32 %v5268, %v5260
    %v5270 = vsub.s32 1, %v5268
    %v5271 = vmul.u32 %v5270, %v5046
    %v5272 = vadd.s32 %v5269, %v5271
    %v5273 = vcvt.s32.f32 %v5263
    %v5274 = vmul.f32 %v5273, %v5165
    %v5275 = vsub.f32 1.0, %v5273
    %v5276 = vmul.f32 %v5275, %v5051
    %v5277 = vadd.f32 %v5274, %v5276
    %v5278 = vmul.f32 %v5273, %v5159
    %v5279 = vmul.f32 %v5275, %v5054
    %v5280 = vadd.f32 %v5278, %v5279
    %v5281 = vmul.u32 %v5263, %v5260
    %v5282 = vsub.s32 1, %v5263
    %v5283 = vmul.u32 %v5282, %v5058
    %v5284 = vadd.s32 %v5281, %v5283
    %vm5285 = vcmp.gt.s32.totalorder %v5060, %v5262
    %v5286 = vsel %vm5285, %v5060, %v5262
    %vm5287 = vcmp.eq.s32.totalorder %v135, %v5284
    %v5288 = vsel %vm5287, 1, 0
    %v5289 = vcvt.s32.f32 %v5288
    %5291 = vrot.lane.b32.xlu0 %v5277, 64
    %v5292 = vpop.permute.xlu0 %5291
    %v5294 = vsel %vm154, %v5289, %v5292
    %v5296 = vsel %vm331, %v5294, 0
    %5298 = vmatprep.subr.mxu0 0.0
    %5299 = vmatpush1.msra.mxu0 %v119
    %5300 = vmatprep.subr.mxu0 0.0
    %5301 = vmatpush1.msra.mxu0 %v120
    %5302 = vmatprep.subr.mxu0 0.0
    %5303 = vmatpush1.msra.mxu0 %v121
    %5304 = vmatprep.subr.mxu0 0.0
    %5305 = vmatpush1.msra.mxu0 %v122
    %5306 = vmatprep.subr.mxu0 0.0
    %5307 = vmatpush1.msra.mxu0 %v123
    %5308 = vmatprep.subr.mxu0 0.0
    %5309 = vmatpush1.msra.mxu0 %v124
    %5310 = vmatprep.subr.mxu0 0.0
    %5311 = vmatpush1.msra.mxu0 %v125
    %5312 = vmatprep.subr.mxu0 0.0
    %5313 = vmatpush1.msra.mxu0 %v126
    %5314 = vmatprep.subr.mxu0 0.0
    %5315 = vmatpush1.msra.mxu0 0.0
    %5316 = vmatprep.subr.mxu0 0.0
    %5317 = vmatpush1.msra.mxu0 0.0
    %5318 = vmatprep.subr.mxu0 0.0
    %5319 = vmatpush1.msra.mxu0 0.0
    %5320 = vmatprep.subr.mxu0 0.0
    %5321 = vmatpush1.msra.mxu0 0.0
    %5322 = vmatprep.subr.mxu0 0.0
    %5323 = vmatpush1.msra.mxu0 0.0
    %5324 = vmatprep.subr.mxu0 0.0
    %5325 = vmatpush1.msra.mxu0 0.0
    %5326 = vmatprep.subr.mxu0 0.0
    %5327 = vmatpush1.msra.mxu0 0.0
    %5328 = vmatprep.subr.mxu0 0.0
    %5329 = vmatpush1.msra.mxu0 0.0
    %5330 = vmatprep.subr.mxu0 0.0
    %5331 = vmatpush1.msra.mxu0 0.0
    %5332 = vmatprep.subr.mxu0 0.0
    %5333 = vmatpush1.msra.mxu0 0.0
    %5334 = vmatprep.subr.mxu0 0.0
    %5335 = vmatpush1.msra.mxu0 0.0
    %5336 = vmatprep.subr.mxu0 0.0
    %5337 = vmatpush1.msra.mxu0 0.0
    %5338 = vmatprep.subr.mxu0 0.0
    %5339 = vmatpush1.msra.mxu0 0.0
    %5340 = vmatprep.subr.mxu0 0.0
    %5341 = vmatpush1.msra.mxu0 0.0
    %5342 = vmatprep.subr.mxu0 0.0
    %5343 = vmatpush1.msra.mxu0 0.0
    %5344 = vmatprep.subr.mxu0 0.0
    %5345 = vmatpush1.msra.mxu0 0.0
    %5346 = vmatprep.subr.mxu0 0.0
    %5347 = vmatpush1.msra.mxu0 0.0
    %5348 = vmatprep.subr.mxu0 0.0
    %5349 = vmatpush1.msra.mxu0 0.0
    %5350 = vmatprep.subr.mxu0 0.0
    %5351 = vmatpush1.msra.mxu0 0.0
    %5352 = vmatprep.subr.mxu0 0.0
    %5353 = vmatpush1.msra.mxu0 0.0
    %5354 = vmatprep.subr.mxu0 0.0
    %5355 = vmatpush1.msra.mxu0 0.0
    %5356 = vmatprep.subr.mxu0 0.0
    %5357 = vmatpush1.msra.mxu0 0.0
    %5358 = vmatprep.subr.mxu0 0.0
    %5359 = vmatpush1.msra.mxu0 0.0
    %5360 = vmatprep.subr.mxu0 0.0
    %5361 = vmatpush1.msra.mxu0 0.0
    %5362 = vmatprep.mubr.f32.mxu0 0.0
    %5363 = vmatmul.mubr.f32.gmra.mrb[0].mxu0 %v5296
    %v5364 = vpop.f32.mrb[0].mxu0
    %v5365 = vadd.f32 %v127, %v5364
    %v5366 = vpop.f32.mrb[0].mxu0
    %5367 = vdwg.mxu0
    %v5368 = vxor.u32 %v5365, 2147483648
    %v5369 = vmul.f32 %v5368, 1.442695
    %v5370 = vpow.pop %v5369
    %v5371 = vadd.f32 %v5370, 1.0
    %v5372 = vrcp.pop %v5371
    %v5373 = vmul.f32 1.0, %v5372
    %v5374 = vtanh.pop %v5365
    %v5375 = vmul.f32 %v5373, %v5280
    %5377 = vrot.lane.b32.xlu0 %v5374, 64
    %v5378 = vpop.permute.xlu0 %5377
    %v5380 = vmul.f32 %v5373, %v5378
    %5382 = vrot.lane.b32.xlu0 %v5380, 32
    %v5383 = vpop.permute.xlu0 %5382
    %v5385 = vadd.f32 %v5375, %v5383
    %v5386 = vtanh.pop %v5385
    %5388 = vrot.lane.b32.xlu0 %v5386, 64
    %v5389 = vpop.permute.xlu0 %5388
    %v5391 = vmul.f32 %v5373, %v5389
    %5393 = vrot.lane.b32.xlu0 %v5391, 32
    %v5394 = vpop.permute.xlu0 %5393
    %v5395 = vsel %vm154, %v5394, 0
    %5397 = vmatprep.subr.mxu0 0.0
    %5398 = vmatpush1.msra.mxu0 %v128
    %5399 = vmatprep.subr.mxu0 0.0
    %5400 = vmatpush1.msra.mxu0 %v129
    %5401 = vmatprep.subr.mxu0 0.0
    %5402 = vmatpush1.msra.mxu0 %v130
    %5403 = vmatprep.subr.mxu0 0.0
    %5404 = vmatpush1.msra.mxu0 %v131
    %5405 = vmatprep.subr.mxu0 0.0
    %5406 = vmatpush1.msra.mxu0 0.0
    %5407 = vmatprep.subr.mxu0 0.0
    %5408 = vmatpush1.msra.mxu0 0.0
    %5409 = vmatprep.subr.mxu0 0.0
    %5410 = vmatpush1.msra.mxu0 0.0
    %5411 = vmatprep.subr.mxu0 0.0
    %5412 = vmatpush1.msra.mxu0 0.0
    %5413 = vmatprep.subr.mxu0 0.0
    %5414 = vmatpush1.msra.mxu0 0.0
    %5415 = vmatprep.subr.mxu0 0.0
    %5416 = vmatpush1.msra.mxu0 0.0
    %5417 = vmatprep.subr.mxu0 0.0
    %5418 = vmatpush1.msra.mxu0 0.0
    %5419 = vmatprep.subr.mxu0 0.0
    %5420 = vmatpush1.msra.mxu0 0.0
    %5421 = vmatprep.subr.mxu0 0.0
    %5422 = vmatpush1.msra.mxu0 0.0
    %5423 = vmatprep.subr.mxu0 0.0
    %5424 = vmatpush1.msra.mxu0 0.0
    %5425 = vmatprep.subr.mxu0 0.0
    %5426 = vmatpush1.msra.mxu0 0.0
    %5427 = vmatprep.subr.mxu0 0.0
    %5428 = vmatpush1.msra.mxu0 0.0
    %5429 = vmatprep.subr.mxu0 0.0
    %5430 = vmatpush1.msra.mxu0 0.0
    %5431 = vmatprep.subr.mxu0 0.0
    %5432 = vmatpush1.msra.mxu0 0.0
    %5433 = vmatprep.subr.mxu0 0.0
    %5434 = vmatpush1.msra.mxu0 0.0
    %5435 = vmatprep.subr.mxu0 0.0
    %5436 = vmatpush1.msra.mxu0 0.0
    %5437 = vmatprep.subr.mxu0 0.0
    %5438 = vmatpush1.msra.mxu0 0.0
    %5439 = vmatprep.subr.mxu0 0.0
    %5440 = vmatpush1.msra.mxu0 0.0
    %5441 = vmatprep.subr.mxu0 0.0
    %5442 = vmatpush1.msra.mxu0 0.0
    %5443 = vmatprep.subr.mxu0 0.0
    %5444 = vmatpush1.msra.mxu0 0.0
    %5445 = vmatprep.subr.mxu0 0.0
    %5446 = vmatpush1.msra.mxu0 0.0
    %5447 = vmatprep.subr.mxu0 0.0
    %5448 = vmatpush1.msra.mxu0 0.0
    %5449 = vmatprep.subr.mxu0 0.0
    %5450 = vmatpush1.msra.mxu0 0.0
    %5451 = vmatprep.subr.mxu0 0.0
    %5452 = vmatpush1.msra.mxu0 0.0
    %5453 = vmatprep.subr.mxu0 0.0
    %5454 = vmatpush1.msra.mxu0 0.0
    %5455 = vmatprep.subr.mxu0 0.0
    %5456 = vmatpush1.msra.mxu0 0.0
    %5457 = vmatprep.subr.mxu0 0.0
    %5458 = vmatpush1.msra.mxu0 0.0
    %5459 = vmatprep.subr.mxu0 0.0
    %5460 = vmatpush1.msra.mxu0 0.0
    %5461 = vmatprep.mubr.f32.mxu0 0.0
    %5462 = vmatmul.mubr.f32.gmra.mrb[0].mxu0 %v5395
    %v5463 = vpop.f32.mrb[0].mxu0
    %v5464 = vadd.f32 %v132, %v5463
    %v5465 = vpop.f32.mrb[0].mxu0
    %5466 = vdwg.mxu0
    %v5467 = vsel %vm2310, %v5464, -inf
    %5468 = vmax.xlane.f32.xlu0 %v5467
    %v5469 = vpop.xlane.xlu0 %5468
    %vm5470 = vcmp.eq.f32.partialorder %v5464, %v5469
    %v5471 = vsel %vm5470, %v135, 32
    %v5472 = vsel %vm2310, %v5471, 2147483647
    %v5473 = vand.u32 %v5472, 65535
    %v5474 = vshra.s32 %v5472, 16
    %v5475 = vcvt.s32.f32 %v5473
    %v5476 = vcvt.s32.f32 %v5474
    %5477 = vmin.xlane.f32.xlu0 %v5476
    %v5478 = vpop.xlane.xlu0 %5477
    %vm5479 = vcmp.eq.f32.partialorder %v5476, %v5478
    %v5480 = vsel %vm5479, %v5475, inf
    %5481 = vmin.xlane.f32.xlu0 %v5480
    %v5482 = vpop.xlane.xlu0 %5481
    %v5483 = vcvt.f32.s32 %v5482
    %v5484 = vcvt.f32.s32 %v5478
    %v5485 = vshll.u32 %v5484, 16
    %v5486 = vadd.s32 %v5485, %v5483
    %vm5487 = vcmp.eq.s32.totalorder %v5486, 2
    %v5488 = vsel %vm5487, 1, 0
    %v5489 = vsub.s32 1, %v5286
    %v5490 = vsub.s32 1, %v5488
    %v5491 = vmul.u32 %v5489, %v5490
    %vm5492 = vcmp.eq.s32.totalorder %v135, 14
    %v5493 = vsel %vm5492, 1, 0
    %v5494 = vmul.u32 %v5493, %v5491
    %v5495 = vmul.u32 %v5494, %v5486
    %v5496 = vsub.s32 1, %v5494
    %v5497 = vmul.u32 %v5496, %v5272
    %v5498 = vadd.s32 %v5495, %v5497
    %v5499 = vcvt.s32.f32 %v5489
    %v5500 = vmul.f32 %v5499, %v5391
    %v5501 = vsub.f32 1.0, %v5499
    %v5502 = vmul.f32 %v5501, %v5277
    %v5503 = vadd.f32 %v5500, %v5502
    %v5504 = vmul.f32 %v5499, %v5385
    %v5505 = vmul.f32 %v5501, %v5280
    %v5506 = vadd.f32 %v5504, %v5505
    %v5507 = vmul.u32 %v5489, %v5486
    %v5508 = vsub.s32 1, %v5489
    %v5509 = vmul.u32 %v5508, %v5284
    %v5510 = vadd.s32 %v5507, %v5509
    %vm5511 = vcmp.gt.s32.totalorder %v5286, %v5488
    %v5512 = vsel %vm5511, %v5286, %v5488
    %vm5513 = vcmp.eq.s32.totalorder %v135, %v5510
    %v5514 = vsel %vm5513, 1, 0
    %v5515 = vcvt.s32.f32 %v5514
    %5517 = vrot.lane.b32.xlu0 %v5503, 64
    %v5518 = vpop.permute.xlu0 %5517
    %v5520 = vsel %vm154, %v5515, %v5518
    %v5522 = vsel %vm331, %v5520, 0
    %5524 = vmatprep.subr.mxu0 0.0
    %5525 = vmatpush1.msra.mxu0 %v119
    %5526 = vmatprep.subr.mxu0 0.0
    %5527 = vmatpush1.msra.mxu0 %v120
    %5528 = vmatprep.subr.mxu0 0.0
    %5529 = vmatpush1.msra.mxu0 %v121
    %5530 = vmatprep.subr.mxu0 0.0
    %5531 = vmatpush1.msra.mxu0 %v122
    %5532 = vmatprep.subr.mxu0 0.0
    %5533 = vmatpush1.msra.mxu0 %v123
    %5534 = vmatprep.subr.mxu0 0.0
    %5535 = vmatpush1.msra.mxu0 %v124
    %5536 = vmatprep.subr.mxu0 0.0
    %5537 = vmatpush1.msra.mxu0 %v125
    %5538 = vmatprep.subr.mxu0 0.0
    %5539 = vmatpush1.msra.mxu0 %v126
    %5540 = vmatprep.subr.mxu0 0.0
    %5541 = vmatpush1.msra.mxu0 0.0
    %5542 = vmatprep.subr.mxu0 0.0
    %5543 = vmatpush1.msra.mxu0 0.0
    %5544 = vmatprep.subr.mxu0 0.0
    %5545 = vmatpush1.msra.mxu0 0.0
    %5546 = vmatprep.subr.mxu0 0.0
    %5547 = vmatpush1.msra.mxu0 0.0
    %5548 = vmatprep.subr.mxu0 0.0
    %5549 = vmatpush1.msra.mxu0 0.0
    %5550 = vmatprep.subr.mxu0 0.0
    %5551 = vmatpush1.msra.mxu0 0.0
    %5552 = vmatprep.subr.mxu0 0.0
    %5553 = vmatpush1.msra.mxu0 0.0
    %5554 = vmatprep.subr.mxu0 0.0
    %5555 = vmatpush1.msra.mxu0 0.0
    %5556 = vmatprep.subr.mxu0 0.0
    %5557 = vmatpush1.msra.mxu0 0.0
    %5558 = vmatprep.subr.mxu0 0.0
    %5559 = vmatpush1.msra.mxu0 0.0
    %5560 = vmatprep.subr.mxu0 0.0
    %5561 = vmatpush1.msra.mxu0 0.0
    %5562 = vmatprep.subr.mxu0 0.0
    %5563 = vmatpush1.msra.mxu0 0.0
    %5564 = vmatprep.subr.mxu0 0.0
    %5565 = vmatpush1.msra.mxu0 0.0
    %5566 = vmatprep.subr.mxu0 0.0
    %5567 = vmatpush1.msra.mxu0 0.0
    %5568 = vmatprep.subr.mxu0 0.0
    %5569 = vmatpush1.msra.mxu0 0.0
    %5570 = vmatprep.subr.mxu0 0.0
    %5571 = vmatpush1.msra.mxu0 0.0
    %5572 = vmatprep.subr.mxu0 0.0
    %5573 = vmatpush1.msra.mxu0 0.0
    %5574 = vmatprep.subr.mxu0 0.0
    %5575 = vmatpush1.msra.mxu0 0.0
    %5576 = vmatprep.subr.mxu0 0.0
    %5577 = vmatpush1.msra.mxu0 0.0
    %5578 = vmatprep.subr.mxu0 0.0
    %5579 = vmatpush1.msra.mxu0 0.0
    %5580 = vmatprep.subr.mxu0 0.0
    %5581 = vmatpush1.msra.mxu0 0.0
    %5582 = vmatprep.subr.mxu0 0.0
    %5583 = vmatpush1.msra.mxu0 0.0
    %5584 = vmatprep.subr.mxu0 0.0
    %5585 = vmatpush1.msra.mxu0 0.0
    %5586 = vmatprep.subr.mxu0 0.0
    %5587 = vmatpush1.msra.mxu0 0.0
    %5588 = vmatprep.mubr.f32.mxu0 0.0
    %5589 = vmatmul.mubr.f32.gmra.mrb[0].mxu0 %v5522
    %v5590 = vpop.f32.mrb[0].mxu0
    %v5591 = vadd.f32 %v127, %v5590
    %v5592 = vpop.f32.mrb[0].mxu0
    %5593 = vdwg.mxu0
    %v5594 = vxor.u32 %v5591, 2147483648
    %v5595 = vmul.f32 %v5594, 1.442695
    %v5596 = vpow.pop %v5595
    %v5597 = vadd.f32 %v5596, 1.0
    %v5598 = vrcp.pop %v5597
    %v5599 = vmul.f32 1.0, %v5598
    %v5600 = vtanh.pop %v5591
    %v5601 = vmul.f32 %v5599, %v5506
    %5603 = vrot.lane.b32.xlu0 %v5600, 64
    %v5604 = vpop.permute.xlu0 %5603
    %v5606 = vmul.f32 %v5599, %v5604
    %5608 = vrot.lane.b32.xlu0 %v5606, 32
    %v5609 = vpop.permute.xlu0 %5608
    %v5611 = vadd.f32 %v5601, %v5609
    %v5612 = vtanh.pop %v5611
    %5614 = vrot.lane.b32.xlu0 %v5612, 64
    %v5615 = vpop.permute.xlu0 %5614
    %v5617 = vmul.f32 %v5599, %v5615
    %5619 = vrot.lane.b32.xlu0 %v5617, 32
    %v5620 = vpop.permute.xlu0 %5619
    %v5621 = vsel %vm154, %v5620, 0
    %5623 = vmatprep.subr.mxu0 0.0
    %5624 = vmatpush1.msra.mxu0 %v128
    %5625 = vmatprep.subr.mxu0 0.0
    %5626 = vmatpush1.msra.mxu0 %v129
    %5627 = vmatprep.subr.mxu0 0.0
    %5628 = vmatpush1.msra.mxu0 %v130
    %5629 = vmatprep.subr.mxu0 0.0
    %5630 = vmatpush1.msra.mxu0 %v131
    %5631 = vmatprep.subr.mxu0 0.0
    %5632 = vmatpush1.msra.mxu0 0.0
    %5633 = vmatprep.subr.mxu0 0.0
    %5634 = vmatpush1.msra.mxu0 0.0
    %5635 = vmatprep.subr.mxu0 0.0
    %5636 = vmatpush1.msra.mxu0 0.0
    %5637 = vmatprep.subr.mxu0 0.0
    %5638 = vmatpush1.msra.mxu0 0.0
    %5639 = vmatprep.subr.mxu0 0.0
    %5640 = vmatpush1.msra.mxu0 0.0
    %5641 = vmatprep.subr.mxu0 0.0
    %5642 = vmatpush1.msra.mxu0 0.0
    %5643 = vmatprep.subr.mxu0 0.0
    %5644 = vmatpush1.msra.mxu0 0.0
    %5645 = vmatprep.subr.mxu0 0.0
    %5646 = vmatpush1.msra.mxu0 0.0
    %5647 = vmatprep.subr.mxu0 0.0
    %5648 = vmatpush1.msra.mxu0 0.0
    %5649 = vmatprep.subr.mxu0 0.0
    %5650 = vmatpush1.msra.mxu0 0.0
    %5651 = vmatprep.subr.mxu0 0.0
    %5652 = vmatpush1.msra.mxu0 0.0
    %5653 = vmatprep.subr.mxu0 0.0
    %5654 = vmatpush1.msra.mxu0 0.0
    %5655 = vmatprep.subr.mxu0 0.0
    %5656 = vmatpush1.msra.mxu0 0.0
    %5657 = vmatprep.subr.mxu0 0.0
    %5658 = vmatpush1.msra.mxu0 0.0
    %5659 = vmatprep.subr.mxu0 0.0
    %5660 = vmatpush1.msra.mxu0 0.0
    %5661 = vmatprep.subr.mxu0 0.0
    %5662 = vmatpush1.msra.mxu0 0.0
    %5663 = vmatprep.subr.mxu0 0.0
    %5664 = vmatpush1.msra.mxu0 0.0
    %5665 = vmatprep.subr.mxu0 0.0
    %5666 = vmatpush1.msra.mxu0 0.0
    %5667 = vmatprep.subr.mxu0 0.0
    %5668 = vmatpush1.msra.mxu0 0.0
    %5669 = vmatprep.subr.mxu0 0.0
    %5670 = vmatpush1.msra.mxu0 0.0
    %5671 = vmatprep.subr.mxu0 0.0
    %5672 = vmatpush1.msra.mxu0 0.0
    %5673 = vmatprep.subr.mxu0 0.0
    %5674 = vmatpush1.msra.mxu0 0.0
    %5675 = vmatprep.subr.mxu0 0.0
    %5676 = vmatpush1.msra.mxu0 0.0
    %5677 = vmatprep.subr.mxu0 0.0
    %5678 = vmatpush1.msra.mxu0 0.0
    %5679 = vmatprep.subr.mxu0 0.0
    %5680 = vmatpush1.msra.mxu0 0.0
    %5681 = vmatprep.subr.mxu0 0.0
    %5682 = vmatpush1.msra.mxu0 0.0
    %5683 = vmatprep.subr.mxu0 0.0
    %5684 = vmatpush1.msra.mxu0 0.0
    %5685 = vmatprep.subr.mxu0 0.0
    %5686 = vmatpush1.msra.mxu0 0.0
    %5687 = vmatprep.mubr.f32.mxu0 0.0
    %5688 = vmatmul.mubr.f32.gmra.mrb[0].mxu0 %v5621
    %v5689 = vpop.f32.mrb[0].mxu0
    %v5690 = vadd.f32 %v132, %v5689
    %v5691 = vpop.f32.mrb[0].mxu0
    %5692 = vdwg.mxu0
    %v5693 = vsel %vm2310, %v5690, -inf
    %5694 = vmax.xlane.f32.xlu0 %v5693
    %v5695 = vpop.xlane.xlu0 %5694
    %vm5696 = vcmp.eq.f32.partialorder %v5690, %v5695
    %v5697 = vsel %vm5696, %v135, 32
    %v5698 = vsel %vm2310, %v5697, 2147483647
    %v5699 = vand.u32 %v5698, 65535
    %v5700 = vshra.s32 %v5698, 16
    %v5701 = vcvt.s32.f32 %v5699
    %v5702 = vcvt.s32.f32 %v5700
    %5703 = vmin.xlane.f32.xlu0 %v5702
    %v5704 = vpop.xlane.xlu0 %5703
    %vm5705 = vcmp.eq.f32.partialorder %v5702, %v5704
    %v5706 = vsel %vm5705, %v5701, inf
    %5707 = vmin.xlane.f32.xlu0 %v5706
    %v5708 = vpop.xlane.xlu0 %5707
    %v5709 = vcvt.f32.s32 %v5708
    %v5710 = vcvt.f32.s32 %v5704
    %v5711 = vshll.u32 %v5710, 16
    %v5712 = vadd.s32 %v5711, %v5709
    %vm5713 = vcmp.eq.s32.totalorder %v5712, 2
    %v5714 = vsel %vm5713, 1, 0
    %v5715 = vsub.s32 1, %v5512
    %v5716 = vsub.s32 1, %v5714
    %v5717 = vmul.u32 %v5715, %v5716
    %vm5718 = vcmp.eq.s32.totalorder %v135, 15
    %v5719 = vsel %vm5718, 1, 0
    %v5720 = vmul.u32 %v5719, %v5717
    %v5721 = vmul.u32 %v5720, %v5712
    %v5722 = vsub.s32 1, %v5720
    %v5723 = vmul.u32 %v5722, %v5498
    %v5724 = vadd.s32 %v5721, %v5723
    %v5725 = vcvt.s32.f32 %v5715
    %v5726 = vmul.f32 %v5725, %v5617
    %v5727 = vsub.f32 1.0, %v5725
    %v5728 = vmul.f32 %v5727, %v5503
    %v5729 = vadd.f32 %v5726, %v5728
    %v5730 = vmul.f32 %v5725, %v5611
    %v5731 = vmul.f32 %v5727, %v5506
    %v5732 = vadd.f32 %v5730, %v5731
    %v5733 = vmul.u32 %v5715, %v5712
    %v5734 = vsub.s32 1, %v5715
    %v5735 = vmul.u32 %v5734, %v5510
    %v5736 = vadd.s32 %v5733, %v5735
    %vm5737 = vcmp.gt.s32.totalorder %v5512, %v5714
    %v5738 = vsel %vm5737, %v5512, %v5714
    %vm5739 = vcmp.eq.s32.totalorder %v135, %v5736
    %v5740 = vsel %vm5739, 1, 0
    %v5741 = vcvt.s32.f32 %v5740
    %5743 = vrot.lane.b32.xlu0 %v5729, 64
    %v5744 = vpop.permute.xlu0 %5743
    %v5746 = vsel %vm154, %v5741, %v5744
    %v5748 = vsel %vm331, %v5746, 0
    %5750 = vmatprep.subr.mxu0 0.0
    %5751 = vmatpush1.msra.mxu0 %v119
    %5752 = vmatprep.subr.mxu0 0.0
    %5753 = vmatpush1.msra.mxu0 %v120
    %5754 = vmatprep.subr.mxu0 0.0
    %5755 = vmatpush1.msra.mxu0 %v121
    %5756 = vmatprep.subr.mxu0 0.0
    %5757 = vmatpush1.msra.mxu0 %v122
    %5758 = vmatprep.subr.mxu0 0.0
    %5759 = vmatpush1.msra.mxu0 %v123
    %5760 = vmatprep.subr.mxu0 0.0
    %5761 = vmatpush1.msra.mxu0 %v124
    %5762 = vmatprep.subr.mxu0 0.0
    %5763 = vmatpush1.msra.mxu0 %v125
    %5764 = vmatprep.subr.mxu0 0.0
    %5765 = vmatpush1.msra.mxu0 %v126
    %5766 = vmatprep.subr.mxu0 0.0
    %5767 = vmatpush1.msra.mxu0 0.0
    %5768 = vmatprep.subr.mxu0 0.0
    %5769 = vmatpush1.msra.mxu0 0.0
    %5770 = vmatprep.subr.mxu0 0.0
    %5771 = vmatpush1.msra.mxu0 0.0
    %5772 = vmatprep.subr.mxu0 0.0
    %5773 = vmatpush1.msra.mxu0 0.0
    %5774 = vmatprep.subr.mxu0 0.0
    %5775 = vmatpush1.msra.mxu0 0.0
    %5776 = vmatprep.subr.mxu0 0.0
    %5777 = vmatpush1.msra.mxu0 0.0
    %5778 = vmatprep.subr.mxu0 0.0
    %5779 = vmatpush1.msra.mxu0 0.0
    %5780 = vmatprep.subr.mxu0 0.0
    %5781 = vmatpush1.msra.mxu0 0.0
    %5782 = vmatprep.subr.mxu0 0.0
    %5783 = vmatpush1.msra.mxu0 0.0
    %5784 = vmatprep.subr.mxu0 0.0
    %5785 = vmatpush1.msra.mxu0 0.0
    %5786 = vmatprep.subr.mxu0 0.0
    %5787 = vmatpush1.msra.mxu0 0.0
    %5788 = vmatprep.subr.mxu0 0.0
    %5789 = vmatpush1.msra.mxu0 0.0
    %5790 = vmatprep.subr.mxu0 0.0
    %5791 = vmatpush1.msra.mxu0 0.0
    %5792 = vmatprep.subr.mxu0 0.0
    %5793 = vmatpush1.msra.mxu0 0.0
    %5794 = vmatprep.subr.mxu0 0.0
    %5795 = vmatpush1.msra.mxu0 0.0
    %5796 = vmatprep.subr.mxu0 0.0
    %5797 = vmatpush1.msra.mxu0 0.0
    %5798 = vmatprep.subr.mxu0 0.0
    %5799 = vmatpush1.msra.mxu0 0.0
    %5800 = vmatprep.subr.mxu0 0.0
    %5801 = vmatpush1.msra.mxu0 0.0
    %5802 = vmatprep.subr.mxu0 0.0
    %5803 = vmatpush1.msra.mxu0 0.0
    %5804 = vmatprep.subr.mxu0 0.0
    %5805 = vmatpush1.msra.mxu0 0.0
    %5806 = vmatprep.subr.mxu0 0.0
    %5807 = vmatpush1.msra.mxu0 0.0
    %5808 = vmatprep.subr.mxu0 0.0
    %5809 = vmatpush1.msra.mxu0 0.0
    %5810 = vmatprep.subr.mxu0 0.0
    %5811 = vmatpush1.msra.mxu0 0.0
    %5812 = vmatprep.subr.mxu0 0.0
    %5813 = vmatpush1.msra.mxu0 0.0
    %5814 = vmatprep.mubr.f32.mxu0 0.0
    %5815 = vmatmul.mubr.f32.gmra.mrb[0].mxu0 %v5748
    %v5816 = vpop.f32.mrb[0].mxu0
    %v5817 = vadd.f32 %v127, %v5816
    %v5818 = vpop.f32.mrb[0].mxu0
    %5819 = vdwg.mxu0
    %v5820 = vxor.u32 %v5817, 2147483648
    %v5821 = vmul.f32 %v5820, 1.442695
    %v5822 = vpow.pop %v5821
    %v5823 = vadd.f32 %v5822, 1.0
    %v5824 = vrcp.pop %v5823
    %v5825 = vmul.f32 1.0, %v5824
    %v5826 = vtanh.pop %v5817
    %v5827 = vmul.f32 %v5825, %v5732
    %5829 = vrot.lane.b32.xlu0 %v5826, 64
    %v5830 = vpop.permute.xlu0 %5829
    %v5832 = vmul.f32 %v5825, %v5830
    %5834 = vrot.lane.b32.xlu0 %v5832, 32
    %v5835 = vpop.permute.xlu0 %5834
    %v5837 = vadd.f32 %v5827, %v5835
    %v5838 = vtanh.pop %v5837
    %5840 = vrot.lane.b32.xlu0 %v5838, 64
    %v5841 = vpop.permute.xlu0 %5840
    %v5843 = vmul.f32 %v5825, %v5841
    %5845 = vrot.lane.b32.xlu0 %v5843, 32
    %v5846 = vpop.permute.xlu0 %5845
    %v5847 = vsel %vm154, %v5846, 0
    %5849 = vmatprep.subr.mxu0 0.0
    %5850 = vmatpush1.msra.mxu0 %v128
    %5851 = vmatprep.subr.mxu0 0.0
    %5852 = vmatpush1.msra.mxu0 %v129
    %5853 = vmatprep.subr.mxu0 0.0
    %5854 = vmatpush1.msra.mxu0 %v130
    %5855 = vmatprep.subr.mxu0 0.0
    %5856 = vmatpush1.msra.mxu0 %v131
    %5857 = vmatprep.subr.mxu0 0.0
    %5858 = vmatpush1.msra.mxu0 0.0
    %5859 = vmatprep.subr.mxu0 0.0
    %5860 = vmatpush1.msra.mxu0 0.0
    %5861 = vmatprep.subr.mxu0 0.0
    %5862 = vmatpush1.msra.mxu0 0.0
    %5863 = vmatprep.subr.mxu0 0.0
    %5864 = vmatpush1.msra.mxu0 0.0
    %5865 = vmatprep.subr.mxu0 0.0
    %5866 = vmatpush1.msra.mxu0 0.0
    %5867 = vmatprep.subr.mxu0 0.0
    %5868 = vmatpush1.msra.mxu0 0.0
    %5869 = vmatprep.subr.mxu0 0.0
    %5870 = vmatpush1.msra.mxu0 0.0
    %5871 = vmatprep.subr.mxu0 0.0
    %5872 = vmatpush1.msra.mxu0 0.0
    %5873 = vmatprep.subr.mxu0 0.0
    %5874 = vmatpush1.msra.mxu0 0.0
    %5875 = vmatprep.subr.mxu0 0.0
    %5876 = vmatpush1.msra.mxu0 0.0
    %5877 = vmatprep.subr.mxu0 0.0
    %5878 = vmatpush1.msra.mxu0 0.0
    %5879 = vmatprep.subr.mxu0 0.0
    %5880 = vmatpush1.msra.mxu0 0.0
    %5881 = vmatprep.subr.mxu0 0.0
    %5882 = vmatpush1.msra.mxu0 0.0
    %5883 = vmatprep.subr.mxu0 0.0
    %5884 = vmatpush1.msra.mxu0 0.0
    %5885 = vmatprep.subr.mxu0 0.0
    %5886 = vmatpush1.msra.mxu0 0.0
    %5887 = vmatprep.subr.mxu0 0.0
    %5888 = vmatpush1.msra.mxu0 0.0
    %5889 = vmatprep.subr.mxu0 0.0
    %5890 = vmatpush1.msra.mxu0 0.0
    %5891 = vmatprep.subr.mxu0 0.0
    %5892 = vmatpush1.msra.mxu0 0.0
    %5893 = vmatprep.subr.mxu0 0.0
    %5894 = vmatpush1.msra.mxu0 0.0
    %5895 = vmatprep.subr.mxu0 0.0
    %5896 = vmatpush1.msra.mxu0 0.0
    %5897 = vmatprep.subr.mxu0 0.0
    %5898 = vmatpush1.msra.mxu0 0.0
    %5899 = vmatprep.subr.mxu0 0.0
    %5900 = vmatpush1.msra.mxu0 0.0
    %5901 = vmatprep.subr.mxu0 0.0
    %5902 = vmatpush1.msra.mxu0 0.0
    %5903 = vmatprep.subr.mxu0 0.0
    %5904 = vmatpush1.msra.mxu0 0.0
    %5905 = vmatprep.subr.mxu0 0.0
    %5906 = vmatpush1.msra.mxu0 0.0
    %5907 = vmatprep.subr.mxu0 0.0
    %5908 = vmatpush1.msra.mxu0 0.0
    %5909 = vmatprep.subr.mxu0 0.0
    %5910 = vmatpush1.msra.mxu0 0.0
    %5911 = vmatprep.subr.mxu0 0.0
    %5912 = vmatpush1.msra.mxu0 0.0
    %5913 = vmatprep.mubr.f32.mxu0 0.0
    %5914 = vmatmul.mubr.f32.gmra.mrb[0].mxu0 %v5847
    %v5915 = vpop.f32.mrb[0].mxu0
    %v5916 = vadd.f32 %v132, %v5915
    %v5917 = vpop.f32.mrb[0].mxu0
    %5918 = vdwg.mxu0
    %v5919 = vsel %vm2310, %v5916, -inf
    %5920 = vmax.xlane.f32.xlu0 %v5919
    %v5921 = vpop.xlane.xlu0 %5920
    %vm5922 = vcmp.eq.f32.partialorder %v5916, %v5921
    %v5923 = vsel %vm5922, %v135, 32
    %v5924 = vsel %vm2310, %v5923, 2147483647
    %v5925 = vand.u32 %v5924, 65535
    %v5926 = vshra.s32 %v5924, 16
    %v5927 = vcvt.s32.f32 %v5925
    %v5928 = vcvt.s32.f32 %v5926
    %5929 = vmin.xlane.f32.xlu0 %v5928
    %v5930 = vpop.xlane.xlu0 %5929
    %vm5931 = vcmp.eq.f32.partialorder %v5928, %v5930
    %v5932 = vsel %vm5931, %v5927, inf
    %5933 = vmin.xlane.f32.xlu0 %v5932
    %v5934 = vpop.xlane.xlu0 %5933
    %v5935 = vcvt.f32.s32 %v5934
    %v5936 = vcvt.f32.s32 %v5930
    %v5937 = vshll.u32 %v5936, 16
    %v5938 = vadd.s32 %v5937, %v5935
    %vm5939 = vcmp.eq.s32.totalorder %v5938, 2
    %v5940 = vsel %vm5939, 1, 0
    %v5941 = vsub.s32 1, %v5738
    %v5942 = vsub.s32 1, %v5940
    %v5943 = vmul.u32 %v5941, %v5942
    %vm5944 = vcmp.eq.s32.totalorder %v135, 16
    %v5945 = vsel %vm5944, 1, 0
    %v5946 = vmul.u32 %v5945, %v5943
    %v5947 = vmul.u32 %v5946, %v5938
    %v5948 = vsub.s32 1, %v5946
    %v5949 = vmul.u32 %v5948, %v5724
    %v5950 = vadd.s32 %v5947, %v5949
    %v5951 = vcvt.s32.f32 %v5941
    %v5952 = vmul.f32 %v5951, %v5843
    %v5953 = vsub.f32 1.0, %v5951
    %v5954 = vmul.f32 %v5953, %v5729
    %v5955 = vadd.f32 %v5952, %v5954
    %v5956 = vmul.f32 %v5951, %v5837
    %v5957 = vmul.f32 %v5953, %v5732
    %v5958 = vadd.f32 %v5956, %v5957
    %v5959 = vmul.u32 %v5941, %v5938
    %v5960 = vsub.s32 1, %v5941
    %v5961 = vmul.u32 %v5960, %v5736
    %v5962 = vadd.s32 %v5959, %v5961
    %vm5963 = vcmp.gt.s32.totalorder %v5738, %v5940
    %v5964 = vsel %vm5963, %v5738, %v5940
    %vm5965 = vcmp.eq.s32.totalorder %v135, %v5962
    %v5966 = vsel %vm5965, 1, 0
    %v5967 = vcvt.s32.f32 %v5966
    %5969 = vrot.lane.b32.xlu0 %v5955, 64
    %v5970 = vpop.permute.xlu0 %5969
    %v5972 = vsel %vm154, %v5967, %v5970
    %v5974 = vsel %vm331, %v5972, 0
    %5976 = vmatprep.subr.mxu0 0.0
    %5977 = vmatpush1.msra.mxu0 %v119
    %5978 = vmatprep.subr.mxu0 0.0
    %5979 = vmatpush1.msra.mxu0 %v120
    %5980 = vmatprep.subr.mxu0 0.0
    %5981 = vmatpush1.msra.mxu0 %v121
    %5982 = vmatprep.subr.mxu0 0.0
    %5983 = vmatpush1.msra.mxu0 %v122
    %5984 = vmatprep.subr.mxu0 0.0
    %5985 = vmatpush1.msra.mxu0 %v123
    %5986 = vmatprep.subr.mxu0 0.0
    %5987 = vmatpush1.msra.mxu0 %v124
    %5988 = vmatprep.subr.mxu0 0.0
    %5989 = vmatpush1.msra.mxu0 %v125
    %5990 = vmatprep.subr.mxu0 0.0
    %5991 = vmatpush1.msra.mxu0 %v126
    %5992 = vmatprep.subr.mxu0 0.0
    %5993 = vmatpush1.msra.mxu0 0.0
    %5994 = vmatprep.subr.mxu0 0.0
    %5995 = vmatpush1.msra.mxu0 0.0
    %5996 = vmatprep.subr.mxu0 0.0
    %5997 = vmatpush1.msra.mxu0 0.0
    %5998 = vmatprep.subr.mxu0 0.0
    %5999 = vmatpush1.msra.mxu0 0.0
    %6000 = vmatprep.subr.mxu0 0.0
    %6001 = vmatpush1.msra.mxu0 0.0
    %6002 = vmatprep.subr.mxu0 0.0
    %6003 = vmatpush1.msra.mxu0 0.0
    %6004 = vmatprep.subr.mxu0 0.0
    %6005 = vmatpush1.msra.mxu0 0.0
    %6006 = vmatprep.subr.mxu0 0.0
    %6007 = vmatpush1.msra.mxu0 0.0
    %6008 = vmatprep.subr.mxu0 0.0
    %6009 = vmatpush1.msra.mxu0 0.0
    %6010 = vmatprep.subr.mxu0 0.0
    %6011 = vmatpush1.msra.mxu0 0.0
    %6012 = vmatprep.subr.mxu0 0.0
    %6013 = vmatpush1.msra.mxu0 0.0
    %6014 = vmatprep.subr.mxu0 0.0
    %6015 = vmatpush1.msra.mxu0 0.0
    %6016 = vmatprep.subr.mxu0 0.0
    %6017 = vmatpush1.msra.mxu0 0.0
    %6018 = vmatprep.subr.mxu0 0.0
    %6019 = vmatpush1.msra.mxu0 0.0
    %6020 = vmatprep.subr.mxu0 0.0
    %6021 = vmatpush1.msra.mxu0 0.0
    %6022 = vmatprep.subr.mxu0 0.0
    %6023 = vmatpush1.msra.mxu0 0.0
    %6024 = vmatprep.subr.mxu0 0.0
    %6025 = vmatpush1.msra.mxu0 0.0
    %6026 = vmatprep.subr.mxu0 0.0
    %6027 = vmatpush1.msra.mxu0 0.0
    %6028 = vmatprep.subr.mxu0 0.0
    %6029 = vmatpush1.msra.mxu0 0.0
    %6030 = vmatprep.subr.mxu0 0.0
    %6031 = vmatpush1.msra.mxu0 0.0
    %6032 = vmatprep.subr.mxu0 0.0
    %6033 = vmatpush1.msra.mxu0 0.0
    %6034 = vmatprep.subr.mxu0 0.0
    %6035 = vmatpush1.msra.mxu0 0.0
    %6036 = vmatprep.subr.mxu0 0.0
    %6037 = vmatpush1.msra.mxu0 0.0
    %6038 = vmatprep.subr.mxu0 0.0
    %6039 = vmatpush1.msra.mxu0 0.0
    %6040 = vmatprep.mubr.f32.mxu0 0.0
    %6041 = vmatmul.mubr.f32.gmra.mrb[0].mxu0 %v5974
    %v6042 = vpop.f32.mrb[0].mxu0
    %v6043 = vadd.f32 %v127, %v6042
    %v6044 = vpop.f32.mrb[0].mxu0
    %6045 = vdwg.mxu0
    %v6046 = vxor.u32 %v6043, 2147483648
    %v6047 = vmul.f32 %v6046, 1.442695
    %v6048 = vpow.pop %v6047
    %v6049 = vadd.f32 %v6048, 1.0
    %v6050 = vrcp.pop %v6049
    %v6051 = vmul.f32 1.0, %v6050
    %v6052 = vtanh.pop %v6043
    %v6053 = vmul.f32 %v6051, %v5958
    %6055 = vrot.lane.b32.xlu0 %v6052, 64
    %v6056 = vpop.permute.xlu0 %6055
    %v6058 = vmul.f32 %v6051, %v6056
    %6060 = vrot.lane.b32.xlu0 %v6058, 32
    %v6061 = vpop.permute.xlu0 %6060
    %v6063 = vadd.f32 %v6053, %v6061
    %v6064 = vtanh.pop %v6063
    %6066 = vrot.lane.b32.xlu0 %v6064, 64
    %v6067 = vpop.permute.xlu0 %6066
    %v6069 = vmul.f32 %v6051, %v6067
    %6071 = vrot.lane.b32.xlu0 %v6069, 32
    %v6072 = vpop.permute.xlu0 %6071
    %v6073 = vsel %vm154, %v6072, 0
    %6075 = vmatprep.subr.mxu0 0.0
    %6076 = vmatpush1.msra.mxu0 %v128
    %6077 = vmatprep.subr.mxu0 0.0
    %6078 = vmatpush1.msra.mxu0 %v129
    %6079 = vmatprep.subr.mxu0 0.0
    %6080 = vmatpush1.msra.mxu0 %v130
    %6081 = vmatprep.subr.mxu0 0.0
    %6082 = vmatpush1.msra.mxu0 %v131
    %6083 = vmatprep.subr.mxu0 0.0
    %6084 = vmatpush1.msra.mxu0 0.0
    %6085 = vmatprep.subr.mxu0 0.0
    %6086 = vmatpush1.msra.mxu0 0.0
    %6087 = vmatprep.subr.mxu0 0.0
    %6088 = vmatpush1.msra.mxu0 0.0
    %6089 = vmatprep.subr.mxu0 0.0
    %6090 = vmatpush1.msra.mxu0 0.0
    %6091 = vmatprep.subr.mxu0 0.0
    %6092 = vmatpush1.msra.mxu0 0.0
    %6093 = vmatprep.subr.mxu0 0.0
    %6094 = vmatpush1.msra.mxu0 0.0
    %6095 = vmatprep.subr.mxu0 0.0
    %6096 = vmatpush1.msra.mxu0 0.0
    %6097 = vmatprep.subr.mxu0 0.0
    %6098 = vmatpush1.msra.mxu0 0.0
    %6099 = vmatprep.subr.mxu0 0.0
    %6100 = vmatpush1.msra.mxu0 0.0
    %6101 = vmatprep.subr.mxu0 0.0
    %6102 = vmatpush1.msra.mxu0 0.0
    %6103 = vmatprep.subr.mxu0 0.0
    %6104 = vmatpush1.msra.mxu0 0.0
    %6105 = vmatprep.subr.mxu0 0.0
    %6106 = vmatpush1.msra.mxu0 0.0
    %6107 = vmatprep.subr.mxu0 0.0
    %6108 = vmatpush1.msra.mxu0 0.0
    %6109 = vmatprep.subr.mxu0 0.0
    %6110 = vmatpush1.msra.mxu0 0.0
    %6111 = vmatprep.subr.mxu0 0.0
    %6112 = vmatpush1.msra.mxu0 0.0
    %6113 = vmatprep.subr.mxu0 0.0
    %6114 = vmatpush1.msra.mxu0 0.0
    %6115 = vmatprep.subr.mxu0 0.0
    %6116 = vmatpush1.msra.mxu0 0.0
    %6117 = vmatprep.subr.mxu0 0.0
    %6118 = vmatpush1.msra.mxu0 0.0
    %6119 = vmatprep.subr.mxu0 0.0
    %6120 = vmatpush1.msra.mxu0 0.0
    %6121 = vmatprep.subr.mxu0 0.0
    %6122 = vmatpush1.msra.mxu0 0.0
    %6123 = vmatprep.subr.mxu0 0.0
    %6124 = vmatpush1.msra.mxu0 0.0
    %6125 = vmatprep.subr.mxu0 0.0
    %6126 = vmatpush1.msra.mxu0 0.0
    %6127 = vmatprep.subr.mxu0 0.0
    %6128 = vmatpush1.msra.mxu0 0.0
    %6129 = vmatprep.subr.mxu0 0.0
    %6130 = vmatpush1.msra.mxu0 0.0
    %6131 = vmatprep.subr.mxu0 0.0
    %6132 = vmatpush1.msra.mxu0 0.0
    %6133 = vmatprep.subr.mxu0 0.0
    %6134 = vmatpush1.msra.mxu0 0.0
    %6135 = vmatprep.subr.mxu0 0.0
    %6136 = vmatpush1.msra.mxu0 0.0
    %6137 = vmatprep.subr.mxu0 0.0
    %6138 = vmatpush1.msra.mxu0 0.0
    %6139 = vmatprep.mubr.f32.mxu0 0.0
    %6140 = vmatmul.mubr.f32.gmra.mrb[0].mxu0 %v6073
    %v6141 = vpop.f32.mrb[0].mxu0
    %v6142 = vadd.f32 %v132, %v6141
    %v6143 = vpop.f32.mrb[0].mxu0
    %6144 = vdwg.mxu0
    %v6145 = vsel %vm2310, %v6142, -inf
    %6146 = vmax.xlane.f32.xlu0 %v6145
    %v6147 = vpop.xlane.xlu0 %6146
    %vm6148 = vcmp.eq.f32.partialorder %v6142, %v6147
    %v6149 = vsel %vm6148, %v135, 32
    %v6150 = vsel %vm2310, %v6149, 2147483647
    %v6151 = vand.u32 %v6150, 65535
    %v6152 = vshra.s32 %v6150, 16
    %v6153 = vcvt.s32.f32 %v6151
    %v6154 = vcvt.s32.f32 %v6152
    %6155 = vmin.xlane.f32.xlu0 %v6154
    %v6156 = vpop.xlane.xlu0 %6155
    %vm6157 = vcmp.eq.f32.partialorder %v6154, %v6156
    %v6158 = vsel %vm6157, %v6153, inf
    %6159 = vmin.xlane.f32.xlu0 %v6158
    %v6160 = vpop.xlane.xlu0 %6159
    %v6161 = vcvt.f32.s32 %v6160
    %v6162 = vcvt.f32.s32 %v6156
    %v6163 = vshll.u32 %v6162, 16
    %v6164 = vadd.s32 %v6163, %v6161
    %vm6165 = vcmp.eq.s32.totalorder %v6164, 2
    %v6166 = vsel %vm6165, 1, 0
    %v6167 = vsub.s32 1, %v5964
    %v6168 = vsub.s32 1, %v6166
    %v6169 = vmul.u32 %v6167, %v6168
    %vm6170 = vcmp.eq.s32.totalorder %v135, 17
    %v6171 = vsel %vm6170, 1, 0
    %v6172 = vmul.u32 %v6171, %v6169
    %v6173 = vmul.u32 %v6172, %v6164
    %v6174 = vsub.s32 1, %v6172
    %v6175 = vmul.u32 %v6174, %v5950
    %v6176 = vadd.s32 %v6173, %v6175
    %v6177 = vcvt.s32.f32 %v6167
    %v6178 = vmul.f32 %v6177, %v6069
    %v6179 = vsub.f32 1.0, %v6177
    %v6180 = vmul.f32 %v6179, %v5955
    %v6181 = vadd.f32 %v6178, %v6180
    %v6182 = vmul.f32 %v6177, %v6063
    %v6183 = vmul.f32 %v6179, %v5958
    %v6184 = vadd.f32 %v6182, %v6183
    %v6185 = vmul.u32 %v6167, %v6164
    %v6186 = vsub.s32 1, %v6167
    %v6187 = vmul.u32 %v6186, %v5962
    %v6188 = vadd.s32 %v6185, %v6187
    %vm6189 = vcmp.gt.s32.totalorder %v5964, %v6166
    %v6190 = vsel %vm6189, %v5964, %v6166
    %vm6191 = vcmp.eq.s32.totalorder %v135, %v6188
    %v6192 = vsel %vm6191, 1, 0
    %v6193 = vcvt.s32.f32 %v6192
    %6195 = vrot.lane.b32.xlu0 %v6181, 64
    %v6196 = vpop.permute.xlu0 %6195
    %v6198 = vsel %vm154, %v6193, %v6196
    %v6200 = vsel %vm331, %v6198, 0
    %6202 = vmatprep.subr.mxu0 0.0
    %6203 = vmatpush1.msra.mxu0 %v119
    %6204 = vmatprep.subr.mxu0 0.0
    %6205 = vmatpush1.msra.mxu0 %v120
    %6206 = vmatprep.subr.mxu0 0.0
    %6207 = vmatpush1.msra.mxu0 %v121
    %6208 = vmatprep.subr.mxu0 0.0
    %6209 = vmatpush1.msra.mxu0 %v122
    %6210 = vmatprep.subr.mxu0 0.0
    %6211 = vmatpush1.msra.mxu0 %v123
    %6212 = vmatprep.subr.mxu0 0.0
    %6213 = vmatpush1.msra.mxu0 %v124
    %6214 = vmatprep.subr.mxu0 0.0
    %6215 = vmatpush1.msra.mxu0 %v125
    %6216 = vmatprep.subr.mxu0 0.0
    %6217 = vmatpush1.msra.mxu0 %v126
    %6218 = vmatprep.subr.mxu0 0.0
    %6219 = vmatpush1.msra.mxu0 0.0
    %6220 = vmatprep.subr.mxu0 0.0
    %6221 = vmatpush1.msra.mxu0 0.0
    %6222 = vmatprep.subr.mxu0 0.0
    %6223 = vmatpush1.msra.mxu0 0.0
    %6224 = vmatprep.subr.mxu0 0.0
    %6225 = vmatpush1.msra.mxu0 0.0
    %6226 = vmatprep.subr.mxu0 0.0
    %6227 = vmatpush1.msra.mxu0 0.0
    %6228 = vmatprep.subr.mxu0 0.0
    %6229 = vmatpush1.msra.mxu0 0.0
    %6230 = vmatprep.subr.mxu0 0.0
    %6231 = vmatpush1.msra.mxu0 0.0
    %6232 = vmatprep.subr.mxu0 0.0
    %6233 = vmatpush1.msra.mxu0 0.0
    %6234 = vmatprep.subr.mxu0 0.0
    %6235 = vmatpush1.msra.mxu0 0.0
    %6236 = vmatprep.subr.mxu0 0.0
    %6237 = vmatpush1.msra.mxu0 0.0
    %6238 = vmatprep.subr.mxu0 0.0
    %6239 = vmatpush1.msra.mxu0 0.0
    %6240 = vmatprep.subr.mxu0 0.0
    %6241 = vmatpush1.msra.mxu0 0.0
    %6242 = vmatprep.subr.mxu0 0.0
    %6243 = vmatpush1.msra.mxu0 0.0
    %6244 = vmatprep.subr.mxu0 0.0
    %6245 = vmatpush1.msra.mxu0 0.0
    %6246 = vmatprep.subr.mxu0 0.0
    %6247 = vmatpush1.msra.mxu0 0.0
    %6248 = vmatprep.subr.mxu0 0.0
    %6249 = vmatpush1.msra.mxu0 0.0
    %6250 = vmatprep.subr.mxu0 0.0
    %6251 = vmatpush1.msra.mxu0 0.0
    %6252 = vmatprep.subr.mxu0 0.0
    %6253 = vmatpush1.msra.mxu0 0.0
    %6254 = vmatprep.subr.mxu0 0.0
    %6255 = vmatpush1.msra.mxu0 0.0
    %6256 = vmatprep.subr.mxu0 0.0
    %6257 = vmatpush1.msra.mxu0 0.0
    %6258 = vmatprep.subr.mxu0 0.0
    %6259 = vmatpush1.msra.mxu0 0.0
    %6260 = vmatprep.subr.mxu0 0.0
    %6261 = vmatpush1.msra.mxu0 0.0
    %6262 = vmatprep.subr.mxu0 0.0
    %6263 = vmatpush1.msra.mxu0 0.0
    %6264 = vmatprep.subr.mxu0 0.0
    %6265 = vmatpush1.msra.mxu0 0.0
    %6266 = vmatprep.mubr.f32.mxu0 0.0
    %6267 = vmatmul.mubr.f32.gmra.mrb[0].mxu0 %v6200
    %v6268 = vpop.f32.mrb[0].mxu0
    %v6269 = vadd.f32 %v127, %v6268
    %v6270 = vpop.f32.mrb[0].mxu0
    %6271 = vdwg.mxu0
    %v6272 = vxor.u32 %v6269, 2147483648
    %v6273 = vmul.f32 %v6272, 1.442695
    %v6274 = vpow.pop %v6273
    %v6275 = vadd.f32 %v6274, 1.0
    %v6276 = vrcp.pop %v6275
    %v6277 = vmul.f32 1.0, %v6276
    %v6278 = vtanh.pop %v6269
    %v6279 = vmul.f32 %v6277, %v6184
    %6281 = vrot.lane.b32.xlu0 %v6278, 64
    %v6282 = vpop.permute.xlu0 %6281
    %v6284 = vmul.f32 %v6277, %v6282
    %6286 = vrot.lane.b32.xlu0 %v6284, 32
    %v6287 = vpop.permute.xlu0 %6286
    %v6289 = vadd.f32 %v6279, %v6287
    %v6290 = vtanh.pop %v6289
    %6292 = vrot.lane.b32.xlu0 %v6290, 64
    %v6293 = vpop.permute.xlu0 %6292
    %v6295 = vmul.f32 %v6277, %v6293
    %6297 = vrot.lane.b32.xlu0 %v6295, 32
    %v6298 = vpop.permute.xlu0 %6297
    %v6299 = vsel %vm154, %v6298, 0
    %6301 = vmatprep.subr.mxu0 0.0
    %6302 = vmatpush1.msra.mxu0 %v128
    %6303 = vmatprep.subr.mxu0 0.0
    %6304 = vmatpush1.msra.mxu0 %v129
    %6305 = vmatprep.subr.mxu0 0.0
    %6306 = vmatpush1.msra.mxu0 %v130
    %6307 = vmatprep.subr.mxu0 0.0
    %6308 = vmatpush1.msra.mxu0 %v131
    %6309 = vmatprep.subr.mxu0 0.0
    %6310 = vmatpush1.msra.mxu0 0.0
    %6311 = vmatprep.subr.mxu0 0.0
    %6312 = vmatpush1.msra.mxu0 0.0
    %6313 = vmatprep.subr.mxu0 0.0
    %6314 = vmatpush1.msra.mxu0 0.0
    %6315 = vmatprep.subr.mxu0 0.0
    %6316 = vmatpush1.msra.mxu0 0.0
    %6317 = vmatprep.subr.mxu0 0.0
    %6318 = vmatpush1.msra.mxu0 0.0
    %6319 = vmatprep.subr.mxu0 0.0
    %6320 = vmatpush1.msra.mxu0 0.0
    %6321 = vmatprep.subr.mxu0 0.0
    %6322 = vmatpush1.msra.mxu0 0.0
    %6323 = vmatprep.subr.mxu0 0.0
    %6324 = vmatpush1.msra.mxu0 0.0
    %6325 = vmatprep.subr.mxu0 0.0
    %6326 = vmatpush1.msra.mxu0 0.0
    %6327 = vmatprep.subr.mxu0 0.0
    %6328 = vmatpush1.msra.mxu0 0.0
    %6329 = vmatprep.subr.mxu0 0.0
    %6330 = vmatpush1.msra.mxu0 0.0
    %6331 = vmatprep.subr.mxu0 0.0
    %6332 = vmatpush1.msra.mxu0 0.0
    %6333 = vmatprep.subr.mxu0 0.0
    %6334 = vmatpush1.msra.mxu0 0.0
    %6335 = vmatprep.subr.mxu0 0.0
    %6336 = vmatpush1.msra.mxu0 0.0
    %6337 = vmatprep.subr.mxu0 0.0
    %6338 = vmatpush1.msra.mxu0 0.0
    %6339 = vmatprep.subr.mxu0 0.0
    %6340 = vmatpush1.msra.mxu0 0.0
    %6341 = vmatprep.subr.mxu0 0.0
    %6342 = vmatpush1.msra.mxu0 0.0
    %6343 = vmatprep.subr.mxu0 0.0
    %6344 = vmatpush1.msra.mxu0 0.0
    %6345 = vmatprep.subr.mxu0 0.0
    %6346 = vmatpush1.msra.mxu0 0.0
    %6347 = vmatprep.subr.mxu0 0.0
    %6348 = vmatpush1.msra.mxu0 0.0
    %6349 = vmatprep.subr.mxu0 0.0
    %6350 = vmatpush1.msra.mxu0 0.0
    %6351 = vmatprep.subr.mxu0 0.0
    %6352 = vmatpush1.msra.mxu0 0.0
    %6353 = vmatprep.subr.mxu0 0.0
    %6354 = vmatpush1.msra.mxu0 0.0
    %6355 = vmatprep.subr.mxu0 0.0
    %6356 = vmatpush1.msra.mxu0 0.0
    %6357 = vmatprep.subr.mxu0 0.0
    %6358 = vmatpush1.msra.mxu0 0.0
    %6359 = vmatprep.subr.mxu0 0.0
    %6360 = vmatpush1.msra.mxu0 0.0
    %6361 = vmatprep.subr.mxu0 0.0
    %6362 = vmatpush1.msra.mxu0 0.0
    %6363 = vmatprep.subr.mxu0 0.0
    %6364 = vmatpush1.msra.mxu0 0.0
    %6365 = vmatprep.mubr.f32.mxu0 0.0
    %6366 = vmatmul.mubr.f32.gmra.mrb[0].mxu0 %v6299
    %v6367 = vpop.f32.mrb[0].mxu0
    %v6368 = vadd.f32 %v132, %v6367
    %v6369 = vpop.f32.mrb[0].mxu0
    %6370 = vdwg.mxu0
    %v6371 = vsel %vm2310, %v6368, -inf
    %6372 = vmax.xlane.f32.xlu0 %v6371
    %v6373 = vpop.xlane.xlu0 %6372
    %vm6374 = vcmp.eq.f32.partialorder %v6368, %v6373
    %v6375 = vsel %vm6374, %v135, 32
    %v6376 = vsel %vm2310, %v6375, 2147483647
    %v6377 = vand.u32 %v6376, 65535
    %v6378 = vshra.s32 %v6376, 16
    %v6379 = vcvt.s32.f32 %v6377
    %v6380 = vcvt.s32.f32 %v6378
    %6381 = vmin.xlane.f32.xlu0 %v6380
    %v6382 = vpop.xlane.xlu0 %6381
    %vm6383 = vcmp.eq.f32.partialorder %v6380, %v6382
    %v6384 = vsel %vm6383, %v6379, inf
    %6385 = vmin.xlane.f32.xlu0 %v6384
    %v6386 = vpop.xlane.xlu0 %6385
    %v6387 = vcvt.f32.s32 %v6386
    %v6388 = vcvt.f32.s32 %v6382
    %v6389 = vshll.u32 %v6388, 16
    %v6390 = vadd.s32 %v6389, %v6387
    %vm6391 = vcmp.eq.s32.totalorder %v6390, 2
    %v6392 = vsel %vm6391, 1, 0
    %v6393 = vsub.s32 1, %v6190
    %v6394 = vsub.s32 1, %v6392
    %v6395 = vmul.u32 %v6393, %v6394
    %vm6396 = vcmp.eq.s32.totalorder %v135, 18
    %v6397 = vsel %vm6396, 1, 0
    %v6398 = vmul.u32 %v6397, %v6395
    %v6399 = vmul.u32 %v6398, %v6390
    %v6400 = vsub.s32 1, %v6398
    %v6401 = vmul.u32 %v6400, %v6176
    %v6402 = vadd.s32 %v6399, %v6401
    %v6403 = vcvt.s32.f32 %v6393
    %v6404 = vmul.f32 %v6403, %v6295
    %v6405 = vsub.f32 1.0, %v6403
    %v6406 = vmul.f32 %v6405, %v6181
    %v6407 = vadd.f32 %v6404, %v6406
    %v6408 = vmul.f32 %v6403, %v6289
    %v6409 = vmul.f32 %v6405, %v6184
    %v6410 = vadd.f32 %v6408, %v6409
    %v6411 = vmul.u32 %v6393, %v6390
    %v6412 = vsub.s32 1, %v6393
    %v6413 = vmul.u32 %v6412, %v6188
    %v6414 = vadd.s32 %v6411, %v6413
    %vm6415 = vcmp.gt.s32.totalorder %v6190, %v6392
    %v6416 = vsel %vm6415, %v6190, %v6392
    %vm6417 = vcmp.eq.s32.totalorder %v135, %v6414
    %v6418 = vsel %vm6417, 1, 0
    %v6419 = vcvt.s32.f32 %v6418
    %6421 = vrot.lane.b32.xlu0 %v6407, 64
    %v6422 = vpop.permute.xlu0 %6421
    %v6424 = vsel %vm154, %v6419, %v6422
    %v6426 = vsel %vm331, %v6424, 0
    %6428 = vmatprep.subr.mxu0 0.0
    %6429 = vmatpush1.msra.mxu0 %v119
    %6430 = vmatprep.subr.mxu0 0.0
    %6431 = vmatpush1.msra.mxu0 %v120
    %6432 = vmatprep.subr.mxu0 0.0
    %6433 = vmatpush1.msra.mxu0 %v121
    %6434 = vmatprep.subr.mxu0 0.0
    %6435 = vmatpush1.msra.mxu0 %v122
    %6436 = vmatprep.subr.mxu0 0.0
    %6437 = vmatpush1.msra.mxu0 %v123
    %6438 = vmatprep.subr.mxu0 0.0
    %6439 = vmatpush1.msra.mxu0 %v124
    %6440 = vmatprep.subr.mxu0 0.0
    %6441 = vmatpush1.msra.mxu0 %v125
    %6442 = vmatprep.subr.mxu0 0.0
    %6443 = vmatpush1.msra.mxu0 %v126
    %6444 = vmatprep.subr.mxu0 0.0
    %6445 = vmatpush1.msra.mxu0 0.0
    %6446 = vmatprep.subr.mxu0 0.0
    %6447 = vmatpush1.msra.mxu0 0.0
    %6448 = vmatprep.subr.mxu0 0.0
    %6449 = vmatpush1.msra.mxu0 0.0
    %6450 = vmatprep.subr.mxu0 0.0
    %6451 = vmatpush1.msra.mxu0 0.0
    %6452 = vmatprep.subr.mxu0 0.0
    %6453 = vmatpush1.msra.mxu0 0.0
    %6454 = vmatprep.subr.mxu0 0.0
    %6455 = vmatpush1.msra.mxu0 0.0
    %6456 = vmatprep.subr.mxu0 0.0
    %6457 = vmatpush1.msra.mxu0 0.0
    %6458 = vmatprep.subr.mxu0 0.0
    %6459 = vmatpush1.msra.mxu0 0.0
    %6460 = vmatprep.subr.mxu0 0.0
    %6461 = vmatpush1.msra.mxu0 0.0
    %6462 = vmatprep.subr.mxu0 0.0
    %6463 = vmatpush1.msra.mxu0 0.0
    %6464 = vmatprep.subr.mxu0 0.0
    %6465 = vmatpush1.msra.mxu0 0.0
    %6466 = vmatprep.subr.mxu0 0.0
    %6467 = vmatpush1.msra.mxu0 0.0
    %6468 = vmatprep.subr.mxu0 0.0
    %6469 = vmatpush1.msra.mxu0 0.0
    %6470 = vmatprep.subr.mxu0 0.0
    %6471 = vmatpush1.msra.mxu0 0.0
    %6472 = vmatprep.subr.mxu0 0.0
    %6473 = vmatpush1.msra.mxu0 0.0
    %6474 = vmatprep.subr.mxu0 0.0
    %6475 = vmatpush1.msra.mxu0 0.0
    %6476 = vmatprep.subr.mxu0 0.0
    %6477 = vmatpush1.msra.mxu0 0.0
    %6478 = vmatprep.subr.mxu0 0.0
    %6479 = vmatpush1.msra.mxu0 0.0
    %6480 = vmatprep.subr.mxu0 0.0
    %6481 = vmatpush1.msra.mxu0 0.0
    %6482 = vmatprep.subr.mxu0 0.0
    %6483 = vmatpush1.msra.mxu0 0.0
    %6484 = vmatprep.subr.mxu0 0.0
    %6485 = vmatpush1.msra.mxu0 0.0
    %6486 = vmatprep.subr.mxu0 0.0
    %6487 = vmatpush1.msra.mxu0 0.0
    %6488 = vmatprep.subr.mxu0 0.0
    %6489 = vmatpush1.msra.mxu0 0.0
    %6490 = vmatprep.subr.mxu0 0.0
    %6491 = vmatpush1.msra.mxu0 0.0
    %6492 = vmatprep.mubr.f32.mxu0 0.0
    %6493 = vmatmul.mubr.f32.gmra.mrb[0].mxu0 %v6426
    %v6494 = vpop.f32.mrb[0].mxu0
    %v6495 = vadd.f32 %v127, %v6494
    %v6496 = vpop.f32.mrb[0].mxu0
    %6497 = vdwg.mxu0
    %v6498 = vxor.u32 %v6495, 2147483648
    %v6499 = vmul.f32 %v6498, 1.442695
    %v6500 = vpow.pop %v6499
    %v6501 = vadd.f32 %v6500, 1.0
    %v6502 = vrcp.pop %v6501
    %v6503 = vmul.f32 1.0, %v6502
    %v6504 = vtanh.pop %v6495
    %v6505 = vmul.f32 %v6503, %v6410
    %6507 = vrot.lane.b32.xlu0 %v6504, 64
    %v6508 = vpop.permute.xlu0 %6507
    %v6510 = vmul.f32 %v6503, %v6508
    %6512 = vrot.lane.b32.xlu0 %v6510, 32
    %v6513 = vpop.permute.xlu0 %6512
    %v6515 = vadd.f32 %v6505, %v6513
    %v6516 = vtanh.pop %v6515
    %6518 = vrot.lane.b32.xlu0 %v6516, 64
    %v6519 = vpop.permute.xlu0 %6518
    %v6521 = vmul.f32 %v6503, %v6519
    %6523 = vrot.lane.b32.xlu0 %v6521, 32
    %v6524 = vpop.permute.xlu0 %6523
    %v6525 = vsel %vm154, %v6524, 0
    %6527 = vmatprep.subr.mxu0 0.0
    %6528 = vmatpush1.msra.mxu0 %v128
    %6529 = vmatprep.subr.mxu0 0.0
    %6530 = vmatpush1.msra.mxu0 %v129
    %6531 = vmatprep.subr.mxu0 0.0
    %6532 = vmatpush1.msra.mxu0 %v130
    %6533 = vmatprep.subr.mxu0 0.0
    %6534 = vmatpush1.msra.mxu0 %v131
    %6535 = vmatprep.subr.mxu0 0.0
    %6536 = vmatpush1.msra.mxu0 0.0
    %6537 = vmatprep.subr.mxu0 0.0
    %6538 = vmatpush1.msra.mxu0 0.0
    %6539 = vmatprep.subr.mxu0 0.0
    %6540 = vmatpush1.msra.mxu0 0.0
    %6541 = vmatprep.subr.mxu0 0.0
    %6542 = vmatpush1.msra.mxu0 0.0
    %6543 = vmatprep.subr.mxu0 0.0
    %6544 = vmatpush1.msra.mxu0 0.0
    %6545 = vmatprep.subr.mxu0 0.0
    %6546 = vmatpush1.msra.mxu0 0.0
    %6547 = vmatprep.subr.mxu0 0.0
    %6548 = vmatpush1.msra.mxu0 0.0
    %6549 = vmatprep.subr.mxu0 0.0
    %6550 = vmatpush1.msra.mxu0 0.0
    %6551 = vmatprep.subr.mxu0 0.0
    %6552 = vmatpush1.msra.mxu0 0.0
    %6553 = vmatprep.subr.mxu0 0.0
    %6554 = vmatpush1.msra.mxu0 0.0
    %6555 = vmatprep.subr.mxu0 0.0
    %6556 = vmatpush1.msra.mxu0 0.0
    %6557 = vmatprep.subr.mxu0 0.0
    %6558 = vmatpush1.msra.mxu0 0.0
    %6559 = vmatprep.subr.mxu0 0.0
    %6560 = vmatpush1.msra.mxu0 0.0
    %6561 = vmatprep.subr.mxu0 0.0
    %6562 = vmatpush1.msra.mxu0 0.0
    %6563 = vmatprep.subr.mxu0 0.0
    %6564 = vmatpush1.msra.mxu0 0.0
    %6565 = vmatprep.subr.mxu0 0.0
    %6566 = vmatpush1.msra.mxu0 0.0
    %6567 = vmatprep.subr.mxu0 0.0
    %6568 = vmatpush1.msra.mxu0 0.0
    %6569 = vmatprep.subr.mxu0 0.0
    %6570 = vmatpush1.msra.mxu0 0.0
    %6571 = vmatprep.subr.mxu0 0.0
    %6572 = vmatpush1.msra.mxu0 0.0
    %6573 = vmatprep.subr.mxu0 0.0
    %6574 = vmatpush1.msra.mxu0 0.0
    %6575 = vmatprep.subr.mxu0 0.0
    %6576 = vmatpush1.msra.mxu0 0.0
    %6577 = vmatprep.subr.mxu0 0.0
    %6578 = vmatpush1.msra.mxu0 0.0
    %6579 = vmatprep.subr.mxu0 0.0
    %6580 = vmatpush1.msra.mxu0 0.0
    %6581 = vmatprep.subr.mxu0 0.0
    %6582 = vmatpush1.msra.mxu0 0.0
    %6583 = vmatprep.subr.mxu0 0.0
    %6584 = vmatpush1.msra.mxu0 0.0
    %6585 = vmatprep.subr.mxu0 0.0
    %6586 = vmatpush1.msra.mxu0 0.0
    %6587 = vmatprep.subr.mxu0 0.0
    %6588 = vmatpush1.msra.mxu0 0.0
    %6589 = vmatprep.subr.mxu0 0.0
    %6590 = vmatpush1.msra.mxu0 0.0
    %6591 = vmatprep.mubr.f32.mxu0 0.0
    %6592 = vmatmul.mubr.f32.gmra.mrb[0].mxu0 %v6525
    %v6593 = vpop.f32.mrb[0].mxu0
    %v6594 = vadd.f32 %v132, %v6593
    %v6595 = vpop.f32.mrb[0].mxu0
    %6596 = vdwg.mxu0
    %v6597 = vsel %vm2310, %v6594, -inf
    %6598 = vmax.xlane.f32.xlu0 %v6597
    %v6599 = vpop.xlane.xlu0 %6598
    %vm6600 = vcmp.eq.f32.partialorder %v6594, %v6599
    %v6601 = vsel %vm6600, %v135, 32
    %v6602 = vsel %vm2310, %v6601, 2147483647
    %v6603 = vand.u32 %v6602, 65535
    %v6604 = vshra.s32 %v6602, 16
    %v6605 = vcvt.s32.f32 %v6603
    %v6606 = vcvt.s32.f32 %v6604
    %6607 = vmin.xlane.f32.xlu0 %v6606
    %v6608 = vpop.xlane.xlu0 %6607
    %vm6609 = vcmp.eq.f32.partialorder %v6606, %v6608
    %v6610 = vsel %vm6609, %v6605, inf
    %6611 = vmin.xlane.f32.xlu0 %v6610
    %v6612 = vpop.xlane.xlu0 %6611
    %v6613 = vcvt.f32.s32 %v6612
    %v6614 = vcvt.f32.s32 %v6608
    %v6615 = vshll.u32 %v6614, 16
    %v6616 = vadd.s32 %v6615, %v6613
    %vm6617 = vcmp.eq.s32.totalorder %v6616, 2
    %v6618 = vsel %vm6617, 1, 0
    %v6619 = vsub.s32 1, %v6416
    %v6620 = vsub.s32 1, %v6618
    %v6621 = vmul.u32 %v6619, %v6620
    %vm6622 = vcmp.eq.s32.totalorder %v135, 19
    %v6623 = vsel %vm6622, 1, 0
    %v6624 = vmul.u32 %v6623, %v6621
    %v6625 = vmul.u32 %v6624, %v6616
    %v6626 = vsub.s32 1, %v6624
    %v6627 = vmul.u32 %v6626, %v6402
    %v6628 = vadd.s32 %v6625, %v6627
    %6629 = vst [vmem:[#allocation12] sm:$0x1] %v6628
    // Predicated region
    $region66: #{run_seq2seq.1} parent=1 // pred_check
      _
    $region67: #{run_seq2seq.1} parent=1 // pred_check_branch
      %6631 = sbr.rel (0) target = $region69
    $region68: #{run_seq2seq.1} parent=1 // pred_region
      %s6633 = ssub.s32 16, 16
      %6634 = vsyncadd [#allocation5], %s6633
      %s6636 = sshll.u32 [#allocation12], 4
      %s6637 = int_to_ptr.vmem [resolvable:$true] %s6636
      %6639 = dma.vmem_to_hbm [thread:$0]  %s6637, 16, %s11, [#allocation5]
    $region69: #{run_seq2seq.1} parent=1 // pred_fallthru
      _
    // Predicated region
    $region70: #{run_seq2seq.1} parent=1 // pred_check
      _
    $region71: #{run_seq2seq.1} parent=1 // pred_check_branch
      %6641 = sbr.rel (0) target = $region73
    $region72: #{run_seq2seq.1} parent=1 // pred_region
      %6642 = dma.done [#allocation5], 16
    $region73: #{run_seq2seq.1} parent=1 // pred_fallthru
      _
    %6643 = vsyncpa [#allocation4], 1
    %6644 = vsyncpa [#allocation7], 1
    %6645 = vsyncpa [#allocation10], 1
    %6646 = vsyncpa [#allocation5], 1

</llo_original>
